<compile_context>
chip_gen: v6e
topology: v6e:2x2x1
jax: 0.10.0
libtpu: 0.0.40
codegen_flags: <defaults>
</compile_context>

<pallas_src>
import jax
import jax.numpy as jnp
import numpy as np
from jax import lax
from jax.experimental import pallas as pl
from jax.experimental.pallas import tpu as pltpu


# ----------------------------------------------------------------------------
# Fused kernel: conv1x1+ReLU -> conv3x3(pad1)+ReLU -> conv1x1+BN+ReLU -> +x
# One grid step = B_BLK images; inner loop = chunks of CHUNK images.
# ----------------------------------------------------------------------------
def drn_block_kernel(x_ref, w1_ref, b1_ref, w2_ref, b2_ref, w3_ref, b3_ref,
                     o_ref, x1c_ref, acc_ref):
    # x_ref  : (B_BLK, H, W, C) f32       input images (NHWC block)
    # w1_ref : (C, C)      bf16           layer1 1x1 weight, (in, out)
    # b1_ref : (1, C)      f32
    # w2_ref : (3, 3C, C)  bf16           layer2 weight, ky-major, rows = kx*C+in
    # b2_ref : (1, C)      f32
    # w3_ref : (C, C)      bf16           layer3 1x1 weight with BN folded in
    # b3_ref : (1, C)      f32            layer3 bias  with BN folded in
    # o_ref  : (B_BLK, H, W, C) f32
    # x1c_ref: (CHUNK, H+2, W, 3C) f32    H-padded, kx-stacked layer1 activation
    # acc_ref: (CHUNK*H*W, C) f32         layer2 accumulator
    B, H, W, C = x_ref.shape
    CHUNK = x1c_ref.shape[0]
    M = CHUNK * H * W
    n_chunks = B // CHUNK

    # Zero the H-padding rows every grid step (no cross-iteration scratch
    # state -> correct under megacore "parallel" sharding on v7x).
    border = jnp.zeros((CHUNK, 1, W, 3 * C), jnp.float32)
    x1c_ref[:, 0:1, :, :] = border
    x1c_ref[:, H + 1:H + 2, :, :] = border

    # W-border masks for the kx=0 / kx=2 column taps (tiny, 1 vreg each).
    col = lax.broadcasted_iota(jnp.int32, (1, 1, W, 1), 2)
    not_first = (col != 0).astype(jnp.float32)        # zero column x = 0
    not_last = (col != W - 1).astype(jnp.float32)     # zero column x = W-1

    def chunk_body(ci, carry):
        b0 = pl.multiple_of(ci * CHUNK, CHUNK)

        # ---- layer1: 1x1 conv + ReLU  -> (M, C) f32 --------------------------
        xin = x_ref[pl.ds(b0, CHUNK)].reshape(M, C)
        y1 = jnp.maximum(
            jnp.dot(xin.astype(jnp.bfloat16), w1_ref[...],
                    preferred_element_type=jnp.float32) + b1_ref[...],
            0.0)

        # ---- build kx-stacked, H-padded activation (im2col over kx) ----------
        # channel block kx holds x1 shifted so that column x reads input x+kx-1.
        # Shifts are XLU sublane rolls + border masks: all stores/reads are
        # lane-dense and sublane-aligned (no masked vst, no relayout copies).
        x1c_ref[:, 1:H + 1, :, C:2 * C] = y1.reshape(CHUNK, H, W, C)
        left = (pltpu.roll(y1, 1, axis=0).reshape(CHUNK, H, W, C) * not_first)
        x1c_ref[:, 1:H + 1, :, 0:C] = left
        right = (pltpu.roll(y1, M - 1, axis=0).reshape(CHUNK, H, W, C) * not_last)
        x1c_ref[:, 1:H + 1, :, 2 * C:3 * C] = right

        # ---- layer2: 3x3 conv as 3 K-stacked matmuls (K = 3C) + ReLU ---------
        a0 = x1c_ref[:, 0:H, :, :].reshape(M, 3 * C)
        acc_ref[...] = (jnp.dot(a0.astype(jnp.bfloat16), w2_ref[0],
                                preferred_element_type=jnp.float32)
                        + b2_ref[...])
        for ky in range(1, 3):
            a = x1c_ref[:, ky:ky + H, :, :].reshape(M, 3 * C)
            acc_ref[...] += jnp.dot(a.astype(jnp.bfloat16), w2_ref[ky],
                                    preferred_element_type=jnp.float32)
        x2 = jnp.maximum(acc_ref[...], 0.0).astype(jnp.bfloat16)

        # ---- layer3: 1x1 conv + folded BatchNorm + ReLU ----------------------
        y3 = jnp.maximum(
            jnp.dot(x2, w3_ref[...], preferred_element_type=jnp.float32)
            + b3_ref[...],
            0.0)

        # ---- residual add + lane-dense store ---------------------------------
        res = x_ref[pl.ds(b0, CHUNK)].reshape(M, C)
        o_ref[pl.ds(b0, CHUNK)] = (res + y3).reshape(CHUNK, H, W, C)
        return carry

    lax.fori_loop(0, n_chunks, chunk_body, 0, unroll=True)


# ----------------------------------------------------------------------------
# Parameter folding (PyTorch OIHW conv weights -> MXU-friendly matrices,
# eval-mode BatchNorm folded into layer3).
# ----------------------------------------------------------------------------
def _fold_params(params, C):
    w1 = params["w1"].reshape(C, C).T.astype(jnp.bfloat16)                 # (in,out)
    b1 = params["b1"].reshape(1, C).astype(jnp.float32)

    # (out,in,ky,kx) -> (ky,kx,in,out) -> (3, 3C, C), rows indexed kx*C + in
    w2 = params["w2"].transpose(2, 3, 1, 0).reshape(3, 3 * C, C).astype(jnp.bfloat16)
    b2 = params["b2"].reshape(1, C).astype(jnp.float32)

    s = params["gamma"] / jnp.sqrt(params["running_var"] + params["eps"])
    w3 = (params["w3"].reshape(C, C).T * s[None, :]).astype(jnp.bfloat16)
    b3 = ((params["b3"] - params["running_mean"]) * s
          + params["beta"]).reshape(1, C).astype(jnp.float32)
    return w1, b1, w2, b2, w3, b3


# ----------------------------------------------------------------------------
# Channels-last entry point (preferred: no layout transposes needed).
# ----------------------------------------------------------------------------
def drn_block_forward_nhwc(x_nhwc, params):
    x_nhwc = x_nhwc.astype(jnp.float32)
    N, H, W, C = x_nhwc.shape
    assert C == 128, "DRN_block is fixed at 128 channels"

    rows = H * W
    # ~256 matmul rows per inner chunk (MXU fill vs. vreg pressure sweet spot)
    chunk_imgs = max(1, 256 // rows)
    # two chunks per grid step when the batch allows (amortize per-step overhead)
    chunks_per_block = 2 if N >= 2 * chunk_imgs else 1
    b_blk = chunk_imgs * chunks_per_block

    pad = (-N) % b_blk
    if pad:
        x_nhwc = jnp.concatenate(
            [x_nhwc, jnp.zeros((pad, H, W, C), x_nhwc.dtype)], axis=0)
    n_total = N + pad

    w1, b1, w2, b2, w3, b3 = _fold_params(params, C)

    out = pl.pallas_call(
        drn_block_kernel,
        out_shape=jax.ShapeDtypeStruct((n_total, H, W, C), jnp.float32),
        grid_spec=pltpu.PrefetchScalarGridSpec(
            num_scalar_prefetch=0,
            grid=(n_total // b_blk,),
            in_specs=[
                pl.BlockSpec((b_blk, H, W, C), lambda n: (n, 0, 0, 0)),  # x
                pl.BlockSpec((C, C), lambda n: (0, 0)),                  # w1
                pl.BlockSpec((1, C), lambda n: (0, 0)),                  # b1
                pl.BlockSpec((3, 3 * C, C), lambda n: (0, 0, 0)),        # w2
                pl.BlockSpec((1, C), lambda n: (0, 0)),                  # b2
                pl.BlockSpec((C, C), lambda n: (0, 0)),                  # w3 (BN folded)
                pl.BlockSpec((1, C), lambda n: (0, 0)),                  # b3 (BN folded)
            ],
            out_specs=pl.BlockSpec((b_blk, H, W, C), lambda n: (n, 0, 0, 0)),
            scratch_shapes=[
                pltpu.VMEM((chunk_imgs, H + 2, W, 3 * C), jnp.float32),  # x1 (kx-stacked)
                pltpu.VMEM((chunk_imgs * H * W, C), jnp.float32),        # layer2 acc
            ],
        ),
        compiler_params=pltpu.CompilerParams(
            dimension_semantics=("parallel",),
            vmem_limit_bytes=32 * 1024 * 1024,
        ),
    )(x_nhwc, w1, b1, w2, b2, w3, b3)

    return out[:N] if pad else out


# ----------------------------------------------------------------------------
# NCHW wrapper (PyTorch layout interop only — a channels-last pipeline should
# call drn_block_forward_nhwc directly and skip these two transposes).
# ----------------------------------------------------------------------------
def drn_block_forward(x, params):
    x_nhwc = jnp.transpose(x, (0, 2, 3, 1))
    out = drn_block_forward_nhwc(x_nhwc, params)
    return jnp.transpose(out, (0, 3, 1, 2))


# ----------------------------------------------------------------------------
# Pure-JAX reference (mirrors PyTorch semantics, BN in eval mode, f32)
# ----------------------------------------------------------------------------
def reference_forward(x, params):
    dn = ("NCHW", "OIHW", "NCHW")
    conv1 = lax.conv_general_dilated(x, params["w1"], (1, 1), "VALID",
                                     dimension_numbers=dn)
    x1 = jnp.maximum(conv1 + params["b1"][None, :, None, None], 0.0)
    conv2 = lax.conv_general_dilated(x1, params["w2"], (1, 1),
                                     ((1, 1), (1, 1)), dimension_numbers=dn)
    x2 = jnp.maximum(conv2 + params["b2"][None, :, None, None], 0.0)
    conv3 = lax.conv_general_dilated(x2, params["w3"], (1, 1), "VALID",
                                     dimension_numbers=dn)
    conv3 = conv3 + params["b3"][None, :, None, None]
    bn = ((conv3 - params["running_mean"][None, :, None, None])
          / jnp.sqrt(params["running_var"] + params["eps"])[None, :, None, None]
          * params["gamma"][None, :, None, None]
          + params["beta"][None, :, None, None])
    x3 = jnp.maximum(bn, 0.0)
    return x + x3


if __name__ == "__main__":
    key = jax.random.PRNGKey(0)
    ks = jax.random.split(key, 12)

    N, C, H, W = 16, 128, 8, 8          # module fixes C=128; small spatial dims
    x = jax.random.normal(ks[0], (N, C, H, W), dtype=jnp.float32)

    params = {
        "w1": 0.1 * jax.random.normal(ks[1], (C, C, 1, 1), dtype=jnp.float32),
        "b1": 0.1 * jax.random.normal(ks[2], (C,), dtype=jnp.float32),
        "w2": 0.05 * jax.random.normal(ks[3], (C, C, 3, 3), dtype=jnp.float32),
        "b2": 0.1 * jax.random.normal(ks[4], (C,), dtype=jnp.float32),
        "w3": 0.1 * jax.random.normal(ks[5], (C, C, 1, 1), dtype=jnp.float32),
        "b3": 0.1 * jax.random.normal(ks[6], (C,), dtype=jnp.float32),
        "gamma": 1.0 + 0.1 * jax.random.normal(ks[7], (C,), dtype=jnp.float32),
        "beta": 0.1 * jax.random.normal(ks[8], (C,), dtype=jnp.float32),
        "running_mean": 0.1 * jax.random.normal(ks[9], (C,), dtype=jnp.float32),
        "running_var": jnp.abs(1.0 + 0.1 * jax.random.normal(
            ks[10], (C,), dtype=jnp.float32)),
        "eps": 1e-5,
    }

    out = jax.block_until_ready(drn_block_forward(x, params))
    ref = jax.block_until_ready(reference_forward(x, params))

    assert out.shape == ref.shape, (out.shape, ref.shape)
    # bf16 matmul operands (f32 accumulate) -> loosened tolerance vs f32 ref.
    np.testing.assert_allclose(np.asarray(out), np.asarray(ref),
                               rtol=3e-2, atol=3e-2)
    print("KERNEL_OK")
</pallas_src>

<mosaic_0001>
module attributes {stable_mosaic.version = 11 : i64} {
  func.func @drn_block_kernel(%arg0: i32, %arg1: memref<8x8x8x128xf32, #tpu.memory_space<vmem>>, %arg2: memref<128x128xbf16, #tpu.memory_space<vmem>>, %arg3: memref<1x128xf32, #tpu.memory_space<vmem>>, %arg4: memref<3x384x128xbf16, #tpu.memory_space<vmem>>, %arg5: memref<1x128xf32, #tpu.memory_space<vmem>>, %arg6: memref<128x128xbf16, #tpu.memory_space<vmem>>, %arg7: memref<1x128xf32, #tpu.memory_space<vmem>>, %arg8: memref<8x8x8x128xf32, #tpu.memory_space<vmem>>, %arg9: memref<4x10x8x384xf32, #tpu.memory_space<vmem>>, %arg10: memref<256x128xf32, #tpu.memory_space<vmem>>) attributes {dimension_semantics = [#tpu.dimension_semantics<parallel>], iteration_bounds = array<i64: 2>, scalar_prefetch = 0 : i64, scratch_operands = 2 : i64, tpu.core_type = #tpu.core_type<tc>, window_params = [{transform_indices = @transform_0, window_bounds = array<i64: 8, 8, 8, 128>}, {pipeline_mode = #tpu.pipeline_mode<synchronous>, transform_indices = @transform_1, window_bounds = array<i64: 128, 128>}, {pipeline_mode = #tpu.pipeline_mode<synchronous>, transform_indices = @transform_2, window_bounds = array<i64: 1, 128>}, {pipeline_mode = #tpu.pipeline_mode<synchronous>, transform_indices = @transform_3, window_bounds = array<i64: 3, 384, 128>}, {pipeline_mode = #tpu.pipeline_mode<synchronous>, transform_indices = @transform_4, window_bounds = array<i64: 1, 128>}, {pipeline_mode = #tpu.pipeline_mode<synchronous>, transform_indices = @transform_5, window_bounds = array<i64: 128, 128>}, {pipeline_mode = #tpu.pipeline_mode<synchronous>, transform_indices = @transform_6, window_bounds = array<i64: 1, 128>}, {transform_indices = @transform_7, window_bounds = array<i64: 8, 8, 8, 128>}]} {
    %cst = arith.constant 0.000000e+00 : f32
    %0 = vector.broadcast %cst : f32 to vector<4x1x8x384xf32>
    %c0 = arith.constant 0 : index
    %c0_0 = arith.constant 0 : index
    %c0_1 = arith.constant 0 : index
    %c0_2 = arith.constant 0 : index
    %1 = vector.load %arg9[%c0, %c0_0, %c0_1, %c0_2] : memref<4x10x8x384xf32, #tpu.memory_space<vmem>>, vector<4x1x8x384xf32>
    tpu.vector_store %arg9[%c0, %c0_0, %c0_1, %c0_2], %0 {strides = array<i32>} : memref<4x10x8x384xf32, #tpu.memory_space<vmem>>, vector<4x1x8x384xf32>,
    %c0_3 = arith.constant 0 : index
    %c9 = arith.constant 9 : index
    %c0_4 = arith.constant 0 : index
    %c0_5 = arith.constant 0 : index
    %2 = vector.load %arg9[%c0_3, %c9, %c0_4, %c0_5] : memref<4x10x8x384xf32, #tpu.memory_space<vmem>>, vector<4x1x8x384xf32>
    tpu.vector_store %arg9[%c0_3, %c9, %c0_4, %c0_5], %0 {strides = array<i32>} : memref<4x10x8x384xf32, #tpu.memory_space<vmem>>, vector<4x1x8x384xf32>,
    %3 = tpu.iota {dimensions = array<i32: 2>} : vector<1x1x8x1xi32>
    %c0_i32 = arith.constant 0 : i32
    %4 = vector.broadcast %c0_i32 : i32 to vector<1x1x8x1xi32>
    %5 = arith.cmpi ne, %3, %4 : vector<1x1x8x1xi32>
    %6 = arith.extui %5 : vector<1x1x8x1xi1> to vector<1x1x8x1xi32>
    %7 = arith.sitofp %6 : vector<1x1x8x1xi32> to vector<1x1x8x1xf32>
    %c7_i32 = arith.constant 7 : i32
    %8 = vector.broadcast %c7_i32 : i32 to vector<1x1x8x1xi32>
    %9 = arith.cmpi ne, %3, %8 : vector<1x1x8x1xi32>
    %10 = arith.extui %9 : vector<1x1x8x1xi1> to vector<1x1x8x1xi32>
    %11 = arith.sitofp %10 : vector<1x1x8x1xi32> to vector<1x1x8x1xf32>
    %c0_i32_6 = arith.constant 0 : i32
    %c4_i32 = arith.constant 4 : i32
    %12 = arith.muli %c0_i32_6, %c4_i32 : i32
    %13 = tpu.assume_multiple %12, 4 : i32
    %14 = arith.index_cast %13 : i32 to index
    %c0_7 = arith.constant 0 : index
    %c0_8 = arith.constant 0 : index
    %c0_9 = arith.constant 0 : index
    %15 = vector.load %arg1[%14, %c0_7, %c0_8, %c0_9] : memref<8x8x8x128xf32, #tpu.memory_space<vmem>>, vector<4x8x8x128xf32>
    %16 = vector.shape_cast %15 : vector<4x8x8x128xf32> to vector<256x128xf32>
    %17 = arith.truncf %16 : vector<256x128xf32> to vector<256x128xbf16>
    %c0_10 = arith.constant 0 : index
    %c0_11 = arith.constant 0 : index
    %18 = vector.load %arg2[%c0_10, %c0_11] : memref<128x128xbf16, #tpu.memory_space<vmem>>, vector<128x128xbf16>
    %cst_12 = arith.constant dense<0.000000e+00> : vector<256x128xf32>
    %19 = tpu.matmul %17, %18, %cst_12 {dimension_numbers = #tpu.dot_dimension_numbers<[1], [0], [0], [1], [0, 0, 1, 1], [], []>} : vector<256x128xbf16>, vector<128x128xbf16>, vector<256x128xf32> -> vector<256x128xf32>
    %c0_13 = arith.constant 0 : index
    %c0_14 = arith.constant 0 : index
    %20 = vector.load %arg3[%c0_13, %c0_14] : memref<1x128xf32, #tpu.memory_space<vmem>>, vector<1x128xf32>
    %21 = vector.broadcast %20 : vector<1x128xf32> to vector<256x128xf32>
    %22 = arith.addf %19, %21 : vector<256x128xf32>
    %cst_15 = arith.constant 0.000000e+00 : f32
    %23 = vector.broadcast %cst_15 : f32 to vector<256x128xf32>
    %24 = arith.maximumf %22, %23 : vector<256x128xf32>
    %25 = vector.shape_cast %24 : vector<256x128xf32> to vector<4x8x8x128xf32>
    %c0_16 = arith.constant 0 : index
    %c1 = arith.constant 1 : index
    %c0_17 = arith.constant 0 : index
    %c128 = arith.constant 128 : index
    %26 = vector.load %arg9[%c0_16, %c1, %c0_17, %c128] : memref<4x10x8x384xf32, #tpu.memory_space<vmem>>, vector<4x8x8x128xf32>
    tpu.vector_store %arg9[%c0_16, %c1, %c0_17, %c128], %25 {strides = array<i32>} : memref<4x10x8x384xf32, #tpu.memory_space<vmem>>, vector<4x8x8x128xf32>,
    %c1_i32 = arith.constant 1 : i32
    %27 = tpu.dynamic_rotate %24 by %c1_i32 dim 0 : vector<256x128xf32>, i32 -> vector<256x128xf32>
    %28 = vector.shape_cast %27 : vector<256x128xf32> to vector<4x8x8x128xf32>
    %29 = vector.broadcast %7 : vector<1x1x8x1xf32> to vector<4x8x8x128xf32>
    %30 = arith.mulf %28, %29 : vector<4x8x8x128xf32>
    %c0_18 = arith.constant 0 : index
    %c1_19 = arith.constant 1 : index
    %c0_20 = arith.constant 0 : index
    %c0_21 = arith.constant 0 : index
    %31 = vector.load %arg9[%c0_18, %c1_19, %c0_20, %c0_21] : memref<4x10x8x384xf32, #tpu.memory_space<vmem>>, vector<4x8x8x128xf32>
    tpu.vector_store %arg9[%c0_18, %c1_19, %c0_20, %c0_21], %30 {strides = array<i32>} : memref<4x10x8x384xf32, #tpu.memory_space<vmem>>, vector<4x8x8x128xf32>,
    %c255_i32 = arith.constant 255 : i32
    %32 = tpu.dynamic_rotate %24 by %c255_i32 dim 0 : vector<256x128xf32>, i32 -> vector<256x128xf32>
    %33 = vector.shape_cast %32 : vector<256x128xf32> to vector<4x8x8x128xf32>
    %34 = vector.broadcast %11 : vector<1x1x8x1xf32> to vector<4x8x8x128xf32>
    %35 = arith.mulf %33, %34 : vector<4x8x8x128xf32>
    %c0_22 = arith.constant 0 : index
    %c1_23 = arith.constant 1 : index
    %c0_24 = arith.constant 0 : index
    %c256 = arith.constant 256 : index
    %36 = vector.load %arg9[%c0_22, %c1_23, %c0_24, %c256] : memref<4x10x8x384xf32, #tpu.memory_space<vmem>>, vector<4x8x8x128xf32>
    tpu.vector_store %arg9[%c0_22, %c1_23, %c0_24, %c256], %35 {strides = array<i32>} : memref<4x10x8x384xf32, #tpu.memory_space<vmem>>, vector<4x8x8x128xf32>,
    %c0_25 = arith.constant 0 : index
    %c0_26 = arith.constant 0 : index
    %c0_27 = arith.constant 0 : index
    %c0_28 = arith.constant 0 : index
    %37 = vector.load %arg9[%c0_25, %c0_26, %c0_27, %c0_28] : memref<4x10x8x384xf32, #tpu.memory_space<vmem>>, vector<4x8x8x384xf32>
    %38 = vector.shape_cast %37 : vector<4x8x8x384xf32> to vector<256x384xf32>
    %39 = arith.truncf %38 : vector<256x384xf32> to vector<256x384xbf16>
    %c0_29 = arith.constant 0 : index
    %c0_30 = arith.constant 0 : index
    %c0_31 = arith.constant 0 : index
    %40 = vector.load %arg4[%c0_29, %c0_30, %c0_31] : memref<3x384x128xbf16, #tpu.memory_space<vmem>>, vector<1x384x128xbf16>
    %41 = vector.shape_cast %40 : vector<1x384x128xbf16> to vector<384x128xbf16>
    %cst_32 = arith.constant dense<0.000000e+00> : vector<256x128xf32>
    %42 = tpu.matmul %39, %41, %cst_32 {dimension_numbers = #tpu.dot_dimension_numbers<[1], [0], [0], [1], [0, 0, 1, 1], [], []>} : vector<256x384xbf16>, vector<384x128xbf16>, vector<256x128xf32> -> vector<256x128xf32>
    %c0_33 = arith.constant 0 : index
    %c0_34 = arith.constant 0 : index
    %43 = vector.load %arg5[%c0_33, %c0_34] : memref<1x128xf32, #tpu.memory_space<vmem>>, vector<1x128xf32>
    %44 = vector.broadcast %43 : vector<1x128xf32> to vector<256x128xf32>
    %45 = arith.addf %42, %44 : vector<256x128xf32>
    %c0_35 = arith.constant 0 : index
    %c0_36 = arith.constant 0 : index
    %46 = vector.load %arg10[%c0_35, %c0_36] : memref<256x128xf32, #tpu.memory_space<vmem>>, vector<256x128xf32>
    tpu.vector_store %arg10[%c0_35, %c0_36], %45 {strides = array<i32>} : memref<256x128xf32, #tpu.memory_space<vmem>>, vector<256x128xf32>,
    %c0_37 = arith.constant 0 : index
    %c1_38 = arith.constant 1 : index
    %c0_39 = arith.constant 0 : index
    %c0_40 = arith.constant 0 : index
    %47 = vector.load %arg9[%c0_37, %c1_38, %c0_39, %c0_40] : memref<4x10x8x384xf32, #tpu.memory_space<vmem>>, vector<4x8x8x384xf32>
    %48 = vector.shape_cast %47 : vector<4x8x8x384xf32> to vector<256x384xf32>
    %c0_41 = arith.constant 0 : index
    %c0_42 = arith.constant 0 : index
    %49 = vector.load %arg10[%c0_41, %c0_42] : memref<256x128xf32, #tpu.memory_space<vmem>>, vector<256x128xf32>
    %50 = arith.truncf %48 : vector<256x384xf32> to vector<256x384xbf16>
    %c1_43 = arith.constant 1 : index
    %c0_44 = arith.constant 0 : index
    %c0_45 = arith.constant 0 : index
    %51 = vector.load %arg4[%c1_43, %c0_44, %c0_45] : memref<3x384x128xbf16, #tpu.memory_space<vmem>>, vector<1x384x128xbf16>
    %52 = vector.shape_cast %51 : vector<1x384x128xbf16> to vector<384x128xbf16>
    %cst_46 = arith.constant dense<0.000000e+00> : vector<256x128xf32>
    %53 = tpu.matmul %50, %52, %cst_46 {dimension_numbers = #tpu.dot_dimension_numbers<[1], [0], [0], [1], [0, 0, 1, 1], [], []>} : vector<256x384xbf16>, vector<384x128xbf16>, vector<256x128xf32> -> vector<256x128xf32>
    %54 = arith.addf %49, %53 : vector<256x128xf32>
    %c0_47 = arith.constant 0 : index
    %c0_48 = arith.constant 0 : index
    %55 = vector.load %arg10[%c0_47, %c0_48] : memref<256x128xf32, #tpu.memory_space<vmem>>, vector<256x128xf32>
    tpu.vector_store %arg10[%c0_47, %c0_48], %54 {strides = array<i32>} : memref<256x128xf32, #tpu.memory_space<vmem>>, vector<256x128xf32>,
    %c0_49 = arith.constant 0 : index
    %c2 = arith.constant 2 : index
    %c0_50 = arith.constant 0 : index
    %c0_51 = arith.constant 0 : index
    %56 = vector.load %arg9[%c0_49, %c2, %c0_50, %c0_51] : memref<4x10x8x384xf32, #tpu.memory_space<vmem>>, vector<4x8x8x384xf32>
    %57 = vector.shape_cast %56 : vector<4x8x8x384xf32> to vector<256x384xf32>
    %c0_52 = arith.constant 0 : index
    %c0_53 = arith.constant 0 : index
    %58 = vector.load %arg10[%c0_52, %c0_53] : memref<256x128xf32, #tpu.memory_space<vmem>>, vector<256x128xf32>
    %59 = arith.truncf %57 : vector<256x384xf32> to vector<256x384xbf16>
    %c2_54 = arith.constant 2 : index
    %c0_55 = arith.constant 0 : index
    %c0_56 = arith.constant 0 : index
    %60 = vector.load %arg4[%c2_54, %c0_55, %c0_56] : memref<3x384x128xbf16, #tpu.memory_space<vmem>>, vector<1x384x128xbf16>
    %61 = vector.shape_cast %60 : vector<1x384x128xbf16> to vector<384x128xbf16>
    %cst_57 = arith.constant dense<0.000000e+00> : vector<256x128xf32>
    %62 = tpu.matmul %59, %61, %cst_57 {dimension_numbers = #tpu.dot_dimension_numbers<[1], [0], [0], [1], [0, 0, 1, 1], [], []>} : vector<256x384xbf16>, vector<384x128xbf16>, vector<256x128xf32> -> vector<256x128xf32>
    %63 = arith.addf %58, %62 : vector<256x128xf32>
    %c0_58 = arith.constant 0 : index
    %c0_59 = arith.constant 0 : index
    %64 = vector.load %arg10[%c0_58, %c0_59] : memref<256x128xf32, #tpu.memory_space<vmem>>, vector<256x128xf32>
    tpu.vector_store %arg10[%c0_58, %c0_59], %63 {strides = array<i32>} : memref<256x128xf32, #tpu.memory_space<vmem>>, vector<256x128xf32>,
    %c0_60 = arith.constant 0 : index
    %c0_61 = arith.constant 0 : index
    %65 = vector.load %arg10[%c0_60, %c0_61] : memref<256x128xf32, #tpu.memory_space<vmem>>, vector<256x128xf32>
    %cst_62 = arith.constant 0.000000e+00 : f32
    %66 = vector.broadcast %cst_62 : f32 to vector<256x128xf32>
    %67 = arith.maximumf %65, %66 : vector<256x128xf32>
    %68 = arith.truncf %67 : vector<256x128xf32> to vector<256x128xbf16>
    %c0_63 = arith.constant 0 : index
    %c0_64 = arith.constant 0 : index
    %69 = vector.load %arg6[%c0_63, %c0_64] : memref<128x128xbf16, #tpu.memory_space<vmem>>, vector<128x128xbf16>
    %cst_65 = arith.constant dense<0.000000e+00> : vector<256x128xf32>
    %70 = tpu.matmul %68, %69, %cst_65 {dimension_numbers = #tpu.dot_dimension_numbers<[1], [0], [0], [1], [0, 0, 1, 1], [], []>} : vector<256x128xbf16>, vector<128x128xbf16>, vector<256x128xf32> -> vector<256x128xf32>
    %c0_66 = arith.constant 0 : index
    %c0_67 = arith.constant 0 : index
    %71 = vector.load %arg7[%c0_66, %c0_67] : memref<1x128xf32, #tpu.memory_space<vmem>>, vector<1x128xf32>
    %72 = vector.broadcast %71 : vector<1x128xf32> to vector<256x128xf32>
    %73 = arith.addf %70, %72 : vector<256x128xf32>
    %cst_68 = arith.constant 0.000000e+00 : f32
    %74 = vector.broadcast %cst_68 : f32 to vector<256x128xf32>
    %75 = arith.maximumf %73, %74 : vector<256x128xf32>
    %76 = arith.index_cast %13 : i32 to index
    %c0_69 = arith.constant 0 : index
    %c0_70 = arith.constant 0 : index
    %c0_71 = arith.constant 0 : index
    %77 = vector.load %arg1[%76, %c0_69, %c0_70, %c0_71] : memref<8x8x8x128xf32, #tpu.memory_space<vmem>>, vector<4x8x8x128xf32>
    %78 = vector.shape_cast %77 : vector<4x8x8x128xf32> to vector<256x128xf32>
    %79 = arith.addf %78, %75 : vector<256x128xf32>
    %80 = vector.shape_cast %79 : vector<256x128xf32> to vector<4x8x8x128xf32>
    %81 = arith.index_cast %13 : i32 to index
    %c0_72 = arith.constant 0 : index
    %c0_73 = arith.constant 0 : index
    %c0_74 = arith.constant 0 : index
    %82 = vector.load %arg8[%81, %c0_72, %c0_73, %c0_74] : memref<8x8x8x128xf32, #tpu.memory_space<vmem>>, vector<4x8x8x128xf32>
    tpu.vector_store %arg8[%81, %c0_72, %c0_73, %c0_74], %80 {strides = array<i32>} : memref<8x8x8x128xf32, #tpu.memory_space<vmem>>, vector<4x8x8x128xf32>,
    %c1_i32_75 = arith.constant 1 : i32
    %c4_i32_76 = arith.constant 4 : i32
    %83 = arith.muli %c1_i32_75, %c4_i32_76 : i32
    %84 = tpu.assume_multiple %83, 4 : i32
    %85 = arith.index_cast %84 : i32 to index
    %c0_77 = arith.constant 0 : index
    %c0_78 = arith.constant 0 : index
    %c0_79 = arith.constant 0 : index
    %86 = vector.load %arg1[%85, %c0_77, %c0_78, %c0_79] : memref<8x8x8x128xf32, #tpu.memory_space<vmem>>, vector<4x8x8x128xf32>
    %87 = vector.shape_cast %86 : vector<4x8x8x128xf32> to vector<256x128xf32>
    %88 = arith.truncf %87 : vector<256x128xf32> to vector<256x128xbf16>
    %c0_80 = arith.constant 0 : index
    %c0_81 = arith.constant 0 : index
    %89 = vector.load %arg2[%c0_80, %c0_81] : memref<128x128xbf16, #tpu.memory_space<vmem>>, vector<128x128xbf16>
    %cst_82 = arith.constant dense<0.000000e+00> : vector<256x128xf32>
    %90 = tpu.matmul %88, %89, %cst_82 {dimension_numbers = #tpu.dot_dimension_numbers<[1], [0], [0], [1], [0, 0, 1, 1], [], []>} : vector<256x128xbf16>, vector<128x128xbf16>, vector<256x128xf32> -> vector<256x128xf32>
    %c0_83 = arith.constant 0 : index
    %c0_84 = arith.constant 0 : index
    %91 = vector.load %arg3[%c0_83, %c0_84] : memref<1x128xf32, #tpu.memory_space<vmem>>, vector<1x128xf32>
    %92 = vector.broadcast %91 : vector<1x128xf32> to vector<256x128xf32>
    %93 = arith.addf %90, %92 : vector<256x128xf32>
    %cst_85 = arith.constant 0.000000e+00 : f32
    %94 = vector.broadcast %cst_85 : f32 to vector<256x128xf32>
    %95 = arith.maximumf %93, %94 : vector<256x128xf32>
    %96 = vector.shape_cast %95 : vector<256x128xf32> to vector<4x8x8x128xf32>
    %c0_86 = arith.constant 0 : index
    %c1_87 = arith.constant 1 : index
    %c0_88 = arith.constant 0 : index
    %c128_89 = arith.constant 128 : index
    %97 = vector.load %arg9[%c0_86, %c1_87, %c0_88, %c128_89] : memref<4x10x8x384xf32, #tpu.memory_space<vmem>>, vector<4x8x8x128xf32>
    tpu.vector_store %arg9[%c0_86, %c1_87, %c0_88, %c128_89], %96 {strides = array<i32>} : memref<4x10x8x384xf32, #tpu.memory_space<vmem>>, vector<4x8x8x128xf32>,
    %c1_i32_90 = arith.constant 1 : i32
    %98 = tpu.dynamic_rotate %95 by %c1_i32_90 dim 0 : vector<256x128xf32>, i32 -> vector<256x128xf32>
    %99 = vector.shape_cast %98 : vector<256x128xf32> to vector<4x8x8x128xf32>
    %100 = vector.broadcast %7 : vector<1x1x8x1xf32> to vector<4x8x8x128xf32>
    %101 = arith.mulf %99, %100 : vector<4x8x8x128xf32>
    %c0_91 = arith.constant 0 : index
    %c1_92 = arith.constant 1 : index
    %c0_93 = arith.constant 0 : index
    %c0_94 = arith.constant 0 : index
    %102 = vector.load %arg9[%c0_91, %c1_92, %c0_93, %c0_94] : memref<4x10x8x384xf32, #tpu.memory_space<vmem>>, vector<4x8x8x128xf32>
    tpu.vector_store %arg9[%c0_91, %c1_92, %c0_93, %c0_94], %101 {strides = array<i32>} : memref<4x10x8x384xf32, #tpu.memory_space<vmem>>, vector<4x8x8x128xf32>,
    %c255_i32_95 = arith.constant 255 : i32
    %103 = tpu.dynamic_rotate %95 by %c255_i32_95 dim 0 : vector<256x128xf32>, i32 -> vector<256x128xf32>
    %104 = vector.shape_cast %103 : vector<256x128xf32> to vector<4x8x8x128xf32>
    %105 = vector.broadcast %11 : vector<1x1x8x1xf32> to vector<4x8x8x128xf32>
    %106 = arith.mulf %104, %105 : vector<4x8x8x128xf32>
    %c0_96 = arith.constant 0 : index
    %c1_97 = arith.constant 1 : index
    %c0_98 = arith.constant 0 : index
    %c256_99 = arith.constant 256 : index
    %107 = vector.load %arg9[%c0_96, %c1_97, %c0_98, %c256_99] : memref<4x10x8x384xf32, #tpu.memory_space<vmem>>, vector<4x8x8x128xf32>
    tpu.vector_store %arg9[%c0_96, %c1_97, %c0_98, %c256_99], %106 {strides = array<i32>} : memref<4x10x8x384xf32, #tpu.memory_space<vmem>>, vector<4x8x8x128xf32>,
    %c0_100 = arith.constant 0 : index
    %c0_101 = arith.constant 0 : index
    %c0_102 = arith.constant 0 : index
    %c0_103 = arith.constant 0 : index
    %108 = vector.load %arg9[%c0_100, %c0_101, %c0_102, %c0_103] : memref<4x10x8x384xf32, #tpu.memory_space<vmem>>, vector<4x8x8x384xf32>
    %109 = vector.shape_cast %108 : vector<4x8x8x384xf32> to vector<256x384xf32>
    %110 = arith.truncf %109 : vector<256x384xf32> to vector<256x384xbf16>
    %c0_104 = arith.constant 0 : index
    %c0_105 = arith.constant 0 : index
    %c0_106 = arith.constant 0 : index
    %111 = vector.load %arg4[%c0_104, %c0_105, %c0_106] : memref<3x384x128xbf16, #tpu.memory_space<vmem>>, vector<1x384x128xbf16>
    %112 = vector.shape_cast %111 : vector<1x384x128xbf16> to vector<384x128xbf16>
    %cst_107 = arith.constant dense<0.000000e+00> : vector<256x128xf32>
    %113 = tpu.matmul %110, %112, %cst_107 {dimension_numbers = #tpu.dot_dimension_numbers<[1], [0], [0], [1], [0, 0, 1, 1], [], []>} : vector<256x384xbf16>, vector<384x128xbf16>, vector<256x128xf32> -> vector<256x128xf32>
    %c0_108 = arith.constant 0 : index
    %c0_109 = arith.constant 0 : index
    %114 = vector.load %arg5[%c0_108, %c0_109] : memref<1x128xf32, #tpu.memory_space<vmem>>, vector<1x128xf32>
    %115 = vector.broadcast %114 : vector<1x128xf32> to vector<256x128xf32>
    %116 = arith.addf %113, %115 : vector<256x128xf32>
    %c0_110 = arith.constant 0 : index
    %c0_111 = arith.constant 0 : index
    %117 = vector.load %arg10[%c0_110, %c0_111] : memref<256x128xf32, #tpu.memory_space<vmem>>, vector<256x128xf32>
    tpu.vector_store %arg10[%c0_110, %c0_111], %116 {strides = array<i32>} : memref<256x128xf32, #tpu.memory_space<vmem>>, vector<256x128xf32>,
    %c0_112 = arith.constant 0 : index
    %c1_113 = arith.constant 1 : index
    %c0_114 = arith.constant 0 : index
    %c0_115 = arith.constant 0 : index
    %118 = vector.load %arg9[%c0_112, %c1_113, %c0_114, %c0_115] : memref<4x10x8x384xf32, #tpu.memory_space<vmem>>, vector<4x8x8x384xf32>
    %119 = vector.shape_cast %118 : vector<4x8x8x384xf32> to vector<256x384xf32>
    %c0_116 = arith.constant 0 : index
    %c0_117 = arith.constant 0 : index
    %120 = vector.load %arg10[%c0_116, %c0_117] : memref<256x128xf32, #tpu.memory_space<vmem>>, vector<256x128xf32>
    %121 = arith.truncf %119 : vector<256x384xf32> to vector<256x384xbf16>
    %c1_118 = arith.constant 1 : index
    %c0_119 = arith.constant 0 : index
    %c0_120 = arith.constant 0 : index
    %122 = vector.load %arg4[%c1_118, %c0_119, %c0_120] : memref<3x384x128xbf16, #tpu.memory_space<vmem>>, vector<1x384x128xbf16>
    %123 = vector.shape_cast %122 : vector<1x384x128xbf16> to vector<384x128xbf16>
    %cst_121 = arith.constant dense<0.000000e+00> : vector<256x128xf32>
    %124 = tpu.matmul %121, %123, %cst_121 {dimension_numbers = #tpu.dot_dimension_numbers<[1], [0], [0], [1], [0, 0, 1, 1], [], []>} : vector<256x384xbf16>, vector<384x128xbf16>, vector<256x128xf32> -> vector<256x128xf32>
    %125 = arith.addf %120, %124 : vector<256x128xf32>
    %c0_122 = arith.constant 0 : index
    %c0_123 = arith.constant 0 : index
    %126 = vector.load %arg10[%c0_122, %c0_123] : memref<256x128xf32, #tpu.memory_space<vmem>>, vector<256x128xf32>
    tpu.vector_store %arg10[%c0_122, %c0_123], %125 {strides = array<i32>} : memref<256x128xf32, #tpu.memory_space<vmem>>, vector<256x128xf32>,
    %c0_124 = arith.constant 0 : index
    %c2_125 = arith.constant 2 : index
    %c0_126 = arith.constant 0 : index
    %c0_127 = arith.constant 0 : index
    %127 = vector.load %arg9[%c0_124, %c2_125, %c0_126, %c0_127] : memref<4x10x8x384xf32, #tpu.memory_space<vmem>>, vector<4x8x8x384xf32>
    %128 = vector.shape_cast %127 : vector<4x8x8x384xf32> to vector<256x384xf32>
    %c0_128 = arith.constant 0 : index
    %c0_129 = arith.constant 0 : index
    %129 = vector.load %arg10[%c0_128, %c0_129] : memref<256x128xf32, #tpu.memory_space<vmem>>, vector<256x128xf32>
    %130 = arith.truncf %128 : vector<256x384xf32> to vector<256x384xbf16>
    %c2_130 = arith.constant 2 : index
    %c0_131 = arith.constant 0 : index
    %c0_132 = arith.constant 0 : index
    %131 = vector.load %arg4[%c2_130, %c0_131, %c0_132] : memref<3x384x128xbf16, #tpu.memory_space<vmem>>, vector<1x384x128xbf16>
    %132 = vector.shape_cast %131 : vector<1x384x128xbf16> to vector<384x128xbf16>
    %cst_133 = arith.constant dense<0.000000e+00> : vector<256x128xf32>
    %133 = tpu.matmul %130, %132, %cst_133 {dimension_numbers = #tpu.dot_dimension_numbers<[1], [0], [0], [1], [0, 0, 1, 1], [], []>} : vector<256x384xbf16>, vector<384x128xbf16>, vector<256x128xf32> -> vector<256x128xf32>
    %134 = arith.addf %129, %133 : vector<256x128xf32>
    %c0_134 = arith.constant 0 : index
    %c0_135 = arith.constant 0 : index
    %135 = vector.load %arg10[%c0_134, %c0_135] : memref<256x128xf32, #tpu.memory_space<vmem>>, vector<256x128xf32>
    tpu.vector_store %arg10[%c0_134, %c0_135], %134 {strides = array<i32>} : memref<256x128xf32, #tpu.memory_space<vmem>>, vector<256x128xf32>,
    %c0_136 = arith.constant 0 : index
    %c0_137 = arith.constant 0 : index
    %136 = vector.load %arg10[%c0_136, %c0_137] : memref<256x128xf32, #tpu.memory_space<vmem>>, vector<256x128xf32>
    %cst_138 = arith.constant 0.000000e+00 : f32
    %137 = vector.broadcast %cst_138 : f32 to vector<256x128xf32>
    %138 = arith.maximumf %136, %137 : vector<256x128xf32>
    %139 = arith.truncf %138 : vector<256x128xf32> to vector<256x128xbf16>
    %c0_139 = arith.constant 0 : index
    %c0_140 = arith.constant 0 : index
    %140 = vector.load %arg6[%c0_139, %c0_140] : memref<128x128xbf16, #tpu.memory_space<vmem>>, vector<128x128xbf16>
    %cst_141 = arith.constant dense<0.000000e+00> : vector<256x128xf32>
    %141 = tpu.matmul %139, %140, %cst_141 {dimension_numbers = #tpu.dot_dimension_numbers<[1], [0], [0], [1], [0, 0, 1, 1], [], []>} : vector<256x128xbf16>, vector<128x128xbf16>, vector<256x128xf32> -> vector<256x128xf32>
    %c0_142 = arith.constant 0 : index
    %c0_143 = arith.constant 0 : index
    %142 = vector.load %arg7[%c0_142, %c0_143] : memref<1x128xf32, #tpu.memory_space<vmem>>, vector<1x128xf32>
    %143 = vector.broadcast %142 : vector<1x128xf32> to vector<256x128xf32>
    %144 = arith.addf %141, %143 : vector<256x128xf32>
    %cst_144 = arith.constant 0.000000e+00 : f32
    %145 = vector.broadcast %cst_144 : f32 to vector<256x128xf32>
    %146 = arith.maximumf %144, %145 : vector<256x128xf32>
    %147 = arith.index_cast %84 : i32 to index
    %c0_145 = arith.constant 0 : index
    %c0_146 = arith.constant 0 : index
    %c0_147 = arith.constant 0 : index
    %148 = vector.load %arg1[%147, %c0_145, %c0_146, %c0_147] : memref<8x8x8x128xf32, #tpu.memory_space<vmem>>, vector<4x8x8x128xf32>
    %149 = vector.shape_cast %148 : vector<4x8x8x128xf32> to vector<256x128xf32>
    %150 = arith.addf %149, %146 : vector<256x128xf32>
    %151 = vector.shape_cast %150 : vector<256x128xf32> to vector<4x8x8x128xf32>
    %152 = arith.index_cast %84 : i32 to index
    %c0_148 = arith.constant 0 : index
    %c0_149 = arith.constant 0 : index
    %c0_150 = arith.constant 0 : index
    %153 = vector.load %arg8[%152, %c0_148, %c0_149, %c0_150] : memref<8x8x8x128xf32, #tpu.memory_space<vmem>>, vector<4x8x8x128xf32>
    tpu.vector_store %arg8[%152, %c0_148, %c0_149, %c0_150], %151 {strides = array<i32>} : memref<8x8x8x128xf32, #tpu.memory_space<vmem>>, vector<4x8x8x128xf32>,
    %c2_i32 = arith.constant 2 : i32
    return
  }
  func.func @transform_0(%arg0: i32) -> (i32, i32, i32, i32) {
    %c0_i32 = arith.constant 0 : i32
    %c0_i32_0 = arith.constant 0 : i32
    %c0_i32_1 = arith.constant 0 : i32
    %c0_i32_2 = arith.constant 0 : i32
    return %arg0, %c0_i32, %c0_i32_0, %c0_i32_1 : i32, i32, i32, i32
  }
  func.func @transform_1(%arg0: i32) -> (i32, i32) {
    %c0_i32 = arith.constant 0 : i32
    %c0_i32_0 = arith.constant 0 : i32
    %c0_i32_1 = arith.constant 0 : i32
    return %c0_i32, %c0_i32_0 : i32, i32
  }
  func.func @transform_2(%arg0: i32) -> (i32, i32) {
    %c0_i32 = arith.constant 0 : i32
    %c0_i32_0 = arith.constant 0 : i32
    %c0_i32_1 = arith.constant 0 : i32
    return %c0_i32, %c0_i32_0 : i32, i32
  }
  func.func @transform_3(%arg0: i32) -> (i32, i32, i32) {
    %c0_i32 = arith.constant 0 : i32
    %c0_i32_0 = arith.constant 0 : i32
    %c0_i32_1 = arith.constant 0 : i32
    %c0_i32_2 = arith.constant 0 : i32
    return %c0_i32, %c0_i32_0, %c0_i32_1 : i32, i32, i32
  }
  func.func @transform_4(%arg0: i32) -> (i32, i32) {
    %c0_i32 = arith.constant 0 : i32
    %c0_i32_0 = arith.constant 0 : i32
    %c0_i32_1 = arith.constant 0 : i32
    return %c0_i32, %c0_i32_0 : i32, i32
  }
  func.func @transform_5(%arg0: i32) -> (i32, i32) {
    %c0_i32 = arith.constant 0 : i32
    %c0_i32_0 = arith.constant 0 : i32
    %c0_i32_1 = arith.constant 0 : i32
    return %c0_i32, %c0_i32_0 : i32, i32
  }
  func.func @transform_6(%arg0: i32) -> (i32, i32) {
    %c0_i32 = arith.constant 0 : i32
    %c0_i32_0 = arith.constant 0 : i32
    %c0_i32_1 = arith.constant 0 : i32
    return %c0_i32, %c0_i32_0 : i32, i32
  }
  func.func @transform_7(%arg0: i32) -> (i32, i32, i32, i32) {
    %c0_i32 = arith.constant 0 : i32
    %c0_i32_0 = arith.constant 0 : i32
    %c0_i32_1 = arith.constant 0 : i32
    %c0_i32_2 = arith.constant 0 : i32
    return %arg0, %c0_i32, %c0_i32_0, %c0_i32_1 : i32, i32, i32, i32
  }
}

</mosaic_0001>

<llo_original>
// kernel: tpu_custom_call.1
$region0: #{tpu_custom_call.1}
  #allocation0 [shape = 'u32[]', space=smem, size = 0x4, offset = 0x4, fixed_abs, tag = 'smem constant byte address 0x4 - core index']
  #allocation1 [shape = 'u32[144,128]{1,0:T(1,128)}', space=vmem, size = 0x12000, scoped, tag = 'internal scratch']
  #allocation2 [shape = 'f32[4,10,8,384]{3,2,1,0:T(8,128)}', space=vmem, size = 0x78000, scoped, tag = 'scratch operand']
  #allocation3 [shape = 'f32[256,128]{1,0:T(8,128)}', space=vmem, size = 0x20000, scoped, tag = 'scratch operand']
  %s0 = inlined_call_operand.hbm [shape: f32[16,8,8,128], index: 0, kind: input, shape index: {}]
  %s1 = inlined_call_operand.hbm [shape: bf16[128,128], index: 1, kind: input, shape index: {}]
  %s2 = inlined_call_operand.vmem [shape: f32[1,128], index: 2, kind: input, shape index: {}]
  %s3 = inlined_call_operand.hbm [shape: bf16[3,384,128], index: 3, kind: input, shape index: {}]
  %s4 = inlined_call_operand.vmem [shape: f32[1,128], index: 4, kind: input, shape index: {}]
  %s5 = inlined_call_operand.hbm [shape: bf16[128,128], index: 5, kind: input, shape index: {}]
  %s6 = inlined_call_operand.vmem [shape: f32[1,128], index: 6, kind: input, shape index: {}]
  %s7 = inlined_call_operand.hbm [shape: f32[16,8,8,128], index: 7, kind: output, shape index: {}]
  %s8 = sld [smem:[#allocation0]]
  $region77: #{tpu_custom_call.1} parent=0
    _
  %s10 = ssub.s32 1, %s8
  %s11 = scalar_select 0, %s10, %s8
  $region1: #{tpu_custom_call.1} parent=0
    #allocation4 [shape = 'u8[524288]{0}', space=vmem, size = 0x80000, scoped, tag = 'input window, operand 0']
    #allocation5 [shape = 's32[2]{0}', space=sflag, size = 0x8, scoped, tag = 'scoped memory for tpu_custom_call.1']
    #allocation6 [shape = 's32[2]{0}', space=sflag, size = 0x8, scoped, tag = 'scoped memory for tpu_custom_call.1']
    #allocation7 [shape = 'u8[32768]{0}', space=vmem, size = 0x8000, scoped, tag = 'input window, operand 1, single buffered']
    #allocation8 [shape = 's32[1]{0}', space=sflag, size = 0x4, scoped, tag = 'scoped memory for tpu_custom_call.1']
    #allocation9 [shape = 'u8[294912]{0}', space=vmem, size = 0x48000, scoped, tag = 'input window, operand 3, single buffered']
    #allocation10 [shape = 'u8[32768]{0}', space=vmem, size = 0x8000, scoped, tag = 'input window, operand 5, single buffered']
    #allocation11 [shape = 's32[1]{0}', space=sflag, size = 0x4, scoped, tag = 'scoped memory for tpu_custom_call.1']
    #allocation12 [shape = 'u8[524288]{0}', space=vmem, size = 0x80000, scoped, tag = 'output window, operand 0']
    %12 = vsyncpa [#allocation5], 0
    %s13 = scalar_lea.sflag [#allocation5], 1
    %14 = vsyncpa %s13, 0
    %15 = vsyncpa [#allocation8], 0
    %16 = vsyncpa [#allocation11], 0
    %17 = vsyncpa [#allocation6], 0
    %s18 = scalar_lea.sflag [#allocation6], 1
    %19 = vsyncpa %s18, 0
    loop: start=0, step=1, limit=4
    $region2: #{tpu_custom_call.1} parent=1 // loop_pre_header
      _
    $region3: #{tpu_custom_call.1} parent=1 // loop_header
      %s21 = sphi 0, %s25
      %p22 = scmp.ge.s32.totalorder %s21, 4
      %s31 = sphi 0, %s33
      %s34 = sphi 0, %s31
      %s35 = sphi 0, %s34
      %s51 = sphi 0, %s35
      %s55 = sphi 0, %s55
      %s57 = sphi 0, %s55
      %s58 = sphi 0, %s57
      %s72 = sphi 0, %s58
      %s76 = sphi 0, %s76
      %s78 = sphi 0, %s76
      %s79 = sphi 0, %s78
      %s93 = sphi 0, %s79
      %s97 = sphi 0, %s97
      %s99 = sphi 0, %s97
      %s100 = sphi 0, %s99
      %s114 = sphi 0, %s100
      %s118 = sphi 0, %s118
      %s120 = sphi 0, %s118
      %s121 = sphi 0, %s120
      %s135 = sphi 0, %s121
      %s139 = sphi 0, %s139
      %s141 = sphi 0, %s139
      %s142 = sphi 0, %s141
      %s156 = sphi 0, %s142
      %s160 = sphi 0, %s160
      %s162 = sphi 0, %s160
      %s163 = sphi 0, %s162
      %s177 = sphi 0, %s163
      %s183 = sphi 0, %s185
      %s186 = sphi 0, %s183
      %s187 = sphi 0, %s186
      %s203 = sphi 0, %s187
    $region4: #{tpu_custom_call.1} parent=1 // loop_header_branch
      %24 = sbr.rel (%p22) target = $region8
    $region5: #{tpu_custom_call.1} parent=1 // loop_body
      %s26 = ssub.s32 %s21, 1
      %s27 = ssub.s32 %s21, 2
      %s28 = sadd.s32 %s21, 1
      %s29 = ssub.s32 %s21, %s28
      %p30 = scmp.eq.s32.totalorder %s29, 0
      %s32 = sadd.s32 %s31, 1
      %s33 = scalar_select %p30, %s31, %s32
      %p36 = pneg %p30
      %p37 = scmp.eq.s32.totalorder %s21, 1
      %p38 = por %p36, %p37
      %p39 = scmp.ne.s32.totalorder %s31, %s34
      %p40 = scmp.eq.s32.totalorder %s21, 0
      %p41 = por %p39, %p40
      %p42 = scmp.ne.s32.totalorder %s31, %s34
      %p43 = scmp.eq.s32.totalorder %s26, 1
      %p44 = por %p42, %p43
      %p45 = scmp.ne.s32.totalorder %s34, %s35
      %p46 = scmp.eq.s32.totalorder %s26, 0
      %p47 = por %p45, %p46
      %p48 = scmp.ne.s32.totalorder %s34, %s35
      %p49 = scmp.eq.s32.totalorder %s27, 1
      %p50 = por %p48, %p49
      %p52 = scmp.ne.s32.totalorder %s35, %s51
      %p53 = scmp.eq.s32.totalorder %s27, 0
      %p54 = por %p52, %p53
      %s56 = sadd.s32 %s55, 1
      %p59 = scmp.eq.s32.totalorder %s21, 1
      %p60 = scmp.ne.s32.totalorder %s55, %s57
      %p61 = scmp.eq.s32.totalorder %s21, 0
      %p62 = por %p60, %p61
      %p63 = scmp.ne.s32.totalorder %s55, %s57
      %p64 = scmp.eq.s32.totalorder %s26, 1
      %p65 = por %p63, %p64
      %p66 = scmp.ne.s32.totalorder %s57, %s58
      %p67 = scmp.eq.s32.totalorder %s26, 0
      %p68 = por %p66, %p67
      %p69 = scmp.ne.s32.totalorder %s57, %s58
      %p70 = scmp.eq.s32.totalorder %s27, 1
      %p71 = por %p69, %p70
      %p73 = scmp.ne.s32.totalorder %s58, %s72
      %p74 = scmp.eq.s32.totalorder %s27, 0
      %p75 = por %p73, %p74
      %s77 = sadd.s32 %s76, 1
      %p80 = scmp.eq.s32.totalorder %s21, 1
      %p81 = scmp.ne.s32.totalorder %s76, %s78
      %p82 = scmp.eq.s32.totalorder %s21, 0
      %p83 = por %p81, %p82
      %p84 = scmp.ne.s32.totalorder %s76, %s78
      %p85 = scmp.eq.s32.totalorder %s26, 1
      %p86 = por %p84, %p85
      %p87 = scmp.ne.s32.totalorder %s78, %s79
      %p88 = scmp.eq.s32.totalorder %s26, 0
      %p89 = por %p87, %p88
      %p90 = scmp.ne.s32.totalorder %s78, %s79
      %p91 = scmp.eq.s32.totalorder %s27, 1
      %p92 = por %p90, %p91
      %p94 = scmp.ne.s32.totalorder %s79, %s93
      %p95 = scmp.eq.s32.totalorder %s27, 0
      %p96 = por %p94, %p95
      %s98 = sadd.s32 %s97, 1
      %p101 = scmp.eq.s32.totalorder %s21, 1
      %p102 = scmp.ne.s32.totalorder %s97, %s99
      %p103 = scmp.eq.s32.totalorder %s21, 0
      %p104 = por %p102, %p103
      %p105 = scmp.ne.s32.totalorder %s97, %s99
      %p106 = scmp.eq.s32.totalorder %s26, 1
      %p107 = por %p105, %p106
      %p108 = scmp.ne.s32.totalorder %s99, %s100
      %p109 = scmp.eq.s32.totalorder %s26, 0
      %p110 = por %p108, %p109
      %p111 = scmp.ne.s32.totalorder %s99, %s100
      %p112 = scmp.eq.s32.totalorder %s27, 1
      %p113 = por %p111, %p112
      %p115 = scmp.ne.s32.totalorder %s100, %s114
      %p116 = scmp.eq.s32.totalorder %s27, 0
      %p117 = por %p115, %p116
      %s119 = sadd.s32 %s118, 1
      %p122 = scmp.eq.s32.totalorder %s21, 1
      %p123 = scmp.ne.s32.totalorder %s118, %s120
      %p124 = scmp.eq.s32.totalorder %s21, 0
      %p125 = por %p123, %p124
      %p126 = scmp.ne.s32.totalorder %s118, %s120
      %p127 = scmp.eq.s32.totalorder %s26, 1
      %p128 = por %p126, %p127
      %p129 = scmp.ne.s32.totalorder %s120, %s121
      %p130 = scmp.eq.s32.totalorder %s26, 0
      %p131 = por %p129, %p130
      %p132 = scmp.ne.s32.totalorder %s120, %s121
      %p133 = scmp.eq.s32.totalorder %s27, 1
      %p134 = por %p132, %p133
      %p136 = scmp.ne.s32.totalorder %s121, %s135
      %p137 = scmp.eq.s32.totalorder %s27, 0
      %p138 = por %p136, %p137
      %s140 = sadd.s32 %s139, 1
      %p143 = scmp.eq.s32.totalorder %s21, 1
      %p144 = scmp.ne.s32.totalorder %s139, %s141
      %p145 = scmp.eq.s32.totalorder %s21, 0
      %p146 = por %p144, %p145
      %p147 = scmp.ne.s32.totalorder %s139, %s141
      %p148 = scmp.eq.s32.totalorder %s26, 1
      %p149 = por %p147, %p148
      %p150 = scmp.ne.s32.totalorder %s141, %s142
      %p151 = scmp.eq.s32.totalorder %s26, 0
      %p152 = por %p150, %p151
      %p153 = scmp.ne.s32.totalorder %s141, %s142
      %p154 = scmp.eq.s32.totalorder %s27, 1
      %p155 = por %p153, %p154
      %p157 = scmp.ne.s32.totalorder %s142, %s156
      %p158 = scmp.eq.s32.totalorder %s27, 0
      %p159 = por %p157, %p158
      %s161 = sadd.s32 %s160, 1
      %p164 = scmp.eq.s32.totalorder %s21, 1
      %p165 = scmp.ne.s32.totalorder %s160, %s162
      %p166 = scmp.eq.s32.totalorder %s21, 0
      %p167 = por %p165, %p166
      %p168 = scmp.ne.s32.totalorder %s160, %s162
      %p169 = scmp.eq.s32.totalorder %s26, 1
      %p170 = por %p168, %p169
      %p171 = scmp.ne.s32.totalorder %s162, %s163
      %p172 = scmp.eq.s32.totalorder %s26, 0
      %p173 = por %p171, %p172
      %p174 = scmp.ne.s32.totalorder %s162, %s163
      %p175 = scmp.eq.s32.totalorder %s27, 1
      %p176 = por %p174, %p175
      %p178 = scmp.ne.s32.totalorder %s163, %s177
      %p179 = scmp.eq.s32.totalorder %s27, 0
      %p180 = por %p178, %p179
      %s181 = ssub.s32 %s21, %s28
      %p182 = scmp.eq.s32.totalorder %s181, 0
      %s184 = sadd.s32 %s183, 1
      %s185 = scalar_select %p182, %s183, %s184
      %p188 = pneg %p182
      %p189 = scmp.eq.s32.totalorder %s21, 1
      %p190 = por %p188, %p189
      %p191 = scmp.ne.s32.totalorder %s183, %s186
      %p192 = scmp.eq.s32.totalorder %s21, 0
      %p193 = por %p191, %p192
      %p194 = scmp.ne.s32.totalorder %s183, %s186
      %p195 = scmp.eq.s32.totalorder %s26, 1
      %p196 = por %p194, %p195
      %p197 = scmp.ne.s32.totalorder %s186, %s187
      %p198 = scmp.eq.s32.totalorder %s26, 0
      %p199 = por %p197, %p198
      %p200 = scmp.ne.s32.totalorder %s186, %s187
      %p201 = scmp.eq.s32.totalorder %s27, 1
      %p202 = por %p200, %p201
      %p204 = scmp.ne.s32.totalorder %s187, %s203
      %p205 = scmp.eq.s32.totalorder %s27, 0
      %p206 = por %p204, %p205
      %p207 = scmp.le.s32.totalorder 1, %s21
      %p208 = scmp.lt.s32.totalorder %s21, 3
      %p209 = pnand %p207, %p208
      %p210 = pneg %p209
      // Predicated region
      $region9: #{tpu_custom_call.1} parent=5 // pred_check
        _
      $region10: #{tpu_custom_call.1} parent=5 // pred_check_branch
        %212 = sbr.rel (%p209) target = $region12
      $region11: #{tpu_custom_call.1} parent=5 // pred_region
        %s213 = ssub.s32 %s21, 1
        // Predicated region
        $region13: #{tpu_custom_call.1} parent=11 // pred_check
          %p214 = pneg %p68
        $region14: #{tpu_custom_call.1} parent=11 // pred_check_branch
          %216 = sbr.rel (%p214) target = $region16
        $region15: #{tpu_custom_call.1} parent=11 // pred_region
          %s218 = ssub.s32 1024, 1024
          %219 = vsyncadd [#allocation8], %s218
          %s220 = sshll.u32 [#allocation7], 4
          %s221 = int_to_ptr.vmem [resolvable:$true] %s220
          %226 = dma.hbm_to_vmem [thread:$0]  %s1, 1024, %s221, [#allocation8], 64, 64, 4
        $region16: #{tpu_custom_call.1} parent=11 // pred_fallthru
          _
        // Predicated region
        $region17: #{tpu_custom_call.1} parent=11 // pred_check
          %p227 = pneg %p89
        $region18: #{tpu_custom_call.1} parent=11 // pred_check_branch
          %229 = sbr.rel (%p227) target = $region20
        $region19: #{tpu_custom_call.1} parent=11 // pred_region
          _
        $region20: #{tpu_custom_call.1} parent=11 // pred_fallthru
          _
        // Predicated region
        $region21: #{tpu_custom_call.1} parent=11 // pred_check
          %p230 = pneg %p110
        $region22: #{tpu_custom_call.1} parent=11 // pred_check_branch
          %232 = sbr.rel (%p230) target = $region24
        $region23: #{tpu_custom_call.1} parent=11 // pred_region
          %s234 = ssub.s32 9216, 9216
          %235 = vsyncadd [#allocation8], %s234
          %s236 = sshll.u32 [#allocation9], 4
          %s237 = int_to_ptr.vmem [resolvable:$true] %s236
          %242 = dma.hbm_to_vmem [thread:$0]  %s3, 9216, %s237, [#allocation8], 64, 64, 4
        $region24: #{tpu_custom_call.1} parent=11 // pred_fallthru
          _
        // Predicated region
        $region25: #{tpu_custom_call.1} parent=11 // pred_check
          %p243 = pneg %p131
        $region26: #{tpu_custom_call.1} parent=11 // pred_check_branch
          %245 = sbr.rel (%p243) target = $region28
        $region27: #{tpu_custom_call.1} parent=11 // pred_region
          _
        $region28: #{tpu_custom_call.1} parent=11 // pred_fallthru
          _
        // Predicated region
        $region29: #{tpu_custom_call.1} parent=11 // pred_check
          %p246 = pneg %p152
        $region30: #{tpu_custom_call.1} parent=11 // pred_check_branch
          %248 = sbr.rel (%p246) target = $region32
        $region31: #{tpu_custom_call.1} parent=11 // pred_region
          %s250 = ssub.s32 1024, 1024
          %251 = vsyncadd [#allocation11], %s250
          %s252 = sshll.u32 [#allocation10], 4
          %s253 = int_to_ptr.vmem [resolvable:$true] %s252
          %258 = dma.hbm_to_vmem [thread:$0]  %s5, 1024, %s253, [#allocation11], 64, 64, 4
        $region32: #{tpu_custom_call.1} parent=11 // pred_fallthru
          _
        // Predicated region
        $region33: #{tpu_custom_call.1} parent=11 // pred_check
          %p259 = pneg %p173
        $region34: #{tpu_custom_call.1} parent=11 // pred_check_branch
          %261 = sbr.rel (%p259) target = $region36
        $region35: #{tpu_custom_call.1} parent=11 // pred_region
          _
        $region36: #{tpu_custom_call.1} parent=11 // pred_fallthru
          _
      $region12: #{tpu_custom_call.1} parent=5 // pred_fallthru
        _
      %p262 = scmp.lt.s32.totalorder %s21, 2
      // Predicated region
      $region37: #{tpu_custom_call.1} parent=5 // pred_check
        %p263 = pneg %p262
      $region38: #{tpu_custom_call.1} parent=5 // pred_check_branch
        %265 = sbr.rel (%p263) target = $region40
      $region39: #{tpu_custom_call.1} parent=5 // pred_region
        // Predicated region
        $region41: #{tpu_custom_call.1} parent=39 // pred_check
          %p266 = pneg %p41
        $region42: #{tpu_custom_call.1} parent=39 // pred_check_branch
          %268 = sbr.rel (%p266) target = $region44
        $region43: #{tpu_custom_call.1} parent=39 // pred_region
          %s269 = sand.u32 %s31, 1
          %s270 = scalar_lea.sflag [#allocation5], %s269
          %s271 = sand.u32 %s31, 1
          %s272 = smul.addr %s271, 512
          %s273 = scalar_lea.vmem [#allocation4], %s272
          %s274 = smul.u32 8, %s21
          %s276 = ssub.s32 8192, 8192
          %277 = vsyncadd %s270, %s276
          %s278 = smul.addr %s274, 8
          %s279 = smul.addr %s278, 128
          %s280 = scalar_lea.hbm %s0, %s279
          %s281 = sshll.u32 %s273, 4
          %s282 = int_to_ptr.vmem [resolvable:$true] %s281
          %287 = dma.hbm_to_vmem [thread:$0]  %s280, 8192, %s282, %s270, 128, 128, 8
        $region44: #{tpu_custom_call.1} parent=39 // pred_fallthru
          _
      $region40: #{tpu_custom_call.1} parent=5 // pred_fallthru
        _
      %p288 = scmp.le.s32.totalorder 1, %s21
      %p289 = scmp.lt.s32.totalorder %s21, 3
      %p290 = pnand %p288, %p289
      %p291 = pneg %p290
      // Predicated region
      $region45: #{tpu_custom_call.1} parent=5 // pred_check
        _
      $region46: #{tpu_custom_call.1} parent=5 // pred_check_branch
        %293 = sbr.rel (%p290) target = $region48
      $region47: #{tpu_custom_call.1} parent=5 // pred_region
        %s294 = ssub.s32 %s21, 1
        %s295 = sand.u32 %s34, 1
        %s296 = scalar_lea.sflag [#allocation5], %s295
        %s297 = sand.u32 %s34, 1
        %s298 = smul.addr %s297, 512
        %s299 = scalar_lea.vmem [#allocation4], %s298
        // Predicated region
        $region49: #{tpu_custom_call.1} parent=47 // pred_check
          %p300 = pneg %p47
        $region50: #{tpu_custom_call.1} parent=47 // pred_check_branch
          %302 = sbr.rel (%p300) target = $region52
        $region51: #{tpu_custom_call.1} parent=47 // pred_region
          %303 = dma.done %s296, 8192
        $region52: #{tpu_custom_call.1} parent=47 // pred_fallthru
          _
        // Predicated region
        $region53: #{tpu_custom_call.1} parent=47 // pred_check
          %p304 = pneg %p68
        $region54: #{tpu_custom_call.1} parent=47 // pred_check_branch
          %306 = sbr.rel (%p304) target = $region56
        $region55: #{tpu_custom_call.1} parent=47 // pred_region
          %307 = dma.done [#allocation8], 1024
        $region56: #{tpu_custom_call.1} parent=47 // pred_fallthru
          _
        // Predicated region
        $region57: #{tpu_custom_call.1} parent=47 // pred_check
          %p308 = pneg %p110
        $region58: #{tpu_custom_call.1} parent=47 // pred_check_branch
          %310 = sbr.rel (%p308) target = $region60
        $region59: #{tpu_custom_call.1} parent=47 // pred_region
          %311 = dma.done [#allocation8], 9216
        $region60: #{tpu_custom_call.1} parent=47 // pred_fallthru
          _
        // Predicated region
        $region61: #{tpu_custom_call.1} parent=47 // pred_check
          %p312 = pneg %p152
        $region62: #{tpu_custom_call.1} parent=47 // pred_check_branch
          %314 = sbr.rel (%p312) target = $region64
        $region63: #{tpu_custom_call.1} parent=47 // pred_region
          %315 = dma.done [#allocation11], 1024
        $region64: #{tpu_custom_call.1} parent=47 // pred_fallthru
          _
        %s316 = sand.u32 %s34, 1
        %s317 = scalar_lea.sflag [#allocation5], %s316
        %s318 = sand.u32 %s34, 1
        %s319 = smul.addr %s318, 512
        %s320 = scalar_lea.vmem [#allocation4], %s319
        %p321 = pneg %p47
        %p322 = pneg %p44
        %p323 = pneg %p68
        %p324 = pneg %p65
        %p325 = pneg %p89
        %p326 = pneg %p86
        %p327 = pneg %p110
        %p328 = pneg %p107
        %p329 = pneg %p131
        %p330 = pneg %p128
        %p331 = pneg %p152
        %p332 = pneg %p149
        %p333 = pneg %p173
        %p334 = pneg %p170
        %p335 = pneg %p199
        %p336 = pneg %p196
        %s337 = sand.u32 %s186, 1
        %s338 = scalar_lea.sflag [#allocation6], %s337
        %s339 = sand.u32 %s186, 1
        %s340 = smul.addr %s339, 512
        %s341 = scalar_lea.vmem [#allocation12], %s340
        %s342 = smul.u32 8, %s26
        %s343 = smul.u32 8, %s26
        %345 = vst [vmem:[#allocation2] sm:$0xff] 0.0
        %346 = vst [vmem:[#allocation2 + $0x8] sm:$0xff] 0.0
        %347 = vst [vmem:[#allocation2 + $0x10] sm:$0xff] 0.0
        %348 = vst [vmem:[#allocation2 + $0xf0] sm:$0xff] 0.0
        %349 = vst [vmem:[#allocation2 + $0xf8] sm:$0xff] 0.0
        %350 = vst [vmem:[#allocation2 + $0x100] sm:$0xff] 0.0
        %351 = vst [vmem:[#allocation2 + $0x1e0] sm:$0xff] 0.0
        %352 = vst [vmem:[#allocation2 + $0x1e8] sm:$0xff] 0.0
        %353 = vst [vmem:[#allocation2 + $0x1f0] sm:$0xff] 0.0
        %354 = vst [vmem:[#allocation2 + $0x2d0] sm:$0xff] 0.0
        %355 = vst [vmem:[#allocation2 + $0x2d8] sm:$0xff] 0.0
        %356 = vst [vmem:[#allocation2 + $0x2e0] sm:$0xff] 0.0
        %s357 = scalar_lea.vmem [#allocation2], 216
        %358 = vst [vmem:[%s357] sm:$0xff] 0.0
        %359 = vst [vmem:[%s357 + $0x8] sm:$0xff] 0.0
        %360 = vst [vmem:[%s357 + $0x10] sm:$0xff] 0.0
        %361 = vst [vmem:[%s357 + $0xf0] sm:$0xff] 0.0
        %362 = vst [vmem:[%s357 + $0xf8] sm:$0xff] 0.0
        %363 = vst [vmem:[%s357 + $0x100] sm:$0xff] 0.0
        %364 = vst [vmem:[%s357 + $0x1e0] sm:$0xff] 0.0
        %365 = vst [vmem:[%s357 + $0x1e8] sm:$0xff] 0.0
        %366 = vst [vmem:[%s357 + $0x1f0] sm:$0xff] 0.0
        %367 = vst [vmem:[%s357 + $0x2d0] sm:$0xff] 0.0
        %368 = vst [vmem:[%s357 + $0x2d8] sm:$0xff] 0.0
        %369 = vst [vmem:[%s357 + $0x2e0] sm:$0xff] 0.0
        %v370 = vlaneseq
        %v371 = vshrl.u32 %v370, 7
        %vm372 = vcmp.ne.s32.totalorder %v371, 0
        %v373 = vsel %vm372, 1, 0
        %v374 = vcvt.s32.f32 %v373
        %vm375 = vcmp.ne.s32.totalorder %v371, 7
        %v376 = vsel %vm375, 1, 0
        %v377 = vcvt.s32.f32 %v376
        %s378 = smul.u32 0, 64
        %s379 = scalar_lea.vmem %s299, %s378 [#allocation4]
        %v380 = vld [vmem:[%s379] sm:$0xff]
        %v381 = vld [vmem:[%s379 + $0x8] sm:$0xff]
        %v382 = vld [vmem:[%s379 + $0x10] sm:$0xff]
        %v383 = vld [vmem:[%s379 + $0x18] sm:$0xff]
        %v384 = vld [vmem:[%s379 + $0x20] sm:$0xff]
        %v385 = vld [vmem:[%s379 + $0x28] sm:$0xff]
        %v386 = vld [vmem:[%s379 + $0x30] sm:$0xff]
        %v387 = vld [vmem:[%s379 + $0x38] sm:$0xff]
        %v388 = vld [vmem:[%s379 + $0x40] sm:$0xff]
        %v389 = vld [vmem:[%s379 + $0x48] sm:$0xff]
        %v390 = vld [vmem:[%s379 + $0x50] sm:$0xff]
        %v391 = vld [vmem:[%s379 + $0x58] sm:$0xff]
        %v392 = vld [vmem:[%s379 + $0x60] sm:$0xff]
        %v393 = vld [vmem:[%s379 + $0x68] sm:$0xff]
        %v394 = vld [vmem:[%s379 + $0x70] sm:$0xff]
        %v395 = vld [vmem:[%s379 + $0x78] sm:$0xff]
        %v396 = vld [vmem:[%s379 + $0x80] sm:$0xff]
        %v397 = vld [vmem:[%s379 + $0x88] sm:$0xff]
        %v398 = vld [vmem:[%s379 + $0x90] sm:$0xff]
        %v399 = vld [vmem:[%s379 + $0x98] sm:$0xff]
        %v400 = vld [vmem:[%s379 + $0xa0] sm:$0xff]
        %v401 = vld [vmem:[%s379 + $0xa8] sm:$0xff]
        %v402 = vld [vmem:[%s379 + $0xb0] sm:$0xff]
        %v403 = vld [vmem:[%s379 + $0xb8] sm:$0xff]
        %v404 = vld [vmem:[%s379 + $0xc0] sm:$0xff]
        %v405 = vld [vmem:[%s379 + $0xc8] sm:$0xff]
        %v406 = vld [vmem:[%s379 + $0xd0] sm:$0xff]
        %v407 = vld [vmem:[%s379 + $0xd8] sm:$0xff]
        %v408 = vld [vmem:[%s379 + $0xe0] sm:$0xff]
        %v409 = vld [vmem:[%s379 + $0xe8] sm:$0xff]
        %v410 = vld [vmem:[%s379 + $0xf0] sm:$0xff]
        %v411 = vld [vmem:[%s379 + $0xf8] sm:$0xff]
        %v412 = vpack.c.bf16 %v381, %v380
        %v413 = vpack.c.bf16 %v383, %v382
        %v414 = vpack.c.bf16 %v385, %v384
        %v415 = vpack.c.bf16 %v387, %v386
        %v416 = vpack.c.bf16 %v389, %v388
        %v417 = vpack.c.bf16 %v391, %v390
        %v418 = vpack.c.bf16 %v393, %v392
        %v419 = vpack.c.bf16 %v395, %v394
        %v420 = vpack.c.bf16 %v397, %v396
        %v421 = vpack.c.bf16 %v399, %v398
        %v422 = vpack.c.bf16 %v401, %v400
        %v423 = vpack.c.bf16 %v403, %v402
        %v424 = vpack.c.bf16 %v405, %v404
        %v425 = vpack.c.bf16 %v407, %v406
        %v426 = vpack.c.bf16 %v409, %v408
        %v427 = vpack.c.bf16 %v411, %v410
        %v428 = vld [vmem:[#allocation7] sm:$0xf]
        %v429 = vld [vmem:[#allocation7 + $0x4] sm:$0xf]
        %v430 = vld [vmem:[#allocation7 + $0x8] sm:$0xf]
        %v431 = vld [vmem:[#allocation7 + $0xc] sm:$0xf]
        %v432 = vld [vmem:[#allocation7 + $0x10] sm:$0xf]
        %v433 = vld [vmem:[#allocation7 + $0x14] sm:$0xf]
        %v434 = vld [vmem:[#allocation7 + $0x18] sm:$0xf]
        %v435 = vld [vmem:[#allocation7 + $0x1c] sm:$0xf]
        %v436 = vld [vmem:[#allocation7 + $0x20] sm:$0xf]
        %v437 = vld [vmem:[#allocation7 + $0x24] sm:$0xf]
        %v438 = vld [vmem:[#allocation7 + $0x28] sm:$0xf]
        %v439 = vld [vmem:[#allocation7 + $0x2c] sm:$0xf]
        %v440 = vld [vmem:[#allocation7 + $0x30] sm:$0xf]
        %v441 = vld [vmem:[#allocation7 + $0x34] sm:$0xf]
        %v442 = vld [vmem:[#allocation7 + $0x38] sm:$0xf]
        %v443 = vld [vmem:[#allocation7 + $0x3c] sm:$0xf]
        %v444 = vld [vmem:[%s2] sm:$0x1]
        %v446 = vlaneseq
        %v447 = vshrl.u32 %v446, 7
        %v448 = vsub.s32 0, %v447
        %v449 = vrot.slane %v444, %v448
        %v467 = vunpack.c.l.b16 %v428
        %v468 = vunpack.c.l.b16 %v429
        %v469 = vunpack.c.l.b16 %v430
        %v470 = vunpack.c.l.b16 %v431
        %v471 = vunpack.c.l.b16 %v432
        %v472 = vunpack.c.l.b16 %v433
        %v473 = vunpack.c.l.b16 %v434
        %v474 = vunpack.c.l.b16 %v435
        %v475 = vunpack.c.l.b16 %v436
        %v476 = vunpack.c.l.b16 %v437
        %v477 = vunpack.c.l.b16 %v438
        %v478 = vunpack.c.l.b16 %v439
        %v479 = vunpack.c.l.b16 %v440
        %v480 = vunpack.c.l.b16 %v441
        %v481 = vunpack.c.l.b16 %v442
        %v482 = vunpack.c.l.b16 %v443
        %v483 = vpack.c.b16 %v468, %v467
        %v484 = vpack.c.b16 %v470, %v469
        %v485 = vpack.c.b16 %v472, %v471
        %v486 = vpack.c.b16 %v474, %v473
        %v487 = vpack.c.b16 %v476, %v475
        %v488 = vpack.c.b16 %v478, %v477
        %v489 = vpack.c.b16 %v480, %v479
        %v490 = vpack.c.b16 %v482, %v481
        %499 = vmatprep.subr.bf16.mxu0 0
        %500 = vmatpush1.bf16.msra.mxu0 %v490
        %501 = vmatprep.subr.bf16.mxu0 0
        %502 = vmatpush1.bf16.msra.mxu0 %v489
        %503 = vmatprep.subr.bf16.mxu0 0
        %504 = vmatpush1.bf16.msra.mxu0 %v488
        %505 = vmatprep.subr.bf16.mxu0 0
        %506 = vmatpush1.bf16.msra.mxu0 %v487
        %507 = vmatprep.subr.bf16.mxu0 0
        %508 = vmatpush1.bf16.msra.mxu0 %v486
        %509 = vmatprep.subr.bf16.mxu0 0
        %510 = vmatpush1.bf16.msra.mxu0 %v485
        %511 = vmatprep.subr.bf16.mxu0 0
        %512 = vmatpush1.bf16.msra.mxu0 %v484
        %513 = vmatprep.subr.bf16.mxu0 0
        %514 = vmatpush1.bf16.msra.mxu0 %v483
        %515 = vmatprep.subr.bf16.mxu0 0
        %516 = vmatpush2.bf16.msra.mxu0 0
        %517 = vmatprep.subr.bf16.mxu0 0
        %518 = vmatpush2.bf16.msra.mxu0 0
        %519 = vmatprep.subr.bf16.mxu0 0
        %520 = vmatpush2.bf16.msra.mxu0 0
        %521 = vmatprep.subr.bf16.mxu0 0
        %522 = vmatpush2.bf16.msra.mxu0 0
        %523 = vmatprep.subr.bf16.mxu0 0
        %524 = vmatpush2.bf16.msra.mxu0 0
        %525 = vmatprep.subr.bf16.mxu0 0
        %526 = vmatpush2.bf16.msra.mxu0 0
        %527 = vmatprep.subr.bf16.mxu0 0
        %528 = vmatpush2.bf16.msra.mxu0 0
        %529 = vmatprep.subr.bf16.mxu0 0
        %530 = vmatpush2.bf16.msra.mxu0 0
        %531 = vmatprep.mubr.bf16.mxu0 0
        %532 = vmatmul.mubr.bf16.gmra.mxu0 %v412
        %v533 = vpop.f32.mrf.mxu0
        %v534 = vadd.f32 %v449, %v533
        %v535 = vpop.f32.mrf.mxu0
        %v536 = vpop.f32.mrf.mxu0
        %v537 = vadd.f32 %v449, %v536
        %v538 = vpop.f32.mrf.mxu0
        %539 = vmatprep.mubr.bf16.mxu0 0
        %540 = vmatmul.mubr.bf16.gmra.mxu0 %v413
        %v541 = vpop.f32.mrf.mxu0
        %v542 = vadd.f32 %v449, %v541
        %v543 = vpop.f32.mrf.mxu0
        %v544 = vpop.f32.mrf.mxu0
        %v545 = vadd.f32 %v449, %v544
        %v546 = vpop.f32.mrf.mxu0
        %547 = vmatprep.mubr.bf16.mxu0 0
        %548 = vmatmul.mubr.bf16.gmra.mxu0 %v414
        %v549 = vpop.f32.mrf.mxu0
        %v550 = vadd.f32 %v449, %v549
        %v551 = vpop.f32.mrf.mxu0
        %v552 = vpop.f32.mrf.mxu0
        %v553 = vadd.f32 %v449, %v552
        %v554 = vpop.f32.mrf.mxu0
        %555 = vmatprep.mubr.bf16.mxu0 0
        %556 = vmatmul.mubr.bf16.gmra.mxu0 %v415
        %v557 = vpop.f32.mrf.mxu0
        %v558 = vadd.f32 %v449, %v557
        %v559 = vpop.f32.mrf.mxu0
        %v560 = vpop.f32.mrf.mxu0
        %v561 = vadd.f32 %v449, %v560
        %v562 = vpop.f32.mrf.mxu0
        %563 = vmatprep.mubr.bf16.mxu0 0
        %564 = vmatmul.mubr.bf16.gmra.mxu0 %v416
        %v565 = vpop.f32.mrf.mxu0
        %v566 = vadd.f32 %v449, %v565
        %v567 = vpop.f32.mrf.mxu0
        %v568 = vpop.f32.mrf.mxu0
        %v569 = vadd.f32 %v449, %v568
        %v570 = vpop.f32.mrf.mxu0
        %571 = vmatprep.mubr.bf16.mxu0 0
        %572 = vmatmul.mubr.bf16.gmra.mxu0 %v417
        %v573 = vpop.f32.mrf.mxu0
        %v574 = vadd.f32 %v449, %v573
        %v575 = vpop.f32.mrf.mxu0
        %v576 = vpop.f32.mrf.mxu0
        %v577 = vadd.f32 %v449, %v576
        %v578 = vpop.f32.mrf.mxu0
        %579 = vmatprep.mubr.bf16.mxu0 0
        %580 = vmatmul.mubr.bf16.gmra.mxu0 %v418
        %v581 = vpop.f32.mrf.mxu0
        %v582 = vadd.f32 %v449, %v581
        %v583 = vpop.f32.mrf.mxu0
        %v584 = vpop.f32.mrf.mxu0
        %v585 = vadd.f32 %v449, %v584
        %v586 = vpop.f32.mrf.mxu0
        %587 = vmatprep.mubr.bf16.mxu0 0
        %588 = vmatmul.mubr.bf16.gmra.mxu0 %v419
        %v589 = vpop.f32.mrf.mxu0
        %v590 = vadd.f32 %v449, %v589
        %v591 = vpop.f32.mrf.mxu0
        %v592 = vpop.f32.mrf.mxu0
        %v593 = vadd.f32 %v449, %v592
        %v594 = vpop.f32.mrf.mxu0
        %595 = vmatprep.mubr.bf16.mxu0 0
        %596 = vmatmul.mubr.bf16.gmra.mxu0 %v420
        %v597 = vpop.f32.mrf.mxu0
        %v598 = vadd.f32 %v449, %v597
        %v599 = vpop.f32.mrf.mxu0
        %v600 = vpop.f32.mrf.mxu0
        %v601 = vadd.f32 %v449, %v600
        %v602 = vpop.f32.mrf.mxu0
        %603 = vmatprep.mubr.bf16.mxu0 0
        %604 = vmatmul.mubr.bf16.gmra.mxu0 %v421
        %v605 = vpop.f32.mrf.mxu0
        %v606 = vadd.f32 %v449, %v605
        %v607 = vpop.f32.mrf.mxu0
        %v608 = vpop.f32.mrf.mxu0
        %v609 = vadd.f32 %v449, %v608
        %v610 = vpop.f32.mrf.mxu0
        %611 = vmatprep.mubr.bf16.mxu0 0
        %612 = vmatmul.mubr.bf16.gmra.mxu0 %v422
        %v613 = vpop.f32.mrf.mxu0
        %v614 = vadd.f32 %v449, %v613
        %v615 = vpop.f32.mrf.mxu0
        %v616 = vpop.f32.mrf.mxu0
        %v617 = vadd.f32 %v449, %v616
        %v618 = vpop.f32.mrf.mxu0
        %619 = vmatprep.mubr.bf16.mxu0 0
        %620 = vmatmul.mubr.bf16.gmra.mxu0 %v423
        %v621 = vpop.f32.mrf.mxu0
        %v622 = vadd.f32 %v449, %v621
        %v623 = vpop.f32.mrf.mxu0
        %v624 = vpop.f32.mrf.mxu0
        %v625 = vadd.f32 %v449, %v624
        %v626 = vpop.f32.mrf.mxu0
        %627 = vmatprep.mubr.bf16.mxu0 0
        %628 = vmatmul.mubr.bf16.gmra.mxu0 %v424
        %v629 = vpop.f32.mrf.mxu0
        %v630 = vadd.f32 %v449, %v629
        %v631 = vpop.f32.mrf.mxu0
        %v632 = vpop.f32.mrf.mxu0
        %v633 = vadd.f32 %v449, %v632
        %v634 = vpop.f32.mrf.mxu0
        %635 = vmatprep.mubr.bf16.mxu0 0
        %636 = vmatmul.mubr.bf16.gmra.mxu0 %v425
        %v637 = vpop.f32.mrf.mxu0
        %v638 = vadd.f32 %v449, %v637
        %v639 = vpop.f32.mrf.mxu0
        %v640 = vpop.f32.mrf.mxu0
        %v641 = vadd.f32 %v449, %v640
        %v642 = vpop.f32.mrf.mxu0
        %643 = vmatprep.mubr.bf16.mxu0 0
        %644 = vmatmul.mubr.bf16.gmra.mxu0 %v426
        %v645 = vpop.f32.mrf.mxu0
        %v646 = vadd.f32 %v449, %v645
        %v647 = vpop.f32.mrf.mxu0
        %v648 = vpop.f32.mrf.mxu0
        %v649 = vadd.f32 %v449, %v648
        %v650 = vpop.f32.mrf.mxu0
        %651 = vmatprep.mubr.bf16.mxu0 0
        %652 = vmatmul.mubr.bf16.gmra.mxu0 %v427
        %v653 = vpop.f32.mrf.mxu0
        %v654 = vadd.f32 %v449, %v653
        %v655 = vpop.f32.mrf.mxu0
        %v656 = vpop.f32.mrf.mxu0
        %v657 = vadd.f32 %v449, %v656
        %v658 = vpop.f32.mrf.mxu0
        %659 = vdwg.mxu0
        %v660 = vmax.f32 %v534, 0.0
        %v661 = vmax.f32 %v537, 0.0
        %v662 = vmax.f32 %v542, 0.0
        %v663 = vmax.f32 %v545, 0.0
        %v664 = vmax.f32 %v550, 0.0
        %v665 = vmax.f32 %v553, 0.0
        %v666 = vmax.f32 %v558, 0.0
        %v667 = vmax.f32 %v561, 0.0
        %v668 = vmax.f32 %v566, 0.0
        %v669 = vmax.f32 %v569, 0.0
        %v670 = vmax.f32 %v574, 0.0
        %v671 = vmax.f32 %v577, 0.0
        %v672 = vmax.f32 %v582, 0.0
        %v673 = vmax.f32 %v585, 0.0
        %v674 = vmax.f32 %v590, 0.0
        %v675 = vmax.f32 %v593, 0.0
        %v676 = vmax.f32 %v598, 0.0
        %v677 = vmax.f32 %v601, 0.0
        %v678 = vmax.f32 %v606, 0.0
        %v679 = vmax.f32 %v609, 0.0
        %v680 = vmax.f32 %v614, 0.0
        %v681 = vmax.f32 %v617, 0.0
        %v682 = vmax.f32 %v622, 0.0
        %v683 = vmax.f32 %v625, 0.0
        %v684 = vmax.f32 %v630, 0.0
        %v685 = vmax.f32 %v633, 0.0
        %v686 = vmax.f32 %v638, 0.0
        %v687 = vmax.f32 %v641, 0.0
        %v688 = vmax.f32 %v646, 0.0
        %v689 = vmax.f32 %v649, 0.0
        %v690 = vmax.f32 %v654, 0.0
        %v691 = vmax.f32 %v657, 0.0
        %s692 = scalar_lea.vmem [#allocation2], 24
        %693 = vst [vmem:[%s692 + $0x8] sm:$0xff] %v660
        %694 = vst [vmem:[%s692 + $0x20] sm:$0xff] %v661
        %695 = vst [vmem:[%s692 + $0x38] sm:$0xff] %v662
        %696 = vst [vmem:[%s692 + $0x50] sm:$0xff] %v663
        %697 = vst [vmem:[%s692 + $0x68] sm:$0xff] %v664
        %698 = vst [vmem:[%s692 + $0x80] sm:$0xff] %v665
        %699 = vst [vmem:[%s692 + $0x98] sm:$0xff] %v666
        %700 = vst [vmem:[%s692 + $0xb0] sm:$0xff] %v667
        %701 = vst [vmem:[%s692 + $0xf8] sm:$0xff] %v668
        %702 = vst [vmem:[%s692 + $0x110] sm:$0xff] %v669
        %703 = vst [vmem:[%s692 + $0x128] sm:$0xff] %v670
        %704 = vst [vmem:[%s692 + $0x140] sm:$0xff] %v671
        %705 = vst [vmem:[%s692 + $0x158] sm:$0xff] %v672
        %706 = vst [vmem:[%s692 + $0x170] sm:$0xff] %v673
        %707 = vst [vmem:[%s692 + $0x188] sm:$0xff] %v674
        %708 = vst [vmem:[%s692 + $0x1a0] sm:$0xff] %v675
        %709 = vst [vmem:[%s692 + $0x1e8] sm:$0xff] %v676
        %710 = vst [vmem:[%s692 + $0x200] sm:$0xff] %v677
        %711 = vst [vmem:[%s692 + $0x218] sm:$0xff] %v678
        %712 = vst [vmem:[%s692 + $0x230] sm:$0xff] %v679
        %713 = vst [vmem:[%s692 + $0x248] sm:$0xff] %v680
        %714 = vst [vmem:[%s692 + $0x260] sm:$0xff] %v681
        %715 = vst [vmem:[%s692 + $0x278] sm:$0xff] %v682
        %716 = vst [vmem:[%s692 + $0x290] sm:$0xff] %v683
        %717 = vst [vmem:[%s692 + $0x2d8] sm:$0xff] %v684
        %718 = vst [vmem:[%s692 + $0x2f0] sm:$0xff] %v685
        %719 = vst [vmem:[%s692 + $0x308] sm:$0xff] %v686
        %720 = vst [vmem:[%s692 + $0x320] sm:$0xff] %v687
        %721 = vst [vmem:[%s692 + $0x338] sm:$0xff] %v688
        %722 = vst [vmem:[%s692 + $0x350] sm:$0xff] %v689
        %723 = vst [vmem:[%s692 + $0x368] sm:$0xff] %v690
        %724 = vst [vmem:[%s692 + $0x380] sm:$0xff] %v691
        %v725 = vrot.slane %v660, 7
        %v726 = vrot.slane %v661, 7
        %v727 = vrot.slane %v662, 7
        %v728 = vrot.slane %v663, 7
        %v729 = vrot.slane %v664, 7
        %v730 = vrot.slane %v665, 7
        %v731 = vrot.slane %v666, 7
        %v732 = vrot.slane %v667, 7
        %v733 = vrot.slane %v668, 7
        %v734 = vrot.slane %v669, 7
        %v735 = vrot.slane %v670, 7
        %v736 = vrot.slane %v671, 7
        %v737 = vrot.slane %v672, 7
        %v738 = vrot.slane %v673, 7
        %v739 = vrot.slane %v674, 7
        %v740 = vrot.slane %v675, 7
        %v741 = vrot.slane %v676, 7
        %v742 = vrot.slane %v677, 7
        %v743 = vrot.slane %v678, 7
        %v744 = vrot.slane %v679, 7
        %v745 = vrot.slane %v680, 7
        %v746 = vrot.slane %v681, 7
        %v747 = vrot.slane %v682, 7
        %v748 = vrot.slane %v683, 7
        %v749 = vrot.slane %v684, 7
        %v750 = vrot.slane %v685, 7
        %v751 = vrot.slane %v686, 7
        %v752 = vrot.slane %v687, 7
        %v753 = vrot.slane %v688, 7
        %v754 = vrot.slane %v689, 7
        %v755 = vrot.slane %v690, 7
        %v756 = vrot.slane %v691, 7
        %vm757 = vcmp.lt.s32.totalorder %v371, 1
        %v758 = vsel %vm757, %v755, %v756
        %v759 = vsel %vm757, %v754, %v755
        %v760 = vsel %vm757, %v753, %v754
        %v761 = vsel %vm757, %v752, %v753
        %v762 = vsel %vm757, %v751, %v752
        %v763 = vsel %vm757, %v750, %v751
        %v764 = vsel %vm757, %v749, %v750
        %v765 = vsel %vm757, %v748, %v749
        %v766 = vsel %vm757, %v747, %v748
        %v767 = vsel %vm757, %v746, %v747
        %v768 = vsel %vm757, %v745, %v746
        %v769 = vsel %vm757, %v744, %v745
        %v770 = vsel %vm757, %v743, %v744
        %v771 = vsel %vm757, %v742, %v743
        %v772 = vsel %vm757, %v741, %v742
        %v773 = vsel %vm757, %v740, %v741
        %v774 = vsel %vm757, %v739, %v740
        %v775 = vsel %vm757, %v738, %v739
        %v776 = vsel %vm757, %v737, %v738
        %v777 = vsel %vm757, %v736, %v737
        %v778 = vsel %vm757, %v735, %v736
        %v779 = vsel %vm757, %v734, %v735
        %v780 = vsel %vm757, %v733, %v734
        %v781 = vsel %vm757, %v732, %v733
        %v782 = vsel %vm757, %v731, %v732
        %v783 = vsel %vm757, %v730, %v731
        %v784 = vsel %vm757, %v729, %v730
        %v785 = vsel %vm757, %v728, %v729
        %v786 = vsel %vm757, %v727, %v728
        %v787 = vsel %vm757, %v726, %v727
        %v788 = vsel %vm757, %v725, %v726
        %v789 = vsel %vm757, %v756, %v725
        %v790 = vmul.f32 %v789, %v374
        %v791 = vmul.f32 %v788, %v374
        %v792 = vmul.f32 %v787, %v374
        %v793 = vmul.f32 %v786, %v374
        %v794 = vmul.f32 %v785, %v374
        %v795 = vmul.f32 %v784, %v374
        %v796 = vmul.f32 %v783, %v374
        %v797 = vmul.f32 %v782, %v374
        %v798 = vmul.f32 %v781, %v374
        %v799 = vmul.f32 %v780, %v374
        %v800 = vmul.f32 %v779, %v374
        %v801 = vmul.f32 %v778, %v374
        %v802 = vmul.f32 %v777, %v374
        %v803 = vmul.f32 %v776, %v374
        %v804 = vmul.f32 %v775, %v374
        %v805 = vmul.f32 %v774, %v374
        %v806 = vmul.f32 %v773, %v374
        %v807 = vmul.f32 %v772, %v374
        %v808 = vmul.f32 %v771, %v374
        %v809 = vmul.f32 %v770, %v374
        %v810 = vmul.f32 %v769, %v374
        %v811 = vmul.f32 %v768, %v374
        %v812 = vmul.f32 %v767, %v374
        %v813 = vmul.f32 %v766, %v374
        %v814 = vmul.f32 %v765, %v374
        %v815 = vmul.f32 %v764, %v374
        %v816 = vmul.f32 %v763, %v374
        %v817 = vmul.f32 %v762, %v374
        %v818 = vmul.f32 %v761, %v374
        %v819 = vmul.f32 %v760, %v374
        %v820 = vmul.f32 %v759, %v374
        %v821 = vmul.f32 %v758, %v374
        %822 = vst [vmem:[%s692] sm:$0xff] %v790
        %823 = vst [vmem:[%s692 + $0x18] sm:$0xff] %v791
        %824 = vst [vmem:[%s692 + $0x30] sm:$0xff] %v792
        %825 = vst [vmem:[%s692 + $0x48] sm:$0xff] %v793
        %826 = vst [vmem:[%s692 + $0x60] sm:$0xff] %v794
        %827 = vst [vmem:[%s692 + $0x78] sm:$0xff] %v795
        %828 = vst [vmem:[%s692 + $0x90] sm:$0xff] %v796
        %829 = vst [vmem:[%s692 + $0xa8] sm:$0xff] %v797
        %830 = vst [vmem:[%s692 + $0xf0] sm:$0xff] %v798
        %831 = vst [vmem:[%s692 + $0x108] sm:$0xff] %v799
        %832 = vst [vmem:[%s692 + $0x120] sm:$0xff] %v800
        %833 = vst [vmem:[%s692 + $0x138] sm:$0xff] %v801
        %834 = vst [vmem:[%s692 + $0x150] sm:$0xff] %v802
        %835 = vst [vmem:[%s692 + $0x168] sm:$0xff] %v803
        %836 = vst [vmem:[%s692 + $0x180] sm:$0xff] %v804
        %837 = vst [vmem:[%s692 + $0x198] sm:$0xff] %v805
        %838 = vst [vmem:[%s692 + $0x1e0] sm:$0xff] %v806
        %839 = vst [vmem:[%s692 + $0x1f8] sm:$0xff] %v807
        %840 = vst [vmem:[%s692 + $0x210] sm:$0xff] %v808
        %841 = vst [vmem:[%s692 + $0x228] sm:$0xff] %v809
        %842 = vst [vmem:[%s692 + $0x240] sm:$0xff] %v810
        %843 = vst [vmem:[%s692 + $0x258] sm:$0xff] %v811
        %844 = vst [vmem:[%s692 + $0x270] sm:$0xff] %v812
        %845 = vst [vmem:[%s692 + $0x288] sm:$0xff] %v813
        %846 = vst [vmem:[%s692 + $0x2d0] sm:$0xff] %v814
        %847 = vst [vmem:[%s692 + $0x2e8] sm:$0xff] %v815
        %848 = vst [vmem:[%s692 + $0x300] sm:$0xff] %v816
        %849 = vst [vmem:[%s692 + $0x318] sm:$0xff] %v817
        %850 = vst [vmem:[%s692 + $0x330] sm:$0xff] %v818
        %851 = vst [vmem:[%s692 + $0x348] sm:$0xff] %v819
        %852 = vst [vmem:[%s692 + $0x360] sm:$0xff] %v820
        %853 = vst [vmem:[%s692 + $0x378] sm:$0xff] %v821
        %v854 = vrot.slane %v660, 1
        %v855 = vrot.slane %v661, 1
        %v856 = vrot.slane %v662, 1
        %v857 = vrot.slane %v663, 1
        %v858 = vrot.slane %v664, 1
        %v859 = vrot.slane %v665, 1
        %v860 = vrot.slane %v666, 1
        %v861 = vrot.slane %v667, 1
        %v862 = vrot.slane %v668, 1
        %v863 = vrot.slane %v669, 1
        %v864 = vrot.slane %v670, 1
        %v865 = vrot.slane %v671, 1
        %v866 = vrot.slane %v672, 1
        %v867 = vrot.slane %v673, 1
        %v868 = vrot.slane %v674, 1
        %v869 = vrot.slane %v675, 1
        %v870 = vrot.slane %v676, 1
        %v871 = vrot.slane %v677, 1
        %v872 = vrot.slane %v678, 1
        %v873 = vrot.slane %v679, 1
        %v874 = vrot.slane %v680, 1
        %v875 = vrot.slane %v681, 1
        %v876 = vrot.slane %v682, 1
        %v877 = vrot.slane %v683, 1
        %v878 = vrot.slane %v684, 1
        %v879 = vrot.slane %v685, 1
        %v880 = vrot.slane %v686, 1
        %v881 = vrot.slane %v687, 1
        %v882 = vrot.slane %v688, 1
        %v883 = vrot.slane %v689, 1
        %v884 = vrot.slane %v690, 1
        %v885 = vrot.slane %v691, 1
        %vm886 = vcmp.lt.s32.totalorder %v371, 7
        %v887 = vsel %vm886, %v884, %v885
        %v888 = vsel %vm886, %v883, %v884
        %v889 = vsel %vm886, %v882, %v883
        %v890 = vsel %vm886, %v881, %v882
        %v891 = vsel %vm886, %v880, %v881
        %v892 = vsel %vm886, %v879, %v880
        %v893 = vsel %vm886, %v878, %v879
        %v894 = vsel %vm886, %v877, %v878
        %v895 = vsel %vm886, %v876, %v877
        %v896 = vsel %vm886, %v875, %v876
        %v897 = vsel %vm886, %v874, %v875
        %v898 = vsel %vm886, %v873, %v874
        %v899 = vsel %vm886, %v872, %v873
        %v900 = vsel %vm886, %v871, %v872
        %v901 = vsel %vm886, %v870, %v871
        %v902 = vsel %vm886, %v869, %v870
        %v903 = vsel %vm886, %v868, %v869
        %v904 = vsel %vm886, %v867, %v868
        %v905 = vsel %vm886, %v866, %v867
        %v906 = vsel %vm886, %v865, %v866
        %v907 = vsel %vm886, %v864, %v865
        %v908 = vsel %vm886, %v863, %v864
        %v909 = vsel %vm886, %v862, %v863
        %v910 = vsel %vm886, %v861, %v862
        %v911 = vsel %vm886, %v860, %v861
        %v912 = vsel %vm886, %v859, %v860
        %v913 = vsel %vm886, %v858, %v859
        %v914 = vsel %vm886, %v857, %v858
        %v915 = vsel %vm886, %v856, %v857
        %v916 = vsel %vm886, %v855, %v856
        %v917 = vsel %vm886, %v854, %v855
        %v918 = vsel %vm886, %v885, %v854
        %v919 = vmul.f32 %v917, %v377
        %v920 = vmul.f32 %v916, %v377
        %v921 = vmul.f32 %v915, %v377
        %v922 = vmul.f32 %v914, %v377
        %v923 = vmul.f32 %v913, %v377
        %v924 = vmul.f32 %v912, %v377
        %v925 = vmul.f32 %v911, %v377
        %v926 = vmul.f32 %v910, %v377
        %v927 = vmul.f32 %v909, %v377
        %v928 = vmul.f32 %v908, %v377
        %v929 = vmul.f32 %v907, %v377
        %v930 = vmul.f32 %v906, %v377
        %v931 = vmul.f32 %v905, %v377
        %v932 = vmul.f32 %v904, %v377
        %v933 = vmul.f32 %v903, %v377
        %v934 = vmul.f32 %v902, %v377
        %v935 = vmul.f32 %v901, %v377
        %v936 = vmul.f32 %v900, %v377
        %v937 = vmul.f32 %v899, %v377
        %v938 = vmul.f32 %v898, %v377
        %v939 = vmul.f32 %v897, %v377
        %v940 = vmul.f32 %v896, %v377
        %v941 = vmul.f32 %v895, %v377
        %v942 = vmul.f32 %v894, %v377
        %v943 = vmul.f32 %v893, %v377
        %v944 = vmul.f32 %v892, %v377
        %v945 = vmul.f32 %v891, %v377
        %v946 = vmul.f32 %v890, %v377
        %v947 = vmul.f32 %v889, %v377
        %v948 = vmul.f32 %v888, %v377
        %v949 = vmul.f32 %v887, %v377
        %v950 = vmul.f32 %v918, %v377
        %951 = vst [vmem:[%s692 + $0x10] sm:$0xff] %v919
        %952 = vst [vmem:[%s692 + $0x28] sm:$0xff] %v920
        %953 = vst [vmem:[%s692 + $0x40] sm:$0xff] %v921
        %954 = vst [vmem:[%s692 + $0x58] sm:$0xff] %v922
        %955 = vst [vmem:[%s692 + $0x70] sm:$0xff] %v923
        %956 = vst [vmem:[%s692 + $0x88] sm:$0xff] %v924
        %957 = vst [vmem:[%s692 + $0xa0] sm:$0xff] %v925
        %958 = vst [vmem:[%s692 + $0xb8] sm:$0xff] %v926
        %959 = vst [vmem:[%s692 + $0x100] sm:$0xff] %v927
        %960 = vst [vmem:[%s692 + $0x118] sm:$0xff] %v928
        %961 = vst [vmem:[%s692 + $0x130] sm:$0xff] %v929
        %962 = vst [vmem:[%s692 + $0x148] sm:$0xff] %v930
        %963 = vst [vmem:[%s692 + $0x160] sm:$0xff] %v931
        %964 = vst [vmem:[%s692 + $0x178] sm:$0xff] %v932
        %965 = vst [vmem:[%s692 + $0x190] sm:$0xff] %v933
        %966 = vst [vmem:[%s692 + $0x1a8] sm:$0xff] %v934
        %967 = vst [vmem:[%s692 + $0x1f0] sm:$0xff] %v935
        %968 = vst [vmem:[%s692 + $0x208] sm:$0xff] %v936
        %969 = vst [vmem:[%s692 + $0x220] sm:$0xff] %v937
        %970 = vst [vmem:[%s692 + $0x238] sm:$0xff] %v938
        %971 = vst [vmem:[%s692 + $0x250] sm:$0xff] %v939
        %972 = vst [vmem:[%s692 + $0x268] sm:$0xff] %v940
        %973 = vst [vmem:[%s692 + $0x280] sm:$0xff] %v941
        %974 = vst [vmem:[%s692 + $0x298] sm:$0xff] %v942
        %975 = vst [vmem:[%s692 + $0x2e0] sm:$0xff] %v943
        %976 = vst [vmem:[%s692 + $0x2f8] sm:$0xff] %v944
        %977 = vst [vmem:[%s692 + $0x310] sm:$0xff] %v945
        %978 = vst [vmem:[%s692 + $0x328] sm:$0xff] %v946
        %979 = vst [vmem:[%s692 + $0x340] sm:$0xff] %v947
        %980 = vst [vmem:[%s692 + $0x358] sm:$0xff] %v948
        %981 = vst [vmem:[%s692 + $0x370] sm:$0xff] %v949
        %982 = vst [vmem:[%s692 + $0x388] sm:$0xff] %v950
        %v983 = vld [vmem:[#allocation2] sm:$0xff]
        %v984 = vld [vmem:[#allocation2 + $0x8] sm:$0xff]
        %v985 = vld [vmem:[#allocation2 + $0x10] sm:$0xff]
        %v986 = vld [vmem:[#allocation2 + $0x18] sm:$0xff]
        %v987 = vld [vmem:[#allocation2 + $0x20] sm:$0xff]
        %v988 = vld [vmem:[#allocation2 + $0x28] sm:$0xff]
        %v989 = vld [vmem:[#allocation2 + $0x30] sm:$0xff]
        %v990 = vld [vmem:[#allocation2 + $0x38] sm:$0xff]
        %v991 = vld [vmem:[#allocation2 + $0x40] sm:$0xff]
        %v992 = vld [vmem:[#allocation2 + $0x48] sm:$0xff]
        %v993 = vld [vmem:[#allocation2 + $0x50] sm:$0xff]
        %v994 = vld [vmem:[#allocation2 + $0x58] sm:$0xff]
        %v995 = vld [vmem:[#allocation2 + $0x60] sm:$0xff]
        %v996 = vld [vmem:[#allocation2 + $0x68] sm:$0xff]
        %v997 = vld [vmem:[#allocation2 + $0x70] sm:$0xff]
        %v998 = vld [vmem:[#allocation2 + $0x78] sm:$0xff]
        %v999 = vld [vmem:[#allocation2 + $0x80] sm:$0xff]
        %v1000 = vld [vmem:[#allocation2 + $0x88] sm:$0xff]
        %v1001 = vld [vmem:[#allocation2 + $0x90] sm:$0xff]
        %v1002 = vld [vmem:[#allocation2 + $0x98] sm:$0xff]
        %v1003 = vld [vmem:[#allocation2 + $0xa0] sm:$0xff]
        %v1004 = vld [vmem:[#allocation2 + $0xa8] sm:$0xff]
        %v1005 = vld [vmem:[#allocation2 + $0xb0] sm:$0xff]
        %v1006 = vld [vmem:[#allocation2 + $0xb8] sm:$0xff]
        %v1007 = vld [vmem:[#allocation2 + $0xf0] sm:$0xff]
        %v1008 = vld [vmem:[#allocation2 + $0xf8] sm:$0xff]
        %v1009 = vld [vmem:[#allocation2 + $0x100] sm:$0xff]
        %v1010 = vld [vmem:[#allocation2 + $0x108] sm:$0xff]
        %v1011 = vld [vmem:[#allocation2 + $0x110] sm:$0xff]
        %v1012 = vld [vmem:[#allocation2 + $0x118] sm:$0xff]
        %v1013 = vld [vmem:[#allocation2 + $0x120] sm:$0xff]
        %v1014 = vld [vmem:[#allocation2 + $0x128] sm:$0xff]
        %v1015 = vld [vmem:[#allocation2 + $0x130] sm:$0xff]
        %v1016 = vld [vmem:[#allocation2 + $0x138] sm:$0xff]
        %v1017 = vld [vmem:[#allocation2 + $0x140] sm:$0xff]
        %v1018 = vld [vmem:[#allocation2 + $0x148] sm:$0xff]
        %v1019 = vld [vmem:[#allocation2 + $0x150] sm:$0xff]
        %v1020 = vld [vmem:[#allocation2 + $0x158] sm:$0xff]
        %v1021 = vld [vmem:[#allocation2 + $0x160] sm:$0xff]
        %v1022 = vld [vmem:[#allocation2 + $0x168] sm:$0xff]
        %v1023 = vld [vmem:[#allocation2 + $0x170] sm:$0xff]
        %v1024 = vld [vmem:[#allocation2 + $0x178] sm:$0xff]
        %v1025 = vld [vmem:[#allocation2 + $0x180] sm:$0xff]
        %v1026 = vld [vmem:[#allocation2 + $0x188] sm:$0xff]
        %v1027 = vld [vmem:[#allocation2 + $0x190] sm:$0xff]
        %v1028 = vld [vmem:[#allocation2 + $0x198] sm:$0xff]
        %v1029 = vld [vmem:[#allocation2 + $0x1a0] sm:$0xff]
        %v1030 = vld [vmem:[#allocation2 + $0x1a8] sm:$0xff]
        %v1031 = vld [vmem:[#allocation2 + $0x1e0] sm:$0xff]
        %v1032 = vld [vmem:[#allocation2 + $0x1e8] sm:$0xff]
        %v1033 = vld [vmem:[#allocation2 + $0x1f0] sm:$0xff]
        %v1034 = vld [vmem:[#allocation2 + $0x1f8] sm:$0xff]
        %v1035 = vld [vmem:[#allocation2 + $0x200] sm:$0xff]
        %v1036 = vld [vmem:[#allocation2 + $0x208] sm:$0xff]
        %v1037 = vld [vmem:[#allocation2 + $0x210] sm:$0xff]
        %v1038 = vld [vmem:[#allocation2 + $0x218] sm:$0xff]
        %v1039 = vld [vmem:[#allocation2 + $0x220] sm:$0xff]
        %v1040 = vld [vmem:[#allocation2 + $0x228] sm:$0xff]
        %v1041 = vld [vmem:[#allocation2 + $0x230] sm:$0xff]
        %v1042 = vld [vmem:[#allocation2 + $0x238] sm:$0xff]
        %v1043 = vld [vmem:[#allocation2 + $0x240] sm:$0xff]
        %v1044 = vld [vmem:[#allocation2 + $0x248] sm:$0xff]
        %v1045 = vld [vmem:[#allocation2 + $0x250] sm:$0xff]
        %v1046 = vld [vmem:[#allocation2 + $0x258] sm:$0xff]
        %v1047 = vld [vmem:[#allocation2 + $0x260] sm:$0xff]
        %v1048 = vld [vmem:[#allocation2 + $0x268] sm:$0xff]
        %v1049 = vld [vmem:[#allocation2 + $0x270] sm:$0xff]
        %v1050 = vld [vmem:[#allocation2 + $0x278] sm:$0xff]
        %v1051 = vld [vmem:[#allocation2 + $0x280] sm:$0xff]
        %v1052 = vld [vmem:[#allocation2 + $0x288] sm:$0xff]
        %v1053 = vld [vmem:[#allocation2 + $0x290] sm:$0xff]
        %v1054 = vld [vmem:[#allocation2 + $0x298] sm:$0xff]
        %v1055 = vld [vmem:[#allocation2 + $0x2d0] sm:$0xff]
        %v1056 = vld [vmem:[#allocation2 + $0x2d8] sm:$0xff]
        %v1057 = vld [vmem:[#allocation2 + $0x2e0] sm:$0xff]
        %v1058 = vld [vmem:[#allocation2 + $0x2e8] sm:$0xff]
        %v1059 = vld [vmem:[#allocation2 + $0x2f0] sm:$0xff]
        %v1060 = vld [vmem:[#allocation2 + $0x2f8] sm:$0xff]
        %v1061 = vld [vmem:[#allocation2 + $0x300] sm:$0xff]
        %v1062 = vld [vmem:[#allocation2 + $0x308] sm:$0xff]
        %v1063 = vld [vmem:[#allocation2 + $0x310] sm:$0xff]
        %v1064 = vld [vmem:[#allocation2 + $0x318] sm:$0xff]
        %v1065 = vld [vmem:[#allocation2 + $0x320] sm:$0xff]
        %v1066 = vld [vmem:[#allocation2 + $0x328] sm:$0xff]
        %v1067 = vld [vmem:[#allocation2 + $0x330] sm:$0xff]
        %v1068 = vld [vmem:[#allocation2 + $0x338] sm:$0xff]
        %v1069 = vld [vmem:[#allocation2 + $0x340] sm:$0xff]
        %v1070 = vld [vmem:[#allocation2 + $0x348] sm:$0xff]
        %v1071 = vld [vmem:[#allocation2 + $0x350] sm:$0xff]
        %v1072 = vld [vmem:[#allocation2 + $0x358] sm:$0xff]
        %v1073 = vld [vmem:[#allocation2 + $0x360] sm:$0xff]
        %v1074 = vld [vmem:[#allocation2 + $0x368] sm:$0xff]
        %v1075 = vld [vmem:[#allocation2 + $0x370] sm:$0xff]
        %v1076 = vld [vmem:[#allocation2 + $0x378] sm:$0xff]
        %v1077 = vld [vmem:[#allocation2 + $0x380] sm:$0xff]
        %v1078 = vld [vmem:[#allocation2 + $0x388] sm:$0xff]
        %v1079 = vpack.c.bf16 %v986, %v983
        %v1080 = vpack.c.bf16 %v987, %v984
        %v1081 = vpack.c.bf16 %v988, %v985
        %v1082 = vpack.c.bf16 %v992, %v989
        %v1083 = vpack.c.bf16 %v993, %v990
        %v1084 = vpack.c.bf16 %v994, %v991
        %v1085 = vpack.c.bf16 %v998, %v995
        %v1086 = vpack.c.bf16 %v999, %v996
        %v1087 = vpack.c.bf16 %v1000, %v997
        %v1088 = vpack.c.bf16 %v1004, %v1001
        %v1089 = vpack.c.bf16 %v1005, %v1002
        %v1090 = vpack.c.bf16 %v1006, %v1003
        %v1091 = vpack.c.bf16 %v1010, %v1007
        %v1092 = vpack.c.bf16 %v1011, %v1008
        %v1093 = vpack.c.bf16 %v1012, %v1009
        %v1094 = vpack.c.bf16 %v1016, %v1013
        %v1095 = vpack.c.bf16 %v1017, %v1014
        %v1096 = vpack.c.bf16 %v1018, %v1015
        %v1097 = vpack.c.bf16 %v1022, %v1019
        %v1098 = vpack.c.bf16 %v1023, %v1020
        %v1099 = vpack.c.bf16 %v1024, %v1021
        %v1100 = vpack.c.bf16 %v1028, %v1025
        %v1101 = vpack.c.bf16 %v1029, %v1026
        %v1102 = vpack.c.bf16 %v1030, %v1027
        %v1103 = vpack.c.bf16 %v1034, %v1031
        %v1104 = vpack.c.bf16 %v1035, %v1032
        %v1105 = vpack.c.bf16 %v1036, %v1033
        %v1106 = vpack.c.bf16 %v1040, %v1037
        %v1107 = vpack.c.bf16 %v1041, %v1038
        %v1108 = vpack.c.bf16 %v1042, %v1039
        %v1109 = vpack.c.bf16 %v1046, %v1043
        %v1110 = vpack.c.bf16 %v1047, %v1044
        %v1111 = vpack.c.bf16 %v1048, %v1045
        %v1112 = vpack.c.bf16 %v1052, %v1049
        %v1113 = vpack.c.bf16 %v1053, %v1050
        %v1114 = vpack.c.bf16 %v1054, %v1051
        %v1115 = vpack.c.bf16 %v1058, %v1055
        %v1116 = vpack.c.bf16 %v1059, %v1056
        %v1117 = vpack.c.bf16 %v1060, %v1057
        %v1118 = vpack.c.bf16 %v1064, %v1061
        %v1119 = vpack.c.bf16 %v1065, %v1062
        %v1120 = vpack.c.bf16 %v1066, %v1063
        %v1121 = vpack.c.bf16 %v1070, %v1067
        %v1122 = vpack.c.bf16 %v1071, %v1068
        %v1123 = vpack.c.bf16 %v1072, %v1069
        %v1124 = vpack.c.bf16 %v1076, %v1073
        %v1125 = vpack.c.bf16 %v1077, %v1074
        %v1126 = vpack.c.bf16 %v1078, %v1075
        %v1127 = vld [vmem:[#allocation9] sm:$0xf]
        %v1128 = vld [vmem:[#allocation9 + $0x4] sm:$0xf]
        %v1129 = vld [vmem:[#allocation9 + $0x8] sm:$0xf]
        %v1130 = vld [vmem:[#allocation9 + $0xc] sm:$0xf]
        %v1131 = vld [vmem:[#allocation9 + $0x10] sm:$0xf]
        %v1132 = vld [vmem:[#allocation9 + $0x14] sm:$0xf]
        %v1133 = vld [vmem:[#allocation9 + $0x18] sm:$0xf]
        %v1134 = vld [vmem:[#allocation9 + $0x1c] sm:$0xf]
        %v1135 = vld [vmem:[#allocation9 + $0x20] sm:$0xf]
        %v1136 = vld [vmem:[#allocation9 + $0x24] sm:$0xf]
        %v1137 = vld [vmem:[#allocation9 + $0x28] sm:$0xf]
        %v1138 = vld [vmem:[#allocation9 + $0x2c] sm:$0xf]
        %v1139 = vld [vmem:[#allocation9 + $0x30] sm:$0xf]
        %v1140 = vld [vmem:[#allocation9 + $0x34] sm:$0xf]
        %v1141 = vld [vmem:[#allocation9 + $0x38] sm:$0xf]
        %v1142 = vld [vmem:[#allocation9 + $0x3c] sm:$0xf]
        %v1143 = vld [vmem:[#allocation9 + $0x40] sm:$0xf]
        %v1144 = vld [vmem:[#allocation9 + $0x44] sm:$0xf]
        %v1145 = vld [vmem:[#allocation9 + $0x48] sm:$0xf]
        %v1146 = vld [vmem:[#allocation9 + $0x4c] sm:$0xf]
        %v1147 = vld [vmem:[#allocation9 + $0x50] sm:$0xf]
        %v1148 = vld [vmem:[#allocation9 + $0x54] sm:$0xf]
        %v1149 = vld [vmem:[#allocation9 + $0x58] sm:$0xf]
        %v1150 = vld [vmem:[#allocation9 + $0x5c] sm:$0xf]
        %v1151 = vld [vmem:[#allocation9 + $0x60] sm:$0xf]
        %v1152 = vld [vmem:[#allocation9 + $0x64] sm:$0xf]
        %v1153 = vld [vmem:[#allocation9 + $0x68] sm:$0xf]
        %v1154 = vld [vmem:[#allocation9 + $0x6c] sm:$0xf]
        %v1155 = vld [vmem:[#allocation9 + $0x70] sm:$0xf]
        %v1156 = vld [vmem:[#allocation9 + $0x74] sm:$0xf]
        %v1157 = vld [vmem:[#allocation9 + $0x78] sm:$0xf]
        %v1158 = vld [vmem:[#allocation9 + $0x7c] sm:$0xf]
        %v1159 = vld [vmem:[#allocation9 + $0x80] sm:$0xf]
        %v1160 = vld [vmem:[#allocation9 + $0x84] sm:$0xf]
        %v1161 = vld [vmem:[#allocation9 + $0x88] sm:$0xf]
        %v1162 = vld [vmem:[#allocation9 + $0x8c] sm:$0xf]
        %v1163 = vld [vmem:[#allocation9 + $0x90] sm:$0xf]
        %v1164 = vld [vmem:[#allocation9 + $0x94] sm:$0xf]
        %v1165 = vld [vmem:[#allocation9 + $0x98] sm:$0xf]
        %v1166 = vld [vmem:[#allocation9 + $0x9c] sm:$0xf]
        %v1167 = vld [vmem:[#allocation9 + $0xa0] sm:$0xf]
        %v1168 = vld [vmem:[#allocation9 + $0xa4] sm:$0xf]
        %v1169 = vld [vmem:[#allocation9 + $0xa8] sm:$0xf]
        %v1170 = vld [vmem:[#allocation9 + $0xac] sm:$0xf]
        %v1171 = vld [vmem:[#allocation9 + $0xb0] sm:$0xf]
        %v1172 = vld [vmem:[#allocation9 + $0xb4] sm:$0xf]
        %v1173 = vld [vmem:[#allocation9 + $0xb8] sm:$0xf]
        %v1174 = vld [vmem:[#allocation9 + $0xbc] sm:$0xf]
        %v1175 = vld [vmem:[%s4] sm:$0x1]
        %v1177 = vlaneseq
        %v1178 = vshrl.u32 %v1177, 7
        %v1179 = vsub.s32 0, %v1178
        %v1180 = vrot.slane %v1175, %v1179
        %v1230 = vunpack.c.l.b16 %v1127
        %v1231 = vunpack.c.l.b16 %v1128
        %v1232 = vunpack.c.l.b16 %v1129
        %v1233 = vunpack.c.l.b16 %v1130
        %v1234 = vunpack.c.l.b16 %v1131
        %v1235 = vunpack.c.l.b16 %v1132
        %v1236 = vunpack.c.l.b16 %v1133
        %v1237 = vunpack.c.l.b16 %v1134
        %v1238 = vunpack.c.l.b16 %v1135
        %v1239 = vunpack.c.l.b16 %v1136
        %v1240 = vunpack.c.l.b16 %v1137
        %v1241 = vunpack.c.l.b16 %v1138
        %v1242 = vunpack.c.l.b16 %v1139
        %v1243 = vunpack.c.l.b16 %v1140
        %v1244 = vunpack.c.l.b16 %v1141
        %v1245 = vunpack.c.l.b16 %v1142
        %v1246 = vunpack.c.l.b16 %v1143
        %v1247 = vunpack.c.l.b16 %v1144
        %v1248 = vunpack.c.l.b16 %v1145
        %v1249 = vunpack.c.l.b16 %v1146
        %v1250 = vunpack.c.l.b16 %v1147
        %v1251 = vunpack.c.l.b16 %v1148
        %v1252 = vunpack.c.l.b16 %v1149
        %v1253 = vunpack.c.l.b16 %v1150
        %v1254 = vunpack.c.l.b16 %v1151
        %v1255 = vunpack.c.l.b16 %v1152
        %v1256 = vunpack.c.l.b16 %v1153
        %v1257 = vunpack.c.l.b16 %v1154
        %v1258 = vunpack.c.l.b16 %v1155
        %v1259 = vunpack.c.l.b16 %v1156
        %v1260 = vunpack.c.l.b16 %v1157
        %v1261 = vunpack.c.l.b16 %v1158
        %v1262 = vunpack.c.l.b16 %v1159
        %v1263 = vunpack.c.l.b16 %v1160
        %v1264 = vunpack.c.l.b16 %v1161
        %v1265 = vunpack.c.l.b16 %v1162
        %v1266 = vunpack.c.l.b16 %v1163
        %v1267 = vunpack.c.l.b16 %v1164
        %v1268 = vunpack.c.l.b16 %v1165
        %v1269 = vunpack.c.l.b16 %v1166
        %v1270 = vunpack.c.l.b16 %v1167
        %v1271 = vunpack.c.l.b16 %v1168
        %v1272 = vunpack.c.l.b16 %v1169
        %v1273 = vunpack.c.l.b16 %v1170
        %v1274 = vunpack.c.l.b16 %v1171
        %v1275 = vunpack.c.l.b16 %v1172
        %v1276 = vunpack.c.l.b16 %v1173
        %v1277 = vunpack.c.l.b16 %v1174
        %v1278 = vpack.c.b16 %v1231, %v1230
        %v1279 = vpack.c.b16 %v1233, %v1232
        %v1280 = vpack.c.b16 %v1235, %v1234
        %v1281 = vpack.c.b16 %v1237, %v1236
        %v1282 = vpack.c.b16 %v1239, %v1238
        %v1283 = vpack.c.b16 %v1241, %v1240
        %v1284 = vpack.c.b16 %v1243, %v1242
        %v1285 = vpack.c.b16 %v1245, %v1244
        %v1286 = vpack.c.b16 %v1247, %v1246
        %v1287 = vpack.c.b16 %v1249, %v1248
        %v1288 = vpack.c.b16 %v1251, %v1250
        %v1289 = vpack.c.b16 %v1253, %v1252
        %v1290 = vpack.c.b16 %v1255, %v1254
        %v1291 = vpack.c.b16 %v1257, %v1256
        %v1292 = vpack.c.b16 %v1259, %v1258
        %v1293 = vpack.c.b16 %v1261, %v1260
        %v1294 = vpack.c.b16 %v1263, %v1262
        %v1295 = vpack.c.b16 %v1265, %v1264
        %v1296 = vpack.c.b16 %v1267, %v1266
        %v1297 = vpack.c.b16 %v1269, %v1268
        %v1298 = vpack.c.b16 %v1271, %v1270
        %v1299 = vpack.c.b16 %v1273, %v1272
        %v1300 = vpack.c.b16 %v1275, %v1274
        %v1301 = vpack.c.b16 %v1277, %v1276
        %1326 = vmatprep.subr.bf16.mxu0 0
        %1327 = vmatpush1.bf16.msra.mxu0 %v1285
        %1328 = vmatprep.subr.bf16.mxu0 0
        %1329 = vmatpush1.bf16.msra.mxu0 %v1284
        %1330 = vmatprep.subr.bf16.mxu0 0
        %1331 = vmatpush1.bf16.msra.mxu0 %v1283
        %1332 = vmatprep.subr.bf16.mxu0 0
        %1333 = vmatpush1.bf16.msra.mxu0 %v1282
        %1334 = vmatprep.subr.bf16.mxu0 0
        %1335 = vmatpush1.bf16.msra.mxu0 %v1281
        %1336 = vmatprep.subr.bf16.mxu0 0
        %1337 = vmatpush1.bf16.msra.mxu0 %v1280
        %1338 = vmatprep.subr.bf16.mxu0 0
        %1339 = vmatpush1.bf16.msra.mxu0 %v1279
        %1340 = vmatprep.subr.bf16.mxu0 0
        %1341 = vmatpush1.bf16.msra.mxu0 %v1278
        %1342 = vmatprep.subr.bf16.mxu0 0
        %1343 = vmatpush2.bf16.msra.mxu0 %v1293
        %1344 = vmatprep.subr.bf16.mxu0 0
        %1345 = vmatpush2.bf16.msra.mxu0 %v1292
        %1346 = vmatprep.subr.bf16.mxu0 0
        %1347 = vmatpush2.bf16.msra.mxu0 %v1291
        %1348 = vmatprep.subr.bf16.mxu0 0
        %1349 = vmatpush2.bf16.msra.mxu0 %v1290
        %1350 = vmatprep.subr.bf16.mxu0 0
        %1351 = vmatpush2.bf16.msra.mxu0 %v1289
        %1352 = vmatprep.subr.bf16.mxu0 0
        %1353 = vmatpush2.bf16.msra.mxu0 %v1288
        %1354 = vmatprep.subr.bf16.mxu0 0
        %1355 = vmatpush2.bf16.msra.mxu0 %v1287
        %1356 = vmatprep.subr.bf16.mxu0 0
        %1357 = vmatpush2.bf16.msra.mxu0 %v1286
        %1358 = vmatprep.mubr.bf16.mxu0 %v1080
        %1359 = vmatmul.mubr.bf16.gmra.mxu0 %v1079
        %v1360 = vpop.f32.mrf.mxu0
        %v1361 = vadd.f32 %v1180, %v1360
        %v1362 = vpop.f32.mrf.mxu0
        %v1363 = vpop.f32.mrf.mxu0
        %v1364 = vadd.f32 %v1180, %v1363
        %v1365 = vpop.f32.mrf.mxu0
        %1366 = vmatprep.mubr.bf16.mxu0 %v1083
        %1367 = vmatmul.mubr.bf16.gmra.mxu0 %v1082
        %v1368 = vpop.f32.mrf.mxu0
        %v1369 = vadd.f32 %v1180, %v1368
        %v1370 = vpop.f32.mrf.mxu0
        %v1371 = vpop.f32.mrf.mxu0
        %v1372 = vadd.f32 %v1180, %v1371
        %v1373 = vpop.f32.mrf.mxu0
        %1374 = vmatprep.mubr.bf16.mxu0 %v1086
        %1375 = vmatmul.mubr.bf16.gmra.mxu0 %v1085
        %v1376 = vpop.f32.mrf.mxu0
        %v1377 = vadd.f32 %v1180, %v1376
        %v1378 = vpop.f32.mrf.mxu0
        %v1379 = vpop.f32.mrf.mxu0
        %v1380 = vadd.f32 %v1180, %v1379
        %v1381 = vpop.f32.mrf.mxu0
        %1382 = vmatprep.mubr.bf16.mxu0 %v1089
        %1383 = vmatmul.mubr.bf16.gmra.mxu0 %v1088
        %v1384 = vpop.f32.mrf.mxu0
        %v1385 = vadd.f32 %v1180, %v1384
        %v1386 = vpop.f32.mrf.mxu0
        %v1387 = vpop.f32.mrf.mxu0
        %v1388 = vadd.f32 %v1180, %v1387
        %v1389 = vpop.f32.mrf.mxu0
        %1390 = vmatprep.mubr.bf16.mxu0 %v1092
        %1391 = vmatmul.mubr.bf16.gmra.mxu0 %v1091
        %v1392 = vpop.f32.mrf.mxu0
        %v1393 = vadd.f32 %v1180, %v1392
        %v1394 = vpop.f32.mrf.mxu0
        %v1395 = vpop.f32.mrf.mxu0
        %v1396 = vadd.f32 %v1180, %v1395
        %v1397 = vpop.f32.mrf.mxu0
        %1398 = vmatprep.mubr.bf16.mxu0 %v1095
        %1399 = vmatmul.mubr.bf16.gmra.mxu0 %v1094
        %v1400 = vpop.f32.mrf.mxu0
        %v1401 = vadd.f32 %v1180, %v1400
        %v1402 = vpop.f32.mrf.mxu0
        %v1403 = vpop.f32.mrf.mxu0
        %v1404 = vadd.f32 %v1180, %v1403
        %v1405 = vpop.f32.mrf.mxu0
        %1406 = vmatprep.mubr.bf16.mxu0 %v1098
        %1407 = vmatmul.mubr.bf16.gmra.mxu0 %v1097
        %v1408 = vpop.f32.mrf.mxu0
        %v1409 = vadd.f32 %v1180, %v1408
        %v1410 = vpop.f32.mrf.mxu0
        %v1411 = vpop.f32.mrf.mxu0
        %v1412 = vadd.f32 %v1180, %v1411
        %v1413 = vpop.f32.mrf.mxu0
        %1414 = vmatprep.mubr.bf16.mxu0 %v1101
        %1415 = vmatmul.mubr.bf16.gmra.mxu0 %v1100
        %v1416 = vpop.f32.mrf.mxu0
        %v1417 = vadd.f32 %v1180, %v1416
        %v1418 = vpop.f32.mrf.mxu0
        %v1419 = vpop.f32.mrf.mxu0
        %v1420 = vadd.f32 %v1180, %v1419
        %v1421 = vpop.f32.mrf.mxu0
        %1422 = vmatprep.mubr.bf16.mxu0 %v1104
        %1423 = vmatmul.mubr.bf16.gmra.mxu0 %v1103
        %v1424 = vpop.f32.mrf.mxu0
        %v1425 = vadd.f32 %v1180, %v1424
        %v1426 = vpop.f32.mrf.mxu0
        %v1427 = vpop.f32.mrf.mxu0
        %v1428 = vadd.f32 %v1180, %v1427
        %v1429 = vpop.f32.mrf.mxu0
        %1430 = vmatprep.mubr.bf16.mxu0 %v1107
        %1431 = vmatmul.mubr.bf16.gmra.mxu0 %v1106
        %v1432 = vpop.f32.mrf.mxu0
        %v1433 = vadd.f32 %v1180, %v1432
        %v1434 = vpop.f32.mrf.mxu0
        %v1435 = vpop.f32.mrf.mxu0
        %v1436 = vadd.f32 %v1180, %v1435
        %v1437 = vpop.f32.mrf.mxu0
        %1438 = vmatprep.mubr.bf16.mxu0 %v1110
        %1439 = vmatmul.mubr.bf16.gmra.mxu0 %v1109
        %v1440 = vpop.f32.mrf.mxu0
        %v1441 = vadd.f32 %v1180, %v1440
        %v1442 = vpop.f32.mrf.mxu0
        %v1443 = vpop.f32.mrf.mxu0
        %v1444 = vadd.f32 %v1180, %v1443
        %v1445 = vpop.f32.mrf.mxu0
        %1446 = vmatprep.mubr.bf16.mxu0 %v1113
        %1447 = vmatmul.mubr.bf16.gmra.mxu0 %v1112
        %v1448 = vpop.f32.mrf.mxu0
        %v1449 = vadd.f32 %v1180, %v1448
        %v1450 = vpop.f32.mrf.mxu0
        %v1451 = vpop.f32.mrf.mxu0
        %v1452 = vadd.f32 %v1180, %v1451
        %v1453 = vpop.f32.mrf.mxu0
        %1454 = vmatprep.mubr.bf16.mxu0 %v1116
        %1455 = vmatmul.mubr.bf16.gmra.mxu0 %v1115
        %v1456 = vpop.f32.mrf.mxu0
        %v1457 = vadd.f32 %v1180, %v1456
        %v1458 = vpop.f32.mrf.mxu0
        %v1459 = vpop.f32.mrf.mxu0
        %v1460 = vadd.f32 %v1180, %v1459
        %v1461 = vpop.f32.mrf.mxu0
        %1462 = vmatprep.mubr.bf16.mxu0 %v1119
        %1463 = vmatmul.mubr.bf16.gmra.mxu0 %v1118
        %v1464 = vpop.f32.mrf.mxu0
        %v1465 = vadd.f32 %v1180, %v1464
        %v1466 = vpop.f32.mrf.mxu0
        %v1467 = vpop.f32.mrf.mxu0
        %v1468 = vadd.f32 %v1180, %v1467
        %v1469 = vpop.f32.mrf.mxu0
        %1470 = vmatprep.mubr.bf16.mxu0 %v1122
        %1471 = vmatmul.mubr.bf16.gmra.mxu0 %v1121
        %v1472 = vpop.f32.mrf.mxu0
        %v1473 = vadd.f32 %v1180, %v1472
        %v1474 = vpop.f32.mrf.mxu0
        %v1475 = vpop.f32.mrf.mxu0
        %v1476 = vadd.f32 %v1180, %v1475
        %v1477 = vpop.f32.mrf.mxu0
        %1478 = vmatprep.mubr.bf16.mxu0 %v1125
        %1479 = vmatmul.mubr.bf16.gmra.mxu0 %v1124
        %v1480 = vpop.f32.mrf.mxu0
        %v1481 = vadd.f32 %v1180, %v1480
        %v1482 = vpop.f32.mrf.mxu0
        %v1483 = vpop.f32.mrf.mxu0
        %v1484 = vadd.f32 %v1180, %v1483
        %v1485 = vpop.f32.mrf.mxu0
        %1486 = vdwg.mxu0
        %1487 = vmatprep.subr.bf16.mxu0 0
        %1488 = vmatpush1.bf16.msra.mxu0 %v1301
        %1489 = vmatprep.subr.bf16.mxu0 0
        %1490 = vmatpush1.bf16.msra.mxu0 %v1300
        %1491 = vmatprep.subr.bf16.mxu0 0
        %1492 = vmatpush1.bf16.msra.mxu0 %v1299
        %1493 = vmatprep.subr.bf16.mxu0 0
        %1494 = vmatpush1.bf16.msra.mxu0 %v1298
        %1495 = vmatprep.subr.bf16.mxu0 0
        %1496 = vmatpush1.bf16.msra.mxu0 %v1297
        %1497 = vmatprep.subr.bf16.mxu0 0
        %1498 = vmatpush1.bf16.msra.mxu0 %v1296
        %1499 = vmatprep.subr.bf16.mxu0 0
        %1500 = vmatpush1.bf16.msra.mxu0 %v1295
        %1501 = vmatprep.subr.bf16.mxu0 0
        %1502 = vmatpush1.bf16.msra.mxu0 %v1294
        %1503 = vmatprep.subr.bf16.mxu0 0
        %1504 = vmatpush2.bf16.msra.mxu0 0
        %1505 = vmatprep.subr.bf16.mxu0 0
        %1506 = vmatpush2.bf16.msra.mxu0 0
        %1507 = vmatprep.subr.bf16.mxu0 0
        %1508 = vmatpush2.bf16.msra.mxu0 0
        %1509 = vmatprep.subr.bf16.mxu0 0
        %1510 = vmatpush2.bf16.msra.mxu0 0
        %1511 = vmatprep.subr.bf16.mxu0 0
        %1512 = vmatpush2.bf16.msra.mxu0 0
        %1513 = vmatprep.subr.bf16.mxu0 0
        %1514 = vmatpush2.bf16.msra.mxu0 0
        %1515 = vmatprep.subr.bf16.mxu0 0
        %1516 = vmatpush2.bf16.msra.mxu0 0
        %1517 = vmatprep.subr.bf16.mxu0 0
        %1518 = vmatpush2.bf16.msra.mxu0 0
        %1519 = vmatprep.mubr.bf16.mxu0 0
        %1520 = vmatmul.mubr.bf16.gmra.mxu0 %v1081
        %v1521 = vpop.f32.mrf.mxu0
        %v1522 = vadd.f32 %v1361, %v1521
        %v1523 = vpop.f32.mrf.mxu0
        %v1524 = vpop.f32.mrf.mxu0
        %v1525 = vadd.f32 %v1364, %v1524
        %v1526 = vpop.f32.mrf.mxu0
        %1527 = vmatprep.mubr.bf16.mxu0 0
        %1528 = vmatmul.mubr.bf16.gmra.mxu0 %v1084
        %v1529 = vpop.f32.mrf.mxu0
        %v1530 = vadd.f32 %v1369, %v1529
        %v1531 = vpop.f32.mrf.mxu0
        %v1532 = vpop.f32.mrf.mxu0
        %v1533 = vadd.f32 %v1372, %v1532
        %v1534 = vpop.f32.mrf.mxu0
        %1535 = vmatprep.mubr.bf16.mxu0 0
        %1536 = vmatmul.mubr.bf16.gmra.mxu0 %v1087
        %v1537 = vpop.f32.mrf.mxu0
        %v1538 = vadd.f32 %v1377, %v1537
        %v1539 = vpop.f32.mrf.mxu0
        %v1540 = vpop.f32.mrf.mxu0
        %v1541 = vadd.f32 %v1380, %v1540
        %v1542 = vpop.f32.mrf.mxu0
        %1543 = vmatprep.mubr.bf16.mxu0 0
        %1544 = vmatmul.mubr.bf16.gmra.mxu0 %v1090
        %v1545 = vpop.f32.mrf.mxu0
        %v1546 = vadd.f32 %v1385, %v1545
        %v1547 = vpop.f32.mrf.mxu0
        %v1548 = vpop.f32.mrf.mxu0
        %v1549 = vadd.f32 %v1388, %v1548
        %v1550 = vpop.f32.mrf.mxu0
        %1551 = vmatprep.mubr.bf16.mxu0 0
        %1552 = vmatmul.mubr.bf16.gmra.mxu0 %v1093
        %v1553 = vpop.f32.mrf.mxu0
        %v1554 = vadd.f32 %v1393, %v1553
        %v1555 = vpop.f32.mrf.mxu0
        %v1556 = vpop.f32.mrf.mxu0
        %v1557 = vadd.f32 %v1396, %v1556
        %v1558 = vpop.f32.mrf.mxu0
        %1559 = vmatprep.mubr.bf16.mxu0 0
        %1560 = vmatmul.mubr.bf16.gmra.mxu0 %v1096
        %v1561 = vpop.f32.mrf.mxu0
        %v1562 = vadd.f32 %v1401, %v1561
        %v1563 = vpop.f32.mrf.mxu0
        %v1564 = vpop.f32.mrf.mxu0
        %v1565 = vadd.f32 %v1404, %v1564
        %v1566 = vpop.f32.mrf.mxu0
        %1567 = vmatprep.mubr.bf16.mxu0 0
        %1568 = vmatmul.mubr.bf16.gmra.mxu0 %v1099
        %v1569 = vpop.f32.mrf.mxu0
        %v1570 = vadd.f32 %v1409, %v1569
        %v1571 = vpop.f32.mrf.mxu0
        %v1572 = vpop.f32.mrf.mxu0
        %v1573 = vadd.f32 %v1412, %v1572
        %v1574 = vpop.f32.mrf.mxu0
        %1575 = vmatprep.mubr.bf16.mxu0 0
        %1576 = vmatmul.mubr.bf16.gmra.mxu0 %v1102
        %v1577 = vpop.f32.mrf.mxu0
        %v1578 = vadd.f32 %v1417, %v1577
        %v1579 = vpop.f32.mrf.mxu0
        %v1580 = vpop.f32.mrf.mxu0
        %v1581 = vadd.f32 %v1420, %v1580
        %v1582 = vpop.f32.mrf.mxu0
        %1583 = vmatprep.mubr.bf16.mxu0 0
        %1584 = vmatmul.mubr.bf16.gmra.mxu0 %v1105
        %v1585 = vpop.f32.mrf.mxu0
        %v1586 = vadd.f32 %v1425, %v1585
        %v1587 = vpop.f32.mrf.mxu0
        %v1588 = vpop.f32.mrf.mxu0
        %v1589 = vadd.f32 %v1428, %v1588
        %v1590 = vpop.f32.mrf.mxu0
        %1591 = vmatprep.mubr.bf16.mxu0 0
        %1592 = vmatmul.mubr.bf16.gmra.mxu0 %v1108
        %v1593 = vpop.f32.mrf.mxu0
        %v1594 = vadd.f32 %v1433, %v1593
        %v1595 = vpop.f32.mrf.mxu0
        %v1596 = vpop.f32.mrf.mxu0
        %v1597 = vadd.f32 %v1436, %v1596
        %v1598 = vpop.f32.mrf.mxu0
        %1599 = vmatprep.mubr.bf16.mxu0 0
        %1600 = vmatmul.mubr.bf16.gmra.mxu0 %v1111
        %v1601 = vpop.f32.mrf.mxu0
        %v1602 = vadd.f32 %v1441, %v1601
        %v1603 = vpop.f32.mrf.mxu0
        %v1604 = vpop.f32.mrf.mxu0
        %v1605 = vadd.f32 %v1444, %v1604
        %v1606 = vpop.f32.mrf.mxu0
        %1607 = vmatprep.mubr.bf16.mxu0 0
        %1608 = vmatmul.mubr.bf16.gmra.mxu0 %v1114
        %v1609 = vpop.f32.mrf.mxu0
        %v1610 = vadd.f32 %v1449, %v1609
        %v1611 = vpop.f32.mrf.mxu0
        %v1612 = vpop.f32.mrf.mxu0
        %v1613 = vadd.f32 %v1452, %v1612
        %v1614 = vpop.f32.mrf.mxu0
        %1615 = vmatprep.mubr.bf16.mxu0 0
        %1616 = vmatmul.mubr.bf16.gmra.mxu0 %v1117
        %v1617 = vpop.f32.mrf.mxu0
        %v1618 = vadd.f32 %v1457, %v1617
        %v1619 = vpop.f32.mrf.mxu0
        %v1620 = vpop.f32.mrf.mxu0
        %v1621 = vadd.f32 %v1460, %v1620
        %v1622 = vpop.f32.mrf.mxu0
        %1623 = vmatprep.mubr.bf16.mxu0 0
        %1624 = vmatmul.mubr.bf16.gmra.mxu0 %v1120
        %v1625 = vpop.f32.mrf.mxu0
        %v1626 = vadd.f32 %v1465, %v1625
        %v1627 = vpop.f32.mrf.mxu0
        %v1628 = vpop.f32.mrf.mxu0
        %v1629 = vadd.f32 %v1468, %v1628
        %v1630 = vpop.f32.mrf.mxu0
        %1631 = vmatprep.mubr.bf16.mxu0 0
        %1632 = vmatmul.mubr.bf16.gmra.mxu0 %v1123
        %v1633 = vpop.f32.mrf.mxu0
        %v1634 = vadd.f32 %v1473, %v1633
        %v1635 = vpop.f32.mrf.mxu0
        %v1636 = vpop.f32.mrf.mxu0
        %v1637 = vadd.f32 %v1476, %v1636
        %v1638 = vpop.f32.mrf.mxu0
        %1639 = vmatprep.mubr.bf16.mxu0 0
        %1640 = vmatmul.mubr.bf16.gmra.mxu0 %v1126
        %v1641 = vpop.f32.mrf.mxu0
        %v1642 = vadd.f32 %v1481, %v1641
        %v1643 = vpop.f32.mrf.mxu0
        %v1644 = vpop.f32.mrf.mxu0
        %v1645 = vadd.f32 %v1484, %v1644
        %v1646 = vpop.f32.mrf.mxu0
        %1647 = vdwg.mxu0
        %1648 = vst [vmem:[#allocation3] sm:$0xff] %v1522
        %1649 = vst [vmem:[#allocation3 + $0x8] sm:$0xff] %v1525
        %1650 = vst [vmem:[#allocation3 + $0x10] sm:$0xff] %v1530
        %1651 = vst [vmem:[#allocation3 + $0x18] sm:$0xff] %v1533
        %1652 = vst [vmem:[#allocation3 + $0x20] sm:$0xff] %v1538
        %1653 = vst [vmem:[#allocation3 + $0x28] sm:$0xff] %v1541
        %1654 = vst [vmem:[#allocation3 + $0x30] sm:$0xff] %v1546
        %1655 = vst [vmem:[#allocation3 + $0x38] sm:$0xff] %v1549
        %1656 = vst [vmem:[#allocation3 + $0x40] sm:$0xff] %v1554
        %1657 = vst [vmem:[#allocation3 + $0x48] sm:$0xff] %v1557
        %1658 = vst [vmem:[#allocation3 + $0x50] sm:$0xff] %v1562
        %1659 = vst [vmem:[#allocation3 + $0x58] sm:$0xff] %v1565
        %1660 = vst [vmem:[#allocation3 + $0x60] sm:$0xff] %v1570
        %1661 = vst [vmem:[#allocation3 + $0x68] sm:$0xff] %v1573
        %1662 = vst [vmem:[#allocation3 + $0x70] sm:$0xff] %v1578
        %1663 = vst [vmem:[#allocation3 + $0x78] sm:$0xff] %v1581
        %1664 = vst [vmem:[#allocation3 + $0x80] sm:$0xff] %v1586
        %1665 = vst [vmem:[#allocation3 + $0x88] sm:$0xff] %v1589
        %1666 = vst [vmem:[#allocation3 + $0x90] sm:$0xff] %v1594
        %1667 = vst [vmem:[#allocation3 + $0x98] sm:$0xff] %v1597
        %1668 = vst [vmem:[#allocation3 + $0xa0] sm:$0xff] %v1602
        %1669 = vst [vmem:[#allocation3 + $0xa8] sm:$0xff] %v1605
        %1670 = vst [vmem:[#allocation3 + $0xb0] sm:$0xff] %v1610
        %1671 = vst [vmem:[#allocation3 + $0xb8] sm:$0xff] %v1613
        %1672 = vst [vmem:[#allocation3 + $0xc0] sm:$0xff] %v1618
        %1673 = vst [vmem:[#allocation3 + $0xc8] sm:$0xff] %v1621
        %1674 = vst [vmem:[#allocation3 + $0xd0] sm:$0xff] %v1626
        %1675 = vst [vmem:[#allocation3 + $0xd8] sm:$0xff] %v1629
        %1676 = vst [vmem:[#allocation3 + $0xe0] sm:$0xff] %v1634
        %1677 = vst [vmem:[#allocation3 + $0xe8] sm:$0xff] %v1637
        %1678 = vst [vmem:[#allocation3 + $0xf0] sm:$0xff] %v1642
        %1679 = vst [vmem:[#allocation3 + $0xf8] sm:$0xff] %v1645
        %v1680 = vld [vmem:[%s692] sm:$0xff]
        %v1681 = vld [vmem:[%s692 + $0x8] sm:$0xff]
        %v1682 = vld [vmem:[%s692 + $0x10] sm:$0xff]
        %v1683 = vld [vmem:[%s692 + $0x18] sm:$0xff]
        %v1684 = vld [vmem:[%s692 + $0x20] sm:$0xff]
        %v1685 = vld [vmem:[%s692 + $0x28] sm:$0xff]
        %v1686 = vld [vmem:[%s692 + $0x30] sm:$0xff]
        %v1687 = vld [vmem:[%s692 + $0x38] sm:$0xff]
        %v1688 = vld [vmem:[%s692 + $0x40] sm:$0xff]
        %v1689 = vld [vmem:[%s692 + $0x48] sm:$0xff]
        %v1690 = vld [vmem:[%s692 + $0x50] sm:$0xff]
        %v1691 = vld [vmem:[%s692 + $0x58] sm:$0xff]
        %v1692 = vld [vmem:[%s692 + $0x60] sm:$0xff]
        %v1693 = vld [vmem:[%s692 + $0x68] sm:$0xff]
        %v1694 = vld [vmem:[%s692 + $0x70] sm:$0xff]
        %v1695 = vld [vmem:[%s692 + $0x78] sm:$0xff]
        %v1696 = vld [vmem:[%s692 + $0x80] sm:$0xff]
        %v1697 = vld [vmem:[%s692 + $0x88] sm:$0xff]
        %v1698 = vld [vmem:[%s692 + $0x90] sm:$0xff]
        %v1699 = vld [vmem:[%s692 + $0x98] sm:$0xff]
        %v1700 = vld [vmem:[%s692 + $0xa0] sm:$0xff]
        %v1701 = vld [vmem:[%s692 + $0xa8] sm:$0xff]
        %v1702 = vld [vmem:[%s692 + $0xb0] sm:$0xff]
        %v1703 = vld [vmem:[%s692 + $0xb8] sm:$0xff]
        %v1704 = vld [vmem:[%s692 + $0xf0] sm:$0xff]
        %v1705 = vld [vmem:[%s692 + $0xf8] sm:$0xff]
        %v1706 = vld [vmem:[%s692 + $0x100] sm:$0xff]
        %v1707 = vld [vmem:[%s692 + $0x108] sm:$0xff]
        %v1708 = vld [vmem:[%s692 + $0x110] sm:$0xff]
        %v1709 = vld [vmem:[%s692 + $0x118] sm:$0xff]
        %v1710 = vld [vmem:[%s692 + $0x120] sm:$0xff]
        %v1711 = vld [vmem:[%s692 + $0x128] sm:$0xff]
        %v1712 = vld [vmem:[%s692 + $0x130] sm:$0xff]
        %v1713 = vld [vmem:[%s692 + $0x138] sm:$0xff]
        %v1714 = vld [vmem:[%s692 + $0x140] sm:$0xff]
        %v1715 = vld [vmem:[%s692 + $0x148] sm:$0xff]
        %v1716 = vld [vmem:[%s692 + $0x150] sm:$0xff]
        %v1717 = vld [vmem:[%s692 + $0x158] sm:$0xff]
        %v1718 = vld [vmem:[%s692 + $0x160] sm:$0xff]
        %v1719 = vld [vmem:[%s692 + $0x168] sm:$0xff]
        %v1720 = vld [vmem:[%s692 + $0x170] sm:$0xff]
        %v1721 = vld [vmem:[%s692 + $0x178] sm:$0xff]
        %v1722 = vld [vmem:[%s692 + $0x180] sm:$0xff]
        %v1723 = vld [vmem:[%s692 + $0x188] sm:$0xff]
        %v1724 = vld [vmem:[%s692 + $0x190] sm:$0xff]
        %v1725 = vld [vmem:[%s692 + $0x198] sm:$0xff]
        %v1726 = vld [vmem:[%s692 + $0x1a0] sm:$0xff]
        %v1727 = vld [vmem:[%s692 + $0x1a8] sm:$0xff]
        %v1728 = vld [vmem:[%s692 + $0x1e0] sm:$0xff]
        %v1729 = vld [vmem:[%s692 + $0x1e8] sm:$0xff]
        %v1730 = vld [vmem:[%s692 + $0x1f0] sm:$0xff]
        %v1731 = vld [vmem:[%s692 + $0x1f8] sm:$0xff]
        %v1732 = vld [vmem:[%s692 + $0x200] sm:$0xff]
        %v1733 = vld [vmem:[%s692 + $0x208] sm:$0xff]
        %v1734 = vld [vmem:[%s692 + $0x210] sm:$0xff]
        %v1735 = vld [vmem:[%s692 + $0x218] sm:$0xff]
        %v1736 = vld [vmem:[%s692 + $0x220] sm:$0xff]
        %v1737 = vld [vmem:[%s692 + $0x228] sm:$0xff]
        %v1738 = vld [vmem:[%s692 + $0x230] sm:$0xff]
        %v1739 = vld [vmem:[%s692 + $0x238] sm:$0xff]
        %v1740 = vld [vmem:[%s692 + $0x240] sm:$0xff]
        %v1741 = vld [vmem:[%s692 + $0x248] sm:$0xff]
        %v1742 = vld [vmem:[%s692 + $0x250] sm:$0xff]
        %v1743 = vld [vmem:[%s692 + $0x258] sm:$0xff]
        %v1744 = vld [vmem:[%s692 + $0x260] sm:$0xff]
        %v1745 = vld [vmem:[%s692 + $0x268] sm:$0xff]
        %v1746 = vld [vmem:[%s692 + $0x270] sm:$0xff]
        %v1747 = vld [vmem:[%s692 + $0x278] sm:$0xff]
        %v1748 = vld [vmem:[%s692 + $0x280] sm:$0xff]
        %v1749 = vld [vmem:[%s692 + $0x288] sm:$0xff]
        %v1750 = vld [vmem:[%s692 + $0x290] sm:$0xff]
        %v1751 = vld [vmem:[%s692 + $0x298] sm:$0xff]
        %v1752 = vld [vmem:[%s692 + $0x2d0] sm:$0xff]
        %v1753 = vld [vmem:[%s692 + $0x2d8] sm:$0xff]
        %v1754 = vld [vmem:[%s692 + $0x2e0] sm:$0xff]
        %v1755 = vld [vmem:[%s692 + $0x2e8] sm:$0xff]
        %v1756 = vld [vmem:[%s692 + $0x2f0] sm:$0xff]
        %v1757 = vld [vmem:[%s692 + $0x2f8] sm:$0xff]
        %v1758 = vld [vmem:[%s692 + $0x300] sm:$0xff]
        %v1759 = vld [vmem:[%s692 + $0x308] sm:$0xff]
        %v1760 = vld [vmem:[%s692 + $0x310] sm:$0xff]
        %v1761 = vld [vmem:[%s692 + $0x318] sm:$0xff]
        %v1762 = vld [vmem:[%s692 + $0x320] sm:$0xff]
        %v1763 = vld [vmem:[%s692 + $0x328] sm:$0xff]
        %v1764 = vld [vmem:[%s692 + $0x330] sm:$0xff]
        %v1765 = vld [vmem:[%s692 + $0x338] sm:$0xff]
        %v1766 = vld [vmem:[%s692 + $0x340] sm:$0xff]
        %v1767 = vld [vmem:[%s692 + $0x348] sm:$0xff]
        %v1768 = vld [vmem:[%s692 + $0x350] sm:$0xff]
        %v1769 = vld [vmem:[%s692 + $0x358] sm:$0xff]
        %v1770 = vld [vmem:[%s692 + $0x360] sm:$0xff]
        %v1771 = vld [vmem:[%s692 + $0x368] sm:$0xff]
        %v1772 = vld [vmem:[%s692 + $0x370] sm:$0xff]
        %v1773 = vld [vmem:[%s692 + $0x378] sm:$0xff]
        %v1774 = vld [vmem:[%s692 + $0x380] sm:$0xff]
        %v1775 = vld [vmem:[%s692 + $0x388] sm:$0xff]
        %v1776 = vld [vmem:[#allocation3] sm:$0xff]
        %v1777 = vld [vmem:[#allocation3 + $0x8] sm:$0xff]
        %v1778 = vld [vmem:[#allocation3 + $0x10] sm:$0xff]
        %v1779 = vld [vmem:[#allocation3 + $0x18] sm:$0xff]
        %v1780 = vld [vmem:[#allocation3 + $0x20] sm:$0xff]
        %v1781 = vld [vmem:[#allocation3 + $0x28] sm:$0xff]
        %v1782 = vld [vmem:[#allocation3 + $0x30] sm:$0xff]
        %v1783 = vld [vmem:[#allocation3 + $0x38] sm:$0xff]
        %v1784 = vld [vmem:[#allocation3 + $0x40] sm:$0xff]
        %v1785 = vld [vmem:[#allocation3 + $0x48] sm:$0xff]
        %v1786 = vld [vmem:[#allocation3 + $0x50] sm:$0xff]
        %v1787 = vld [vmem:[#allocation3 + $0x58] sm:$0xff]
        %v1788 = vld [vmem:[#allocation3 + $0x60] sm:$0xff]
        %v1789 = vld [vmem:[#allocation3 + $0x68] sm:$0xff]
        %v1790 = vld [vmem:[#allocation3 + $0x70] sm:$0xff]
        %v1791 = vld [vmem:[#allocation3 + $0x78] sm:$0xff]
        %v1792 = vld [vmem:[#allocation3 + $0x80] sm:$0xff]
        %v1793 = vld [vmem:[#allocation3 + $0x88] sm:$0xff]
        %v1794 = vld [vmem:[#allocation3 + $0x90] sm:$0xff]
        %v1795 = vld [vmem:[#allocation3 + $0x98] sm:$0xff]
        %v1796 = vld [vmem:[#allocation3 + $0xa0] sm:$0xff]
        %v1797 = vld [vmem:[#allocation3 + $0xa8] sm:$0xff]
        %v1798 = vld [vmem:[#allocation3 + $0xb0] sm:$0xff]
        %v1799 = vld [vmem:[#allocation3 + $0xb8] sm:$0xff]
        %v1800 = vld [vmem:[#allocation3 + $0xc0] sm:$0xff]
        %v1801 = vld [vmem:[#allocation3 + $0xc8] sm:$0xff]
        %v1802 = vld [vmem:[#allocation3 + $0xd0] sm:$0xff]
        %v1803 = vld [vmem:[#allocation3 + $0xd8] sm:$0xff]
        %v1804 = vld [vmem:[#allocation3 + $0xe0] sm:$0xff]
        %v1805 = vld [vmem:[#allocation3 + $0xe8] sm:$0xff]
        %v1806 = vld [vmem:[#allocation3 + $0xf0] sm:$0xff]
        %v1807 = vld [vmem:[#allocation3 + $0xf8] sm:$0xff]
        %v1808 = vpack.c.bf16 %v1683, %v1680
        %v1809 = vpack.c.bf16 %v1684, %v1681
        %v1810 = vpack.c.bf16 %v1685, %v1682
        %v1811 = vpack.c.bf16 %v1689, %v1686
        %v1812 = vpack.c.bf16 %v1690, %v1687
        %v1813 = vpack.c.bf16 %v1691, %v1688
        %v1814 = vpack.c.bf16 %v1695, %v1692
        %v1815 = vpack.c.bf16 %v1696, %v1693
        %v1816 = vpack.c.bf16 %v1697, %v1694
        %v1817 = vpack.c.bf16 %v1701, %v1698
        %v1818 = vpack.c.bf16 %v1702, %v1699
        %v1819 = vpack.c.bf16 %v1703, %v1700
        %v1820 = vpack.c.bf16 %v1707, %v1704
        %v1821 = vpack.c.bf16 %v1708, %v1705
        %v1822 = vpack.c.bf16 %v1709, %v1706
        %v1823 = vpack.c.bf16 %v1713, %v1710
        %v1824 = vpack.c.bf16 %v1714, %v1711
        %v1825 = vpack.c.bf16 %v1715, %v1712
        %v1826 = vpack.c.bf16 %v1719, %v1716
        %v1827 = vpack.c.bf16 %v1720, %v1717
        %v1828 = vpack.c.bf16 %v1721, %v1718
        %v1829 = vpack.c.bf16 %v1725, %v1722
        %v1830 = vpack.c.bf16 %v1726, %v1723
        %v1831 = vpack.c.bf16 %v1727, %v1724
        %v1832 = vpack.c.bf16 %v1731, %v1728
        %v1833 = vpack.c.bf16 %v1732, %v1729
        %v1834 = vpack.c.bf16 %v1733, %v1730
        %v1835 = vpack.c.bf16 %v1737, %v1734
        %v1836 = vpack.c.bf16 %v1738, %v1735
        %v1837 = vpack.c.bf16 %v1739, %v1736
        %v1838 = vpack.c.bf16 %v1743, %v1740
        %v1839 = vpack.c.bf16 %v1744, %v1741
        %v1840 = vpack.c.bf16 %v1745, %v1742
        %v1841 = vpack.c.bf16 %v1749, %v1746
        %v1842 = vpack.c.bf16 %v1750, %v1747
        %v1843 = vpack.c.bf16 %v1751, %v1748
        %v1844 = vpack.c.bf16 %v1755, %v1752
        %v1845 = vpack.c.bf16 %v1756, %v1753
        %v1846 = vpack.c.bf16 %v1757, %v1754
        %v1847 = vpack.c.bf16 %v1761, %v1758
        %v1848 = vpack.c.bf16 %v1762, %v1759
        %v1849 = vpack.c.bf16 %v1763, %v1760
        %v1850 = vpack.c.bf16 %v1767, %v1764
        %v1851 = vpack.c.bf16 %v1768, %v1765
        %v1852 = vpack.c.bf16 %v1769, %v1766
        %v1853 = vpack.c.bf16 %v1773, %v1770
        %v1854 = vpack.c.bf16 %v1774, %v1771
        %v1855 = vpack.c.bf16 %v1775, %v1772
        %s1856 = scalar_lea.vmem [#allocation9], 192
        %v1857 = vld [vmem:[%s1856] sm:$0xf]
        %v1858 = vld [vmem:[%s1856 + $0x4] sm:$0xf]
        %v1859 = vld [vmem:[%s1856 + $0x8] sm:$0xf]
        %v1860 = vld [vmem:[%s1856 + $0xc] sm:$0xf]
        %v1861 = vld [vmem:[%s1856 + $0x10] sm:$0xf]
        %v1862 = vld [vmem:[%s1856 + $0x14] sm:$0xf]
        %v1863 = vld [vmem:[%s1856 + $0x18] sm:$0xf]
        %v1864 = vld [vmem:[%s1856 + $0x1c] sm:$0xf]
        %v1865 = vld [vmem:[%s1856 + $0x20] sm:$0xf]
        %v1866 = vld [vmem:[%s1856 + $0x24] sm:$0xf]
        %v1867 = vld [vmem:[%s1856 + $0x28] sm:$0xf]
        %v1868 = vld [vmem:[%s1856 + $0x2c] sm:$0xf]
        %v1869 = vld [vmem:[%s1856 + $0x30] sm:$0xf]
        %v1870 = vld [vmem:[%s1856 + $0x34] sm:$0xf]
        %v1871 = vld [vmem:[%s1856 + $0x38] sm:$0xf]
        %v1872 = vld [vmem:[%s1856 + $0x3c] sm:$0xf]
        %v1873 = vld [vmem:[%s1856 + $0x40] sm:$0xf]
        %v1874 = vld [vmem:[%s1856 + $0x44] sm:$0xf]
        %v1875 = vld [vmem:[%s1856 + $0x48] sm:$0xf]
        %v1876 = vld [vmem:[%s1856 + $0x4c] sm:$0xf]
        %v1877 = vld [vmem:[%s1856 + $0x50] sm:$0xf]
        %v1878 = vld [vmem:[%s1856 + $0x54] sm:$0xf]
        %v1879 = vld [vmem:[%s1856 + $0x58] sm:$0xf]
        %v1880 = vld [vmem:[%s1856 + $0x5c] sm:$0xf]
        %v1881 = vld [vmem:[%s1856 + $0x60] sm:$0xf]
        %v1882 = vld [vmem:[%s1856 + $0x64] sm:$0xf]
        %v1883 = vld [vmem:[%s1856 + $0x68] sm:$0xf]
        %v1884 = vld [vmem:[%s1856 + $0x6c] sm:$0xf]
        %v1885 = vld [vmem:[%s1856 + $0x70] sm:$0xf]
        %v1886 = vld [vmem:[%s1856 + $0x74] sm:$0xf]
        %v1887 = vld [vmem:[%s1856 + $0x78] sm:$0xf]
        %v1888 = vld [vmem:[%s1856 + $0x7c] sm:$0xf]
        %v1889 = vld [vmem:[%s1856 + $0x80] sm:$0xf]
        %v1890 = vld [vmem:[%s1856 + $0x84] sm:$0xf]
        %v1891 = vld [vmem:[%s1856 + $0x88] sm:$0xf]
        %v1892 = vld [vmem:[%s1856 + $0x8c] sm:$0xf]
        %v1893 = vld [vmem:[%s1856 + $0x90] sm:$0xf]
        %v1894 = vld [vmem:[%s1856 + $0x94] sm:$0xf]
        %v1895 = vld [vmem:[%s1856 + $0x98] sm:$0xf]
        %v1896 = vld [vmem:[%s1856 + $0x9c] sm:$0xf]
        %v1897 = vld [vmem:[%s1856 + $0xa0] sm:$0xf]
        %v1898 = vld [vmem:[%s1856 + $0xa4] sm:$0xf]
        %v1899 = vld [vmem:[%s1856 + $0xa8] sm:$0xf]
        %v1900 = vld [vmem:[%s1856 + $0xac] sm:$0xf]
        %v1901 = vld [vmem:[%s1856 + $0xb0] sm:$0xf]
        %v1902 = vld [vmem:[%s1856 + $0xb4] sm:$0xf]
        %v1903 = vld [vmem:[%s1856 + $0xb8] sm:$0xf]
        %v1904 = vld [vmem:[%s1856 + $0xbc] sm:$0xf]
        %v1953 = vunpack.c.l.b16 %v1857
        %v1954 = vunpack.c.l.b16 %v1858
        %v1955 = vunpack.c.l.b16 %v1859
        %v1956 = vunpack.c.l.b16 %v1860
        %v1957 = vunpack.c.l.b16 %v1861
        %v1958 = vunpack.c.l.b16 %v1862
        %v1959 = vunpack.c.l.b16 %v1863
        %v1960 = vunpack.c.l.b16 %v1864
        %v1961 = vunpack.c.l.b16 %v1865
        %v1962 = vunpack.c.l.b16 %v1866
        %v1963 = vunpack.c.l.b16 %v1867
        %v1964 = vunpack.c.l.b16 %v1868
        %v1965 = vunpack.c.l.b16 %v1869
        %v1966 = vunpack.c.l.b16 %v1870
        %v1967 = vunpack.c.l.b16 %v1871
        %v1968 = vunpack.c.l.b16 %v1872
        %v1969 = vunpack.c.l.b16 %v1873
        %v1970 = vunpack.c.l.b16 %v1874
        %v1971 = vunpack.c.l.b16 %v1875
        %v1972 = vunpack.c.l.b16 %v1876
        %v1973 = vunpack.c.l.b16 %v1877
        %v1974 = vunpack.c.l.b16 %v1878
        %v1975 = vunpack.c.l.b16 %v1879
        %v1976 = vunpack.c.l.b16 %v1880
        %v1977 = vunpack.c.l.b16 %v1881
        %v1978 = vunpack.c.l.b16 %v1882
        %v1979 = vunpack.c.l.b16 %v1883
        %v1980 = vunpack.c.l.b16 %v1884
        %v1981 = vunpack.c.l.b16 %v1885
        %v1982 = vunpack.c.l.b16 %v1886
        %v1983 = vunpack.c.l.b16 %v1887
        %v1984 = vunpack.c.l.b16 %v1888
        %v1985 = vunpack.c.l.b16 %v1889
        %v1986 = vunpack.c.l.b16 %v1890
        %v1987 = vunpack.c.l.b16 %v1891
        %v1988 = vunpack.c.l.b16 %v1892
        %v1989 = vunpack.c.l.b16 %v1893
        %v1990 = vunpack.c.l.b16 %v1894
        %v1991 = vunpack.c.l.b16 %v1895
        %v1992 = vunpack.c.l.b16 %v1896
        %v1993 = vunpack.c.l.b16 %v1897
        %v1994 = vunpack.c.l.b16 %v1898
        %v1995 = vunpack.c.l.b16 %v1899
        %v1996 = vunpack.c.l.b16 %v1900
        %v1997 = vunpack.c.l.b16 %v1901
        %v1998 = vunpack.c.l.b16 %v1902
        %v1999 = vunpack.c.l.b16 %v1903
        %v2000 = vunpack.c.l.b16 %v1904
        %v2001 = vpack.c.b16 %v1954, %v1953
        %v2002 = vpack.c.b16 %v1956, %v1955
        %v2003 = vpack.c.b16 %v1958, %v1957
        %v2004 = vpack.c.b16 %v1960, %v1959
        %v2005 = vpack.c.b16 %v1962, %v1961
        %v2006 = vpack.c.b16 %v1964, %v1963
        %v2007 = vpack.c.b16 %v1966, %v1965
        %v2008 = vpack.c.b16 %v1968, %v1967
        %v2009 = vpack.c.b16 %v1970, %v1969
        %v2010 = vpack.c.b16 %v1972, %v1971
        %v2011 = vpack.c.b16 %v1974, %v1973
        %v2012 = vpack.c.b16 %v1976, %v1975
        %v2013 = vpack.c.b16 %v1978, %v1977
        %v2014 = vpack.c.b16 %v1980, %v1979
        %v2015 = vpack.c.b16 %v1982, %v1981
        %v2016 = vpack.c.b16 %v1984, %v1983
        %v2017 = vpack.c.b16 %v1986, %v1985
        %v2018 = vpack.c.b16 %v1988, %v1987
        %v2019 = vpack.c.b16 %v1990, %v1989
        %v2020 = vpack.c.b16 %v1992, %v1991
        %v2021 = vpack.c.b16 %v1994, %v1993
        %v2022 = vpack.c.b16 %v1996, %v1995
        %v2023 = vpack.c.b16 %v1998, %v1997
        %v2024 = vpack.c.b16 %v2000, %v1999
        %2049 = vmatprep.subr.bf16.mxu0 0
        %2050 = vmatpush1.bf16.msra.mxu0 %v2008
        %2051 = vmatprep.subr.bf16.mxu0 0
        %2052 = vmatpush1.bf16.msra.mxu0 %v2007
        %2053 = vmatprep.subr.bf16.mxu0 0
        %2054 = vmatpush1.bf16.msra.mxu0 %v2006
        %2055 = vmatprep.subr.bf16.mxu0 0
        %2056 = vmatpush1.bf16.msra.mxu0 %v2005
        %2057 = vmatprep.subr.bf16.mxu0 0
        %2058 = vmatpush1.bf16.msra.mxu0 %v2004
        %2059 = vmatprep.subr.bf16.mxu0 0
        %2060 = vmatpush1.bf16.msra.mxu0 %v2003
        %2061 = vmatprep.subr.bf16.mxu0 0
        %2062 = vmatpush1.bf16.msra.mxu0 %v2002
        %2063 = vmatprep.subr.bf16.mxu0 0
        %2064 = vmatpush1.bf16.msra.mxu0 %v2001
        %2065 = vmatprep.subr.bf16.mxu0 0
        %2066 = vmatpush2.bf16.msra.mxu0 %v2016
        %2067 = vmatprep.subr.bf16.mxu0 0
        %2068 = vmatpush2.bf16.msra.mxu0 %v2015
        %2069 = vmatprep.subr.bf16.mxu0 0
        %2070 = vmatpush2.bf16.msra.mxu0 %v2014
        %2071 = vmatprep.subr.bf16.mxu0 0
        %2072 = vmatpush2.bf16.msra.mxu0 %v2013
        %2073 = vmatprep.subr.bf16.mxu0 0
        %2074 = vmatpush2.bf16.msra.mxu0 %v2012
        %2075 = vmatprep.subr.bf16.mxu0 0
        %2076 = vmatpush2.bf16.msra.mxu0 %v2011
        %2077 = vmatprep.subr.bf16.mxu0 0
        %2078 = vmatpush2.bf16.msra.mxu0 %v2010
        %2079 = vmatprep.subr.bf16.mxu0 0
        %2080 = vmatpush2.bf16.msra.mxu0 %v2009
        %2081 = vmatprep.mubr.bf16.mxu0 %v1809
        %2082 = vmatmul.mubr.bf16.gmra.mxu0 %v1808
        %v2083 = vpop.f32.mrf.mxu0
        %v2084 = vadd.f32 0.0, %v2083
        %v2085 = vpop.f32.mrf.mxu0
        %v2086 = vpop.f32.mrf.mxu0
        %v2087 = vadd.f32 0.0, %v2086
        %v2088 = vpop.f32.mrf.mxu0
        %2089 = vmatprep.mubr.bf16.mxu0 %v1812
        %2090 = vmatmul.mubr.bf16.gmra.mxu0 %v1811
        %v2091 = vpop.f32.mrf.mxu0
        %v2092 = vadd.f32 0.0, %v2091
        %v2093 = vpop.f32.mrf.mxu0
        %v2094 = vpop.f32.mrf.mxu0
        %v2095 = vadd.f32 0.0, %v2094
        %v2096 = vpop.f32.mrf.mxu0
        %2097 = vmatprep.mubr.bf16.mxu0 %v1815
        %2098 = vmatmul.mubr.bf16.gmra.mxu0 %v1814
        %v2099 = vpop.f32.mrf.mxu0
        %v2100 = vadd.f32 0.0, %v2099
        %v2101 = vpop.f32.mrf.mxu0
        %v2102 = vpop.f32.mrf.mxu0
        %v2103 = vadd.f32 0.0, %v2102
        %v2104 = vpop.f32.mrf.mxu0
        %2105 = vmatprep.mubr.bf16.mxu0 %v1818
        %2106 = vmatmul.mubr.bf16.gmra.mxu0 %v1817
        %v2107 = vpop.f32.mrf.mxu0
        %v2108 = vadd.f32 0.0, %v2107
        %v2109 = vpop.f32.mrf.mxu0
        %v2110 = vpop.f32.mrf.mxu0
        %v2111 = vadd.f32 0.0, %v2110
        %v2112 = vpop.f32.mrf.mxu0
        %2113 = vmatprep.mubr.bf16.mxu0 %v1821
        %2114 = vmatmul.mubr.bf16.gmra.mxu0 %v1820
        %v2115 = vpop.f32.mrf.mxu0
        %v2116 = vadd.f32 0.0, %v2115
        %v2117 = vpop.f32.mrf.mxu0
        %v2118 = vpop.f32.mrf.mxu0
        %v2119 = vadd.f32 0.0, %v2118
        %v2120 = vpop.f32.mrf.mxu0
        %2121 = vmatprep.mubr.bf16.mxu0 %v1824
        %2122 = vmatmul.mubr.bf16.gmra.mxu0 %v1823
        %v2123 = vpop.f32.mrf.mxu0
        %v2124 = vadd.f32 0.0, %v2123
        %v2125 = vpop.f32.mrf.mxu0
        %v2126 = vpop.f32.mrf.mxu0
        %v2127 = vadd.f32 0.0, %v2126
        %v2128 = vpop.f32.mrf.mxu0
        %2129 = vmatprep.mubr.bf16.mxu0 %v1827
        %2130 = vmatmul.mubr.bf16.gmra.mxu0 %v1826
        %v2131 = vpop.f32.mrf.mxu0
        %v2132 = vadd.f32 0.0, %v2131
        %v2133 = vpop.f32.mrf.mxu0
        %v2134 = vpop.f32.mrf.mxu0
        %v2135 = vadd.f32 0.0, %v2134
        %v2136 = vpop.f32.mrf.mxu0
        %2137 = vmatprep.mubr.bf16.mxu0 %v1830
        %2138 = vmatmul.mubr.bf16.gmra.mxu0 %v1829
        %v2139 = vpop.f32.mrf.mxu0
        %v2140 = vadd.f32 0.0, %v2139
        %v2141 = vpop.f32.mrf.mxu0
        %v2142 = vpop.f32.mrf.mxu0
        %v2143 = vadd.f32 0.0, %v2142
        %v2144 = vpop.f32.mrf.mxu0
        %2145 = vmatprep.mubr.bf16.mxu0 %v1833
        %2146 = vmatmul.mubr.bf16.gmra.mxu0 %v1832
        %v2147 = vpop.f32.mrf.mxu0
        %v2148 = vadd.f32 0.0, %v2147
        %v2149 = vpop.f32.mrf.mxu0
        %v2150 = vpop.f32.mrf.mxu0
        %v2151 = vadd.f32 0.0, %v2150
        %v2152 = vpop.f32.mrf.mxu0
        %2153 = vmatprep.mubr.bf16.mxu0 %v1836
        %2154 = vmatmul.mubr.bf16.gmra.mxu0 %v1835
        %v2155 = vpop.f32.mrf.mxu0
        %v2156 = vadd.f32 0.0, %v2155
        %v2157 = vpop.f32.mrf.mxu0
        %v2158 = vpop.f32.mrf.mxu0
        %v2159 = vadd.f32 0.0, %v2158
        %v2160 = vpop.f32.mrf.mxu0
        %2161 = vmatprep.mubr.bf16.mxu0 %v1839
        %2162 = vmatmul.mubr.bf16.gmra.mxu0 %v1838
        %v2163 = vpop.f32.mrf.mxu0
        %v2164 = vadd.f32 0.0, %v2163
        %v2165 = vpop.f32.mrf.mxu0
        %v2166 = vpop.f32.mrf.mxu0
        %v2167 = vadd.f32 0.0, %v2166
        %v2168 = vpop.f32.mrf.mxu0
        %2169 = vmatprep.mubr.bf16.mxu0 %v1842
        %2170 = vmatmul.mubr.bf16.gmra.mxu0 %v1841
        %v2171 = vpop.f32.mrf.mxu0
        %v2172 = vadd.f32 0.0, %v2171
        %v2173 = vpop.f32.mrf.mxu0
        %v2174 = vpop.f32.mrf.mxu0
        %v2175 = vadd.f32 0.0, %v2174
        %v2176 = vpop.f32.mrf.mxu0
        %2177 = vmatprep.mubr.bf16.mxu0 %v1845
        %2178 = vmatmul.mubr.bf16.gmra.mxu0 %v1844
        %v2179 = vpop.f32.mrf.mxu0
        %v2180 = vadd.f32 0.0, %v2179
        %v2181 = vpop.f32.mrf.mxu0
        %v2182 = vpop.f32.mrf.mxu0
        %v2183 = vadd.f32 0.0, %v2182
        %v2184 = vpop.f32.mrf.mxu0
        %2185 = vmatprep.mubr.bf16.mxu0 %v1848
        %2186 = vmatmul.mubr.bf16.gmra.mxu0 %v1847
        %v2187 = vpop.f32.mrf.mxu0
        %v2188 = vadd.f32 0.0, %v2187
        %v2189 = vpop.f32.mrf.mxu0
        %v2190 = vpop.f32.mrf.mxu0
        %v2191 = vadd.f32 0.0, %v2190
        %v2192 = vpop.f32.mrf.mxu0
        %2193 = vmatprep.mubr.bf16.mxu0 %v1851
        %2194 = vmatmul.mubr.bf16.gmra.mxu0 %v1850
        %v2195 = vpop.f32.mrf.mxu0
        %v2196 = vadd.f32 0.0, %v2195
        %v2197 = vpop.f32.mrf.mxu0
        %v2198 = vpop.f32.mrf.mxu0
        %v2199 = vadd.f32 0.0, %v2198
        %v2200 = vpop.f32.mrf.mxu0
        %2201 = vmatprep.mubr.bf16.mxu0 %v1854
        %2202 = vmatmul.mubr.bf16.gmra.mxu0 %v1853
        %v2203 = vpop.f32.mrf.mxu0
        %v2204 = vadd.f32 0.0, %v2203
        %v2205 = vpop.f32.mrf.mxu0
        %v2206 = vpop.f32.mrf.mxu0
        %v2207 = vadd.f32 0.0, %v2206
        %v2208 = vpop.f32.mrf.mxu0
        %2209 = vdwg.mxu0
        %2210 = vmatprep.subr.bf16.mxu0 0
        %2211 = vmatpush1.bf16.msra.mxu0 %v2024
        %2212 = vmatprep.subr.bf16.mxu0 0
        %2213 = vmatpush1.bf16.msra.mxu0 %v2023
        %2214 = vmatprep.subr.bf16.mxu0 0
        %2215 = vmatpush1.bf16.msra.mxu0 %v2022
        %2216 = vmatprep.subr.bf16.mxu0 0
        %2217 = vmatpush1.bf16.msra.mxu0 %v2021
        %2218 = vmatprep.subr.bf16.mxu0 0
        %2219 = vmatpush1.bf16.msra.mxu0 %v2020
        %2220 = vmatprep.subr.bf16.mxu0 0
        %2221 = vmatpush1.bf16.msra.mxu0 %v2019
        %2222 = vmatprep.subr.bf16.mxu0 0
        %2223 = vmatpush1.bf16.msra.mxu0 %v2018
        %2224 = vmatprep.subr.bf16.mxu0 0
        %2225 = vmatpush1.bf16.msra.mxu0 %v2017
        %2226 = vmatprep.subr.bf16.mxu0 0
        %2227 = vmatpush2.bf16.msra.mxu0 0
        %2228 = vmatprep.subr.bf16.mxu0 0
        %2229 = vmatpush2.bf16.msra.mxu0 0
        %2230 = vmatprep.subr.bf16.mxu0 0
        %2231 = vmatpush2.bf16.msra.mxu0 0
        %2232 = vmatprep.subr.bf16.mxu0 0
        %2233 = vmatpush2.bf16.msra.mxu0 0
        %2234 = vmatprep.subr.bf16.mxu0 0
        %2235 = vmatpush2.bf16.msra.mxu0 0
        %2236 = vmatprep.subr.bf16.mxu0 0
        %2237 = vmatpush2.bf16.msra.mxu0 0
        %2238 = vmatprep.subr.bf16.mxu0 0
        %2239 = vmatpush2.bf16.msra.mxu0 0
        %2240 = vmatprep.subr.bf16.mxu0 0
        %2241 = vmatpush2.bf16.msra.mxu0 0
        %2242 = vmatprep.mubr.bf16.mxu0 0
        %2243 = vmatmul.mubr.bf16.gmra.mxu0 %v1810
        %v2244 = vpop.f32.mrf.mxu0
        %v2245 = vadd.f32 %v2084, %v2244
        %v2246 = vpop.f32.mrf.mxu0
        %v2247 = vpop.f32.mrf.mxu0
        %v2248 = vadd.f32 %v2087, %v2247
        %v2249 = vpop.f32.mrf.mxu0
        %2250 = vmatprep.mubr.bf16.mxu0 0
        %2251 = vmatmul.mubr.bf16.gmra.mxu0 %v1813
        %v2252 = vpop.f32.mrf.mxu0
        %v2253 = vadd.f32 %v2092, %v2252
        %v2254 = vpop.f32.mrf.mxu0
        %v2255 = vpop.f32.mrf.mxu0
        %v2256 = vadd.f32 %v2095, %v2255
        %v2257 = vpop.f32.mrf.mxu0
        %2258 = vmatprep.mubr.bf16.mxu0 0
        %2259 = vmatmul.mubr.bf16.gmra.mxu0 %v1816
        %v2260 = vpop.f32.mrf.mxu0
        %v2261 = vadd.f32 %v2100, %v2260
        %v2262 = vpop.f32.mrf.mxu0
        %v2263 = vpop.f32.mrf.mxu0
        %v2264 = vadd.f32 %v2103, %v2263
        %v2265 = vpop.f32.mrf.mxu0
        %2266 = vmatprep.mubr.bf16.mxu0 0
        %2267 = vmatmul.mubr.bf16.gmra.mxu0 %v1819
        %v2268 = vpop.f32.mrf.mxu0
        %v2269 = vadd.f32 %v2108, %v2268
        %v2270 = vpop.f32.mrf.mxu0
        %v2271 = vpop.f32.mrf.mxu0
        %v2272 = vadd.f32 %v2111, %v2271
        %v2273 = vpop.f32.mrf.mxu0
        %2274 = vmatprep.mubr.bf16.mxu0 0
        %2275 = vmatmul.mubr.bf16.gmra.mxu0 %v1822
        %v2276 = vpop.f32.mrf.mxu0
        %v2277 = vadd.f32 %v2116, %v2276
        %v2278 = vpop.f32.mrf.mxu0
        %v2279 = vpop.f32.mrf.mxu0
        %v2280 = vadd.f32 %v2119, %v2279
        %v2281 = vpop.f32.mrf.mxu0
        %2282 = vmatprep.mubr.bf16.mxu0 0
        %2283 = vmatmul.mubr.bf16.gmra.mxu0 %v1825
        %v2284 = vpop.f32.mrf.mxu0
        %v2285 = vadd.f32 %v2124, %v2284
        %v2286 = vpop.f32.mrf.mxu0
        %v2287 = vpop.f32.mrf.mxu0
        %v2288 = vadd.f32 %v2127, %v2287
        %v2289 = vpop.f32.mrf.mxu0
        %2290 = vmatprep.mubr.bf16.mxu0 0
        %2291 = vmatmul.mubr.bf16.gmra.mxu0 %v1828
        %v2292 = vpop.f32.mrf.mxu0
        %v2293 = vadd.f32 %v2132, %v2292
        %v2294 = vpop.f32.mrf.mxu0
        %v2295 = vpop.f32.mrf.mxu0
        %v2296 = vadd.f32 %v2135, %v2295
        %v2297 = vpop.f32.mrf.mxu0
        %2298 = vmatprep.mubr.bf16.mxu0 0
        %2299 = vmatmul.mubr.bf16.gmra.mxu0 %v1831
        %v2300 = vpop.f32.mrf.mxu0
        %v2301 = vadd.f32 %v2140, %v2300
        %v2302 = vpop.f32.mrf.mxu0
        %v2303 = vpop.f32.mrf.mxu0
        %v2304 = vadd.f32 %v2143, %v2303
        %v2305 = vpop.f32.mrf.mxu0
        %2306 = vmatprep.mubr.bf16.mxu0 0
        %2307 = vmatmul.mubr.bf16.gmra.mxu0 %v1834
        %v2308 = vpop.f32.mrf.mxu0
        %v2309 = vadd.f32 %v2148, %v2308
        %v2310 = vpop.f32.mrf.mxu0
        %v2311 = vpop.f32.mrf.mxu0
        %v2312 = vadd.f32 %v2151, %v2311
        %v2313 = vpop.f32.mrf.mxu0
        %2314 = vmatprep.mubr.bf16.mxu0 0
        %2315 = vmatmul.mubr.bf16.gmra.mxu0 %v1837
        %v2316 = vpop.f32.mrf.mxu0
        %v2317 = vadd.f32 %v2156, %v2316
        %v2318 = vpop.f32.mrf.mxu0
        %v2319 = vpop.f32.mrf.mxu0
        %v2320 = vadd.f32 %v2159, %v2319
        %v2321 = vpop.f32.mrf.mxu0
        %2322 = vmatprep.mubr.bf16.mxu0 0
        %2323 = vmatmul.mubr.bf16.gmra.mxu0 %v1840
        %v2324 = vpop.f32.mrf.mxu0
        %v2325 = vadd.f32 %v2164, %v2324
        %v2326 = vpop.f32.mrf.mxu0
        %v2327 = vpop.f32.mrf.mxu0
        %v2328 = vadd.f32 %v2167, %v2327
        %v2329 = vpop.f32.mrf.mxu0
        %2330 = vmatprep.mubr.bf16.mxu0 0
        %2331 = vmatmul.mubr.bf16.gmra.mxu0 %v1843
        %v2332 = vpop.f32.mrf.mxu0
        %v2333 = vadd.f32 %v2172, %v2332
        %v2334 = vpop.f32.mrf.mxu0
        %v2335 = vpop.f32.mrf.mxu0
        %v2336 = vadd.f32 %v2175, %v2335
        %v2337 = vpop.f32.mrf.mxu0
        %2338 = vmatprep.mubr.bf16.mxu0 0
        %2339 = vmatmul.mubr.bf16.gmra.mxu0 %v1846
        %v2340 = vpop.f32.mrf.mxu0
        %v2341 = vadd.f32 %v2180, %v2340
        %v2342 = vpop.f32.mrf.mxu0
        %v2343 = vpop.f32.mrf.mxu0
        %v2344 = vadd.f32 %v2183, %v2343
        %v2345 = vpop.f32.mrf.mxu0
        %2346 = vmatprep.mubr.bf16.mxu0 0
        %2347 = vmatmul.mubr.bf16.gmra.mxu0 %v1849
        %v2348 = vpop.f32.mrf.mxu0
        %v2349 = vadd.f32 %v2188, %v2348
        %v2350 = vpop.f32.mrf.mxu0
        %v2351 = vpop.f32.mrf.mxu0
        %v2352 = vadd.f32 %v2191, %v2351
        %v2353 = vpop.f32.mrf.mxu0
        %2354 = vmatprep.mubr.bf16.mxu0 0
        %2355 = vmatmul.mubr.bf16.gmra.mxu0 %v1852
        %v2356 = vpop.f32.mrf.mxu0
        %v2357 = vadd.f32 %v2196, %v2356
        %v2358 = vpop.f32.mrf.mxu0
        %v2359 = vpop.f32.mrf.mxu0
        %v2360 = vadd.f32 %v2199, %v2359
        %v2361 = vpop.f32.mrf.mxu0
        %2362 = vmatprep.mubr.bf16.mxu0 0
        %2363 = vmatmul.mubr.bf16.gmra.mxu0 %v1855
        %v2364 = vpop.f32.mrf.mxu0
        %v2365 = vadd.f32 %v2204, %v2364
        %v2366 = vpop.f32.mrf.mxu0
        %v2367 = vpop.f32.mrf.mxu0
        %v2368 = vadd.f32 %v2207, %v2367
        %v2369 = vpop.f32.mrf.mxu0
        %2370 = vdwg.mxu0
        %v2371 = vadd.f32 %v1776, %v2245
        %v2372 = vadd.f32 %v1777, %v2248
        %v2373 = vadd.f32 %v1778, %v2253
        %v2374 = vadd.f32 %v1779, %v2256
        %v2375 = vadd.f32 %v1780, %v2261
        %v2376 = vadd.f32 %v1781, %v2264
        %v2377 = vadd.f32 %v1782, %v2269
        %v2378 = vadd.f32 %v1783, %v2272
        %v2379 = vadd.f32 %v1784, %v2277
        %v2380 = vadd.f32 %v1785, %v2280
        %v2381 = vadd.f32 %v1786, %v2285
        %v2382 = vadd.f32 %v1787, %v2288
        %v2383 = vadd.f32 %v1788, %v2293
        %v2384 = vadd.f32 %v1789, %v2296
        %v2385 = vadd.f32 %v1790, %v2301
        %v2386 = vadd.f32 %v1791, %v2304
        %v2387 = vadd.f32 %v1792, %v2309
        %v2388 = vadd.f32 %v1793, %v2312
        %v2389 = vadd.f32 %v1794, %v2317
        %v2390 = vadd.f32 %v1795, %v2320
        %v2391 = vadd.f32 %v1796, %v2325
        %v2392 = vadd.f32 %v1797, %v2328
        %v2393 = vadd.f32 %v1798, %v2333
        %v2394 = vadd.f32 %v1799, %v2336
        %v2395 = vadd.f32 %v1800, %v2341
        %v2396 = vadd.f32 %v1801, %v2344
        %v2397 = vadd.f32 %v1802, %v2349
        %v2398 = vadd.f32 %v1803, %v2352
        %v2399 = vadd.f32 %v1804, %v2357
        %v2400 = vadd.f32 %v1805, %v2360
        %v2401 = vadd.f32 %v1806, %v2365
        %v2402 = vadd.f32 %v1807, %v2368
        %2403 = vst [vmem:[#allocation3] sm:$0xff] %v2371
        %2404 = vst [vmem:[#allocation3 + $0x8] sm:$0xff] %v2372
        %2405 = vst [vmem:[#allocation3 + $0x10] sm:$0xff] %v2373
        %2406 = vst [vmem:[#allocation3 + $0x18] sm:$0xff] %v2374
        %2407 = vst [vmem:[#allocation3 + $0x20] sm:$0xff] %v2375
        %2408 = vst [vmem:[#allocation3 + $0x28] sm:$0xff] %v2376
        %2409 = vst [vmem:[#allocation3 + $0x30] sm:$0xff] %v2377
        %2410 = vst [vmem:[#allocation3 + $0x38] sm:$0xff] %v2378
        %2411 = vst [vmem:[#allocation3 + $0x40] sm:$0xff] %v2379
        %2412 = vst [vmem:[#allocation3 + $0x48] sm:$0xff] %v2380
        %2413 = vst [vmem:[#allocation3 + $0x50] sm:$0xff] %v2381
        %2414 = vst [vmem:[#allocation3 + $0x58] sm:$0xff] %v2382
        %2415 = vst [vmem:[#allocation3 + $0x60] sm:$0xff] %v2383
        %2416 = vst [vmem:[#allocation3 + $0x68] sm:$0xff] %v2384
        %2417 = vst [vmem:[#allocation3 + $0x70] sm:$0xff] %v2385
        %2418 = vst [vmem:[#allocation3 + $0x78] sm:$0xff] %v2386
        %2419 = vst [vmem:[#allocation3 + $0x80] sm:$0xff] %v2387
        %2420 = vst [vmem:[#allocation3 + $0x88] sm:$0xff] %v2388
        %2421 = vst [vmem:[#allocation3 + $0x90] sm:$0xff] %v2389
        %2422 = vst [vmem:[#allocation3 + $0x98] sm:$0xff] %v2390
        %2423 = vst [vmem:[#allocation3 + $0xa0] sm:$0xff] %v2391
        %2424 = vst [vmem:[#allocation3 + $0xa8] sm:$0xff] %v2392
        %2425 = vst [vmem:[#allocation3 + $0xb0] sm:$0xff] %v2393
        %2426 = vst [vmem:[#allocation3 + $0xb8] sm:$0xff] %v2394
        %2427 = vst [vmem:[#allocation3 + $0xc0] sm:$0xff] %v2395
        %2428 = vst [vmem:[#allocation3 + $0xc8] sm:$0xff] %v2396
        %2429 = vst [vmem:[#allocation3 + $0xd0] sm:$0xff] %v2397
        %2430 = vst [vmem:[#allocation3 + $0xd8] sm:$0xff] %v2398
        %2431 = vst [vmem:[#allocation3 + $0xe0] sm:$0xff] %v2399
        %2432 = vst [vmem:[#allocation3 + $0xe8] sm:$0xff] %v2400
        %2433 = vst [vmem:[#allocation3 + $0xf0] sm:$0xff] %v2401
        %2434 = vst [vmem:[#allocation3 + $0xf8] sm:$0xff] %v2402
        %s2435 = scalar_lea.vmem [#allocation2], 48
        %v2436 = vld [vmem:[%s2435] sm:$0xff]
        %v2437 = vld [vmem:[%s2435 + $0x8] sm:$0xff]
        %v2438 = vld [vmem:[%s2435 + $0x10] sm:$0xff]
        %v2439 = vld [vmem:[%s2435 + $0x18] sm:$0xff]
        %v2440 = vld [vmem:[%s2435 + $0x20] sm:$0xff]
        %v2441 = vld [vmem:[%s2435 + $0x28] sm:$0xff]
        %v2442 = vld [vmem:[%s2435 + $0x30] sm:$0xff]
        %v2443 = vld [vmem:[%s2435 + $0x38] sm:$0xff]
        %v2444 = vld [vmem:[%s2435 + $0x40] sm:$0xff]
        %v2445 = vld [vmem:[%s2435 + $0x48] sm:$0xff]
        %v2446 = vld [vmem:[%s2435 + $0x50] sm:$0xff]
        %v2447 = vld [vmem:[%s2435 + $0x58] sm:$0xff]
        %v2448 = vld [vmem:[%s2435 + $0x60] sm:$0xff]
        %v2449 = vld [vmem:[%s2435 + $0x68] sm:$0xff]
        %v2450 = vld [vmem:[%s2435 + $0x70] sm:$0xff]
        %v2451 = vld [vmem:[%s2435 + $0x78] sm:$0xff]
        %v2452 = vld [vmem:[%s2435 + $0x80] sm:$0xff]
        %v2453 = vld [vmem:[%s2435 + $0x88] sm:$0xff]
        %v2454 = vld [vmem:[%s2435 + $0x90] sm:$0xff]
        %v2455 = vld [vmem:[%s2435 + $0x98] sm:$0xff]
        %v2456 = vld [vmem:[%s2435 + $0xa0] sm:$0xff]
        %v2457 = vld [vmem:[%s2435 + $0xa8] sm:$0xff]
        %v2458 = vld [vmem:[%s2435 + $0xb0] sm:$0xff]
        %v2459 = vld [vmem:[%s2435 + $0xb8] sm:$0xff]
        %v2460 = vld [vmem:[%s2435 + $0xf0] sm:$0xff]
        %v2461 = vld [vmem:[%s2435 + $0xf8] sm:$0xff]
        %v2462 = vld [vmem:[%s2435 + $0x100] sm:$0xff]
        %v2463 = vld [vmem:[%s2435 + $0x108] sm:$0xff]
        %v2464 = vld [vmem:[%s2435 + $0x110] sm:$0xff]
        %v2465 = vld [vmem:[%s2435 + $0x118] sm:$0xff]
        %v2466 = vld [vmem:[%s2435 + $0x120] sm:$0xff]
        %v2467 = vld [vmem:[%s2435 + $0x128] sm:$0xff]
        %v2468 = vld [vmem:[%s2435 + $0x130] sm:$0xff]
        %v2469 = vld [vmem:[%s2435 + $0x138] sm:$0xff]
        %v2470 = vld [vmem:[%s2435 + $0x140] sm:$0xff]
        %v2471 = vld [vmem:[%s2435 + $0x148] sm:$0xff]
        %v2472 = vld [vmem:[%s2435 + $0x150] sm:$0xff]
        %v2473 = vld [vmem:[%s2435 + $0x158] sm:$0xff]
        %v2474 = vld [vmem:[%s2435 + $0x160] sm:$0xff]
        %v2475 = vld [vmem:[%s2435 + $0x168] sm:$0xff]
        %v2476 = vld [vmem:[%s2435 + $0x170] sm:$0xff]
        %v2477 = vld [vmem:[%s2435 + $0x178] sm:$0xff]
        %v2478 = vld [vmem:[%s2435 + $0x180] sm:$0xff]
        %v2479 = vld [vmem:[%s2435 + $0x188] sm:$0xff]
        %v2480 = vld [vmem:[%s2435 + $0x190] sm:$0xff]
        %v2481 = vld [vmem:[%s2435 + $0x198] sm:$0xff]
        %v2482 = vld [vmem:[%s2435 + $0x1a0] sm:$0xff]
        %v2483 = vld [vmem:[%s2435 + $0x1a8] sm:$0xff]
        %v2484 = vld [vmem:[%s2435 + $0x1e0] sm:$0xff]
        %v2485 = vld [vmem:[%s2435 + $0x1e8] sm:$0xff]
        %v2486 = vld [vmem:[%s2435 + $0x1f0] sm:$0xff]
        %v2487 = vld [vmem:[%s2435 + $0x1f8] sm:$0xff]
        %v2488 = vld [vmem:[%s2435 + $0x200] sm:$0xff]
        %v2489 = vld [vmem:[%s2435 + $0x208] sm:$0xff]
        %v2490 = vld [vmem:[%s2435 + $0x210] sm:$0xff]
        %v2491 = vld [vmem:[%s2435 + $0x218] sm:$0xff]
        %v2492 = vld [vmem:[%s2435 + $0x220] sm:$0xff]
        %v2493 = vld [vmem:[%s2435 + $0x228] sm:$0xff]
        %v2494 = vld [vmem:[%s2435 + $0x230] sm:$0xff]
        %v2495 = vld [vmem:[%s2435 + $0x238] sm:$0xff]
        %v2496 = vld [vmem:[%s2435 + $0x240] sm:$0xff]
        %v2497 = vld [vmem:[%s2435 + $0x248] sm:$0xff]
        %v2498 = vld [vmem:[%s2435 + $0x250] sm:$0xff]
        %v2499 = vld [vmem:[%s2435 + $0x258] sm:$0xff]
        %v2500 = vld [vmem:[%s2435 + $0x260] sm:$0xff]
        %v2501 = vld [vmem:[%s2435 + $0x268] sm:$0xff]
        %v2502 = vld [vmem:[%s2435 + $0x270] sm:$0xff]
        %v2503 = vld [vmem:[%s2435 + $0x278] sm:$0xff]
        %v2504 = vld [vmem:[%s2435 + $0x280] sm:$0xff]
        %v2505 = vld [vmem:[%s2435 + $0x288] sm:$0xff]
        %v2506 = vld [vmem:[%s2435 + $0x290] sm:$0xff]
        %v2507 = vld [vmem:[%s2435 + $0x298] sm:$0xff]
        %v2508 = vld [vmem:[%s2435 + $0x2d0] sm:$0xff]
        %v2509 = vld [vmem:[%s2435 + $0x2d8] sm:$0xff]
        %v2510 = vld [vmem:[%s2435 + $0x2e0] sm:$0xff]
        %v2511 = vld [vmem:[%s2435 + $0x2e8] sm:$0xff]
        %v2512 = vld [vmem:[%s2435 + $0x2f0] sm:$0xff]
        %v2513 = vld [vmem:[%s2435 + $0x2f8] sm:$0xff]
        %v2514 = vld [vmem:[%s2435 + $0x300] sm:$0xff]
        %v2515 = vld [vmem:[%s2435 + $0x308] sm:$0xff]
        %v2516 = vld [vmem:[%s2435 + $0x310] sm:$0xff]
        %v2517 = vld [vmem:[%s2435 + $0x318] sm:$0xff]
        %v2518 = vld [vmem:[%s2435 + $0x320] sm:$0xff]
        %v2519 = vld [vmem:[%s2435 + $0x328] sm:$0xff]
        %v2520 = vld [vmem:[%s2435 + $0x330] sm:$0xff]
        %v2521 = vld [vmem:[%s2435 + $0x338] sm:$0xff]
        %v2522 = vld [vmem:[%s2435 + $0x340] sm:$0xff]
        %v2523 = vld [vmem:[%s2435 + $0x348] sm:$0xff]
        %v2524 = vld [vmem:[%s2435 + $0x350] sm:$0xff]
        %v2525 = vld [vmem:[%s2435 + $0x358] sm:$0xff]
        %v2526 = vld [vmem:[%s2435 + $0x360] sm:$0xff]
        %v2527 = vld [vmem:[%s2435 + $0x368] sm:$0xff]
        %v2528 = vld [vmem:[%s2435 + $0x370] sm:$0xff]
        %v2529 = vld [vmem:[%s2435 + $0x378] sm:$0xff]
        %v2530 = vld [vmem:[%s2435 + $0x380] sm:$0xff]
        %v2531 = vld [vmem:[%s2435 + $0x388] sm:$0xff]
        %v2532 = vld [vmem:[#allocation3] sm:$0xff]
        %v2533 = vld [vmem:[#allocation3 + $0x8] sm:$0xff]
        %v2534 = vld [vmem:[#allocation3 + $0x10] sm:$0xff]
        %v2535 = vld [vmem:[#allocation3 + $0x18] sm:$0xff]
        %v2536 = vld [vmem:[#allocation3 + $0x20] sm:$0xff]
        %v2537 = vld [vmem:[#allocation3 + $0x28] sm:$0xff]
        %v2538 = vld [vmem:[#allocation3 + $0x30] sm:$0xff]
        %v2539 = vld [vmem:[#allocation3 + $0x38] sm:$0xff]
        %v2540 = vld [vmem:[#allocation3 + $0x40] sm:$0xff]
        %v2541 = vld [vmem:[#allocation3 + $0x48] sm:$0xff]
        %v2542 = vld [vmem:[#allocation3 + $0x50] sm:$0xff]
        %v2543 = vld [vmem:[#allocation3 + $0x58] sm:$0xff]
        %v2544 = vld [vmem:[#allocation3 + $0x60] sm:$0xff]
        %v2545 = vld [vmem:[#allocation3 + $0x68] sm:$0xff]
        %v2546 = vld [vmem:[#allocation3 + $0x70] sm:$0xff]
        %v2547 = vld [vmem:[#allocation3 + $0x78] sm:$0xff]
        %v2548 = vld [vmem:[#allocation3 + $0x80] sm:$0xff]
        %v2549 = vld [vmem:[#allocation3 + $0x88] sm:$0xff]
        %v2550 = vld [vmem:[#allocation3 + $0x90] sm:$0xff]
        %v2551 = vld [vmem:[#allocation3 + $0x98] sm:$0xff]
        %v2552 = vld [vmem:[#allocation3 + $0xa0] sm:$0xff]
        %v2553 = vld [vmem:[#allocation3 + $0xa8] sm:$0xff]
        %v2554 = vld [vmem:[#allocation3 + $0xb0] sm:$0xff]
        %v2555 = vld [vmem:[#allocation3 + $0xb8] sm:$0xff]
        %v2556 = vld [vmem:[#allocation3 + $0xc0] sm:$0xff]
        %v2557 = vld [vmem:[#allocation3 + $0xc8] sm:$0xff]
        %v2558 = vld [vmem:[#allocation3 + $0xd0] sm:$0xff]
        %v2559 = vld [vmem:[#allocation3 + $0xd8] sm:$0xff]
        %v2560 = vld [vmem:[#allocation3 + $0xe0] sm:$0xff]
        %v2561 = vld [vmem:[#allocation3 + $0xe8] sm:$0xff]
        %v2562 = vld [vmem:[#allocation3 + $0xf0] sm:$0xff]
        %v2563 = vld [vmem:[#allocation3 + $0xf8] sm:$0xff]
        %v2564 = vpack.c.bf16 %v2439, %v2436
        %v2565 = vpack.c.bf16 %v2440, %v2437
        %v2566 = vpack.c.bf16 %v2441, %v2438
        %v2567 = vpack.c.bf16 %v2445, %v2442
        %v2568 = vpack.c.bf16 %v2446, %v2443
        %v2569 = vpack.c.bf16 %v2447, %v2444
        %v2570 = vpack.c.bf16 %v2451, %v2448
        %v2571 = vpack.c.bf16 %v2452, %v2449
        %v2572 = vpack.c.bf16 %v2453, %v2450
        %v2573 = vpack.c.bf16 %v2457, %v2454
        %v2574 = vpack.c.bf16 %v2458, %v2455
        %v2575 = vpack.c.bf16 %v2459, %v2456
        %v2576 = vpack.c.bf16 %v2463, %v2460
        %v2577 = vpack.c.bf16 %v2464, %v2461
        %v2578 = vpack.c.bf16 %v2465, %v2462
        %v2579 = vpack.c.bf16 %v2469, %v2466
        %v2580 = vpack.c.bf16 %v2470, %v2467
        %v2581 = vpack.c.bf16 %v2471, %v2468
        %v2582 = vpack.c.bf16 %v2475, %v2472
        %v2583 = vpack.c.bf16 %v2476, %v2473
        %v2584 = vpack.c.bf16 %v2477, %v2474
        %v2585 = vpack.c.bf16 %v2481, %v2478
        %v2586 = vpack.c.bf16 %v2482, %v2479
        %v2587 = vpack.c.bf16 %v2483, %v2480
        %v2588 = vpack.c.bf16 %v2487, %v2484
        %v2589 = vpack.c.bf16 %v2488, %v2485
        %v2590 = vpack.c.bf16 %v2489, %v2486
        %v2591 = vpack.c.bf16 %v2493, %v2490
        %v2592 = vpack.c.bf16 %v2494, %v2491
        %v2593 = vpack.c.bf16 %v2495, %v2492
        %v2594 = vpack.c.bf16 %v2499, %v2496
        %v2595 = vpack.c.bf16 %v2500, %v2497
        %v2596 = vpack.c.bf16 %v2501, %v2498
        %v2597 = vpack.c.bf16 %v2505, %v2502
        %v2598 = vpack.c.bf16 %v2506, %v2503
        %v2599 = vpack.c.bf16 %v2507, %v2504
        %v2600 = vpack.c.bf16 %v2511, %v2508
        %v2601 = vpack.c.bf16 %v2512, %v2509
        %v2602 = vpack.c.bf16 %v2513, %v2510
        %v2603 = vpack.c.bf16 %v2517, %v2514
        %v2604 = vpack.c.bf16 %v2518, %v2515
        %v2605 = vpack.c.bf16 %v2519, %v2516
        %v2606 = vpack.c.bf16 %v2523, %v2520
        %v2607 = vpack.c.bf16 %v2524, %v2521
        %v2608 = vpack.c.bf16 %v2525, %v2522
        %v2609 = vpack.c.bf16 %v2529, %v2526
        %v2610 = vpack.c.bf16 %v2530, %v2527
        %v2611 = vpack.c.bf16 %v2531, %v2528
        %s2612 = scalar_lea.vmem [#allocation9], 384
        %v2613 = vld [vmem:[%s2612] sm:$0xf]
        %v2614 = vld [vmem:[%s2612 + $0x4] sm:$0xf]
        %v2615 = vld [vmem:[%s2612 + $0x8] sm:$0xf]
        %v2616 = vld [vmem:[%s2612 + $0xc] sm:$0xf]
        %v2617 = vld [vmem:[%s2612 + $0x10] sm:$0xf]
        %v2618 = vld [vmem:[%s2612 + $0x14] sm:$0xf]
        %v2619 = vld [vmem:[%s2612 + $0x18] sm:$0xf]
        %v2620 = vld [vmem:[%s2612 + $0x1c] sm:$0xf]
        %v2621 = vld [vmem:[%s2612 + $0x20] sm:$0xf]
        %v2622 = vld [vmem:[%s2612 + $0x24] sm:$0xf]
        %v2623 = vld [vmem:[%s2612 + $0x28] sm:$0xf]
        %v2624 = vld [vmem:[%s2612 + $0x2c] sm:$0xf]
        %v2625 = vld [vmem:[%s2612 + $0x30] sm:$0xf]
        %v2626 = vld [vmem:[%s2612 + $0x34] sm:$0xf]
        %v2627 = vld [vmem:[%s2612 + $0x38] sm:$0xf]
        %v2628 = vld [vmem:[%s2612 + $0x3c] sm:$0xf]
        %v2629 = vld [vmem:[%s2612 + $0x40] sm:$0xf]
        %v2630 = vld [vmem:[%s2612 + $0x44] sm:$0xf]
        %v2631 = vld [vmem:[%s2612 + $0x48] sm:$0xf]
        %v2632 = vld [vmem:[%s2612 + $0x4c] sm:$0xf]
        %v2633 = vld [vmem:[%s2612 + $0x50] sm:$0xf]
        %v2634 = vld [vmem:[%s2612 + $0x54] sm:$0xf]
        %v2635 = vld [vmem:[%s2612 + $0x58] sm:$0xf]
        %v2636 = vld [vmem:[%s2612 + $0x5c] sm:$0xf]
        %v2637 = vld [vmem:[%s2612 + $0x60] sm:$0xf]
        %v2638 = vld [vmem:[%s2612 + $0x64] sm:$0xf]
        %v2639 = vld [vmem:[%s2612 + $0x68] sm:$0xf]
        %v2640 = vld [vmem:[%s2612 + $0x6c] sm:$0xf]
        %v2641 = vld [vmem:[%s2612 + $0x70] sm:$0xf]
        %v2642 = vld [vmem:[%s2612 + $0x74] sm:$0xf]
        %v2643 = vld [vmem:[%s2612 + $0x78] sm:$0xf]
        %v2644 = vld [vmem:[%s2612 + $0x7c] sm:$0xf]
        %v2645 = vld [vmem:[%s2612 + $0x80] sm:$0xf]
        %v2646 = vld [vmem:[%s2612 + $0x84] sm:$0xf]
        %v2647 = vld [vmem:[%s2612 + $0x88] sm:$0xf]
        %v2648 = vld [vmem:[%s2612 + $0x8c] sm:$0xf]
        %v2649 = vld [vmem:[%s2612 + $0x90] sm:$0xf]
        %v2650 = vld [vmem:[%s2612 + $0x94] sm:$0xf]
        %v2651 = vld [vmem:[%s2612 + $0x98] sm:$0xf]
        %v2652 = vld [vmem:[%s2612 + $0x9c] sm:$0xf]
        %v2653 = vld [vmem:[%s2612 + $0xa0] sm:$0xf]
        %v2654 = vld [vmem:[%s2612 + $0xa4] sm:$0xf]
        %v2655 = vld [vmem:[%s2612 + $0xa8] sm:$0xf]
        %v2656 = vld [vmem:[%s2612 + $0xac] sm:$0xf]
        %v2657 = vld [vmem:[%s2612 + $0xb0] sm:$0xf]
        %v2658 = vld [vmem:[%s2612 + $0xb4] sm:$0xf]
        %v2659 = vld [vmem:[%s2612 + $0xb8] sm:$0xf]
        %v2660 = vld [vmem:[%s2612 + $0xbc] sm:$0xf]
        %v2709 = vunpack.c.l.b16 %v2613
        %v2710 = vunpack.c.l.b16 %v2614
        %v2711 = vunpack.c.l.b16 %v2615
        %v2712 = vunpack.c.l.b16 %v2616
        %v2713 = vunpack.c.l.b16 %v2617
        %v2714 = vunpack.c.l.b16 %v2618
        %v2715 = vunpack.c.l.b16 %v2619
        %v2716 = vunpack.c.l.b16 %v2620
        %v2717 = vunpack.c.l.b16 %v2621
        %v2718 = vunpack.c.l.b16 %v2622
        %v2719 = vunpack.c.l.b16 %v2623
        %v2720 = vunpack.c.l.b16 %v2624
        %v2721 = vunpack.c.l.b16 %v2625
        %v2722 = vunpack.c.l.b16 %v2626
        %v2723 = vunpack.c.l.b16 %v2627
        %v2724 = vunpack.c.l.b16 %v2628
        %v2725 = vunpack.c.l.b16 %v2629
        %v2726 = vunpack.c.l.b16 %v2630
        %v2727 = vunpack.c.l.b16 %v2631
        %v2728 = vunpack.c.l.b16 %v2632
        %v2729 = vunpack.c.l.b16 %v2633
        %v2730 = vunpack.c.l.b16 %v2634
        %v2731 = vunpack.c.l.b16 %v2635
        %v2732 = vunpack.c.l.b16 %v2636
        %v2733 = vunpack.c.l.b16 %v2637
        %v2734 = vunpack.c.l.b16 %v2638
        %v2735 = vunpack.c.l.b16 %v2639
        %v2736 = vunpack.c.l.b16 %v2640
        %v2737 = vunpack.c.l.b16 %v2641
        %v2738 = vunpack.c.l.b16 %v2642
        %v2739 = vunpack.c.l.b16 %v2643
        %v2740 = vunpack.c.l.b16 %v2644
        %v2741 = vunpack.c.l.b16 %v2645
        %v2742 = vunpack.c.l.b16 %v2646
        %v2743 = vunpack.c.l.b16 %v2647
        %v2744 = vunpack.c.l.b16 %v2648
        %v2745 = vunpack.c.l.b16 %v2649
        %v2746 = vunpack.c.l.b16 %v2650
        %v2747 = vunpack.c.l.b16 %v2651
        %v2748 = vunpack.c.l.b16 %v2652
        %v2749 = vunpack.c.l.b16 %v2653
        %v2750 = vunpack.c.l.b16 %v2654
        %v2751 = vunpack.c.l.b16 %v2655
        %v2752 = vunpack.c.l.b16 %v2656
        %v2753 = vunpack.c.l.b16 %v2657
        %v2754 = vunpack.c.l.b16 %v2658
        %v2755 = vunpack.c.l.b16 %v2659
        %v2756 = vunpack.c.l.b16 %v2660
        %v2757 = vpack.c.b16 %v2710, %v2709
        %v2758 = vpack.c.b16 %v2712, %v2711
        %v2759 = vpack.c.b16 %v2714, %v2713
        %v2760 = vpack.c.b16 %v2716, %v2715
        %v2761 = vpack.c.b16 %v2718, %v2717
        %v2762 = vpack.c.b16 %v2720, %v2719
        %v2763 = vpack.c.b16 %v2722, %v2721
        %v2764 = vpack.c.b16 %v2724, %v2723
        %v2765 = vpack.c.b16 %v2726, %v2725
        %v2766 = vpack.c.b16 %v2728, %v2727
        %v2767 = vpack.c.b16 %v2730, %v2729
        %v2768 = vpack.c.b16 %v2732, %v2731
        %v2769 = vpack.c.b16 %v2734, %v2733
        %v2770 = vpack.c.b16 %v2736, %v2735
        %v2771 = vpack.c.b16 %v2738, %v2737
        %v2772 = vpack.c.b16 %v2740, %v2739
        %v2773 = vpack.c.b16 %v2742, %v2741
        %v2774 = vpack.c.b16 %v2744, %v2743
        %v2775 = vpack.c.b16 %v2746, %v2745
        %v2776 = vpack.c.b16 %v2748, %v2747
        %v2777 = vpack.c.b16 %v2750, %v2749
        %v2778 = vpack.c.b16 %v2752, %v2751
        %v2779 = vpack.c.b16 %v2754, %v2753
        %v2780 = vpack.c.b16 %v2756, %v2755
        %2805 = vmatprep.subr.bf16.mxu0 0
        %2806 = vmatpush1.bf16.msra.mxu0 %v2764
        %2807 = vmatprep.subr.bf16.mxu0 0
        %2808 = vmatpush1.bf16.msra.mxu0 %v2763
        %2809 = vmatprep.subr.bf16.mxu0 0
        %2810 = vmatpush1.bf16.msra.mxu0 %v2762
        %2811 = vmatprep.subr.bf16.mxu0 0
        %2812 = vmatpush1.bf16.msra.mxu0 %v2761
        %2813 = vmatprep.subr.bf16.mxu0 0
        %2814 = vmatpush1.bf16.msra.mxu0 %v2760
        %2815 = vmatprep.subr.bf16.mxu0 0
        %2816 = vmatpush1.bf16.msra.mxu0 %v2759
        %2817 = vmatprep.subr.bf16.mxu0 0
        %2818 = vmatpush1.bf16.msra.mxu0 %v2758
        %2819 = vmatprep.subr.bf16.mxu0 0
        %2820 = vmatpush1.bf16.msra.mxu0 %v2757
        %2821 = vmatprep.subr.bf16.mxu0 0
        %2822 = vmatpush2.bf16.msra.mxu0 %v2772
        %2823 = vmatprep.subr.bf16.mxu0 0
        %2824 = vmatpush2.bf16.msra.mxu0 %v2771
        %2825 = vmatprep.subr.bf16.mxu0 0
        %2826 = vmatpush2.bf16.msra.mxu0 %v2770
        %2827 = vmatprep.subr.bf16.mxu0 0
        %2828 = vmatpush2.bf16.msra.mxu0 %v2769
        %2829 = vmatprep.subr.bf16.mxu0 0
        %2830 = vmatpush2.bf16.msra.mxu0 %v2768
        %2831 = vmatprep.subr.bf16.mxu0 0
        %2832 = vmatpush2.bf16.msra.mxu0 %v2767
        %2833 = vmatprep.subr.bf16.mxu0 0
        %2834 = vmatpush2.bf16.msra.mxu0 %v2766
        %2835 = vmatprep.subr.bf16.mxu0 0
        %2836 = vmatpush2.bf16.msra.mxu0 %v2765
        %2837 = vmatprep.mubr.bf16.mxu0 %v2565
        %2838 = vmatmul.mubr.bf16.gmra.mxu0 %v2564
        %v2839 = vpop.f32.mrf.mxu0
        %v2840 = vadd.f32 0.0, %v2839
        %v2841 = vpop.f32.mrf.mxu0
        %v2842 = vpop.f32.mrf.mxu0
        %v2843 = vadd.f32 0.0, %v2842
        %v2844 = vpop.f32.mrf.mxu0
        %2845 = vmatprep.mubr.bf16.mxu0 %v2568
        %2846 = vmatmul.mubr.bf16.gmra.mxu0 %v2567
        %v2847 = vpop.f32.mrf.mxu0
        %v2848 = vadd.f32 0.0, %v2847
        %v2849 = vpop.f32.mrf.mxu0
        %v2850 = vpop.f32.mrf.mxu0
        %v2851 = vadd.f32 0.0, %v2850
        %v2852 = vpop.f32.mrf.mxu0
        %2853 = vmatprep.mubr.bf16.mxu0 %v2571
        %2854 = vmatmul.mubr.bf16.gmra.mxu0 %v2570
        %v2855 = vpop.f32.mrf.mxu0
        %v2856 = vadd.f32 0.0, %v2855
        %v2857 = vpop.f32.mrf.mxu0
        %v2858 = vpop.f32.mrf.mxu0
        %v2859 = vadd.f32 0.0, %v2858
        %v2860 = vpop.f32.mrf.mxu0
        %2861 = vmatprep.mubr.bf16.mxu0 %v2574
        %2862 = vmatmul.mubr.bf16.gmra.mxu0 %v2573
        %v2863 = vpop.f32.mrf.mxu0
        %v2864 = vadd.f32 0.0, %v2863
        %v2865 = vpop.f32.mrf.mxu0
        %v2866 = vpop.f32.mrf.mxu0
        %v2867 = vadd.f32 0.0, %v2866
        %v2868 = vpop.f32.mrf.mxu0
        %2869 = vmatprep.mubr.bf16.mxu0 %v2577
        %2870 = vmatmul.mubr.bf16.gmra.mxu0 %v2576
        %v2871 = vpop.f32.mrf.mxu0
        %v2872 = vadd.f32 0.0, %v2871
        %v2873 = vpop.f32.mrf.mxu0
        %v2874 = vpop.f32.mrf.mxu0
        %v2875 = vadd.f32 0.0, %v2874
        %v2876 = vpop.f32.mrf.mxu0
        %2877 = vmatprep.mubr.bf16.mxu0 %v2580
        %2878 = vmatmul.mubr.bf16.gmra.mxu0 %v2579
        %v2879 = vpop.f32.mrf.mxu0
        %v2880 = vadd.f32 0.0, %v2879
        %v2881 = vpop.f32.mrf.mxu0
        %v2882 = vpop.f32.mrf.mxu0
        %v2883 = vadd.f32 0.0, %v2882
        %v2884 = vpop.f32.mrf.mxu0
        %2885 = vmatprep.mubr.bf16.mxu0 %v2583
        %2886 = vmatmul.mubr.bf16.gmra.mxu0 %v2582
        %v2887 = vpop.f32.mrf.mxu0
        %v2888 = vadd.f32 0.0, %v2887
        %v2889 = vpop.f32.mrf.mxu0
        %v2890 = vpop.f32.mrf.mxu0
        %v2891 = vadd.f32 0.0, %v2890
        %v2892 = vpop.f32.mrf.mxu0
        %2893 = vmatprep.mubr.bf16.mxu0 %v2586
        %2894 = vmatmul.mubr.bf16.gmra.mxu0 %v2585
        %v2895 = vpop.f32.mrf.mxu0
        %v2896 = vadd.f32 0.0, %v2895
        %v2897 = vpop.f32.mrf.mxu0
        %v2898 = vpop.f32.mrf.mxu0
        %v2899 = vadd.f32 0.0, %v2898
        %v2900 = vpop.f32.mrf.mxu0
        %2901 = vmatprep.mubr.bf16.mxu0 %v2589
        %2902 = vmatmul.mubr.bf16.gmra.mxu0 %v2588
        %v2903 = vpop.f32.mrf.mxu0
        %v2904 = vadd.f32 0.0, %v2903
        %v2905 = vpop.f32.mrf.mxu0
        %v2906 = vpop.f32.mrf.mxu0
        %v2907 = vadd.f32 0.0, %v2906
        %v2908 = vpop.f32.mrf.mxu0
        %2909 = vmatprep.mubr.bf16.mxu0 %v2592
        %2910 = vmatmul.mubr.bf16.gmra.mxu0 %v2591
        %v2911 = vpop.f32.mrf.mxu0
        %v2912 = vadd.f32 0.0, %v2911
        %v2913 = vpop.f32.mrf.mxu0
        %v2914 = vpop.f32.mrf.mxu0
        %v2915 = vadd.f32 0.0, %v2914
        %v2916 = vpop.f32.mrf.mxu0
        %2917 = vmatprep.mubr.bf16.mxu0 %v2595
        %2918 = vmatmul.mubr.bf16.gmra.mxu0 %v2594
        %v2919 = vpop.f32.mrf.mxu0
        %v2920 = vadd.f32 0.0, %v2919
        %v2921 = vpop.f32.mrf.mxu0
        %v2922 = vpop.f32.mrf.mxu0
        %v2923 = vadd.f32 0.0, %v2922
        %v2924 = vpop.f32.mrf.mxu0
        %2925 = vmatprep.mubr.bf16.mxu0 %v2598
        %2926 = vmatmul.mubr.bf16.gmra.mxu0 %v2597
        %v2927 = vpop.f32.mrf.mxu0
        %v2928 = vadd.f32 0.0, %v2927
        %v2929 = vpop.f32.mrf.mxu0
        %v2930 = vpop.f32.mrf.mxu0
        %v2931 = vadd.f32 0.0, %v2930
        %v2932 = vpop.f32.mrf.mxu0
        %2933 = vmatprep.mubr.bf16.mxu0 %v2601
        %2934 = vmatmul.mubr.bf16.gmra.mxu0 %v2600
        %v2935 = vpop.f32.mrf.mxu0
        %v2936 = vadd.f32 0.0, %v2935
        %v2937 = vpop.f32.mrf.mxu0
        %v2938 = vpop.f32.mrf.mxu0
        %v2939 = vadd.f32 0.0, %v2938
        %v2940 = vpop.f32.mrf.mxu0
        %2941 = vmatprep.mubr.bf16.mxu0 %v2604
        %2942 = vmatmul.mubr.bf16.gmra.mxu0 %v2603
        %v2943 = vpop.f32.mrf.mxu0
        %v2944 = vadd.f32 0.0, %v2943
        %v2945 = vpop.f32.mrf.mxu0
        %v2946 = vpop.f32.mrf.mxu0
        %v2947 = vadd.f32 0.0, %v2946
        %v2948 = vpop.f32.mrf.mxu0
        %2949 = vmatprep.mubr.bf16.mxu0 %v2607
        %2950 = vmatmul.mubr.bf16.gmra.mxu0 %v2606
        %v2951 = vpop.f32.mrf.mxu0
        %v2952 = vadd.f32 0.0, %v2951
        %v2953 = vpop.f32.mrf.mxu0
        %v2954 = vpop.f32.mrf.mxu0
        %v2955 = vadd.f32 0.0, %v2954
        %v2956 = vpop.f32.mrf.mxu0
        %2957 = vmatprep.mubr.bf16.mxu0 %v2610
        %2958 = vmatmul.mubr.bf16.gmra.mxu0 %v2609
        %v2959 = vpop.f32.mrf.mxu0
        %v2960 = vadd.f32 0.0, %v2959
        %v2961 = vpop.f32.mrf.mxu0
        %v2962 = vpop.f32.mrf.mxu0
        %v2963 = vadd.f32 0.0, %v2962
        %v2964 = vpop.f32.mrf.mxu0
        %2965 = vdwg.mxu0
        %2966 = vmatprep.subr.bf16.mxu0 0
        %2967 = vmatpush1.bf16.msra.mxu0 %v2780
        %2968 = vmatprep.subr.bf16.mxu0 0
        %2969 = vmatpush1.bf16.msra.mxu0 %v2779
        %2970 = vmatprep.subr.bf16.mxu0 0
        %2971 = vmatpush1.bf16.msra.mxu0 %v2778
        %2972 = vmatprep.subr.bf16.mxu0 0
        %2973 = vmatpush1.bf16.msra.mxu0 %v2777
        %2974 = vmatprep.subr.bf16.mxu0 0
        %2975 = vmatpush1.bf16.msra.mxu0 %v2776
        %2976 = vmatprep.subr.bf16.mxu0 0
        %2977 = vmatpush1.bf16.msra.mxu0 %v2775
        %2978 = vmatprep.subr.bf16.mxu0 0
        %2979 = vmatpush1.bf16.msra.mxu0 %v2774
        %2980 = vmatprep.subr.bf16.mxu0 0
        %2981 = vmatpush1.bf16.msra.mxu0 %v2773
        %2982 = vmatprep.subr.bf16.mxu0 0
        %2983 = vmatpush2.bf16.msra.mxu0 0
        %2984 = vmatprep.subr.bf16.mxu0 0
        %2985 = vmatpush2.bf16.msra.mxu0 0
        %2986 = vmatprep.subr.bf16.mxu0 0
        %2987 = vmatpush2.bf16.msra.mxu0 0
        %2988 = vmatprep.subr.bf16.mxu0 0
        %2989 = vmatpush2.bf16.msra.mxu0 0
        %2990 = vmatprep.subr.bf16.mxu0 0
        %2991 = vmatpush2.bf16.msra.mxu0 0
        %2992 = vmatprep.subr.bf16.mxu0 0
        %2993 = vmatpush2.bf16.msra.mxu0 0
        %2994 = vmatprep.subr.bf16.mxu0 0
        %2995 = vmatpush2.bf16.msra.mxu0 0
        %2996 = vmatprep.subr.bf16.mxu0 0
        %2997 = vmatpush2.bf16.msra.mxu0 0
        %2998 = vmatprep.mubr.bf16.mxu0 0
        %2999 = vmatmul.mubr.bf16.gmra.mxu0 %v2566
        %v3000 = vpop.f32.mrf.mxu0
        %v3001 = vadd.f32 %v2840, %v3000
        %v3002 = vpop.f32.mrf.mxu0
        %v3003 = vpop.f32.mrf.mxu0
        %v3004 = vadd.f32 %v2843, %v3003
        %v3005 = vpop.f32.mrf.mxu0
        %3006 = vmatprep.mubr.bf16.mxu0 0
        %3007 = vmatmul.mubr.bf16.gmra.mxu0 %v2569
        %v3008 = vpop.f32.mrf.mxu0
        %v3009 = vadd.f32 %v2848, %v3008
        %v3010 = vpop.f32.mrf.mxu0
        %v3011 = vpop.f32.mrf.mxu0
        %v3012 = vadd.f32 %v2851, %v3011
        %v3013 = vpop.f32.mrf.mxu0
        %3014 = vmatprep.mubr.bf16.mxu0 0
        %3015 = vmatmul.mubr.bf16.gmra.mxu0 %v2572
        %v3016 = vpop.f32.mrf.mxu0
        %v3017 = vadd.f32 %v2856, %v3016
        %v3018 = vpop.f32.mrf.mxu0
        %v3019 = vpop.f32.mrf.mxu0
        %v3020 = vadd.f32 %v2859, %v3019
        %v3021 = vpop.f32.mrf.mxu0
        %3022 = vmatprep.mubr.bf16.mxu0 0
        %3023 = vmatmul.mubr.bf16.gmra.mxu0 %v2575
        %v3024 = vpop.f32.mrf.mxu0
        %v3025 = vadd.f32 %v2864, %v3024
        %v3026 = vpop.f32.mrf.mxu0
        %v3027 = vpop.f32.mrf.mxu0
        %v3028 = vadd.f32 %v2867, %v3027
        %v3029 = vpop.f32.mrf.mxu0
        %3030 = vmatprep.mubr.bf16.mxu0 0
        %3031 = vmatmul.mubr.bf16.gmra.mxu0 %v2578
        %v3032 = vpop.f32.mrf.mxu0
        %v3033 = vadd.f32 %v2872, %v3032
        %v3034 = vpop.f32.mrf.mxu0
        %v3035 = vpop.f32.mrf.mxu0
        %v3036 = vadd.f32 %v2875, %v3035
        %v3037 = vpop.f32.mrf.mxu0
        %3038 = vmatprep.mubr.bf16.mxu0 0
        %3039 = vmatmul.mubr.bf16.gmra.mxu0 %v2581
        %v3040 = vpop.f32.mrf.mxu0
        %v3041 = vadd.f32 %v2880, %v3040
        %v3042 = vpop.f32.mrf.mxu0
        %v3043 = vpop.f32.mrf.mxu0
        %v3044 = vadd.f32 %v2883, %v3043
        %v3045 = vpop.f32.mrf.mxu0
        %3046 = vmatprep.mubr.bf16.mxu0 0
        %3047 = vmatmul.mubr.bf16.gmra.mxu0 %v2584
        %v3048 = vpop.f32.mrf.mxu0
        %v3049 = vadd.f32 %v2888, %v3048
        %v3050 = vpop.f32.mrf.mxu0
        %v3051 = vpop.f32.mrf.mxu0
        %v3052 = vadd.f32 %v2891, %v3051
        %v3053 = vpop.f32.mrf.mxu0
        %3054 = vmatprep.mubr.bf16.mxu0 0
        %3055 = vmatmul.mubr.bf16.gmra.mxu0 %v2587
        %v3056 = vpop.f32.mrf.mxu0
        %v3057 = vadd.f32 %v2896, %v3056
        %v3058 = vpop.f32.mrf.mxu0
        %v3059 = vpop.f32.mrf.mxu0
        %v3060 = vadd.f32 %v2899, %v3059
        %v3061 = vpop.f32.mrf.mxu0
        %3062 = vmatprep.mubr.bf16.mxu0 0
        %3063 = vmatmul.mubr.bf16.gmra.mxu0 %v2590
        %v3064 = vpop.f32.mrf.mxu0
        %v3065 = vadd.f32 %v2904, %v3064
        %v3066 = vpop.f32.mrf.mxu0
        %v3067 = vpop.f32.mrf.mxu0
        %v3068 = vadd.f32 %v2907, %v3067
        %v3069 = vpop.f32.mrf.mxu0
        %3070 = vmatprep.mubr.bf16.mxu0 0
        %3071 = vmatmul.mubr.bf16.gmra.mxu0 %v2593
        %v3072 = vpop.f32.mrf.mxu0
        %v3073 = vadd.f32 %v2912, %v3072
        %v3074 = vpop.f32.mrf.mxu0
        %v3075 = vpop.f32.mrf.mxu0
        %v3076 = vadd.f32 %v2915, %v3075
        %v3077 = vpop.f32.mrf.mxu0
        %3078 = vmatprep.mubr.bf16.mxu0 0
        %3079 = vmatmul.mubr.bf16.gmra.mxu0 %v2596
        %v3080 = vpop.f32.mrf.mxu0
        %v3081 = vadd.f32 %v2920, %v3080
        %v3082 = vpop.f32.mrf.mxu0
        %v3083 = vpop.f32.mrf.mxu0
        %v3084 = vadd.f32 %v2923, %v3083
        %v3085 = vpop.f32.mrf.mxu0
        %3086 = vmatprep.mubr.bf16.mxu0 0
        %3087 = vmatmul.mubr.bf16.gmra.mxu0 %v2599
        %v3088 = vpop.f32.mrf.mxu0
        %v3089 = vadd.f32 %v2928, %v3088
        %v3090 = vpop.f32.mrf.mxu0
        %v3091 = vpop.f32.mrf.mxu0
        %v3092 = vadd.f32 %v2931, %v3091
        %v3093 = vpop.f32.mrf.mxu0
        %3094 = vmatprep.mubr.bf16.mxu0 0
        %3095 = vmatmul.mubr.bf16.gmra.mxu0 %v2602
        %v3096 = vpop.f32.mrf.mxu0
        %v3097 = vadd.f32 %v2936, %v3096
        %v3098 = vpop.f32.mrf.mxu0
        %v3099 = vpop.f32.mrf.mxu0
        %v3100 = vadd.f32 %v2939, %v3099
        %v3101 = vpop.f32.mrf.mxu0
        %3102 = vmatprep.mubr.bf16.mxu0 0
        %3103 = vmatmul.mubr.bf16.gmra.mxu0 %v2605
        %v3104 = vpop.f32.mrf.mxu0
        %v3105 = vadd.f32 %v2944, %v3104
        %v3106 = vpop.f32.mrf.mxu0
        %v3107 = vpop.f32.mrf.mxu0
        %v3108 = vadd.f32 %v2947, %v3107
        %v3109 = vpop.f32.mrf.mxu0
        %3110 = vmatprep.mubr.bf16.mxu0 0
        %3111 = vmatmul.mubr.bf16.gmra.mxu0 %v2608
        %v3112 = vpop.f32.mrf.mxu0
        %v3113 = vadd.f32 %v2952, %v3112
        %v3114 = vpop.f32.mrf.mxu0
        %v3115 = vpop.f32.mrf.mxu0
        %v3116 = vadd.f32 %v2955, %v3115
        %v3117 = vpop.f32.mrf.mxu0
        %3118 = vmatprep.mubr.bf16.mxu0 0
        %3119 = vmatmul.mubr.bf16.gmra.mxu0 %v2611
        %v3120 = vpop.f32.mrf.mxu0
        %v3121 = vadd.f32 %v2960, %v3120
        %v3122 = vpop.f32.mrf.mxu0
        %v3123 = vpop.f32.mrf.mxu0
        %v3124 = vadd.f32 %v2963, %v3123
        %v3125 = vpop.f32.mrf.mxu0
        %3126 = vdwg.mxu0
        %v3127 = vadd.f32 %v2532, %v3001
        %v3128 = vadd.f32 %v2533, %v3004
        %v3129 = vadd.f32 %v2534, %v3009
        %v3130 = vadd.f32 %v2535, %v3012
        %v3131 = vadd.f32 %v2536, %v3017
        %v3132 = vadd.f32 %v2537, %v3020
        %v3133 = vadd.f32 %v2538, %v3025
        %v3134 = vadd.f32 %v2539, %v3028
        %v3135 = vadd.f32 %v2540, %v3033
        %v3136 = vadd.f32 %v2541, %v3036
        %v3137 = vadd.f32 %v2542, %v3041
        %v3138 = vadd.f32 %v2543, %v3044
        %v3139 = vadd.f32 %v2544, %v3049
        %v3140 = vadd.f32 %v2545, %v3052
        %v3141 = vadd.f32 %v2546, %v3057
        %v3142 = vadd.f32 %v2547, %v3060
        %v3143 = vadd.f32 %v2548, %v3065
        %v3144 = vadd.f32 %v2549, %v3068
        %v3145 = vadd.f32 %v2550, %v3073
        %v3146 = vadd.f32 %v2551, %v3076
        %v3147 = vadd.f32 %v2552, %v3081
        %v3148 = vadd.f32 %v2553, %v3084
        %v3149 = vadd.f32 %v2554, %v3089
        %v3150 = vadd.f32 %v2555, %v3092
        %v3151 = vadd.f32 %v2556, %v3097
        %v3152 = vadd.f32 %v2557, %v3100
        %v3153 = vadd.f32 %v2558, %v3105
        %v3154 = vadd.f32 %v2559, %v3108
        %v3155 = vadd.f32 %v2560, %v3113
        %v3156 = vadd.f32 %v2561, %v3116
        %v3157 = vadd.f32 %v2562, %v3121
        %v3158 = vadd.f32 %v2563, %v3124
        %3159 = vst [vmem:[#allocation3] sm:$0xff] %v3127
        %3160 = vst [vmem:[#allocation3 + $0x8] sm:$0xff] %v3128
        %3161 = vst [vmem:[#allocation3 + $0x10] sm:$0xff] %v3129
        %3162 = vst [vmem:[#allocation3 + $0x18] sm:$0xff] %v3130
        %3163 = vst [vmem:[#allocation3 + $0x20] sm:$0xff] %v3131
        %3164 = vst [vmem:[#allocation3 + $0x28] sm:$0xff] %v3132
        %3165 = vst [vmem:[#allocation3 + $0x30] sm:$0xff] %v3133
        %3166 = vst [vmem:[#allocation3 + $0x38] sm:$0xff] %v3134
        %3167 = vst [vmem:[#allocation3 + $0x40] sm:$0xff] %v3135
        %3168 = vst [vmem:[#allocation3 + $0x48] sm:$0xff] %v3136
        %3169 = vst [vmem:[#allocation3 + $0x50] sm:$0xff] %v3137
        %3170 = vst [vmem:[#allocation3 + $0x58] sm:$0xff] %v3138
        %3171 = vst [vmem:[#allocation3 + $0x60] sm:$0xff] %v3139
        %3172 = vst [vmem:[#allocation3 + $0x68] sm:$0xff] %v3140
        %3173 = vst [vmem:[#allocation3 + $0x70] sm:$0xff] %v3141
        %3174 = vst [vmem:[#allocation3 + $0x78] sm:$0xff] %v3142
        %3175 = vst [vmem:[#allocation3 + $0x80] sm:$0xff] %v3143
        %3176 = vst [vmem:[#allocation3 + $0x88] sm:$0xff] %v3144
        %3177 = vst [vmem:[#allocation3 + $0x90] sm:$0xff] %v3145
        %3178 = vst [vmem:[#allocation3 + $0x98] sm:$0xff] %v3146
        %3179 = vst [vmem:[#allocation3 + $0xa0] sm:$0xff] %v3147
        %3180 = vst [vmem:[#allocation3 + $0xa8] sm:$0xff] %v3148
        %3181 = vst [vmem:[#allocation3 + $0xb0] sm:$0xff] %v3149
        %3182 = vst [vmem:[#allocation3 + $0xb8] sm:$0xff] %v3150
        %3183 = vst [vmem:[#allocation3 + $0xc0] sm:$0xff] %v3151
        %3184 = vst [vmem:[#allocation3 + $0xc8] sm:$0xff] %v3152
        %3185 = vst [vmem:[#allocation3 + $0xd0] sm:$0xff] %v3153
        %3186 = vst [vmem:[#allocation3 + $0xd8] sm:$0xff] %v3154
        %3187 = vst [vmem:[#allocation3 + $0xe0] sm:$0xff] %v3155
        %3188 = vst [vmem:[#allocation3 + $0xe8] sm:$0xff] %v3156
        %3189 = vst [vmem:[#allocation3 + $0xf0] sm:$0xff] %v3157
        %3190 = vst [vmem:[#allocation3 + $0xf8] sm:$0xff] %v3158
        %v3191 = vld [vmem:[#allocation3] sm:$0xff]
        %v3192 = vld [vmem:[#allocation3 + $0x8] sm:$0xff]
        %v3193 = vld [vmem:[#allocation3 + $0x10] sm:$0xff]
        %v3194 = vld [vmem:[#allocation3 + $0x18] sm:$0xff]
        %v3195 = vld [vmem:[#allocation3 + $0x20] sm:$0xff]
        %v3196 = vld [vmem:[#allocation3 + $0x28] sm:$0xff]
        %v3197 = vld [vmem:[#allocation3 + $0x30] sm:$0xff]
        %v3198 = vld [vmem:[#allocation3 + $0x38] sm:$0xff]
        %v3199 = vld [vmem:[#allocation3 + $0x40] sm:$0xff]
        %v3200 = vld [vmem:[#allocation3 + $0x48] sm:$0xff]
        %v3201 = vld [vmem:[#allocation3 + $0x50] sm:$0xff]
        %v3202 = vld [vmem:[#allocation3 + $0x58] sm:$0xff]
        %v3203 = vld [vmem:[#allocation3 + $0x60] sm:$0xff]
        %v3204 = vld [vmem:[#allocation3 + $0x68] sm:$0xff]
        %v3205 = vld [vmem:[#allocation3 + $0x70] sm:$0xff]
        %v3206 = vld [vmem:[#allocation3 + $0x78] sm:$0xff]
        %v3207 = vld [vmem:[#allocation3 + $0x80] sm:$0xff]
        %v3208 = vld [vmem:[#allocation3 + $0x88] sm:$0xff]
        %v3209 = vld [vmem:[#allocation3 + $0x90] sm:$0xff]
        %v3210 = vld [vmem:[#allocation3 + $0x98] sm:$0xff]
        %v3211 = vld [vmem:[#allocation3 + $0xa0] sm:$0xff]
        %v3212 = vld [vmem:[#allocation3 + $0xa8] sm:$0xff]
        %v3213 = vld [vmem:[#allocation3 + $0xb0] sm:$0xff]
        %v3214 = vld [vmem:[#allocation3 + $0xb8] sm:$0xff]
        %v3215 = vld [vmem:[#allocation3 + $0xc0] sm:$0xff]
        %v3216 = vld [vmem:[#allocation3 + $0xc8] sm:$0xff]
        %v3217 = vld [vmem:[#allocation3 + $0xd0] sm:$0xff]
        %v3218 = vld [vmem:[#allocation3 + $0xd8] sm:$0xff]
        %v3219 = vld [vmem:[#allocation3 + $0xe0] sm:$0xff]
        %v3220 = vld [vmem:[#allocation3 + $0xe8] sm:$0xff]
        %v3221 = vld [vmem:[#allocation3 + $0xf0] sm:$0xff]
        %v3222 = vld [vmem:[#allocation3 + $0xf8] sm:$0xff]
        %v3223 = vmax.f32 %v3191, 0.0
        %v3224 = vmax.f32 %v3192, 0.0
        %v3225 = vmax.f32 %v3193, 0.0
        %v3226 = vmax.f32 %v3194, 0.0
        %v3227 = vmax.f32 %v3195, 0.0
        %v3228 = vmax.f32 %v3196, 0.0
        %v3229 = vmax.f32 %v3197, 0.0
        %v3230 = vmax.f32 %v3198, 0.0
        %v3231 = vmax.f32 %v3199, 0.0
        %v3232 = vmax.f32 %v3200, 0.0
        %v3233 = vmax.f32 %v3201, 0.0
        %v3234 = vmax.f32 %v3202, 0.0
        %v3235 = vmax.f32 %v3203, 0.0
        %v3236 = vmax.f32 %v3204, 0.0
        %v3237 = vmax.f32 %v3205, 0.0
        %v3238 = vmax.f32 %v3206, 0.0
        %v3239 = vmax.f32 %v3207, 0.0
        %v3240 = vmax.f32 %v3208, 0.0
        %v3241 = vmax.f32 %v3209, 0.0
        %v3242 = vmax.f32 %v3210, 0.0
        %v3243 = vmax.f32 %v3211, 0.0
        %v3244 = vmax.f32 %v3212, 0.0
        %v3245 = vmax.f32 %v3213, 0.0
        %v3246 = vmax.f32 %v3214, 0.0
        %v3247 = vmax.f32 %v3215, 0.0
        %v3248 = vmax.f32 %v3216, 0.0
        %v3249 = vmax.f32 %v3217, 0.0
        %v3250 = vmax.f32 %v3218, 0.0
        %v3251 = vmax.f32 %v3219, 0.0
        %v3252 = vmax.f32 %v3220, 0.0
        %v3253 = vmax.f32 %v3221, 0.0
        %v3254 = vmax.f32 %v3222, 0.0
        %v3255 = vpack.c.bf16 %v3224, %v3223
        %v3256 = vpack.c.bf16 %v3226, %v3225
        %v3257 = vpack.c.bf16 %v3228, %v3227
        %v3258 = vpack.c.bf16 %v3230, %v3229
        %v3259 = vpack.c.bf16 %v3232, %v3231
        %v3260 = vpack.c.bf16 %v3234, %v3233
        %v3261 = vpack.c.bf16 %v3236, %v3235
        %v3262 = vpack.c.bf16 %v3238, %v3237
        %v3263 = vpack.c.bf16 %v3240, %v3239
        %v3264 = vpack.c.bf16 %v3242, %v3241
        %v3265 = vpack.c.bf16 %v3244, %v3243
        %v3266 = vpack.c.bf16 %v3246, %v3245
        %v3267 = vpack.c.bf16 %v3248, %v3247
        %v3268 = vpack.c.bf16 %v3250, %v3249
        %v3269 = vpack.c.bf16 %v3252, %v3251
        %v3270 = vpack.c.bf16 %v3254, %v3253
        %v3271 = vld [vmem:[#allocation10] sm:$0xf]
        %v3272 = vld [vmem:[#allocation10 + $0x4] sm:$0xf]
        %v3273 = vld [vmem:[#allocation10 + $0x8] sm:$0xf]
        %v3274 = vld [vmem:[#allocation10 + $0xc] sm:$0xf]
        %v3275 = vld [vmem:[#allocation10 + $0x10] sm:$0xf]
        %v3276 = vld [vmem:[#allocation10 + $0x14] sm:$0xf]
        %v3277 = vld [vmem:[#allocation10 + $0x18] sm:$0xf]
        %v3278 = vld [vmem:[#allocation10 + $0x1c] sm:$0xf]
        %v3279 = vld [vmem:[#allocation10 + $0x20] sm:$0xf]
        %v3280 = vld [vmem:[#allocation10 + $0x24] sm:$0xf]
        %v3281 = vld [vmem:[#allocation10 + $0x28] sm:$0xf]
        %v3282 = vld [vmem:[#allocation10 + $0x2c] sm:$0xf]
        %v3283 = vld [vmem:[#allocation10 + $0x30] sm:$0xf]
        %v3284 = vld [vmem:[#allocation10 + $0x34] sm:$0xf]
        %v3285 = vld [vmem:[#allocation10 + $0x38] sm:$0xf]
        %v3286 = vld [vmem:[#allocation10 + $0x3c] sm:$0xf]
        %v3287 = vld [vmem:[%s6] sm:$0x1]
        %v3289 = vlaneseq
        %v3290 = vshrl.u32 %v3289, 7
        %v3291 = vsub.s32 0, %v3290
        %v3292 = vrot.slane %v3287, %v3291
        %v3310 = vunpack.c.l.b16 %v3271
        %v3311 = vunpack.c.l.b16 %v3272
        %v3312 = vunpack.c.l.b16 %v3273
        %v3313 = vunpack.c.l.b16 %v3274
        %v3314 = vunpack.c.l.b16 %v3275
        %v3315 = vunpack.c.l.b16 %v3276
        %v3316 = vunpack.c.l.b16 %v3277
        %v3317 = vunpack.c.l.b16 %v3278
        %v3318 = vunpack.c.l.b16 %v3279
        %v3319 = vunpack.c.l.b16 %v3280
        %v3320 = vunpack.c.l.b16 %v3281
        %v3321 = vunpack.c.l.b16 %v3282
        %v3322 = vunpack.c.l.b16 %v3283
        %v3323 = vunpack.c.l.b16 %v3284
        %v3324 = vunpack.c.l.b16 %v3285
        %v3325 = vunpack.c.l.b16 %v3286
        %v3326 = vpack.c.b16 %v3311, %v3310
        %v3327 = vpack.c.b16 %v3313, %v3312
        %v3328 = vpack.c.b16 %v3315, %v3314
        %v3329 = vpack.c.b16 %v3317, %v3316
        %v3330 = vpack.c.b16 %v3319, %v3318
        %v3331 = vpack.c.b16 %v3321, %v3320
        %v3332 = vpack.c.b16 %v3323, %v3322
        %v3333 = vpack.c.b16 %v3325, %v3324
        %3342 = vmatprep.subr.bf16.mxu0 0
        %3343 = vmatpush1.bf16.msra.mxu0 %v3333
        %3344 = vmatprep.subr.bf16.mxu0 0
        %3345 = vmatpush1.bf16.msra.mxu0 %v3332
        %3346 = vmatprep.subr.bf16.mxu0 0
        %3347 = vmatpush1.bf16.msra.mxu0 %v3331
        %3348 = vmatprep.subr.bf16.mxu0 0
        %3349 = vmatpush1.bf16.msra.mxu0 %v3330
        %3350 = vmatprep.subr.bf16.mxu0 0
        %3351 = vmatpush1.bf16.msra.mxu0 %v3329
        %3352 = vmatprep.subr.bf16.mxu0 0
        %3353 = vmatpush1.bf16.msra.mxu0 %v3328
        %3354 = vmatprep.subr.bf16.mxu0 0
        %3355 = vmatpush1.bf16.msra.mxu0 %v3327
        %3356 = vmatprep.subr.bf16.mxu0 0
        %3357 = vmatpush1.bf16.msra.mxu0 %v3326
        %3358 = vmatprep.subr.bf16.mxu0 0
        %3359 = vmatpush2.bf16.msra.mxu0 0
        %3360 = vmatprep.subr.bf16.mxu0 0
        %3361 = vmatpush2.bf16.msra.mxu0 0
        %3362 = vmatprep.subr.bf16.mxu0 0
        %3363 = vmatpush2.bf16.msra.mxu0 0
        %3364 = vmatprep.subr.bf16.mxu0 0
        %3365 = vmatpush2.bf16.msra.mxu0 0
        %3366 = vmatprep.subr.bf16.mxu0 0
        %3367 = vmatpush2.bf16.msra.mxu0 0
        %3368 = vmatprep.subr.bf16.mxu0 0
        %3369 = vmatpush2.bf16.msra.mxu0 0
        %3370 = vmatprep.subr.bf16.mxu0 0
        %3371 = vmatpush2.bf16.msra.mxu0 0
        %3372 = vmatprep.subr.bf16.mxu0 0
        %3373 = vmatpush2.bf16.msra.mxu0 0
        %3374 = vmatprep.mubr.bf16.mxu0 0
        %3375 = vmatmul.mubr.bf16.gmra.mxu0 %v3255
        %v3376 = vpop.f32.mrf.mxu0
        %v3377 = vadd.f32 %v3292, %v3376
        %v3378 = vpop.f32.mrf.mxu0
        %v3379 = vpop.f32.mrf.mxu0
        %v3380 = vadd.f32 %v3292, %v3379
        %v3381 = vpop.f32.mrf.mxu0
        %3382 = vmatprep.mubr.bf16.mxu0 0
        %3383 = vmatmul.mubr.bf16.gmra.mxu0 %v3256
        %v3384 = vpop.f32.mrf.mxu0
        %v3385 = vadd.f32 %v3292, %v3384
        %v3386 = vpop.f32.mrf.mxu0
        %v3387 = vpop.f32.mrf.mxu0
        %v3388 = vadd.f32 %v3292, %v3387
        %v3389 = vpop.f32.mrf.mxu0
        %3390 = vmatprep.mubr.bf16.mxu0 0
        %3391 = vmatmul.mubr.bf16.gmra.mxu0 %v3257
        %v3392 = vpop.f32.mrf.mxu0
        %v3393 = vadd.f32 %v3292, %v3392
        %v3394 = vpop.f32.mrf.mxu0
        %v3395 = vpop.f32.mrf.mxu0
        %v3396 = vadd.f32 %v3292, %v3395
        %v3397 = vpop.f32.mrf.mxu0
        %3398 = vmatprep.mubr.bf16.mxu0 0
        %3399 = vmatmul.mubr.bf16.gmra.mxu0 %v3258
        %v3400 = vpop.f32.mrf.mxu0
        %v3401 = vadd.f32 %v3292, %v3400
        %v3402 = vpop.f32.mrf.mxu0
        %v3403 = vpop.f32.mrf.mxu0
        %v3404 = vadd.f32 %v3292, %v3403
        %v3405 = vpop.f32.mrf.mxu0
        %3406 = vmatprep.mubr.bf16.mxu0 0
        %3407 = vmatmul.mubr.bf16.gmra.mxu0 %v3259
        %v3408 = vpop.f32.mrf.mxu0
        %v3409 = vadd.f32 %v3292, %v3408
        %v3410 = vpop.f32.mrf.mxu0
        %v3411 = vpop.f32.mrf.mxu0
        %v3412 = vadd.f32 %v3292, %v3411
        %v3413 = vpop.f32.mrf.mxu0
        %3414 = vmatprep.mubr.bf16.mxu0 0
        %3415 = vmatmul.mubr.bf16.gmra.mxu0 %v3260
        %v3416 = vpop.f32.mrf.mxu0
        %v3417 = vadd.f32 %v3292, %v3416
        %v3418 = vpop.f32.mrf.mxu0
        %v3419 = vpop.f32.mrf.mxu0
        %v3420 = vadd.f32 %v3292, %v3419
        %v3421 = vpop.f32.mrf.mxu0
        %3422 = vmatprep.mubr.bf16.mxu0 0
        %3423 = vmatmul.mubr.bf16.gmra.mxu0 %v3261
        %v3424 = vpop.f32.mrf.mxu0
        %v3425 = vadd.f32 %v3292, %v3424
        %v3426 = vpop.f32.mrf.mxu0
        %v3427 = vpop.f32.mrf.mxu0
        %v3428 = vadd.f32 %v3292, %v3427
        %v3429 = vpop.f32.mrf.mxu0
        %3430 = vmatprep.mubr.bf16.mxu0 0
        %3431 = vmatmul.mubr.bf16.gmra.mxu0 %v3262
        %v3432 = vpop.f32.mrf.mxu0
        %v3433 = vadd.f32 %v3292, %v3432
        %v3434 = vpop.f32.mrf.mxu0
        %v3435 = vpop.f32.mrf.mxu0
        %v3436 = vadd.f32 %v3292, %v3435
        %v3437 = vpop.f32.mrf.mxu0
        %3438 = vmatprep.mubr.bf16.mxu0 0
        %3439 = vmatmul.mubr.bf16.gmra.mxu0 %v3263
        %v3440 = vpop.f32.mrf.mxu0
        %v3441 = vadd.f32 %v3292, %v3440
        %v3442 = vpop.f32.mrf.mxu0
        %v3443 = vpop.f32.mrf.mxu0
        %v3444 = vadd.f32 %v3292, %v3443
        %v3445 = vpop.f32.mrf.mxu0
        %3446 = vmatprep.mubr.bf16.mxu0 0
        %3447 = vmatmul.mubr.bf16.gmra.mxu0 %v3264
        %v3448 = vpop.f32.mrf.mxu0
        %v3449 = vadd.f32 %v3292, %v3448
        %v3450 = vpop.f32.mrf.mxu0
        %v3451 = vpop.f32.mrf.mxu0
        %v3452 = vadd.f32 %v3292, %v3451
        %v3453 = vpop.f32.mrf.mxu0
        %3454 = vmatprep.mubr.bf16.mxu0 0
        %3455 = vmatmul.mubr.bf16.gmra.mxu0 %v3265
        %v3456 = vpop.f32.mrf.mxu0
        %v3457 = vadd.f32 %v3292, %v3456
        %v3458 = vpop.f32.mrf.mxu0
        %v3459 = vpop.f32.mrf.mxu0
        %v3460 = vadd.f32 %v3292, %v3459
        %v3461 = vpop.f32.mrf.mxu0
        %3462 = vmatprep.mubr.bf16.mxu0 0
        %3463 = vmatmul.mubr.bf16.gmra.mxu0 %v3266
        %v3464 = vpop.f32.mrf.mxu0
        %v3465 = vadd.f32 %v3292, %v3464
        %v3466 = vpop.f32.mrf.mxu0
        %v3467 = vpop.f32.mrf.mxu0
        %v3468 = vadd.f32 %v3292, %v3467
        %v3469 = vpop.f32.mrf.mxu0
        %3470 = vmatprep.mubr.bf16.mxu0 0
        %3471 = vmatmul.mubr.bf16.gmra.mxu0 %v3267
        %v3472 = vpop.f32.mrf.mxu0
        %v3473 = vadd.f32 %v3292, %v3472
        %v3474 = vpop.f32.mrf.mxu0
        %v3475 = vpop.f32.mrf.mxu0
        %v3476 = vadd.f32 %v3292, %v3475
        %v3477 = vpop.f32.mrf.mxu0
        %3478 = vmatprep.mubr.bf16.mxu0 0
        %3479 = vmatmul.mubr.bf16.gmra.mxu0 %v3268
        %v3480 = vpop.f32.mrf.mxu0
        %v3481 = vadd.f32 %v3292, %v3480
        %v3482 = vpop.f32.mrf.mxu0
        %v3483 = vpop.f32.mrf.mxu0
        %v3484 = vadd.f32 %v3292, %v3483
        %v3485 = vpop.f32.mrf.mxu0
        %3486 = vmatprep.mubr.bf16.mxu0 0
        %3487 = vmatmul.mubr.bf16.gmra.mxu0 %v3269
        %v3488 = vpop.f32.mrf.mxu0
        %v3489 = vadd.f32 %v3292, %v3488
        %v3490 = vpop.f32.mrf.mxu0
        %v3491 = vpop.f32.mrf.mxu0
        %v3492 = vadd.f32 %v3292, %v3491
        %v3493 = vpop.f32.mrf.mxu0
        %3494 = vmatprep.mubr.bf16.mxu0 0
        %3495 = vmatmul.mubr.bf16.gmra.mxu0 %v3270
        %v3496 = vpop.f32.mrf.mxu0
        %v3497 = vadd.f32 %v3292, %v3496
        %v3498 = vpop.f32.mrf.mxu0
        %v3499 = vpop.f32.mrf.mxu0
        %v3500 = vadd.f32 %v3292, %v3499
        %v3501 = vpop.f32.mrf.mxu0
        %3502 = vdwg.mxu0
        %v3503 = vmax.f32 %v3377, 0.0
        %v3504 = vmax.f32 %v3380, 0.0
        %v3505 = vmax.f32 %v3385, 0.0
        %v3506 = vmax.f32 %v3388, 0.0
        %v3507 = vmax.f32 %v3393, 0.0
        %v3508 = vmax.f32 %v3396, 0.0
        %v3509 = vmax.f32 %v3401, 0.0
        %v3510 = vmax.f32 %v3404, 0.0
        %v3511 = vmax.f32 %v3409, 0.0
        %v3512 = vmax.f32 %v3412, 0.0
        %v3513 = vmax.f32 %v3417, 0.0
        %v3514 = vmax.f32 %v3420, 0.0
        %v3515 = vmax.f32 %v3425, 0.0
        %v3516 = vmax.f32 %v3428, 0.0
        %v3517 = vmax.f32 %v3433, 0.0
        %v3518 = vmax.f32 %v3436, 0.0
        %v3519 = vmax.f32 %v3441, 0.0
        %v3520 = vmax.f32 %v3444, 0.0
        %v3521 = vmax.f32 %v3449, 0.0
        %v3522 = vmax.f32 %v3452, 0.0
        %v3523 = vmax.f32 %v3457, 0.0
        %v3524 = vmax.f32 %v3460, 0.0
        %v3525 = vmax.f32 %v3465, 0.0
        %v3526 = vmax.f32 %v3468, 0.0
        %v3527 = vmax.f32 %v3473, 0.0
        %v3528 = vmax.f32 %v3476, 0.0
        %v3529 = vmax.f32 %v3481, 0.0
        %v3530 = vmax.f32 %v3484, 0.0
        %v3531 = vmax.f32 %v3489, 0.0
        %v3532 = vmax.f32 %v3492, 0.0
        %v3533 = vmax.f32 %v3497, 0.0
        %v3534 = vmax.f32 %v3500, 0.0
        %v3535 = vld [vmem:[%s379] sm:$0xff]
        %v3536 = vld [vmem:[%s379 + $0x8] sm:$0xff]
        %v3537 = vld [vmem:[%s379 + $0x10] sm:$0xff]
        %v3538 = vld [vmem:[%s379 + $0x18] sm:$0xff]
        %v3539 = vld [vmem:[%s379 + $0x20] sm:$0xff]
        %v3540 = vld [vmem:[%s379 + $0x28] sm:$0xff]
        %v3541 = vld [vmem:[%s379 + $0x30] sm:$0xff]
        %v3542 = vld [vmem:[%s379 + $0x38] sm:$0xff]
        %v3543 = vld [vmem:[%s379 + $0x40] sm:$0xff]
        %v3544 = vld [vmem:[%s379 + $0x48] sm:$0xff]
        %v3545 = vld [vmem:[%s379 + $0x50] sm:$0xff]
        %v3546 = vld [vmem:[%s379 + $0x58] sm:$0xff]
        %v3547 = vld [vmem:[%s379 + $0x60] sm:$0xff]
        %v3548 = vld [vmem:[%s379 + $0x68] sm:$0xff]
        %v3549 = vld [vmem:[%s379 + $0x70] sm:$0xff]
        %v3550 = vld [vmem:[%s379 + $0x78] sm:$0xff]
        %v3551 = vld [vmem:[%s379 + $0x80] sm:$0xff]
        %v3552 = vld [vmem:[%s379 + $0x88] sm:$0xff]
        %v3553 = vld [vmem:[%s379 + $0x90] sm:$0xff]
        %v3554 = vld [vmem:[%s379 + $0x98] sm:$0xff]
        %v3555 = vld [vmem:[%s379 + $0xa0] sm:$0xff]
        %v3556 = vld [vmem:[%s379 + $0xa8] sm:$0xff]
        %v3557 = vld [vmem:[%s379 + $0xb0] sm:$0xff]
        %v3558 = vld [vmem:[%s379 + $0xb8] sm:$0xff]
        %v3559 = vld [vmem:[%s379 + $0xc0] sm:$0xff]
        %v3560 = vld [vmem:[%s379 + $0xc8] sm:$0xff]
        %v3561 = vld [vmem:[%s379 + $0xd0] sm:$0xff]
        %v3562 = vld [vmem:[%s379 + $0xd8] sm:$0xff]
        %v3563 = vld [vmem:[%s379 + $0xe0] sm:$0xff]
        %v3564 = vld [vmem:[%s379 + $0xe8] sm:$0xff]
        %v3565 = vld [vmem:[%s379 + $0xf0] sm:$0xff]
        %v3566 = vld [vmem:[%s379 + $0xf8] sm:$0xff]
        %v3567 = vadd.f32 %v3535, %v3503
        %v3568 = vadd.f32 %v3536, %v3504
        %v3569 = vadd.f32 %v3537, %v3505
        %v3570 = vadd.f32 %v3538, %v3506
        %v3571 = vadd.f32 %v3539, %v3507
        %v3572 = vadd.f32 %v3540, %v3508
        %v3573 = vadd.f32 %v3541, %v3509
        %v3574 = vadd.f32 %v3542, %v3510
        %v3575 = vadd.f32 %v3543, %v3511
        %v3576 = vadd.f32 %v3544, %v3512
        %v3577 = vadd.f32 %v3545, %v3513
        %v3578 = vadd.f32 %v3546, %v3514
        %v3579 = vadd.f32 %v3547, %v3515
        %v3580 = vadd.f32 %v3548, %v3516
        %v3581 = vadd.f32 %v3549, %v3517
        %v3582 = vadd.f32 %v3550, %v3518
        %v3583 = vadd.f32 %v3551, %v3519
        %v3584 = vadd.f32 %v3552, %v3520
        %v3585 = vadd.f32 %v3553, %v3521
        %v3586 = vadd.f32 %v3554, %v3522
        %v3587 = vadd.f32 %v3555, %v3523
        %v3588 = vadd.f32 %v3556, %v3524
        %v3589 = vadd.f32 %v3557, %v3525
        %v3590 = vadd.f32 %v3558, %v3526
        %v3591 = vadd.f32 %v3559, %v3527
        %v3592 = vadd.f32 %v3560, %v3528
        %v3593 = vadd.f32 %v3561, %v3529
        %v3594 = vadd.f32 %v3562, %v3530
        %v3595 = vadd.f32 %v3563, %v3531
        %v3596 = vadd.f32 %v3564, %v3532
        %v3597 = vadd.f32 %v3565, %v3533
        %v3598 = vadd.f32 %v3566, %v3534
        %s3599 = scalar_lea.vmem %s341, %s378 [#allocation12]
        %3600 = vst [vmem:[%s3599] sm:$0xff] %v3567
        %3601 = vst [vmem:[%s3599 + $0x8] sm:$0xff] %v3568
        %3602 = vst [vmem:[%s3599 + $0x10] sm:$0xff] %v3569
        %3603 = vst [vmem:[%s3599 + $0x18] sm:$0xff] %v3570
        %3604 = vst [vmem:[%s3599 + $0x20] sm:$0xff] %v3571
        %3605 = vst [vmem:[%s3599 + $0x28] sm:$0xff] %v3572
        %3606 = vst [vmem:[%s3599 + $0x30] sm:$0xff] %v3573
        %3607 = vst [vmem:[%s3599 + $0x38] sm:$0xff] %v3574
        %3608 = vst [vmem:[%s3599 + $0x40] sm:$0xff] %v3575
        %3609 = vst [vmem:[%s3599 + $0x48] sm:$0xff] %v3576
        %3610 = vst [vmem:[%s3599 + $0x50] sm:$0xff] %v3577
        %3611 = vst [vmem:[%s3599 + $0x58] sm:$0xff] %v3578
        %3612 = vst [vmem:[%s3599 + $0x60] sm:$0xff] %v3579
        %3613 = vst [vmem:[%s3599 + $0x68] sm:$0xff] %v3580
        %3614 = vst [vmem:[%s3599 + $0x70] sm:$0xff] %v3581
        %3615 = vst [vmem:[%s3599 + $0x78] sm:$0xff] %v3582
        %3616 = vst [vmem:[%s3599 + $0x80] sm:$0xff] %v3583
        %3617 = vst [vmem:[%s3599 + $0x88] sm:$0xff] %v3584
        %3618 = vst [vmem:[%s3599 + $0x90] sm:$0xff] %v3585
        %3619 = vst [vmem:[%s3599 + $0x98] sm:$0xff] %v3586
        %3620 = vst [vmem:[%s3599 + $0xa0] sm:$0xff] %v3587
        %3621 = vst [vmem:[%s3599 + $0xa8] sm:$0xff] %v3588
        %3622 = vst [vmem:[%s3599 + $0xb0] sm:$0xff] %v3589
        %3623 = vst [vmem:[%s3599 + $0xb8] sm:$0xff] %v3590
        %3624 = vst [vmem:[%s3599 + $0xc0] sm:$0xff] %v3591
        %3625 = vst [vmem:[%s3599 + $0xc8] sm:$0xff] %v3592
        %3626 = vst [vmem:[%s3599 + $0xd0] sm:$0xff] %v3593
        %3627 = vst [vmem:[%s3599 + $0xd8] sm:$0xff] %v3594
        %3628 = vst [vmem:[%s3599 + $0xe0] sm:$0xff] %v3595
        %3629 = vst [vmem:[%s3599 + $0xe8] sm:$0xff] %v3596
        %3630 = vst [vmem:[%s3599 + $0xf0] sm:$0xff] %v3597
        %3631 = vst [vmem:[%s3599 + $0xf8] sm:$0xff] %v3598
        %s3632 = smul.u32 4, 64
        %s3633 = scalar_lea.vmem %s299, %s3632 [#allocation4]
        %v3634 = vld [vmem:[%s3633] sm:$0xff]
        %v3635 = vld [vmem:[%s3633 + $0x8] sm:$0xff]
        %v3636 = vld [vmem:[%s3633 + $0x10] sm:$0xff]
        %v3637 = vld [vmem:[%s3633 + $0x18] sm:$0xff]
        %v3638 = vld [vmem:[%s3633 + $0x20] sm:$0xff]
        %v3639 = vld [vmem:[%s3633 + $0x28] sm:$0xff]
        %v3640 = vld [vmem:[%s3633 + $0x30] sm:$0xff]
        %v3641 = vld [vmem:[%s3633 + $0x38] sm:$0xff]
        %v3642 = vld [vmem:[%s3633 + $0x40] sm:$0xff]
        %v3643 = vld [vmem:[%s3633 + $0x48] sm:$0xff]
        %v3644 = vld [vmem:[%s3633 + $0x50] sm:$0xff]
        %v3645 = vld [vmem:[%s3633 + $0x58] sm:$0xff]
        %v3646 = vld [vmem:[%s3633 + $0x60] sm:$0xff]
        %v3647 = vld [vmem:[%s3633 + $0x68] sm:$0xff]
        %v3648 = vld [vmem:[%s3633 + $0x70] sm:$0xff]
        %v3649 = vld [vmem:[%s3633 + $0x78] sm:$0xff]
        %v3650 = vld [vmem:[%s3633 + $0x80] sm:$0xff]
        %v3651 = vld [vmem:[%s3633 + $0x88] sm:$0xff]
        %v3652 = vld [vmem:[%s3633 + $0x90] sm:$0xff]
        %v3653 = vld [vmem:[%s3633 + $0x98] sm:$0xff]
        %v3654 = vld [vmem:[%s3633 + $0xa0] sm:$0xff]
        %v3655 = vld [vmem:[%s3633 + $0xa8] sm:$0xff]
        %v3656 = vld [vmem:[%s3633 + $0xb0] sm:$0xff]
        %v3657 = vld [vmem:[%s3633 + $0xb8] sm:$0xff]
        %v3658 = vld [vmem:[%s3633 + $0xc0] sm:$0xff]
        %v3659 = vld [vmem:[%s3633 + $0xc8] sm:$0xff]
        %v3660 = vld [vmem:[%s3633 + $0xd0] sm:$0xff]
        %v3661 = vld [vmem:[%s3633 + $0xd8] sm:$0xff]
        %v3662 = vld [vmem:[%s3633 + $0xe0] sm:$0xff]
        %v3663 = vld [vmem:[%s3633 + $0xe8] sm:$0xff]
        %v3664 = vld [vmem:[%s3633 + $0xf0] sm:$0xff]
        %v3665 = vld [vmem:[%s3633 + $0xf8] sm:$0xff]
        %v3666 = vpack.c.bf16 %v3635, %v3634
        %v3667 = vpack.c.bf16 %v3637, %v3636
        %v3668 = vpack.c.bf16 %v3639, %v3638
        %v3669 = vpack.c.bf16 %v3641, %v3640
        %v3670 = vpack.c.bf16 %v3643, %v3642
        %v3671 = vpack.c.bf16 %v3645, %v3644
        %v3672 = vpack.c.bf16 %v3647, %v3646
        %v3673 = vpack.c.bf16 %v3649, %v3648
        %v3674 = vpack.c.bf16 %v3651, %v3650
        %v3675 = vpack.c.bf16 %v3653, %v3652
        %v3676 = vpack.c.bf16 %v3655, %v3654
        %v3677 = vpack.c.bf16 %v3657, %v3656
        %v3678 = vpack.c.bf16 %v3659, %v3658
        %v3679 = vpack.c.bf16 %v3661, %v3660
        %v3680 = vpack.c.bf16 %v3663, %v3662
        %v3681 = vpack.c.bf16 %v3665, %v3664
        %v3682 = vld [vmem:[#allocation7] sm:$0xf]
        %v3683 = vld [vmem:[#allocation7 + $0x4] sm:$0xf]
        %v3684 = vld [vmem:[#allocation7 + $0x8] sm:$0xf]
        %v3685 = vld [vmem:[#allocation7 + $0xc] sm:$0xf]
        %v3686 = vld [vmem:[#allocation7 + $0x10] sm:$0xf]
        %v3687 = vld [vmem:[#allocation7 + $0x14] sm:$0xf]
        %v3688 = vld [vmem:[#allocation7 + $0x18] sm:$0xf]
        %v3689 = vld [vmem:[#allocation7 + $0x1c] sm:$0xf]
        %v3690 = vld [vmem:[#allocation7 + $0x20] sm:$0xf]
        %v3691 = vld [vmem:[#allocation7 + $0x24] sm:$0xf]
        %v3692 = vld [vmem:[#allocation7 + $0x28] sm:$0xf]
        %v3693 = vld [vmem:[#allocation7 + $0x2c] sm:$0xf]
        %v3694 = vld [vmem:[#allocation7 + $0x30] sm:$0xf]
        %v3695 = vld [vmem:[#allocation7 + $0x34] sm:$0xf]
        %v3696 = vld [vmem:[#allocation7 + $0x38] sm:$0xf]
        %v3697 = vld [vmem:[#allocation7 + $0x3c] sm:$0xf]
        %v3698 = vld [vmem:[%s2] sm:$0x1]
        %v3700 = vlaneseq
        %v3701 = vshrl.u32 %v3700, 7
        %v3702 = vsub.s32 0, %v3701
        %v3703 = vrot.slane %v3698, %v3702
        %v3721 = vunpack.c.l.b16 %v3682
        %v3722 = vunpack.c.l.b16 %v3683
        %v3723 = vunpack.c.l.b16 %v3684
        %v3724 = vunpack.c.l.b16 %v3685
        %v3725 = vunpack.c.l.b16 %v3686
        %v3726 = vunpack.c.l.b16 %v3687
        %v3727 = vunpack.c.l.b16 %v3688
        %v3728 = vunpack.c.l.b16 %v3689
        %v3729 = vunpack.c.l.b16 %v3690
        %v3730 = vunpack.c.l.b16 %v3691
        %v3731 = vunpack.c.l.b16 %v3692
        %v3732 = vunpack.c.l.b16 %v3693
        %v3733 = vunpack.c.l.b16 %v3694
        %v3734 = vunpack.c.l.b16 %v3695
        %v3735 = vunpack.c.l.b16 %v3696
        %v3736 = vunpack.c.l.b16 %v3697
        %v3737 = vpack.c.b16 %v3722, %v3721
        %v3738 = vpack.c.b16 %v3724, %v3723
        %v3739 = vpack.c.b16 %v3726, %v3725
        %v3740 = vpack.c.b16 %v3728, %v3727
        %v3741 = vpack.c.b16 %v3730, %v3729
        %v3742 = vpack.c.b16 %v3732, %v3731
        %v3743 = vpack.c.b16 %v3734, %v3733
        %v3744 = vpack.c.b16 %v3736, %v3735
        %3753 = vmatprep.subr.bf16.mxu0 0
        %3754 = vmatpush1.bf16.msra.mxu0 %v3744
        %3755 = vmatprep.subr.bf16.mxu0 0
        %3756 = vmatpush1.bf16.msra.mxu0 %v3743
        %3757 = vmatprep.subr.bf16.mxu0 0
        %3758 = vmatpush1.bf16.msra.mxu0 %v3742
        %3759 = vmatprep.subr.bf16.mxu0 0
        %3760 = vmatpush1.bf16.msra.mxu0 %v3741
        %3761 = vmatprep.subr.bf16.mxu0 0
        %3762 = vmatpush1.bf16.msra.mxu0 %v3740
        %3763 = vmatprep.subr.bf16.mxu0 0
        %3764 = vmatpush1.bf16.msra.mxu0 %v3739
        %3765 = vmatprep.subr.bf16.mxu0 0
        %3766 = vmatpush1.bf16.msra.mxu0 %v3738
        %3767 = vmatprep.subr.bf16.mxu0 0
        %3768 = vmatpush1.bf16.msra.mxu0 %v3737
        %3769 = vmatprep.subr.bf16.mxu0 0
        %3770 = vmatpush2.bf16.msra.mxu0 0
        %3771 = vmatprep.subr.bf16.mxu0 0
        %3772 = vmatpush2.bf16.msra.mxu0 0
        %3773 = vmatprep.subr.bf16.mxu0 0
        %3774 = vmatpush2.bf16.msra.mxu0 0
        %3775 = vmatprep.subr.bf16.mxu0 0
        %3776 = vmatpush2.bf16.msra.mxu0 0
        %3777 = vmatprep.subr.bf16.mxu0 0
        %3778 = vmatpush2.bf16.msra.mxu0 0
        %3779 = vmatprep.subr.bf16.mxu0 0
        %3780 = vmatpush2.bf16.msra.mxu0 0
        %3781 = vmatprep.subr.bf16.mxu0 0
        %3782 = vmatpush2.bf16.msra.mxu0 0
        %3783 = vmatprep.subr.bf16.mxu0 0
        %3784 = vmatpush2.bf16.msra.mxu0 0
        %3785 = vmatprep.mubr.bf16.mxu0 0
        %3786 = vmatmul.mubr.bf16.gmra.mxu0 %v3666
        %v3787 = vpop.f32.mrf.mxu0
        %v3788 = vadd.f32 %v3703, %v3787
        %v3789 = vpop.f32.mrf.mxu0
        %v3790 = vpop.f32.mrf.mxu0
        %v3791 = vadd.f32 %v3703, %v3790
        %v3792 = vpop.f32.mrf.mxu0
        %3793 = vmatprep.mubr.bf16.mxu0 0
        %3794 = vmatmul.mubr.bf16.gmra.mxu0 %v3667
        %v3795 = vpop.f32.mrf.mxu0
        %v3796 = vadd.f32 %v3703, %v3795
        %v3797 = vpop.f32.mrf.mxu0
        %v3798 = vpop.f32.mrf.mxu0
        %v3799 = vadd.f32 %v3703, %v3798
        %v3800 = vpop.f32.mrf.mxu0
        %3801 = vmatprep.mubr.bf16.mxu0 0
        %3802 = vmatmul.mubr.bf16.gmra.mxu0 %v3668
        %v3803 = vpop.f32.mrf.mxu0
        %v3804 = vadd.f32 %v3703, %v3803
        %v3805 = vpop.f32.mrf.mxu0
        %v3806 = vpop.f32.mrf.mxu0
        %v3807 = vadd.f32 %v3703, %v3806
        %v3808 = vpop.f32.mrf.mxu0
        %3809 = vmatprep.mubr.bf16.mxu0 0
        %3810 = vmatmul.mubr.bf16.gmra.mxu0 %v3669
        %v3811 = vpop.f32.mrf.mxu0
        %v3812 = vadd.f32 %v3703, %v3811
        %v3813 = vpop.f32.mrf.mxu0
        %v3814 = vpop.f32.mrf.mxu0
        %v3815 = vadd.f32 %v3703, %v3814
        %v3816 = vpop.f32.mrf.mxu0
        %3817 = vmatprep.mubr.bf16.mxu0 0
        %3818 = vmatmul.mubr.bf16.gmra.mxu0 %v3670
        %v3819 = vpop.f32.mrf.mxu0
        %v3820 = vadd.f32 %v3703, %v3819
        %v3821 = vpop.f32.mrf.mxu0
        %v3822 = vpop.f32.mrf.mxu0
        %v3823 = vadd.f32 %v3703, %v3822
        %v3824 = vpop.f32.mrf.mxu0
        %3825 = vmatprep.mubr.bf16.mxu0 0
        %3826 = vmatmul.mubr.bf16.gmra.mxu0 %v3671
        %v3827 = vpop.f32.mrf.mxu0
        %v3828 = vadd.f32 %v3703, %v3827
        %v3829 = vpop.f32.mrf.mxu0
        %v3830 = vpop.f32.mrf.mxu0
        %v3831 = vadd.f32 %v3703, %v3830
        %v3832 = vpop.f32.mrf.mxu0
        %3833 = vmatprep.mubr.bf16.mxu0 0
        %3834 = vmatmul.mubr.bf16.gmra.mxu0 %v3672
        %v3835 = vpop.f32.mrf.mxu0
        %v3836 = vadd.f32 %v3703, %v3835
        %v3837 = vpop.f32.mrf.mxu0
        %v3838 = vpop.f32.mrf.mxu0
        %v3839 = vadd.f32 %v3703, %v3838
        %v3840 = vpop.f32.mrf.mxu0
        %3841 = vmatprep.mubr.bf16.mxu0 0
        %3842 = vmatmul.mubr.bf16.gmra.mxu0 %v3673
        %v3843 = vpop.f32.mrf.mxu0
        %v3844 = vadd.f32 %v3703, %v3843
        %v3845 = vpop.f32.mrf.mxu0
        %v3846 = vpop.f32.mrf.mxu0
        %v3847 = vadd.f32 %v3703, %v3846
        %v3848 = vpop.f32.mrf.mxu0
        %3849 = vmatprep.mubr.bf16.mxu0 0
        %3850 = vmatmul.mubr.bf16.gmra.mxu0 %v3674
        %v3851 = vpop.f32.mrf.mxu0
        %v3852 = vadd.f32 %v3703, %v3851
        %v3853 = vpop.f32.mrf.mxu0
        %v3854 = vpop.f32.mrf.mxu0
        %v3855 = vadd.f32 %v3703, %v3854
        %v3856 = vpop.f32.mrf.mxu0
        %3857 = vmatprep.mubr.bf16.mxu0 0
        %3858 = vmatmul.mubr.bf16.gmra.mxu0 %v3675
        %v3859 = vpop.f32.mrf.mxu0
        %v3860 = vadd.f32 %v3703, %v3859
        %v3861 = vpop.f32.mrf.mxu0
        %v3862 = vpop.f32.mrf.mxu0
        %v3863 = vadd.f32 %v3703, %v3862
        %v3864 = vpop.f32.mrf.mxu0
        %3865 = vmatprep.mubr.bf16.mxu0 0
        %3866 = vmatmul.mubr.bf16.gmra.mxu0 %v3676
        %v3867 = vpop.f32.mrf.mxu0
        %v3868 = vadd.f32 %v3703, %v3867
        %v3869 = vpop.f32.mrf.mxu0
        %v3870 = vpop.f32.mrf.mxu0
        %v3871 = vadd.f32 %v3703, %v3870
        %v3872 = vpop.f32.mrf.mxu0
        %3873 = vmatprep.mubr.bf16.mxu0 0
        %3874 = vmatmul.mubr.bf16.gmra.mxu0 %v3677
        %v3875 = vpop.f32.mrf.mxu0
        %v3876 = vadd.f32 %v3703, %v3875
        %v3877 = vpop.f32.mrf.mxu0
        %v3878 = vpop.f32.mrf.mxu0
        %v3879 = vadd.f32 %v3703, %v3878
        %v3880 = vpop.f32.mrf.mxu0
        %3881 = vmatprep.mubr.bf16.mxu0 0
        %3882 = vmatmul.mubr.bf16.gmra.mxu0 %v3678
        %v3883 = vpop.f32.mrf.mxu0
        %v3884 = vadd.f32 %v3703, %v3883
        %v3885 = vpop.f32.mrf.mxu0
        %v3886 = vpop.f32.mrf.mxu0
        %v3887 = vadd.f32 %v3703, %v3886
        %v3888 = vpop.f32.mrf.mxu0
        %3889 = vmatprep.mubr.bf16.mxu0 0
        %3890 = vmatmul.mubr.bf16.gmra.mxu0 %v3679
        %v3891 = vpop.f32.mrf.mxu0
        %v3892 = vadd.f32 %v3703, %v3891
        %v3893 = vpop.f32.mrf.mxu0
        %v3894 = vpop.f32.mrf.mxu0
        %v3895 = vadd.f32 %v3703, %v3894
        %v3896 = vpop.f32.mrf.mxu0
        %3897 = vmatprep.mubr.bf16.mxu0 0
        %3898 = vmatmul.mubr.bf16.gmra.mxu0 %v3680
        %v3899 = vpop.f32.mrf.mxu0
        %v3900 = vadd.f32 %v3703, %v3899
        %v3901 = vpop.f32.mrf.mxu0
        %v3902 = vpop.f32.mrf.mxu0
        %v3903 = vadd.f32 %v3703, %v3902
        %v3904 = vpop.f32.mrf.mxu0
        %3905 = vmatprep.mubr.bf16.mxu0 0
        %3906 = vmatmul.mubr.bf16.gmra.mxu0 %v3681
        %v3907 = vpop.f32.mrf.mxu0
        %v3908 = vadd.f32 %v3703, %v3907
        %v3909 = vpop.f32.mrf.mxu0
        %v3910 = vpop.f32.mrf.mxu0
        %v3911 = vadd.f32 %v3703, %v3910
        %v3912 = vpop.f32.mrf.mxu0
        %3913 = vdwg.mxu0
        %v3914 = vmax.f32 %v3788, 0.0
        %v3915 = vmax.f32 %v3791, 0.0
        %v3916 = vmax.f32 %v3796, 0.0
        %v3917 = vmax.f32 %v3799, 0.0
        %v3918 = vmax.f32 %v3804, 0.0
        %v3919 = vmax.f32 %v3807, 0.0
        %v3920 = vmax.f32 %v3812, 0.0
        %v3921 = vmax.f32 %v3815, 0.0
        %v3922 = vmax.f32 %v3820, 0.0
        %v3923 = vmax.f32 %v3823, 0.0
        %v3924 = vmax.f32 %v3828, 0.0
        %v3925 = vmax.f32 %v3831, 0.0
        %v3926 = vmax.f32 %v3836, 0.0
        %v3927 = vmax.f32 %v3839, 0.0
        %v3928 = vmax.f32 %v3844, 0.0
        %v3929 = vmax.f32 %v3847, 0.0
        %v3930 = vmax.f32 %v3852, 0.0
        %v3931 = vmax.f32 %v3855, 0.0
        %v3932 = vmax.f32 %v3860, 0.0
        %v3933 = vmax.f32 %v3863, 0.0
        %v3934 = vmax.f32 %v3868, 0.0
        %v3935 = vmax.f32 %v3871, 0.0
        %v3936 = vmax.f32 %v3876, 0.0
        %v3937 = vmax.f32 %v3879, 0.0
        %v3938 = vmax.f32 %v3884, 0.0
        %v3939 = vmax.f32 %v3887, 0.0
        %v3940 = vmax.f32 %v3892, 0.0
        %v3941 = vmax.f32 %v3895, 0.0
        %v3942 = vmax.f32 %v3900, 0.0
        %v3943 = vmax.f32 %v3903, 0.0
        %v3944 = vmax.f32 %v3908, 0.0
        %v3945 = vmax.f32 %v3911, 0.0
        %3946 = vst [vmem:[%s692 + $0x8] sm:$0xff] %v3914
        %3947 = vst [vmem:[%s692 + $0x20] sm:$0xff] %v3915
        %3948 = vst [vmem:[%s692 + $0x38] sm:$0xff] %v3916
        %3949 = vst [vmem:[%s692 + $0x50] sm:$0xff] %v3917
        %3950 = vst [vmem:[%s692 + $0x68] sm:$0xff] %v3918
        %3951 = vst [vmem:[%s692 + $0x80] sm:$0xff] %v3919
        %3952 = vst [vmem:[%s692 + $0x98] sm:$0xff] %v3920
        %3953 = vst [vmem:[%s692 + $0xb0] sm:$0xff] %v3921
        %3954 = vst [vmem:[%s692 + $0xf8] sm:$0xff] %v3922
        %3955 = vst [vmem:[%s692 + $0x110] sm:$0xff] %v3923
        %3956 = vst [vmem:[%s692 + $0x128] sm:$0xff] %v3924
        %3957 = vst [vmem:[%s692 + $0x140] sm:$0xff] %v3925
        %3958 = vst [vmem:[%s692 + $0x158] sm:$0xff] %v3926
        %3959 = vst [vmem:[%s692 + $0x170] sm:$0xff] %v3927
        %3960 = vst [vmem:[%s692 + $0x188] sm:$0xff] %v3928
        %3961 = vst [vmem:[%s692 + $0x1a0] sm:$0xff] %v3929
        %3962 = vst [vmem:[%s692 + $0x1e8] sm:$0xff] %v3930
        %3963 = vst [vmem:[%s692 + $0x200] sm:$0xff] %v3931
        %3964 = vst [vmem:[%s692 + $0x218] sm:$0xff] %v3932
        %3965 = vst [vmem:[%s692 + $0x230] sm:$0xff] %v3933
        %3966 = vst [vmem:[%s692 + $0x248] sm:$0xff] %v3934
        %3967 = vst [vmem:[%s692 + $0x260] sm:$0xff] %v3935
        %3968 = vst [vmem:[%s692 + $0x278] sm:$0xff] %v3936
        %3969 = vst [vmem:[%s692 + $0x290] sm:$0xff] %v3937
        %3970 = vst [vmem:[%s692 + $0x2d8] sm:$0xff] %v3938
        %3971 = vst [vmem:[%s692 + $0x2f0] sm:$0xff] %v3939
        %3972 = vst [vmem:[%s692 + $0x308] sm:$0xff] %v3940
        %3973 = vst [vmem:[%s692 + $0x320] sm:$0xff] %v3941
        %3974 = vst [vmem:[%s692 + $0x338] sm:$0xff] %v3942
        %3975 = vst [vmem:[%s692 + $0x350] sm:$0xff] %v3943
        %3976 = vst [vmem:[%s692 + $0x368] sm:$0xff] %v3944
        %3977 = vst [vmem:[%s692 + $0x380] sm:$0xff] %v3945
        %v3978 = vrot.slane %v3914, 7
        %v3979 = vrot.slane %v3915, 7
        %v3980 = vrot.slane %v3916, 7
        %v3981 = vrot.slane %v3917, 7
        %v3982 = vrot.slane %v3918, 7
        %v3983 = vrot.slane %v3919, 7
        %v3984 = vrot.slane %v3920, 7
        %v3985 = vrot.slane %v3921, 7
        %v3986 = vrot.slane %v3922, 7
        %v3987 = vrot.slane %v3923, 7
        %v3988 = vrot.slane %v3924, 7
        %v3989 = vrot.slane %v3925, 7
        %v3990 = vrot.slane %v3926, 7
        %v3991 = vrot.slane %v3927, 7
        %v3992 = vrot.slane %v3928, 7
        %v3993 = vrot.slane %v3929, 7
        %v3994 = vrot.slane %v3930, 7
        %v3995 = vrot.slane %v3931, 7
        %v3996 = vrot.slane %v3932, 7
        %v3997 = vrot.slane %v3933, 7
        %v3998 = vrot.slane %v3934, 7
        %v3999 = vrot.slane %v3935, 7
        %v4000 = vrot.slane %v3936, 7
        %v4001 = vrot.slane %v3937, 7
        %v4002 = vrot.slane %v3938, 7
        %v4003 = vrot.slane %v3939, 7
        %v4004 = vrot.slane %v3940, 7
        %v4005 = vrot.slane %v3941, 7
        %v4006 = vrot.slane %v3942, 7
        %v4007 = vrot.slane %v3943, 7
        %v4008 = vrot.slane %v3944, 7
        %v4009 = vrot.slane %v3945, 7
        %v4010 = vsel %vm757, %v4008, %v4009
        %v4011 = vsel %vm757, %v4007, %v4008
        %v4012 = vsel %vm757, %v4006, %v4007
        %v4013 = vsel %vm757, %v4005, %v4006
        %v4014 = vsel %vm757, %v4004, %v4005
        %v4015 = vsel %vm757, %v4003, %v4004
        %v4016 = vsel %vm757, %v4002, %v4003
        %v4017 = vsel %vm757, %v4001, %v4002
        %v4018 = vsel %vm757, %v4000, %v4001
        %v4019 = vsel %vm757, %v3999, %v4000
        %v4020 = vsel %vm757, %v3998, %v3999
        %v4021 = vsel %vm757, %v3997, %v3998
        %v4022 = vsel %vm757, %v3996, %v3997
        %v4023 = vsel %vm757, %v3995, %v3996
        %v4024 = vsel %vm757, %v3994, %v3995
        %v4025 = vsel %vm757, %v3993, %v3994
        %v4026 = vsel %vm757, %v3992, %v3993
        %v4027 = vsel %vm757, %v3991, %v3992
        %v4028 = vsel %vm757, %v3990, %v3991
        %v4029 = vsel %vm757, %v3989, %v3990
        %v4030 = vsel %vm757, %v3988, %v3989
        %v4031 = vsel %vm757, %v3987, %v3988
        %v4032 = vsel %vm757, %v3986, %v3987
        %v4033 = vsel %vm757, %v3985, %v3986
        %v4034 = vsel %vm757, %v3984, %v3985
        %v4035 = vsel %vm757, %v3983, %v3984
        %v4036 = vsel %vm757, %v3982, %v3983
        %v4037 = vsel %vm757, %v3981, %v3982
        %v4038 = vsel %vm757, %v3980, %v3981
        %v4039 = vsel %vm757, %v3979, %v3980
        %v4040 = vsel %vm757, %v3978, %v3979
        %v4041 = vsel %vm757, %v4009, %v3978
        %v4042 = vmul.f32 %v4041, %v374
        %v4043 = vmul.f32 %v4040, %v374
        %v4044 = vmul.f32 %v4039, %v374
        %v4045 = vmul.f32 %v4038, %v374
        %v4046 = vmul.f32 %v4037, %v374
        %v4047 = vmul.f32 %v4036, %v374
        %v4048 = vmul.f32 %v4035, %v374
        %v4049 = vmul.f32 %v4034, %v374
        %v4050 = vmul.f32 %v4033, %v374
        %v4051 = vmul.f32 %v4032, %v374
        %v4052 = vmul.f32 %v4031, %v374
        %v4053 = vmul.f32 %v4030, %v374
        %v4054 = vmul.f32 %v4029, %v374
        %v4055 = vmul.f32 %v4028, %v374
        %v4056 = vmul.f32 %v4027, %v374
        %v4057 = vmul.f32 %v4026, %v374
        %v4058 = vmul.f32 %v4025, %v374
        %v4059 = vmul.f32 %v4024, %v374
        %v4060 = vmul.f32 %v4023, %v374
        %v4061 = vmul.f32 %v4022, %v374
        %v4062 = vmul.f32 %v4021, %v374
        %v4063 = vmul.f32 %v4020, %v374
        %v4064 = vmul.f32 %v4019, %v374
        %v4065 = vmul.f32 %v4018, %v374
        %v4066 = vmul.f32 %v4017, %v374
        %v4067 = vmul.f32 %v4016, %v374
        %v4068 = vmul.f32 %v4015, %v374
        %v4069 = vmul.f32 %v4014, %v374
        %v4070 = vmul.f32 %v4013, %v374
        %v4071 = vmul.f32 %v4012, %v374
        %v4072 = vmul.f32 %v4011, %v374
        %v4073 = vmul.f32 %v4010, %v374
        %4074 = vst [vmem:[%s692] sm:$0xff] %v4042
        %4075 = vst [vmem:[%s692 + $0x18] sm:$0xff] %v4043
        %4076 = vst [vmem:[%s692 + $0x30] sm:$0xff] %v4044
        %4077 = vst [vmem:[%s692 + $0x48] sm:$0xff] %v4045
        %4078 = vst [vmem:[%s692 + $0x60] sm:$0xff] %v4046
        %4079 = vst [vmem:[%s692 + $0x78] sm:$0xff] %v4047
        %4080 = vst [vmem:[%s692 + $0x90] sm:$0xff] %v4048
        %4081 = vst [vmem:[%s692 + $0xa8] sm:$0xff] %v4049
        %4082 = vst [vmem:[%s692 + $0xf0] sm:$0xff] %v4050
        %4083 = vst [vmem:[%s692 + $0x108] sm:$0xff] %v4051
        %4084 = vst [vmem:[%s692 + $0x120] sm:$0xff] %v4052
        %4085 = vst [vmem:[%s692 + $0x138] sm:$0xff] %v4053
        %4086 = vst [vmem:[%s692 + $0x150] sm:$0xff] %v4054
        %4087 = vst [vmem:[%s692 + $0x168] sm:$0xff] %v4055
        %4088 = vst [vmem:[%s692 + $0x180] sm:$0xff] %v4056
        %4089 = vst [vmem:[%s692 + $0x198] sm:$0xff] %v4057
        %4090 = vst [vmem:[%s692 + $0x1e0] sm:$0xff] %v4058
        %4091 = vst [vmem:[%s692 + $0x1f8] sm:$0xff] %v4059
        %4092 = vst [vmem:[%s692 + $0x210] sm:$0xff] %v4060
        %4093 = vst [vmem:[%s692 + $0x228] sm:$0xff] %v4061
        %4094 = vst [vmem:[%s692 + $0x240] sm:$0xff] %v4062
        %4095 = vst [vmem:[%s692 + $0x258] sm:$0xff] %v4063
        %4096 = vst [vmem:[%s692 + $0x270] sm:$0xff] %v4064
        %4097 = vst [vmem:[%s692 + $0x288] sm:$0xff] %v4065
        %4098 = vst [vmem:[%s692 + $0x2d0] sm:$0xff] %v4066
        %4099 = vst [vmem:[%s692 + $0x2e8] sm:$0xff] %v4067
        %4100 = vst [vmem:[%s692 + $0x300] sm:$0xff] %v4068
        %4101 = vst [vmem:[%s692 + $0x318] sm:$0xff] %v4069
        %4102 = vst [vmem:[%s692 + $0x330] sm:$0xff] %v4070
        %4103 = vst [vmem:[%s692 + $0x348] sm:$0xff] %v4071
        %4104 = vst [vmem:[%s692 + $0x360] sm:$0xff] %v4072
        %4105 = vst [vmem:[%s692 + $0x378] sm:$0xff] %v4073
        %v4106 = vrot.slane %v3914, 1
        %v4107 = vrot.slane %v3915, 1
        %v4108 = vrot.slane %v3916, 1
        %v4109 = vrot.slane %v3917, 1
        %v4110 = vrot.slane %v3918, 1
        %v4111 = vrot.slane %v3919, 1
        %v4112 = vrot.slane %v3920, 1
        %v4113 = vrot.slane %v3921, 1
        %v4114 = vrot.slane %v3922, 1
        %v4115 = vrot.slane %v3923, 1
        %v4116 = vrot.slane %v3924, 1
        %v4117 = vrot.slane %v3925, 1
        %v4118 = vrot.slane %v3926, 1
        %v4119 = vrot.slane %v3927, 1
        %v4120 = vrot.slane %v3928, 1
        %v4121 = vrot.slane %v3929, 1
        %v4122 = vrot.slane %v3930, 1
        %v4123 = vrot.slane %v3931, 1
        %v4124 = vrot.slane %v3932, 1
        %v4125 = vrot.slane %v3933, 1
        %v4126 = vrot.slane %v3934, 1
        %v4127 = vrot.slane %v3935, 1
        %v4128 = vrot.slane %v3936, 1
        %v4129 = vrot.slane %v3937, 1
        %v4130 = vrot.slane %v3938, 1
        %v4131 = vrot.slane %v3939, 1
        %v4132 = vrot.slane %v3940, 1
        %v4133 = vrot.slane %v3941, 1
        %v4134 = vrot.slane %v3942, 1
        %v4135 = vrot.slane %v3943, 1
        %v4136 = vrot.slane %v3944, 1
        %v4137 = vrot.slane %v3945, 1
        %v4138 = vsel %vm886, %v4136, %v4137
        %v4139 = vsel %vm886, %v4135, %v4136
        %v4140 = vsel %vm886, %v4134, %v4135
        %v4141 = vsel %vm886, %v4133, %v4134
        %v4142 = vsel %vm886, %v4132, %v4133
        %v4143 = vsel %vm886, %v4131, %v4132
        %v4144 = vsel %vm886, %v4130, %v4131
        %v4145 = vsel %vm886, %v4129, %v4130
        %v4146 = vsel %vm886, %v4128, %v4129
        %v4147 = vsel %vm886, %v4127, %v4128
        %v4148 = vsel %vm886, %v4126, %v4127
        %v4149 = vsel %vm886, %v4125, %v4126
        %v4150 = vsel %vm886, %v4124, %v4125
        %v4151 = vsel %vm886, %v4123, %v4124
        %v4152 = vsel %vm886, %v4122, %v4123
        %v4153 = vsel %vm886, %v4121, %v4122
        %v4154 = vsel %vm886, %v4120, %v4121
        %v4155 = vsel %vm886, %v4119, %v4120
        %v4156 = vsel %vm886, %v4118, %v4119
        %v4157 = vsel %vm886, %v4117, %v4118
        %v4158 = vsel %vm886, %v4116, %v4117
        %v4159 = vsel %vm886, %v4115, %v4116
        %v4160 = vsel %vm886, %v4114, %v4115
        %v4161 = vsel %vm886, %v4113, %v4114
        %v4162 = vsel %vm886, %v4112, %v4113
        %v4163 = vsel %vm886, %v4111, %v4112
        %v4164 = vsel %vm886, %v4110, %v4111
        %v4165 = vsel %vm886, %v4109, %v4110
        %v4166 = vsel %vm886, %v4108, %v4109
        %v4167 = vsel %vm886, %v4107, %v4108
        %v4168 = vsel %vm886, %v4106, %v4107
        %v4169 = vsel %vm886, %v4137, %v4106
        %v4170 = vmul.f32 %v4168, %v377
        %v4171 = vmul.f32 %v4167, %v377
        %v4172 = vmul.f32 %v4166, %v377
        %v4173 = vmul.f32 %v4165, %v377
        %v4174 = vmul.f32 %v4164, %v377
        %v4175 = vmul.f32 %v4163, %v377
        %v4176 = vmul.f32 %v4162, %v377
        %v4177 = vmul.f32 %v4161, %v377
        %v4178 = vmul.f32 %v4160, %v377
        %v4179 = vmul.f32 %v4159, %v377
        %v4180 = vmul.f32 %v4158, %v377
        %v4181 = vmul.f32 %v4157, %v377
        %v4182 = vmul.f32 %v4156, %v377
        %v4183 = vmul.f32 %v4155, %v377
        %v4184 = vmul.f32 %v4154, %v377
        %v4185 = vmul.f32 %v4153, %v377
        %v4186 = vmul.f32 %v4152, %v377
        %v4187 = vmul.f32 %v4151, %v377
        %v4188 = vmul.f32 %v4150, %v377
        %v4189 = vmul.f32 %v4149, %v377
        %v4190 = vmul.f32 %v4148, %v377
        %v4191 = vmul.f32 %v4147, %v377
        %v4192 = vmul.f32 %v4146, %v377
        %v4193 = vmul.f32 %v4145, %v377
        %v4194 = vmul.f32 %v4144, %v377
        %v4195 = vmul.f32 %v4143, %v377
        %v4196 = vmul.f32 %v4142, %v377
        %v4197 = vmul.f32 %v4141, %v377
        %v4198 = vmul.f32 %v4140, %v377
        %v4199 = vmul.f32 %v4139, %v377
        %v4200 = vmul.f32 %v4138, %v377
        %v4201 = vmul.f32 %v4169, %v377
        %4202 = vst [vmem:[%s692 + $0x10] sm:$0xff] %v4170
        %4203 = vst [vmem:[%s692 + $0x28] sm:$0xff] %v4171
        %4204 = vst [vmem:[%s692 + $0x40] sm:$0xff] %v4172
        %4205 = vst [vmem:[%s692 + $0x58] sm:$0xff] %v4173
        %4206 = vst [vmem:[%s692 + $0x70] sm:$0xff] %v4174
        %4207 = vst [vmem:[%s692 + $0x88] sm:$0xff] %v4175
        %4208 = vst [vmem:[%s692 + $0xa0] sm:$0xff] %v4176
        %4209 = vst [vmem:[%s692 + $0xb8] sm:$0xff] %v4177
        %4210 = vst [vmem:[%s692 + $0x100] sm:$0xff] %v4178
        %4211 = vst [vmem:[%s692 + $0x118] sm:$0xff] %v4179
        %4212 = vst [vmem:[%s692 + $0x130] sm:$0xff] %v4180
        %4213 = vst [vmem:[%s692 + $0x148] sm:$0xff] %v4181
        %4214 = vst [vmem:[%s692 + $0x160] sm:$0xff] %v4182
        %4215 = vst [vmem:[%s692 + $0x178] sm:$0xff] %v4183
        %4216 = vst [vmem:[%s692 + $0x190] sm:$0xff] %v4184
        %4217 = vst [vmem:[%s692 + $0x1a8] sm:$0xff] %v4185
        %4218 = vst [vmem:[%s692 + $0x1f0] sm:$0xff] %v4186
        %4219 = vst [vmem:[%s692 + $0x208] sm:$0xff] %v4187
        %4220 = vst [vmem:[%s692 + $0x220] sm:$0xff] %v4188
        %4221 = vst [vmem:[%s692 + $0x238] sm:$0xff] %v4189
        %4222 = vst [vmem:[%s692 + $0x250] sm:$0xff] %v4190
        %4223 = vst [vmem:[%s692 + $0x268] sm:$0xff] %v4191
        %4224 = vst [vmem:[%s692 + $0x280] sm:$0xff] %v4192
        %4225 = vst [vmem:[%s692 + $0x298] sm:$0xff] %v4193
        %4226 = vst [vmem:[%s692 + $0x2e0] sm:$0xff] %v4194
        %4227 = vst [vmem:[%s692 + $0x2f8] sm:$0xff] %v4195
        %4228 = vst [vmem:[%s692 + $0x310] sm:$0xff] %v4196
        %4229 = vst [vmem:[%s692 + $0x328] sm:$0xff] %v4197
        %4230 = vst [vmem:[%s692 + $0x340] sm:$0xff] %v4198
        %4231 = vst [vmem:[%s692 + $0x358] sm:$0xff] %v4199
        %4232 = vst [vmem:[%s692 + $0x370] sm:$0xff] %v4200
        %4233 = vst [vmem:[%s692 + $0x388] sm:$0xff] %v4201
        %v4234 = vld [vmem:[#allocation2] sm:$0xff]
        %v4235 = vld [vmem:[#allocation2 + $0x8] sm:$0xff]
        %v4236 = vld [vmem:[#allocation2 + $0x10] sm:$0xff]
        %v4237 = vld [vmem:[#allocation2 + $0x18] sm:$0xff]
        %v4238 = vld [vmem:[#allocation2 + $0x20] sm:$0xff]
        %v4239 = vld [vmem:[#allocation2 + $0x28] sm:$0xff]
        %v4240 = vld [vmem:[#allocation2 + $0x30] sm:$0xff]
        %v4241 = vld [vmem:[#allocation2 + $0x38] sm:$0xff]
        %v4242 = vld [vmem:[#allocation2 + $0x40] sm:$0xff]
        %v4243 = vld [vmem:[#allocation2 + $0x48] sm:$0xff]
        %v4244 = vld [vmem:[#allocation2 + $0x50] sm:$0xff]
        %v4245 = vld [vmem:[#allocation2 + $0x58] sm:$0xff]
        %v4246 = vld [vmem:[#allocation2 + $0x60] sm:$0xff]
        %v4247 = vld [vmem:[#allocation2 + $0x68] sm:$0xff]
        %v4248 = vld [vmem:[#allocation2 + $0x70] sm:$0xff]
        %v4249 = vld [vmem:[#allocation2 + $0x78] sm:$0xff]
        %v4250 = vld [vmem:[#allocation2 + $0x80] sm:$0xff]
        %v4251 = vld [vmem:[#allocation2 + $0x88] sm:$0xff]
        %v4252 = vld [vmem:[#allocation2 + $0x90] sm:$0xff]
        %v4253 = vld [vmem:[#allocation2 + $0x98] sm:$0xff]
        %v4254 = vld [vmem:[#allocation2 + $0xa0] sm:$0xff]
        %v4255 = vld [vmem:[#allocation2 + $0xa8] sm:$0xff]
        %v4256 = vld [vmem:[#allocation2 + $0xb0] sm:$0xff]
        %v4257 = vld [vmem:[#allocation2 + $0xb8] sm:$0xff]
        %v4258 = vld [vmem:[#allocation2 + $0xf0] sm:$0xff]
        %v4259 = vld [vmem:[#allocation2 + $0xf8] sm:$0xff]
        %v4260 = vld [vmem:[#allocation2 + $0x100] sm:$0xff]
        %v4261 = vld [vmem:[#allocation2 + $0x108] sm:$0xff]
        %v4262 = vld [vmem:[#allocation2 + $0x110] sm:$0xff]
        %v4263 = vld [vmem:[#allocation2 + $0x118] sm:$0xff]
        %v4264 = vld [vmem:[#allocation2 + $0x120] sm:$0xff]
        %v4265 = vld [vmem:[#allocation2 + $0x128] sm:$0xff]
        %v4266 = vld [vmem:[#allocation2 + $0x130] sm:$0xff]
        %v4267 = vld [vmem:[#allocation2 + $0x138] sm:$0xff]
        %v4268 = vld [vmem:[#allocation2 + $0x140] sm:$0xff]
        %v4269 = vld [vmem:[#allocation2 + $0x148] sm:$0xff]
        %v4270 = vld [vmem:[#allocation2 + $0x150] sm:$0xff]
        %v4271 = vld [vmem:[#allocation2 + $0x158] sm:$0xff]
        %v4272 = vld [vmem:[#allocation2 + $0x160] sm:$0xff]
        %v4273 = vld [vmem:[#allocation2 + $0x168] sm:$0xff]
        %v4274 = vld [vmem:[#allocation2 + $0x170] sm:$0xff]
        %v4275 = vld [vmem:[#allocation2 + $0x178] sm:$0xff]
        %v4276 = vld [vmem:[#allocation2 + $0x180] sm:$0xff]
        %v4277 = vld [vmem:[#allocation2 + $0x188] sm:$0xff]
        %v4278 = vld [vmem:[#allocation2 + $0x190] sm:$0xff]
        %v4279 = vld [vmem:[#allocation2 + $0x198] sm:$0xff]
        %v4280 = vld [vmem:[#allocation2 + $0x1a0] sm:$0xff]
        %v4281 = vld [vmem:[#allocation2 + $0x1a8] sm:$0xff]
        %v4282 = vld [vmem:[#allocation2 + $0x1e0] sm:$0xff]
        %v4283 = vld [vmem:[#allocation2 + $0x1e8] sm:$0xff]
        %v4284 = vld [vmem:[#allocation2 + $0x1f0] sm:$0xff]
        %v4285 = vld [vmem:[#allocation2 + $0x1f8] sm:$0xff]
        %v4286 = vld [vmem:[#allocation2 + $0x200] sm:$0xff]
        %v4287 = vld [vmem:[#allocation2 + $0x208] sm:$0xff]
        %v4288 = vld [vmem:[#allocation2 + $0x210] sm:$0xff]
        %v4289 = vld [vmem:[#allocation2 + $0x218] sm:$0xff]
        %v4290 = vld [vmem:[#allocation2 + $0x220] sm:$0xff]
        %v4291 = vld [vmem:[#allocation2 + $0x228] sm:$0xff]
        %v4292 = vld [vmem:[#allocation2 + $0x230] sm:$0xff]
        %v4293 = vld [vmem:[#allocation2 + $0x238] sm:$0xff]
        %v4294 = vld [vmem:[#allocation2 + $0x240] sm:$0xff]
        %v4295 = vld [vmem:[#allocation2 + $0x248] sm:$0xff]
        %v4296 = vld [vmem:[#allocation2 + $0x250] sm:$0xff]
        %v4297 = vld [vmem:[#allocation2 + $0x258] sm:$0xff]
        %v4298 = vld [vmem:[#allocation2 + $0x260] sm:$0xff]
        %v4299 = vld [vmem:[#allocation2 + $0x268] sm:$0xff]
        %v4300 = vld [vmem:[#allocation2 + $0x270] sm:$0xff]
        %v4301 = vld [vmem:[#allocation2 + $0x278] sm:$0xff]
        %v4302 = vld [vmem:[#allocation2 + $0x280] sm:$0xff]
        %v4303 = vld [vmem:[#allocation2 + $0x288] sm:$0xff]
        %v4304 = vld [vmem:[#allocation2 + $0x290] sm:$0xff]
        %v4305 = vld [vmem:[#allocation2 + $0x298] sm:$0xff]
        %v4306 = vld [vmem:[#allocation2 + $0x2d0] sm:$0xff]
        %v4307 = vld [vmem:[#allocation2 + $0x2d8] sm:$0xff]
        %v4308 = vld [vmem:[#allocation2 + $0x2e0] sm:$0xff]
        %v4309 = vld [vmem:[#allocation2 + $0x2e8] sm:$0xff]
        %v4310 = vld [vmem:[#allocation2 + $0x2f0] sm:$0xff]
        %v4311 = vld [vmem:[#allocation2 + $0x2f8] sm:$0xff]
        %v4312 = vld [vmem:[#allocation2 + $0x300] sm:$0xff]
        %v4313 = vld [vmem:[#allocation2 + $0x308] sm:$0xff]
        %v4314 = vld [vmem:[#allocation2 + $0x310] sm:$0xff]
        %v4315 = vld [vmem:[#allocation2 + $0x318] sm:$0xff]
        %v4316 = vld [vmem:[#allocation2 + $0x320] sm:$0xff]
        %v4317 = vld [vmem:[#allocation2 + $0x328] sm:$0xff]
        %v4318 = vld [vmem:[#allocation2 + $0x330] sm:$0xff]
        %v4319 = vld [vmem:[#allocation2 + $0x338] sm:$0xff]
        %v4320 = vld [vmem:[#allocation2 + $0x340] sm:$0xff]
        %v4321 = vld [vmem:[#allocation2 + $0x348] sm:$0xff]
        %v4322 = vld [vmem:[#allocation2 + $0x350] sm:$0xff]
        %v4323 = vld [vmem:[#allocation2 + $0x358] sm:$0xff]
        %v4324 = vld [vmem:[#allocation2 + $0x360] sm:$0xff]
        %v4325 = vld [vmem:[#allocation2 + $0x368] sm:$0xff]
        %v4326 = vld [vmem:[#allocation2 + $0x370] sm:$0xff]
        %v4327 = vld [vmem:[#allocation2 + $0x378] sm:$0xff]
        %v4328 = vld [vmem:[#allocation2 + $0x380] sm:$0xff]
        %v4329 = vld [vmem:[#allocation2 + $0x388] sm:$0xff]
        %v4330 = vpack.c.bf16 %v4237, %v4234
        %v4331 = vpack.c.bf16 %v4238, %v4235
        %v4332 = vpack.c.bf16 %v4239, %v4236
        %v4333 = vpack.c.bf16 %v4243, %v4240
        %v4334 = vpack.c.bf16 %v4244, %v4241
        %v4335 = vpack.c.bf16 %v4245, %v4242
        %v4336 = vpack.c.bf16 %v4249, %v4246
        %v4337 = vpack.c.bf16 %v4250, %v4247
        %v4338 = vpack.c.bf16 %v4251, %v4248
        %v4339 = vpack.c.bf16 %v4255, %v4252
        %v4340 = vpack.c.bf16 %v4256, %v4253
        %v4341 = vpack.c.bf16 %v4257, %v4254
        %v4342 = vpack.c.bf16 %v4261, %v4258
        %v4343 = vpack.c.bf16 %v4262, %v4259
        %v4344 = vpack.c.bf16 %v4263, %v4260
        %v4345 = vpack.c.bf16 %v4267, %v4264
        %v4346 = vpack.c.bf16 %v4268, %v4265
        %v4347 = vpack.c.bf16 %v4269, %v4266
        %v4348 = vpack.c.bf16 %v4273, %v4270
        %v4349 = vpack.c.bf16 %v4274, %v4271
        %v4350 = vpack.c.bf16 %v4275, %v4272
        %v4351 = vpack.c.bf16 %v4279, %v4276
        %v4352 = vpack.c.bf16 %v4280, %v4277
        %v4353 = vpack.c.bf16 %v4281, %v4278
        %v4354 = vpack.c.bf16 %v4285, %v4282
        %v4355 = vpack.c.bf16 %v4286, %v4283
        %v4356 = vpack.c.bf16 %v4287, %v4284
        %v4357 = vpack.c.bf16 %v4291, %v4288
        %v4358 = vpack.c.bf16 %v4292, %v4289
        %v4359 = vpack.c.bf16 %v4293, %v4290
        %v4360 = vpack.c.bf16 %v4297, %v4294
        %v4361 = vpack.c.bf16 %v4298, %v4295
        %v4362 = vpack.c.bf16 %v4299, %v4296
        %v4363 = vpack.c.bf16 %v4303, %v4300
        %v4364 = vpack.c.bf16 %v4304, %v4301
        %v4365 = vpack.c.bf16 %v4305, %v4302
        %v4366 = vpack.c.bf16 %v4309, %v4306
        %v4367 = vpack.c.bf16 %v4310, %v4307
        %v4368 = vpack.c.bf16 %v4311, %v4308
        %v4369 = vpack.c.bf16 %v4315, %v4312
        %v4370 = vpack.c.bf16 %v4316, %v4313
        %v4371 = vpack.c.bf16 %v4317, %v4314
        %v4372 = vpack.c.bf16 %v4321, %v4318
        %v4373 = vpack.c.bf16 %v4322, %v4319
        %v4374 = vpack.c.bf16 %v4323, %v4320
        %v4375 = vpack.c.bf16 %v4327, %v4324
        %v4376 = vpack.c.bf16 %v4328, %v4325
        %v4377 = vpack.c.bf16 %v4329, %v4326
        %v4378 = vld [vmem:[#allocation9] sm:$0xf]
        %v4379 = vld [vmem:[#allocation9 + $0x4] sm:$0xf]
        %v4380 = vld [vmem:[#allocation9 + $0x8] sm:$0xf]
        %v4381 = vld [vmem:[#allocation9 + $0xc] sm:$0xf]
        %v4382 = vld [vmem:[#allocation9 + $0x10] sm:$0xf]
        %v4383 = vld [vmem:[#allocation9 + $0x14] sm:$0xf]
        %v4384 = vld [vmem:[#allocation9 + $0x18] sm:$0xf]
        %v4385 = vld [vmem:[#allocation9 + $0x1c] sm:$0xf]
        %v4386 = vld [vmem:[#allocation9 + $0x20] sm:$0xf]
        %v4387 = vld [vmem:[#allocation9 + $0x24] sm:$0xf]
        %v4388 = vld [vmem:[#allocation9 + $0x28] sm:$0xf]
        %v4389 = vld [vmem:[#allocation9 + $0x2c] sm:$0xf]
        %v4390 = vld [vmem:[#allocation9 + $0x30] sm:$0xf]
        %v4391 = vld [vmem:[#allocation9 + $0x34] sm:$0xf]
        %v4392 = vld [vmem:[#allocation9 + $0x38] sm:$0xf]
        %v4393 = vld [vmem:[#allocation9 + $0x3c] sm:$0xf]
        %v4394 = vld [vmem:[#allocation9 + $0x40] sm:$0xf]
        %v4395 = vld [vmem:[#allocation9 + $0x44] sm:$0xf]
        %v4396 = vld [vmem:[#allocation9 + $0x48] sm:$0xf]
        %v4397 = vld [vmem:[#allocation9 + $0x4c] sm:$0xf]
        %v4398 = vld [vmem:[#allocation9 + $0x50] sm:$0xf]
        %v4399 = vld [vmem:[#allocation9 + $0x54] sm:$0xf]
        %v4400 = vld [vmem:[#allocation9 + $0x58] sm:$0xf]
        %v4401 = vld [vmem:[#allocation9 + $0x5c] sm:$0xf]
        %v4402 = vld [vmem:[#allocation9 + $0x60] sm:$0xf]
        %v4403 = vld [vmem:[#allocation9 + $0x64] sm:$0xf]
        %v4404 = vld [vmem:[#allocation9 + $0x68] sm:$0xf]
        %v4405 = vld [vmem:[#allocation9 + $0x6c] sm:$0xf]
        %v4406 = vld [vmem:[#allocation9 + $0x70] sm:$0xf]
        %v4407 = vld [vmem:[#allocation9 + $0x74] sm:$0xf]
        %v4408 = vld [vmem:[#allocation9 + $0x78] sm:$0xf]
        %v4409 = vld [vmem:[#allocation9 + $0x7c] sm:$0xf]
        %v4410 = vld [vmem:[#allocation9 + $0x80] sm:$0xf]
        %v4411 = vld [vmem:[#allocation9 + $0x84] sm:$0xf]
        %v4412 = vld [vmem:[#allocation9 + $0x88] sm:$0xf]
        %v4413 = vld [vmem:[#allocation9 + $0x8c] sm:$0xf]
        %v4414 = vld [vmem:[#allocation9 + $0x90] sm:$0xf]
        %v4415 = vld [vmem:[#allocation9 + $0x94] sm:$0xf]
        %v4416 = vld [vmem:[#allocation9 + $0x98] sm:$0xf]
        %v4417 = vld [vmem:[#allocation9 + $0x9c] sm:$0xf]
        %v4418 = vld [vmem:[#allocation9 + $0xa0] sm:$0xf]
        %v4419 = vld [vmem:[#allocation9 + $0xa4] sm:$0xf]
        %v4420 = vld [vmem:[#allocation9 + $0xa8] sm:$0xf]
        %v4421 = vld [vmem:[#allocation9 + $0xac] sm:$0xf]
        %v4422 = vld [vmem:[#allocation9 + $0xb0] sm:$0xf]
        %v4423 = vld [vmem:[#allocation9 + $0xb4] sm:$0xf]
        %v4424 = vld [vmem:[#allocation9 + $0xb8] sm:$0xf]
        %v4425 = vld [vmem:[#allocation9 + $0xbc] sm:$0xf]
        %v4426 = vld [vmem:[%s4] sm:$0x1]
        %v4428 = vlaneseq
        %v4429 = vshrl.u32 %v4428, 7
        %v4430 = vsub.s32 0, %v4429
        %v4431 = vrot.slane %v4426, %v4430
        %v4481 = vunpack.c.l.b16 %v4378
        %v4482 = vunpack.c.l.b16 %v4379
        %v4483 = vunpack.c.l.b16 %v4380
        %v4484 = vunpack.c.l.b16 %v4381
        %v4485 = vunpack.c.l.b16 %v4382
        %v4486 = vunpack.c.l.b16 %v4383
        %v4487 = vunpack.c.l.b16 %v4384
        %v4488 = vunpack.c.l.b16 %v4385
        %v4489 = vunpack.c.l.b16 %v4386
        %v4490 = vunpack.c.l.b16 %v4387
        %v4491 = vunpack.c.l.b16 %v4388
        %v4492 = vunpack.c.l.b16 %v4389
        %v4493 = vunpack.c.l.b16 %v4390
        %v4494 = vunpack.c.l.b16 %v4391
        %v4495 = vunpack.c.l.b16 %v4392
        %v4496 = vunpack.c.l.b16 %v4393
        %v4497 = vunpack.c.l.b16 %v4394
        %v4498 = vunpack.c.l.b16 %v4395
        %v4499 = vunpack.c.l.b16 %v4396
        %v4500 = vunpack.c.l.b16 %v4397
        %v4501 = vunpack.c.l.b16 %v4398
        %v4502 = vunpack.c.l.b16 %v4399
        %v4503 = vunpack.c.l.b16 %v4400
        %v4504 = vunpack.c.l.b16 %v4401
        %v4505 = vunpack.c.l.b16 %v4402
        %v4506 = vunpack.c.l.b16 %v4403
        %v4507 = vunpack.c.l.b16 %v4404
        %v4508 = vunpack.c.l.b16 %v4405
        %v4509 = vunpack.c.l.b16 %v4406
        %v4510 = vunpack.c.l.b16 %v4407
        %v4511 = vunpack.c.l.b16 %v4408
        %v4512 = vunpack.c.l.b16 %v4409
        %v4513 = vunpack.c.l.b16 %v4410
        %v4514 = vunpack.c.l.b16 %v4411
        %v4515 = vunpack.c.l.b16 %v4412
        %v4516 = vunpack.c.l.b16 %v4413
        %v4517 = vunpack.c.l.b16 %v4414
        %v4518 = vunpack.c.l.b16 %v4415
        %v4519 = vunpack.c.l.b16 %v4416
        %v4520 = vunpack.c.l.b16 %v4417
        %v4521 = vunpack.c.l.b16 %v4418
        %v4522 = vunpack.c.l.b16 %v4419
        %v4523 = vunpack.c.l.b16 %v4420
        %v4524 = vunpack.c.l.b16 %v4421
        %v4525 = vunpack.c.l.b16 %v4422
        %v4526 = vunpack.c.l.b16 %v4423
        %v4527 = vunpack.c.l.b16 %v4424
        %v4528 = vunpack.c.l.b16 %v4425
        %v4529 = vpack.c.b16 %v4482, %v4481
        %v4530 = vpack.c.b16 %v4484, %v4483
        %v4531 = vpack.c.b16 %v4486, %v4485
        %v4532 = vpack.c.b16 %v4488, %v4487
        %v4533 = vpack.c.b16 %v4490, %v4489
        %v4534 = vpack.c.b16 %v4492, %v4491
        %v4535 = vpack.c.b16 %v4494, %v4493
        %v4536 = vpack.c.b16 %v4496, %v4495
        %v4537 = vpack.c.b16 %v4498, %v4497
        %v4538 = vpack.c.b16 %v4500, %v4499
        %v4539 = vpack.c.b16 %v4502, %v4501
        %v4540 = vpack.c.b16 %v4504, %v4503
        %v4541 = vpack.c.b16 %v4506, %v4505
        %v4542 = vpack.c.b16 %v4508, %v4507
        %v4543 = vpack.c.b16 %v4510, %v4509
        %v4544 = vpack.c.b16 %v4512, %v4511
        %v4545 = vpack.c.b16 %v4514, %v4513
        %v4546 = vpack.c.b16 %v4516, %v4515
        %v4547 = vpack.c.b16 %v4518, %v4517
        %v4548 = vpack.c.b16 %v4520, %v4519
        %v4549 = vpack.c.b16 %v4522, %v4521
        %v4550 = vpack.c.b16 %v4524, %v4523
        %v4551 = vpack.c.b16 %v4526, %v4525
        %v4552 = vpack.c.b16 %v4528, %v4527
        %4577 = vmatprep.subr.bf16.mxu0 0
        %4578 = vmatpush1.bf16.msra.mxu0 %v4536
        %4579 = vmatprep.subr.bf16.mxu0 0
        %4580 = vmatpush1.bf16.msra.mxu0 %v4535
        %4581 = vmatprep.subr.bf16.mxu0 0
        %4582 = vmatpush1.bf16.msra.mxu0 %v4534
        %4583 = vmatprep.subr.bf16.mxu0 0
        %4584 = vmatpush1.bf16.msra.mxu0 %v4533
        %4585 = vmatprep.subr.bf16.mxu0 0
        %4586 = vmatpush1.bf16.msra.mxu0 %v4532
        %4587 = vmatprep.subr.bf16.mxu0 0
        %4588 = vmatpush1.bf16.msra.mxu0 %v4531
        %4589 = vmatprep.subr.bf16.mxu0 0
        %4590 = vmatpush1.bf16.msra.mxu0 %v4530
        %4591 = vmatprep.subr.bf16.mxu0 0
        %4592 = vmatpush1.bf16.msra.mxu0 %v4529
        %4593 = vmatprep.subr.bf16.mxu0 0
        %4594 = vmatpush2.bf16.msra.mxu0 %v4544
        %4595 = vmatprep.subr.bf16.mxu0 0
        %4596 = vmatpush2.bf16.msra.mxu0 %v4543
        %4597 = vmatprep.subr.bf16.mxu0 0
        %4598 = vmatpush2.bf16.msra.mxu0 %v4542
        %4599 = vmatprep.subr.bf16.mxu0 0
        %4600 = vmatpush2.bf16.msra.mxu0 %v4541
        %4601 = vmatprep.subr.bf16.mxu0 0
        %4602 = vmatpush2.bf16.msra.mxu0 %v4540
        %4603 = vmatprep.subr.bf16.mxu0 0
        %4604 = vmatpush2.bf16.msra.mxu0 %v4539
        %4605 = vmatprep.subr.bf16.mxu0 0
        %4606 = vmatpush2.bf16.msra.mxu0 %v4538
        %4607 = vmatprep.subr.bf16.mxu0 0
        %4608 = vmatpush2.bf16.msra.mxu0 %v4537
        %4609 = vmatprep.mubr.bf16.mxu0 %v4331
        %4610 = vmatmul.mubr.bf16.gmra.mxu0 %v4330
        %v4611 = vpop.f32.mrf.mxu0
        %v4612 = vadd.f32 %v4431, %v4611
        %v4613 = vpop.f32.mrf.mxu0
        %v4614 = vpop.f32.mrf.mxu0
        %v4615 = vadd.f32 %v4431, %v4614
        %v4616 = vpop.f32.mrf.mxu0
        %4617 = vmatprep.mubr.bf16.mxu0 %v4334
        %4618 = vmatmul.mubr.bf16.gmra.mxu0 %v4333
        %v4619 = vpop.f32.mrf.mxu0
        %v4620 = vadd.f32 %v4431, %v4619
        %v4621 = vpop.f32.mrf.mxu0
        %v4622 = vpop.f32.mrf.mxu0
        %v4623 = vadd.f32 %v4431, %v4622
        %v4624 = vpop.f32.mrf.mxu0
        %4625 = vmatprep.mubr.bf16.mxu0 %v4337
        %4626 = vmatmul.mubr.bf16.gmra.mxu0 %v4336
        %v4627 = vpop.f32.mrf.mxu0
        %v4628 = vadd.f32 %v4431, %v4627
        %v4629 = vpop.f32.mrf.mxu0
        %v4630 = vpop.f32.mrf.mxu0
        %v4631 = vadd.f32 %v4431, %v4630
        %v4632 = vpop.f32.mrf.mxu0
        %4633 = vmatprep.mubr.bf16.mxu0 %v4340
        %4634 = vmatmul.mubr.bf16.gmra.mxu0 %v4339
        %v4635 = vpop.f32.mrf.mxu0
        %v4636 = vadd.f32 %v4431, %v4635
        %v4637 = vpop.f32.mrf.mxu0
        %v4638 = vpop.f32.mrf.mxu0
        %v4639 = vadd.f32 %v4431, %v4638
        %v4640 = vpop.f32.mrf.mxu0
        %4641 = vmatprep.mubr.bf16.mxu0 %v4343
        %4642 = vmatmul.mubr.bf16.gmra.mxu0 %v4342
        %v4643 = vpop.f32.mrf.mxu0
        %v4644 = vadd.f32 %v4431, %v4643
        %v4645 = vpop.f32.mrf.mxu0
        %v4646 = vpop.f32.mrf.mxu0
        %v4647 = vadd.f32 %v4431, %v4646
        %v4648 = vpop.f32.mrf.mxu0
        %4649 = vmatprep.mubr.bf16.mxu0 %v4346
        %4650 = vmatmul.mubr.bf16.gmra.mxu0 %v4345
        %v4651 = vpop.f32.mrf.mxu0
        %v4652 = vadd.f32 %v4431, %v4651
        %v4653 = vpop.f32.mrf.mxu0
        %v4654 = vpop.f32.mrf.mxu0
        %v4655 = vadd.f32 %v4431, %v4654
        %v4656 = vpop.f32.mrf.mxu0
        %4657 = vmatprep.mubr.bf16.mxu0 %v4349
        %4658 = vmatmul.mubr.bf16.gmra.mxu0 %v4348
        %v4659 = vpop.f32.mrf.mxu0
        %v4660 = vadd.f32 %v4431, %v4659
        %v4661 = vpop.f32.mrf.mxu0
        %v4662 = vpop.f32.mrf.mxu0
        %v4663 = vadd.f32 %v4431, %v4662
        %v4664 = vpop.f32.mrf.mxu0
        %4665 = vmatprep.mubr.bf16.mxu0 %v4352
        %4666 = vmatmul.mubr.bf16.gmra.mxu0 %v4351
        %v4667 = vpop.f32.mrf.mxu0
        %v4668 = vadd.f32 %v4431, %v4667
        %v4669 = vpop.f32.mrf.mxu0
        %v4670 = vpop.f32.mrf.mxu0
        %v4671 = vadd.f32 %v4431, %v4670
        %v4672 = vpop.f32.mrf.mxu0
        %4673 = vmatprep.mubr.bf16.mxu0 %v4355
        %4674 = vmatmul.mubr.bf16.gmra.mxu0 %v4354
        %v4675 = vpop.f32.mrf.mxu0
        %v4676 = vadd.f32 %v4431, %v4675
        %v4677 = vpop.f32.mrf.mxu0
        %v4678 = vpop.f32.mrf.mxu0
        %v4679 = vadd.f32 %v4431, %v4678
        %v4680 = vpop.f32.mrf.mxu0
        %4681 = vmatprep.mubr.bf16.mxu0 %v4358
        %4682 = vmatmul.mubr.bf16.gmra.mxu0 %v4357
        %v4683 = vpop.f32.mrf.mxu0
        %v4684 = vadd.f32 %v4431, %v4683
        %v4685 = vpop.f32.mrf.mxu0
        %v4686 = vpop.f32.mrf.mxu0
        %v4687 = vadd.f32 %v4431, %v4686
        %v4688 = vpop.f32.mrf.mxu0
        %4689 = vmatprep.mubr.bf16.mxu0 %v4361
        %4690 = vmatmul.mubr.bf16.gmra.mxu0 %v4360
        %v4691 = vpop.f32.mrf.mxu0
        %v4692 = vadd.f32 %v4431, %v4691
        %v4693 = vpop.f32.mrf.mxu0
        %v4694 = vpop.f32.mrf.mxu0
        %v4695 = vadd.f32 %v4431, %v4694
        %v4696 = vpop.f32.mrf.mxu0
        %4697 = vmatprep.mubr.bf16.mxu0 %v4364
        %4698 = vmatmul.mubr.bf16.gmra.mxu0 %v4363
        %v4699 = vpop.f32.mrf.mxu0
        %v4700 = vadd.f32 %v4431, %v4699
        %v4701 = vpop.f32.mrf.mxu0
        %v4702 = vpop.f32.mrf.mxu0
        %v4703 = vadd.f32 %v4431, %v4702
        %v4704 = vpop.f32.mrf.mxu0
        %4705 = vmatprep.mubr.bf16.mxu0 %v4367
        %4706 = vmatmul.mubr.bf16.gmra.mxu0 %v4366
        %v4707 = vpop.f32.mrf.mxu0
        %v4708 = vadd.f32 %v4431, %v4707
        %v4709 = vpop.f32.mrf.mxu0
        %v4710 = vpop.f32.mrf.mxu0
        %v4711 = vadd.f32 %v4431, %v4710
        %v4712 = vpop.f32.mrf.mxu0
        %4713 = vmatprep.mubr.bf16.mxu0 %v4370
        %4714 = vmatmul.mubr.bf16.gmra.mxu0 %v4369
        %v4715 = vpop.f32.mrf.mxu0
        %v4716 = vadd.f32 %v4431, %v4715
        %v4717 = vpop.f32.mrf.mxu0
        %v4718 = vpop.f32.mrf.mxu0
        %v4719 = vadd.f32 %v4431, %v4718
        %v4720 = vpop.f32.mrf.mxu0
        %4721 = vmatprep.mubr.bf16.mxu0 %v4373
        %4722 = vmatmul.mubr.bf16.gmra.mxu0 %v4372
        %v4723 = vpop.f32.mrf.mxu0
        %v4724 = vadd.f32 %v4431, %v4723
        %v4725 = vpop.f32.mrf.mxu0
        %v4726 = vpop.f32.mrf.mxu0
        %v4727 = vadd.f32 %v4431, %v4726
        %v4728 = vpop.f32.mrf.mxu0
        %4729 = vmatprep.mubr.bf16.mxu0 %v4376
        %4730 = vmatmul.mubr.bf16.gmra.mxu0 %v4375
        %v4731 = vpop.f32.mrf.mxu0
        %v4732 = vadd.f32 %v4431, %v4731
        %v4733 = vpop.f32.mrf.mxu0
        %v4734 = vpop.f32.mrf.mxu0
        %v4735 = vadd.f32 %v4431, %v4734
        %v4736 = vpop.f32.mrf.mxu0
        %4737 = vdwg.mxu0
        %4738 = vmatprep.subr.bf16.mxu0 0
        %4739 = vmatpush1.bf16.msra.mxu0 %v4552
        %4740 = vmatprep.subr.bf16.mxu0 0
        %4741 = vmatpush1.bf16.msra.mxu0 %v4551
        %4742 = vmatprep.subr.bf16.mxu0 0
        %4743 = vmatpush1.bf16.msra.mxu0 %v4550
        %4744 = vmatprep.subr.bf16.mxu0 0
        %4745 = vmatpush1.bf16.msra.mxu0 %v4549
        %4746 = vmatprep.subr.bf16.mxu0 0
        %4747 = vmatpush1.bf16.msra.mxu0 %v4548
        %4748 = vmatprep.subr.bf16.mxu0 0
        %4749 = vmatpush1.bf16.msra.mxu0 %v4547
        %4750 = vmatprep.subr.bf16.mxu0 0
        %4751 = vmatpush1.bf16.msra.mxu0 %v4546
        %4752 = vmatprep.subr.bf16.mxu0 0
        %4753 = vmatpush1.bf16.msra.mxu0 %v4545
        %4754 = vmatprep.subr.bf16.mxu0 0
        %4755 = vmatpush2.bf16.msra.mxu0 0
        %4756 = vmatprep.subr.bf16.mxu0 0
        %4757 = vmatpush2.bf16.msra.mxu0 0
        %4758 = vmatprep.subr.bf16.mxu0 0
        %4759 = vmatpush2.bf16.msra.mxu0 0
        %4760 = vmatprep.subr.bf16.mxu0 0
        %4761 = vmatpush2.bf16.msra.mxu0 0
        %4762 = vmatprep.subr.bf16.mxu0 0
        %4763 = vmatpush2.bf16.msra.mxu0 0
        %4764 = vmatprep.subr.bf16.mxu0 0
        %4765 = vmatpush2.bf16.msra.mxu0 0
        %4766 = vmatprep.subr.bf16.mxu0 0
        %4767 = vmatpush2.bf16.msra.mxu0 0
        %4768 = vmatprep.subr.bf16.mxu0 0
        %4769 = vmatpush2.bf16.msra.mxu0 0
        %4770 = vmatprep.mubr.bf16.mxu0 0
        %4771 = vmatmul.mubr.bf16.gmra.mxu0 %v4332
        %v4772 = vpop.f32.mrf.mxu0
        %v4773 = vadd.f32 %v4612, %v4772
        %v4774 = vpop.f32.mrf.mxu0
        %v4775 = vpop.f32.mrf.mxu0
        %v4776 = vadd.f32 %v4615, %v4775
        %v4777 = vpop.f32.mrf.mxu0
        %4778 = vmatprep.mubr.bf16.mxu0 0
        %4779 = vmatmul.mubr.bf16.gmra.mxu0 %v4335
        %v4780 = vpop.f32.mrf.mxu0
        %v4781 = vadd.f32 %v4620, %v4780
        %v4782 = vpop.f32.mrf.mxu0
        %v4783 = vpop.f32.mrf.mxu0
        %v4784 = vadd.f32 %v4623, %v4783
        %v4785 = vpop.f32.mrf.mxu0
        %4786 = vmatprep.mubr.bf16.mxu0 0
        %4787 = vmatmul.mubr.bf16.gmra.mxu0 %v4338
        %v4788 = vpop.f32.mrf.mxu0
        %v4789 = vadd.f32 %v4628, %v4788
        %v4790 = vpop.f32.mrf.mxu0
        %v4791 = vpop.f32.mrf.mxu0
        %v4792 = vadd.f32 %v4631, %v4791
        %v4793 = vpop.f32.mrf.mxu0
        %4794 = vmatprep.mubr.bf16.mxu0 0
        %4795 = vmatmul.mubr.bf16.gmra.mxu0 %v4341
        %v4796 = vpop.f32.mrf.mxu0
        %v4797 = vadd.f32 %v4636, %v4796
        %v4798 = vpop.f32.mrf.mxu0
        %v4799 = vpop.f32.mrf.mxu0
        %v4800 = vadd.f32 %v4639, %v4799
        %v4801 = vpop.f32.mrf.mxu0
        %4802 = vmatprep.mubr.bf16.mxu0 0
        %4803 = vmatmul.mubr.bf16.gmra.mxu0 %v4344
        %v4804 = vpop.f32.mrf.mxu0
        %v4805 = vadd.f32 %v4644, %v4804
        %v4806 = vpop.f32.mrf.mxu0
        %v4807 = vpop.f32.mrf.mxu0
        %v4808 = vadd.f32 %v4647, %v4807
        %v4809 = vpop.f32.mrf.mxu0
        %4810 = vmatprep.mubr.bf16.mxu0 0
        %4811 = vmatmul.mubr.bf16.gmra.mxu0 %v4347
        %v4812 = vpop.f32.mrf.mxu0
        %v4813 = vadd.f32 %v4652, %v4812
        %v4814 = vpop.f32.mrf.mxu0
        %v4815 = vpop.f32.mrf.mxu0
        %v4816 = vadd.f32 %v4655, %v4815
        %v4817 = vpop.f32.mrf.mxu0
        %4818 = vmatprep.mubr.bf16.mxu0 0
        %4819 = vmatmul.mubr.bf16.gmra.mxu0 %v4350
        %v4820 = vpop.f32.mrf.mxu0
        %v4821 = vadd.f32 %v4660, %v4820
        %v4822 = vpop.f32.mrf.mxu0
        %v4823 = vpop.f32.mrf.mxu0
        %v4824 = vadd.f32 %v4663, %v4823
        %v4825 = vpop.f32.mrf.mxu0
        %4826 = vmatprep.mubr.bf16.mxu0 0
        %4827 = vmatmul.mubr.bf16.gmra.mxu0 %v4353
        %v4828 = vpop.f32.mrf.mxu0
        %v4829 = vadd.f32 %v4668, %v4828
        %v4830 = vpop.f32.mrf.mxu0
        %v4831 = vpop.f32.mrf.mxu0
        %v4832 = vadd.f32 %v4671, %v4831
        %v4833 = vpop.f32.mrf.mxu0
        %4834 = vmatprep.mubr.bf16.mxu0 0
        %4835 = vmatmul.mubr.bf16.gmra.mxu0 %v4356
        %v4836 = vpop.f32.mrf.mxu0
        %v4837 = vadd.f32 %v4676, %v4836
        %v4838 = vpop.f32.mrf.mxu0
        %v4839 = vpop.f32.mrf.mxu0
        %v4840 = vadd.f32 %v4679, %v4839
        %v4841 = vpop.f32.mrf.mxu0
        %4842 = vmatprep.mubr.bf16.mxu0 0
        %4843 = vmatmul.mubr.bf16.gmra.mxu0 %v4359
        %v4844 = vpop.f32.mrf.mxu0
        %v4845 = vadd.f32 %v4684, %v4844
        %v4846 = vpop.f32.mrf.mxu0
        %v4847 = vpop.f32.mrf.mxu0
        %v4848 = vadd.f32 %v4687, %v4847
        %v4849 = vpop.f32.mrf.mxu0
        %4850 = vmatprep.mubr.bf16.mxu0 0
        %4851 = vmatmul.mubr.bf16.gmra.mxu0 %v4362
        %v4852 = vpop.f32.mrf.mxu0
        %v4853 = vadd.f32 %v4692, %v4852
        %v4854 = vpop.f32.mrf.mxu0
        %v4855 = vpop.f32.mrf.mxu0
        %v4856 = vadd.f32 %v4695, %v4855
        %v4857 = vpop.f32.mrf.mxu0
        %4858 = vmatprep.mubr.bf16.mxu0 0
        %4859 = vmatmul.mubr.bf16.gmra.mxu0 %v4365
        %v4860 = vpop.f32.mrf.mxu0
        %v4861 = vadd.f32 %v4700, %v4860
        %v4862 = vpop.f32.mrf.mxu0
        %v4863 = vpop.f32.mrf.mxu0
        %v4864 = vadd.f32 %v4703, %v4863
        %v4865 = vpop.f32.mrf.mxu0
        %4866 = vmatprep.mubr.bf16.mxu0 0
        %4867 = vmatmul.mubr.bf16.gmra.mxu0 %v4368
        %v4868 = vpop.f32.mrf.mxu0
        %v4869 = vadd.f32 %v4708, %v4868
        %v4870 = vpop.f32.mrf.mxu0
        %v4871 = vpop.f32.mrf.mxu0
        %v4872 = vadd.f32 %v4711, %v4871
        %v4873 = vpop.f32.mrf.mxu0
        %4874 = vmatprep.mubr.bf16.mxu0 0
        %4875 = vmatmul.mubr.bf16.gmra.mxu0 %v4371
        %v4876 = vpop.f32.mrf.mxu0
        %v4877 = vadd.f32 %v4716, %v4876
        %v4878 = vpop.f32.mrf.mxu0
        %v4879 = vpop.f32.mrf.mxu0
        %v4880 = vadd.f32 %v4719, %v4879
        %v4881 = vpop.f32.mrf.mxu0
        %4882 = vmatprep.mubr.bf16.mxu0 0
        %4883 = vmatmul.mubr.bf16.gmra.mxu0 %v4374
        %v4884 = vpop.f32.mrf.mxu0
        %v4885 = vadd.f32 %v4724, %v4884
        %v4886 = vpop.f32.mrf.mxu0
        %v4887 = vpop.f32.mrf.mxu0
        %v4888 = vadd.f32 %v4727, %v4887
        %v4889 = vpop.f32.mrf.mxu0
        %4890 = vmatprep.mubr.bf16.mxu0 0
        %4891 = vmatmul.mubr.bf16.gmra.mxu0 %v4377
        %v4892 = vpop.f32.mrf.mxu0
        %v4893 = vadd.f32 %v4732, %v4892
        %v4894 = vpop.f32.mrf.mxu0
        %v4895 = vpop.f32.mrf.mxu0
        %v4896 = vadd.f32 %v4735, %v4895
        %v4897 = vpop.f32.mrf.mxu0
        %4898 = vdwg.mxu0
        %4899 = vst [vmem:[#allocation3] sm:$0xff] %v4773
        %4900 = vst [vmem:[#allocation3 + $0x8] sm:$0xff] %v4776
        %4901 = vst [vmem:[#allocation3 + $0x10] sm:$0xff] %v4781
        %4902 = vst [vmem:[#allocation3 + $0x18] sm:$0xff] %v4784
        %4903 = vst [vmem:[#allocation3 + $0x20] sm:$0xff] %v4789
        %4904 = vst [vmem:[#allocation3 + $0x28] sm:$0xff] %v4792
        %4905 = vst [vmem:[#allocation3 + $0x30] sm:$0xff] %v4797
        %4906 = vst [vmem:[#allocation3 + $0x38] sm:$0xff] %v4800
        %4907 = vst [vmem:[#allocation3 + $0x40] sm:$0xff] %v4805
        %4908 = vst [vmem:[#allocation3 + $0x48] sm:$0xff] %v4808
        %4909 = vst [vmem:[#allocation3 + $0x50] sm:$0xff] %v4813
        %4910 = vst [vmem:[#allocation3 + $0x58] sm:$0xff] %v4816
        %4911 = vst [vmem:[#allocation3 + $0x60] sm:$0xff] %v4821
        %4912 = vst [vmem:[#allocation3 + $0x68] sm:$0xff] %v4824
        %4913 = vst [vmem:[#allocation3 + $0x70] sm:$0xff] %v4829
        %4914 = vst [vmem:[#allocation3 + $0x78] sm:$0xff] %v4832
        %4915 = vst [vmem:[#allocation3 + $0x80] sm:$0xff] %v4837
        %4916 = vst [vmem:[#allocation3 + $0x88] sm:$0xff] %v4840
        %4917 = vst [vmem:[#allocation3 + $0x90] sm:$0xff] %v4845
        %4918 = vst [vmem:[#allocation3 + $0x98] sm:$0xff] %v4848
        %4919 = vst [vmem:[#allocation3 + $0xa0] sm:$0xff] %v4853
        %4920 = vst [vmem:[#allocation3 + $0xa8] sm:$0xff] %v4856
        %4921 = vst [vmem:[#allocation3 + $0xb0] sm:$0xff] %v4861
        %4922 = vst [vmem:[#allocation3 + $0xb8] sm:$0xff] %v4864
        %4923 = vst [vmem:[#allocation3 + $0xc0] sm:$0xff] %v4869
        %4924 = vst [vmem:[#allocation3 + $0xc8] sm:$0xff] %v4872
        %4925 = vst [vmem:[#allocation3 + $0xd0] sm:$0xff] %v4877
        %4926 = vst [vmem:[#allocation3 + $0xd8] sm:$0xff] %v4880
        %4927 = vst [vmem:[#allocation3 + $0xe0] sm:$0xff] %v4885
        %4928 = vst [vmem:[#allocation3 + $0xe8] sm:$0xff] %v4888
        %4929 = vst [vmem:[#allocation3 + $0xf0] sm:$0xff] %v4893
        %4930 = vst [vmem:[#allocation3 + $0xf8] sm:$0xff] %v4896
        %v4931 = vld [vmem:[%s692] sm:$0xff]
        %v4932 = vld [vmem:[%s692 + $0x8] sm:$0xff]
        %v4933 = vld [vmem:[%s692 + $0x10] sm:$0xff]
        %v4934 = vld [vmem:[%s692 + $0x18] sm:$0xff]
        %v4935 = vld [vmem:[%s692 + $0x20] sm:$0xff]
        %v4936 = vld [vmem:[%s692 + $0x28] sm:$0xff]
        %v4937 = vld [vmem:[%s692 + $0x30] sm:$0xff]
        %v4938 = vld [vmem:[%s692 + $0x38] sm:$0xff]
        %v4939 = vld [vmem:[%s692 + $0x40] sm:$0xff]
        %v4940 = vld [vmem:[%s692 + $0x48] sm:$0xff]
        %v4941 = vld [vmem:[%s692 + $0x50] sm:$0xff]
        %v4942 = vld [vmem:[%s692 + $0x58] sm:$0xff]
        %v4943 = vld [vmem:[%s692 + $0x60] sm:$0xff]
        %v4944 = vld [vmem:[%s692 + $0x68] sm:$0xff]
        %v4945 = vld [vmem:[%s692 + $0x70] sm:$0xff]
        %v4946 = vld [vmem:[%s692 + $0x78] sm:$0xff]
        %v4947 = vld [vmem:[%s692 + $0x80] sm:$0xff]
        %v4948 = vld [vmem:[%s692 + $0x88] sm:$0xff]
        %v4949 = vld [vmem:[%s692 + $0x90] sm:$0xff]
        %v4950 = vld [vmem:[%s692 + $0x98] sm:$0xff]
        %v4951 = vld [vmem:[%s692 + $0xa0] sm:$0xff]
        %v4952 = vld [vmem:[%s692 + $0xa8] sm:$0xff]
        %v4953 = vld [vmem:[%s692 + $0xb0] sm:$0xff]
        %v4954 = vld [vmem:[%s692 + $0xb8] sm:$0xff]
        %v4955 = vld [vmem:[%s692 + $0xf0] sm:$0xff]
        %v4956 = vld [vmem:[%s692 + $0xf8] sm:$0xff]
        %v4957 = vld [vmem:[%s692 + $0x100] sm:$0xff]
        %v4958 = vld [vmem:[%s692 + $0x108] sm:$0xff]
        %v4959 = vld [vmem:[%s692 + $0x110] sm:$0xff]
        %v4960 = vld [vmem:[%s692 + $0x118] sm:$0xff]
        %v4961 = vld [vmem:[%s692 + $0x120] sm:$0xff]
        %v4962 = vld [vmem:[%s692 + $0x128] sm:$0xff]
        %v4963 = vld [vmem:[%s692 + $0x130] sm:$0xff]
        %v4964 = vld [vmem:[%s692 + $0x138] sm:$0xff]
        %v4965 = vld [vmem:[%s692 + $0x140] sm:$0xff]
        %v4966 = vld [vmem:[%s692 + $0x148] sm:$0xff]
        %v4967 = vld [vmem:[%s692 + $0x150] sm:$0xff]
        %v4968 = vld [vmem:[%s692 + $0x158] sm:$0xff]
        %v4969 = vld [vmem:[%s692 + $0x160] sm:$0xff]
        %v4970 = vld [vmem:[%s692 + $0x168] sm:$0xff]
        %v4971 = vld [vmem:[%s692 + $0x170] sm:$0xff]
        %v4972 = vld [vmem:[%s692 + $0x178] sm:$0xff]
        %v4973 = vld [vmem:[%s692 + $0x180] sm:$0xff]
        %v4974 = vld [vmem:[%s692 + $0x188] sm:$0xff]
        %v4975 = vld [vmem:[%s692 + $0x190] sm:$0xff]
        %v4976 = vld [vmem:[%s692 + $0x198] sm:$0xff]
        %v4977 = vld [vmem:[%s692 + $0x1a0] sm:$0xff]
        %v4978 = vld [vmem:[%s692 + $0x1a8] sm:$0xff]
        %v4979 = vld [vmem:[%s692 + $0x1e0] sm:$0xff]
        %v4980 = vld [vmem:[%s692 + $0x1e8] sm:$0xff]
        %v4981 = vld [vmem:[%s692 + $0x1f0] sm:$0xff]
        %v4982 = vld [vmem:[%s692 + $0x1f8] sm:$0xff]
        %v4983 = vld [vmem:[%s692 + $0x200] sm:$0xff]
        %v4984 = vld [vmem:[%s692 + $0x208] sm:$0xff]
        %v4985 = vld [vmem:[%s692 + $0x210] sm:$0xff]
        %v4986 = vld [vmem:[%s692 + $0x218] sm:$0xff]
        %v4987 = vld [vmem:[%s692 + $0x220] sm:$0xff]
        %v4988 = vld [vmem:[%s692 + $0x228] sm:$0xff]
        %v4989 = vld [vmem:[%s692 + $0x230] sm:$0xff]
        %v4990 = vld [vmem:[%s692 + $0x238] sm:$0xff]
        %v4991 = vld [vmem:[%s692 + $0x240] sm:$0xff]
        %v4992 = vld [vmem:[%s692 + $0x248] sm:$0xff]
        %v4993 = vld [vmem:[%s692 + $0x250] sm:$0xff]
        %v4994 = vld [vmem:[%s692 + $0x258] sm:$0xff]
        %v4995 = vld [vmem:[%s692 + $0x260] sm:$0xff]
        %v4996 = vld [vmem:[%s692 + $0x268] sm:$0xff]
        %v4997 = vld [vmem:[%s692 + $0x270] sm:$0xff]
        %v4998 = vld [vmem:[%s692 + $0x278] sm:$0xff]
        %v4999 = vld [vmem:[%s692 + $0x280] sm:$0xff]
        %v5000 = vld [vmem:[%s692 + $0x288] sm:$0xff]
        %v5001 = vld [vmem:[%s692 + $0x290] sm:$0xff]
        %v5002 = vld [vmem:[%s692 + $0x298] sm:$0xff]
        %v5003 = vld [vmem:[%s692 + $0x2d0] sm:$0xff]
        %v5004 = vld [vmem:[%s692 + $0x2d8] sm:$0xff]
        %v5005 = vld [vmem:[%s692 + $0x2e0] sm:$0xff]
        %v5006 = vld [vmem:[%s692 + $0x2e8] sm:$0xff]
        %v5007 = vld [vmem:[%s692 + $0x2f0] sm:$0xff]
        %v5008 = vld [vmem:[%s692 + $0x2f8] sm:$0xff]
        %v5009 = vld [vmem:[%s692 + $0x300] sm:$0xff]
        %v5010 = vld [vmem:[%s692 + $0x308] sm:$0xff]
        %v5011 = vld [vmem:[%s692 + $0x310] sm:$0xff]
        %v5012 = vld [vmem:[%s692 + $0x318] sm:$0xff]
        %v5013 = vld [vmem:[%s692 + $0x320] sm:$0xff]
        %v5014 = vld [vmem:[%s692 + $0x328] sm:$0xff]
        %v5015 = vld [vmem:[%s692 + $0x330] sm:$0xff]
        %v5016 = vld [vmem:[%s692 + $0x338] sm:$0xff]
        %v5017 = vld [vmem:[%s692 + $0x340] sm:$0xff]
        %v5018 = vld [vmem:[%s692 + $0x348] sm:$0xff]
        %v5019 = vld [vmem:[%s692 + $0x350] sm:$0xff]
        %v5020 = vld [vmem:[%s692 + $0x358] sm:$0xff]
        %v5021 = vld [vmem:[%s692 + $0x360] sm:$0xff]
        %v5022 = vld [vmem:[%s692 + $0x368] sm:$0xff]
        %v5023 = vld [vmem:[%s692 + $0x370] sm:$0xff]
        %v5024 = vld [vmem:[%s692 + $0x378] sm:$0xff]
        %v5025 = vld [vmem:[%s692 + $0x380] sm:$0xff]
        %v5026 = vld [vmem:[%s692 + $0x388] sm:$0xff]
        %v5027 = vld [vmem:[#allocation3] sm:$0xff]
        %v5028 = vld [vmem:[#allocation3 + $0x8] sm:$0xff]
        %v5029 = vld [vmem:[#allocation3 + $0x10] sm:$0xff]
        %v5030 = vld [vmem:[#allocation3 + $0x18] sm:$0xff]
        %v5031 = vld [vmem:[#allocation3 + $0x20] sm:$0xff]
        %v5032 = vld [vmem:[#allocation3 + $0x28] sm:$0xff]
        %v5033 = vld [vmem:[#allocation3 + $0x30] sm:$0xff]
        %v5034 = vld [vmem:[#allocation3 + $0x38] sm:$0xff]
        %v5035 = vld [vmem:[#allocation3 + $0x40] sm:$0xff]
        %v5036 = vld [vmem:[#allocation3 + $0x48] sm:$0xff]
        %v5037 = vld [vmem:[#allocation3 + $0x50] sm:$0xff]
        %v5038 = vld [vmem:[#allocation3 + $0x58] sm:$0xff]
        %v5039 = vld [vmem:[#allocation3 + $0x60] sm:$0xff]
        %v5040 = vld [vmem:[#allocation3 + $0x68] sm:$0xff]
        %v5041 = vld [vmem:[#allocation3 + $0x70] sm:$0xff]
        %v5042 = vld [vmem:[#allocation3 + $0x78] sm:$0xff]
        %v5043 = vld [vmem:[#allocation3 + $0x80] sm:$0xff]
        %v5044 = vld [vmem:[#allocation3 + $0x88] sm:$0xff]
        %v5045 = vld [vmem:[#allocation3 + $0x90] sm:$0xff]
        %v5046 = vld [vmem:[#allocation3 + $0x98] sm:$0xff]
        %v5047 = vld [vmem:[#allocation3 + $0xa0] sm:$0xff]
        %v5048 = vld [vmem:[#allocation3 + $0xa8] sm:$0xff]
        %v5049 = vld [vmem:[#allocation3 + $0xb0] sm:$0xff]
        %v5050 = vld [vmem:[#allocation3 + $0xb8] sm:$0xff]
        %v5051 = vld [vmem:[#allocation3 + $0xc0] sm:$0xff]
        %v5052 = vld [vmem:[#allocation3 + $0xc8] sm:$0xff]
        %v5053 = vld [vmem:[#allocation3 + $0xd0] sm:$0xff]
        %v5054 = vld [vmem:[#allocation3 + $0xd8] sm:$0xff]
        %v5055 = vld [vmem:[#allocation3 + $0xe0] sm:$0xff]
        %v5056 = vld [vmem:[#allocation3 + $0xe8] sm:$0xff]
        %v5057 = vld [vmem:[#allocation3 + $0xf0] sm:$0xff]
        %v5058 = vld [vmem:[#allocation3 + $0xf8] sm:$0xff]
        %v5059 = vpack.c.bf16 %v4934, %v4931
        %v5060 = vpack.c.bf16 %v4935, %v4932
        %v5061 = vpack.c.bf16 %v4936, %v4933
        %v5062 = vpack.c.bf16 %v4940, %v4937
        %v5063 = vpack.c.bf16 %v4941, %v4938
        %v5064 = vpack.c.bf16 %v4942, %v4939
        %v5065 = vpack.c.bf16 %v4946, %v4943
        %v5066 = vpack.c.bf16 %v4947, %v4944
        %v5067 = vpack.c.bf16 %v4948, %v4945
        %v5068 = vpack.c.bf16 %v4952, %v4949
        %v5069 = vpack.c.bf16 %v4953, %v4950
        %v5070 = vpack.c.bf16 %v4954, %v4951
        %v5071 = vpack.c.bf16 %v4958, %v4955
        %v5072 = vpack.c.bf16 %v4959, %v4956
        %v5073 = vpack.c.bf16 %v4960, %v4957
        %v5074 = vpack.c.bf16 %v4964, %v4961
        %v5075 = vpack.c.bf16 %v4965, %v4962
        %v5076 = vpack.c.bf16 %v4966, %v4963
        %v5077 = vpack.c.bf16 %v4970, %v4967
        %v5078 = vpack.c.bf16 %v4971, %v4968
        %v5079 = vpack.c.bf16 %v4972, %v4969
        %v5080 = vpack.c.bf16 %v4976, %v4973
        %v5081 = vpack.c.bf16 %v4977, %v4974
        %v5082 = vpack.c.bf16 %v4978, %v4975
        %v5083 = vpack.c.bf16 %v4982, %v4979
        %v5084 = vpack.c.bf16 %v4983, %v4980
        %v5085 = vpack.c.bf16 %v4984, %v4981
        %v5086 = vpack.c.bf16 %v4988, %v4985
        %v5087 = vpack.c.bf16 %v4989, %v4986
        %v5088 = vpack.c.bf16 %v4990, %v4987
        %v5089 = vpack.c.bf16 %v4994, %v4991
        %v5090 = vpack.c.bf16 %v4995, %v4992
        %v5091 = vpack.c.bf16 %v4996, %v4993
        %v5092 = vpack.c.bf16 %v5000, %v4997
        %v5093 = vpack.c.bf16 %v5001, %v4998
        %v5094 = vpack.c.bf16 %v5002, %v4999
        %v5095 = vpack.c.bf16 %v5006, %v5003
        %v5096 = vpack.c.bf16 %v5007, %v5004
        %v5097 = vpack.c.bf16 %v5008, %v5005
        %v5098 = vpack.c.bf16 %v5012, %v5009
        %v5099 = vpack.c.bf16 %v5013, %v5010
        %v5100 = vpack.c.bf16 %v5014, %v5011
        %v5101 = vpack.c.bf16 %v5018, %v5015
        %v5102 = vpack.c.bf16 %v5019, %v5016
        %v5103 = vpack.c.bf16 %v5020, %v5017
        %v5104 = vpack.c.bf16 %v5024, %v5021
        %v5105 = vpack.c.bf16 %v5025, %v5022
        %v5106 = vpack.c.bf16 %v5026, %v5023
        %v5107 = vld [vmem:[%s1856] sm:$0xf]
        %v5108 = vld [vmem:[%s1856 + $0x4] sm:$0xf]
        %v5109 = vld [vmem:[%s1856 + $0x8] sm:$0xf]
        %v5110 = vld [vmem:[%s1856 + $0xc] sm:$0xf]
        %v5111 = vld [vmem:[%s1856 + $0x10] sm:$0xf]
        %v5112 = vld [vmem:[%s1856 + $0x14] sm:$0xf]
        %v5113 = vld [vmem:[%s1856 + $0x18] sm:$0xf]
        %v5114 = vld [vmem:[%s1856 + $0x1c] sm:$0xf]
        %v5115 = vld [vmem:[%s1856 + $0x20] sm:$0xf]
        %v5116 = vld [vmem:[%s1856 + $0x24] sm:$0xf]
        %v5117 = vld [vmem:[%s1856 + $0x28] sm:$0xf]
        %v5118 = vld [vmem:[%s1856 + $0x2c] sm:$0xf]
        %v5119 = vld [vmem:[%s1856 + $0x30] sm:$0xf]
        %v5120 = vld [vmem:[%s1856 + $0x34] sm:$0xf]
        %v5121 = vld [vmem:[%s1856 + $0x38] sm:$0xf]
        %v5122 = vld [vmem:[%s1856 + $0x3c] sm:$0xf]
        %v5123 = vld [vmem:[%s1856 + $0x40] sm:$0xf]
        %v5124 = vld [vmem:[%s1856 + $0x44] sm:$0xf]
        %v5125 = vld [vmem:[%s1856 + $0x48] sm:$0xf]
        %v5126 = vld [vmem:[%s1856 + $0x4c] sm:$0xf]
        %v5127 = vld [vmem:[%s1856 + $0x50] sm:$0xf]
        %v5128 = vld [vmem:[%s1856 + $0x54] sm:$0xf]
        %v5129 = vld [vmem:[%s1856 + $0x58] sm:$0xf]
        %v5130 = vld [vmem:[%s1856 + $0x5c] sm:$0xf]
        %v5131 = vld [vmem:[%s1856 + $0x60] sm:$0xf]
        %v5132 = vld [vmem:[%s1856 + $0x64] sm:$0xf]
        %v5133 = vld [vmem:[%s1856 + $0x68] sm:$0xf]
        %v5134 = vld [vmem:[%s1856 + $0x6c] sm:$0xf]
        %v5135 = vld [vmem:[%s1856 + $0x70] sm:$0xf]
        %v5136 = vld [vmem:[%s1856 + $0x74] sm:$0xf]
        %v5137 = vld [vmem:[%s1856 + $0x78] sm:$0xf]
        %v5138 = vld [vmem:[%s1856 + $0x7c] sm:$0xf]
        %v5139 = vld [vmem:[%s1856 + $0x80] sm:$0xf]
        %v5140 = vld [vmem:[%s1856 + $0x84] sm:$0xf]
        %v5141 = vld [vmem:[%s1856 + $0x88] sm:$0xf]
        %v5142 = vld [vmem:[%s1856 + $0x8c] sm:$0xf]
        %v5143 = vld [vmem:[%s1856 + $0x90] sm:$0xf]
        %v5144 = vld [vmem:[%s1856 + $0x94] sm:$0xf]
        %v5145 = vld [vmem:[%s1856 + $0x98] sm:$0xf]
        %v5146 = vld [vmem:[%s1856 + $0x9c] sm:$0xf]
        %v5147 = vld [vmem:[%s1856 + $0xa0] sm:$0xf]
        %v5148 = vld [vmem:[%s1856 + $0xa4] sm:$0xf]
        %v5149 = vld [vmem:[%s1856 + $0xa8] sm:$0xf]
        %v5150 = vld [vmem:[%s1856 + $0xac] sm:$0xf]
        %v5151 = vld [vmem:[%s1856 + $0xb0] sm:$0xf]
        %v5152 = vld [vmem:[%s1856 + $0xb4] sm:$0xf]
        %v5153 = vld [vmem:[%s1856 + $0xb8] sm:$0xf]
        %v5154 = vld [vmem:[%s1856 + $0xbc] sm:$0xf]
        %v5203 = vunpack.c.l.b16 %v5107
        %v5204 = vunpack.c.l.b16 %v5108
        %v5205 = vunpack.c.l.b16 %v5109
        %v5206 = vunpack.c.l.b16 %v5110
        %v5207 = vunpack.c.l.b16 %v5111
        %v5208 = vunpack.c.l.b16 %v5112
        %v5209 = vunpack.c.l.b16 %v5113
        %v5210 = vunpack.c.l.b16 %v5114
        %v5211 = vunpack.c.l.b16 %v5115
        %v5212 = vunpack.c.l.b16 %v5116
        %v5213 = vunpack.c.l.b16 %v5117
        %v5214 = vunpack.c.l.b16 %v5118
        %v5215 = vunpack.c.l.b16 %v5119
        %v5216 = vunpack.c.l.b16 %v5120
        %v5217 = vunpack.c.l.b16 %v5121
        %v5218 = vunpack.c.l.b16 %v5122
        %v5219 = vunpack.c.l.b16 %v5123
        %v5220 = vunpack.c.l.b16 %v5124
        %v5221 = vunpack.c.l.b16 %v5125
        %v5222 = vunpack.c.l.b16 %v5126
        %v5223 = vunpack.c.l.b16 %v5127
        %v5224 = vunpack.c.l.b16 %v5128
        %v5225 = vunpack.c.l.b16 %v5129
        %v5226 = vunpack.c.l.b16 %v5130
        %v5227 = vunpack.c.l.b16 %v5131
        %v5228 = vunpack.c.l.b16 %v5132
        %v5229 = vunpack.c.l.b16 %v5133
        %v5230 = vunpack.c.l.b16 %v5134
        %v5231 = vunpack.c.l.b16 %v5135
        %v5232 = vunpack.c.l.b16 %v5136
        %v5233 = vunpack.c.l.b16 %v5137
        %v5234 = vunpack.c.l.b16 %v5138
        %v5235 = vunpack.c.l.b16 %v5139
        %v5236 = vunpack.c.l.b16 %v5140
        %v5237 = vunpack.c.l.b16 %v5141
        %v5238 = vunpack.c.l.b16 %v5142
        %v5239 = vunpack.c.l.b16 %v5143
        %v5240 = vunpack.c.l.b16 %v5144
        %v5241 = vunpack.c.l.b16 %v5145
        %v5242 = vunpack.c.l.b16 %v5146
        %v5243 = vunpack.c.l.b16 %v5147
        %v5244 = vunpack.c.l.b16 %v5148
        %v5245 = vunpack.c.l.b16 %v5149
        %v5246 = vunpack.c.l.b16 %v5150
        %v5247 = vunpack.c.l.b16 %v5151
        %v5248 = vunpack.c.l.b16 %v5152
        %v5249 = vunpack.c.l.b16 %v5153
        %v5250 = vunpack.c.l.b16 %v5154
        %v5251 = vpack.c.b16 %v5204, %v5203
        %v5252 = vpack.c.b16 %v5206, %v5205
        %v5253 = vpack.c.b16 %v5208, %v5207
        %v5254 = vpack.c.b16 %v5210, %v5209
        %v5255 = vpack.c.b16 %v5212, %v5211
        %v5256 = vpack.c.b16 %v5214, %v5213
        %v5257 = vpack.c.b16 %v5216, %v5215
        %v5258 = vpack.c.b16 %v5218, %v5217
        %v5259 = vpack.c.b16 %v5220, %v5219
        %v5260 = vpack.c.b16 %v5222, %v5221
        %v5261 = vpack.c.b16 %v5224, %v5223
        %v5262 = vpack.c.b16 %v5226, %v5225
        %v5263 = vpack.c.b16 %v5228, %v5227
        %v5264 = vpack.c.b16 %v5230, %v5229
        %v5265 = vpack.c.b16 %v5232, %v5231
        %v5266 = vpack.c.b16 %v5234, %v5233
        %v5267 = vpack.c.b16 %v5236, %v5235
        %v5268 = vpack.c.b16 %v5238, %v5237
        %v5269 = vpack.c.b16 %v5240, %v5239
        %v5270 = vpack.c.b16 %v5242, %v5241
        %v5271 = vpack.c.b16 %v5244, %v5243
        %v5272 = vpack.c.b16 %v5246, %v5245
        %v5273 = vpack.c.b16 %v5248, %v5247
        %v5274 = vpack.c.b16 %v5250, %v5249
        %5299 = vmatprep.subr.bf16.mxu0 0
        %5300 = vmatpush1.bf16.msra.mxu0 %v5258
        %5301 = vmatprep.subr.bf16.mxu0 0
        %5302 = vmatpush1.bf16.msra.mxu0 %v5257
        %5303 = vmatprep.subr.bf16.mxu0 0
        %5304 = vmatpush1.bf16.msra.mxu0 %v5256
        %5305 = vmatprep.subr.bf16.mxu0 0
        %5306 = vmatpush1.bf16.msra.mxu0 %v5255
        %5307 = vmatprep.subr.bf16.mxu0 0
        %5308 = vmatpush1.bf16.msra.mxu0 %v5254
        %5309 = vmatprep.subr.bf16.mxu0 0
        %5310 = vmatpush1.bf16.msra.mxu0 %v5253
        %5311 = vmatprep.subr.bf16.mxu0 0
        %5312 = vmatpush1.bf16.msra.mxu0 %v5252
        %5313 = vmatprep.subr.bf16.mxu0 0
        %5314 = vmatpush1.bf16.msra.mxu0 %v5251
        %5315 = vmatprep.subr.bf16.mxu0 0
        %5316 = vmatpush2.bf16.msra.mxu0 %v5266
        %5317 = vmatprep.subr.bf16.mxu0 0
        %5318 = vmatpush2.bf16.msra.mxu0 %v5265
        %5319 = vmatprep.subr.bf16.mxu0 0
        %5320 = vmatpush2.bf16.msra.mxu0 %v5264
        %5321 = vmatprep.subr.bf16.mxu0 0
        %5322 = vmatpush2.bf16.msra.mxu0 %v5263
        %5323 = vmatprep.subr.bf16.mxu0 0
        %5324 = vmatpush2.bf16.msra.mxu0 %v5262
        %5325 = vmatprep.subr.bf16.mxu0 0
        %5326 = vmatpush2.bf16.msra.mxu0 %v5261
        %5327 = vmatprep.subr.bf16.mxu0 0
        %5328 = vmatpush2.bf16.msra.mxu0 %v5260
        %5329 = vmatprep.subr.bf16.mxu0 0
        %5330 = vmatpush2.bf16.msra.mxu0 %v5259
        %5331 = vmatprep.mubr.bf16.mxu0 %v5060
        %5332 = vmatmul.mubr.bf16.gmra.mxu0 %v5059
        %v5333 = vpop.f32.mrf.mxu0
        %v5334 = vadd.f32 0.0, %v5333
        %v5335 = vpop.f32.mrf.mxu0
        %v5336 = vpop.f32.mrf.mxu0
        %v5337 = vadd.f32 0.0, %v5336
        %v5338 = vpop.f32.mrf.mxu0
        %5339 = vmatprep.mubr.bf16.mxu0 %v5063
        %5340 = vmatmul.mubr.bf16.gmra.mxu0 %v5062
        %v5341 = vpop.f32.mrf.mxu0
        %v5342 = vadd.f32 0.0, %v5341
        %v5343 = vpop.f32.mrf.mxu0
        %v5344 = vpop.f32.mrf.mxu0
        %v5345 = vadd.f32 0.0, %v5344
        %v5346 = vpop.f32.mrf.mxu0
        %5347 = vmatprep.mubr.bf16.mxu0 %v5066
        %5348 = vmatmul.mubr.bf16.gmra.mxu0 %v5065
        %v5349 = vpop.f32.mrf.mxu0
        %v5350 = vadd.f32 0.0, %v5349
        %v5351 = vpop.f32.mrf.mxu0
        %v5352 = vpop.f32.mrf.mxu0
        %v5353 = vadd.f32 0.0, %v5352
        %v5354 = vpop.f32.mrf.mxu0
        %5355 = vmatprep.mubr.bf16.mxu0 %v5069
        %5356 = vmatmul.mubr.bf16.gmra.mxu0 %v5068
        %v5357 = vpop.f32.mrf.mxu0
        %v5358 = vadd.f32 0.0, %v5357
        %v5359 = vpop.f32.mrf.mxu0
        %v5360 = vpop.f32.mrf.mxu0
        %v5361 = vadd.f32 0.0, %v5360
        %v5362 = vpop.f32.mrf.mxu0
        %5363 = vmatprep.mubr.bf16.mxu0 %v5072
        %5364 = vmatmul.mubr.bf16.gmra.mxu0 %v5071
        %v5365 = vpop.f32.mrf.mxu0
        %v5366 = vadd.f32 0.0, %v5365
        %v5367 = vpop.f32.mrf.mxu0
        %v5368 = vpop.f32.mrf.mxu0
        %v5369 = vadd.f32 0.0, %v5368
        %v5370 = vpop.f32.mrf.mxu0
        %5371 = vmatprep.mubr.bf16.mxu0 %v5075
        %5372 = vmatmul.mubr.bf16.gmra.mxu0 %v5074
        %v5373 = vpop.f32.mrf.mxu0
        %v5374 = vadd.f32 0.0, %v5373
        %v5375 = vpop.f32.mrf.mxu0
        %v5376 = vpop.f32.mrf.mxu0
        %v5377 = vadd.f32 0.0, %v5376
        %v5378 = vpop.f32.mrf.mxu0
        %5379 = vmatprep.mubr.bf16.mxu0 %v5078
        %5380 = vmatmul.mubr.bf16.gmra.mxu0 %v5077
        %v5381 = vpop.f32.mrf.mxu0
        %v5382 = vadd.f32 0.0, %v5381
        %v5383 = vpop.f32.mrf.mxu0
        %v5384 = vpop.f32.mrf.mxu0
        %v5385 = vadd.f32 0.0, %v5384
        %v5386 = vpop.f32.mrf.mxu0
        %5387 = vmatprep.mubr.bf16.mxu0 %v5081
        %5388 = vmatmul.mubr.bf16.gmra.mxu0 %v5080
        %v5389 = vpop.f32.mrf.mxu0
        %v5390 = vadd.f32 0.0, %v5389
        %v5391 = vpop.f32.mrf.mxu0
        %v5392 = vpop.f32.mrf.mxu0
        %v5393 = vadd.f32 0.0, %v5392
        %v5394 = vpop.f32.mrf.mxu0
        %5395 = vmatprep.mubr.bf16.mxu0 %v5084
        %5396 = vmatmul.mubr.bf16.gmra.mxu0 %v5083
        %v5397 = vpop.f32.mrf.mxu0
        %v5398 = vadd.f32 0.0, %v5397
        %v5399 = vpop.f32.mrf.mxu0
        %v5400 = vpop.f32.mrf.mxu0
        %v5401 = vadd.f32 0.0, %v5400
        %v5402 = vpop.f32.mrf.mxu0
        %5403 = vmatprep.mubr.bf16.mxu0 %v5087
        %5404 = vmatmul.mubr.bf16.gmra.mxu0 %v5086
        %v5405 = vpop.f32.mrf.mxu0
        %v5406 = vadd.f32 0.0, %v5405
        %v5407 = vpop.f32.mrf.mxu0
        %v5408 = vpop.f32.mrf.mxu0
        %v5409 = vadd.f32 0.0, %v5408
        %v5410 = vpop.f32.mrf.mxu0
        %5411 = vmatprep.mubr.bf16.mxu0 %v5090
        %5412 = vmatmul.mubr.bf16.gmra.mxu0 %v5089
        %v5413 = vpop.f32.mrf.mxu0
        %v5414 = vadd.f32 0.0, %v5413
        %v5415 = vpop.f32.mrf.mxu0
        %v5416 = vpop.f32.mrf.mxu0
        %v5417 = vadd.f32 0.0, %v5416
        %v5418 = vpop.f32.mrf.mxu0
        %5419 = vmatprep.mubr.bf16.mxu0 %v5093
        %5420 = vmatmul.mubr.bf16.gmra.mxu0 %v5092
        %v5421 = vpop.f32.mrf.mxu0
        %v5422 = vadd.f32 0.0, %v5421
        %v5423 = vpop.f32.mrf.mxu0
        %v5424 = vpop.f32.mrf.mxu0
        %v5425 = vadd.f32 0.0, %v5424
        %v5426 = vpop.f32.mrf.mxu0
        %5427 = vmatprep.mubr.bf16.mxu0 %v5096
        %5428 = vmatmul.mubr.bf16.gmra.mxu0 %v5095
        %v5429 = vpop.f32.mrf.mxu0
        %v5430 = vadd.f32 0.0, %v5429
        %v5431 = vpop.f32.mrf.mxu0
        %v5432 = vpop.f32.mrf.mxu0
        %v5433 = vadd.f32 0.0, %v5432
        %v5434 = vpop.f32.mrf.mxu0
        %5435 = vmatprep.mubr.bf16.mxu0 %v5099
        %5436 = vmatmul.mubr.bf16.gmra.mxu0 %v5098
        %v5437 = vpop.f32.mrf.mxu0
        %v5438 = vadd.f32 0.0, %v5437
        %v5439 = vpop.f32.mrf.mxu0
        %v5440 = vpop.f32.mrf.mxu0
        %v5441 = vadd.f32 0.0, %v5440
        %v5442 = vpop.f32.mrf.mxu0
        %5443 = vmatprep.mubr.bf16.mxu0 %v5102
        %5444 = vmatmul.mubr.bf16.gmra.mxu0 %v5101
        %v5445 = vpop.f32.mrf.mxu0
        %v5446 = vadd.f32 0.0, %v5445
        %v5447 = vpop.f32.mrf.mxu0
        %v5448 = vpop.f32.mrf.mxu0
        %v5449 = vadd.f32 0.0, %v5448
        %v5450 = vpop.f32.mrf.mxu0
        %5451 = vmatprep.mubr.bf16.mxu0 %v5105
        %5452 = vmatmul.mubr.bf16.gmra.mxu0 %v5104
        %v5453 = vpop.f32.mrf.mxu0
        %v5454 = vadd.f32 0.0, %v5453
        %v5455 = vpop.f32.mrf.mxu0
        %v5456 = vpop.f32.mrf.mxu0
        %v5457 = vadd.f32 0.0, %v5456
        %v5458 = vpop.f32.mrf.mxu0
        %5459 = vdwg.mxu0
        %5460 = vmatprep.subr.bf16.mxu0 0
        %5461 = vmatpush1.bf16.msra.mxu0 %v5274
        %5462 = vmatprep.subr.bf16.mxu0 0
        %5463 = vmatpush1.bf16.msra.mxu0 %v5273
        %5464 = vmatprep.subr.bf16.mxu0 0
        %5465 = vmatpush1.bf16.msra.mxu0 %v5272
        %5466 = vmatprep.subr.bf16.mxu0 0
        %5467 = vmatpush1.bf16.msra.mxu0 %v5271
        %5468 = vmatprep.subr.bf16.mxu0 0
        %5469 = vmatpush1.bf16.msra.mxu0 %v5270
        %5470 = vmatprep.subr.bf16.mxu0 0
        %5471 = vmatpush1.bf16.msra.mxu0 %v5269
        %5472 = vmatprep.subr.bf16.mxu0 0
        %5473 = vmatpush1.bf16.msra.mxu0 %v5268
        %5474 = vmatprep.subr.bf16.mxu0 0
        %5475 = vmatpush1.bf16.msra.mxu0 %v5267
        %5476 = vmatprep.subr.bf16.mxu0 0
        %5477 = vmatpush2.bf16.msra.mxu0 0
        %5478 = vmatprep.subr.bf16.mxu0 0
        %5479 = vmatpush2.bf16.msra.mxu0 0
        %5480 = vmatprep.subr.bf16.mxu0 0
        %5481 = vmatpush2.bf16.msra.mxu0 0
        %5482 = vmatprep.subr.bf16.mxu0 0
        %5483 = vmatpush2.bf16.msra.mxu0 0
        %5484 = vmatprep.subr.bf16.mxu0 0
        %5485 = vmatpush2.bf16.msra.mxu0 0
        %5486 = vmatprep.subr.bf16.mxu0 0
        %5487 = vmatpush2.bf16.msra.mxu0 0
        %5488 = vmatprep.subr.bf16.mxu0 0
        %5489 = vmatpush2.bf16.msra.mxu0 0
        %5490 = vmatprep.subr.bf16.mxu0 0
        %5491 = vmatpush2.bf16.msra.mxu0 0
        %5492 = vmatprep.mubr.bf16.mxu0 0
        %5493 = vmatmul.mubr.bf16.gmra.mxu0 %v5061
        %v5494 = vpop.f32.mrf.mxu0
        %v5495 = vadd.f32 %v5334, %v5494
        %v5496 = vpop.f32.mrf.mxu0
        %v5497 = vpop.f32.mrf.mxu0
        %v5498 = vadd.f32 %v5337, %v5497
        %v5499 = vpop.f32.mrf.mxu0
        %5500 = vmatprep.mubr.bf16.mxu0 0
        %5501 = vmatmul.mubr.bf16.gmra.mxu0 %v5064
        %v5502 = vpop.f32.mrf.mxu0
        %v5503 = vadd.f32 %v5342, %v5502
        %v5504 = vpop.f32.mrf.mxu0
        %v5505 = vpop.f32.mrf.mxu0
        %v5506 = vadd.f32 %v5345, %v5505
        %v5507 = vpop.f32.mrf.mxu0
        %5508 = vmatprep.mubr.bf16.mxu0 0
        %5509 = vmatmul.mubr.bf16.gmra.mxu0 %v5067
        %v5510 = vpop.f32.mrf.mxu0
        %v5511 = vadd.f32 %v5350, %v5510
        %v5512 = vpop.f32.mrf.mxu0
        %v5513 = vpop.f32.mrf.mxu0
        %v5514 = vadd.f32 %v5353, %v5513
        %v5515 = vpop.f32.mrf.mxu0
        %5516 = vmatprep.mubr.bf16.mxu0 0
        %5517 = vmatmul.mubr.bf16.gmra.mxu0 %v5070
        %v5518 = vpop.f32.mrf.mxu0
        %v5519 = vadd.f32 %v5358, %v5518
        %v5520 = vpop.f32.mrf.mxu0
        %v5521 = vpop.f32.mrf.mxu0
        %v5522 = vadd.f32 %v5361, %v5521
        %v5523 = vpop.f32.mrf.mxu0
        %5524 = vmatprep.mubr.bf16.mxu0 0
        %5525 = vmatmul.mubr.bf16.gmra.mxu0 %v5073
        %v5526 = vpop.f32.mrf.mxu0
        %v5527 = vadd.f32 %v5366, %v5526
        %v5528 = vpop.f32.mrf.mxu0
        %v5529 = vpop.f32.mrf.mxu0
        %v5530 = vadd.f32 %v5369, %v5529
        %v5531 = vpop.f32.mrf.mxu0
        %5532 = vmatprep.mubr.bf16.mxu0 0
        %5533 = vmatmul.mubr.bf16.gmra.mxu0 %v5076
        %v5534 = vpop.f32.mrf.mxu0
        %v5535 = vadd.f32 %v5374, %v5534
        %v5536 = vpop.f32.mrf.mxu0
        %v5537 = vpop.f32.mrf.mxu0
        %v5538 = vadd.f32 %v5377, %v5537
        %v5539 = vpop.f32.mrf.mxu0
        %5540 = vmatprep.mubr.bf16.mxu0 0
        %5541 = vmatmul.mubr.bf16.gmra.mxu0 %v5079
        %v5542 = vpop.f32.mrf.mxu0
        %v5543 = vadd.f32 %v5382, %v5542
        %v5544 = vpop.f32.mrf.mxu0
        %v5545 = vpop.f32.mrf.mxu0
        %v5546 = vadd.f32 %v5385, %v5545
        %v5547 = vpop.f32.mrf.mxu0
        %5548 = vmatprep.mubr.bf16.mxu0 0
        %5549 = vmatmul.mubr.bf16.gmra.mxu0 %v5082
        %v5550 = vpop.f32.mrf.mxu0
        %v5551 = vadd.f32 %v5390, %v5550
        %v5552 = vpop.f32.mrf.mxu0
        %v5553 = vpop.f32.mrf.mxu0
        %v5554 = vadd.f32 %v5393, %v5553
        %v5555 = vpop.f32.mrf.mxu0
        %5556 = vmatprep.mubr.bf16.mxu0 0
        %5557 = vmatmul.mubr.bf16.gmra.mxu0 %v5085
        %v5558 = vpop.f32.mrf.mxu0
        %v5559 = vadd.f32 %v5398, %v5558
        %v5560 = vpop.f32.mrf.mxu0
        %v5561 = vpop.f32.mrf.mxu0
        %v5562 = vadd.f32 %v5401, %v5561
        %v5563 = vpop.f32.mrf.mxu0
        %5564 = vmatprep.mubr.bf16.mxu0 0
        %5565 = vmatmul.mubr.bf16.gmra.mxu0 %v5088
        %v5566 = vpop.f32.mrf.mxu0
        %v5567 = vadd.f32 %v5406, %v5566
        %v5568 = vpop.f32.mrf.mxu0
        %v5569 = vpop.f32.mrf.mxu0
        %v5570 = vadd.f32 %v5409, %v5569
        %v5571 = vpop.f32.mrf.mxu0
        %5572 = vmatprep.mubr.bf16.mxu0 0
        %5573 = vmatmul.mubr.bf16.gmra.mxu0 %v5091
        %v5574 = vpop.f32.mrf.mxu0
        %v5575 = vadd.f32 %v5414, %v5574
        %v5576 = vpop.f32.mrf.mxu0
        %v5577 = vpop.f32.mrf.mxu0
        %v5578 = vadd.f32 %v5417, %v5577
        %v5579 = vpop.f32.mrf.mxu0
        %5580 = vmatprep.mubr.bf16.mxu0 0
        %5581 = vmatmul.mubr.bf16.gmra.mxu0 %v5094
        %v5582 = vpop.f32.mrf.mxu0
        %v5583 = vadd.f32 %v5422, %v5582
        %v5584 = vpop.f32.mrf.mxu0
        %v5585 = vpop.f32.mrf.mxu0
        %v5586 = vadd.f32 %v5425, %v5585
        %v5587 = vpop.f32.mrf.mxu0
        %5588 = vmatprep.mubr.bf16.mxu0 0
        %5589 = vmatmul.mubr.bf16.gmra.mxu0 %v5097
        %v5590 = vpop.f32.mrf.mxu0
        %v5591 = vadd.f32 %v5430, %v5590
        %v5592 = vpop.f32.mrf.mxu0
        %v5593 = vpop.f32.mrf.mxu0
        %v5594 = vadd.f32 %v5433, %v5593
        %v5595 = vpop.f32.mrf.mxu0
        %5596 = vmatprep.mubr.bf16.mxu0 0
        %5597 = vmatmul.mubr.bf16.gmra.mxu0 %v5100
        %v5598 = vpop.f32.mrf.mxu0
        %v5599 = vadd.f32 %v5438, %v5598
        %v5600 = vpop.f32.mrf.mxu0
        %v5601 = vpop.f32.mrf.mxu0
        %v5602 = vadd.f32 %v5441, %v5601
        %v5603 = vpop.f32.mrf.mxu0
        %5604 = vmatprep.mubr.bf16.mxu0 0
        %5605 = vmatmul.mubr.bf16.gmra.mxu0 %v5103
        %v5606 = vpop.f32.mrf.mxu0
        %v5607 = vadd.f32 %v5446, %v5606
        %v5608 = vpop.f32.mrf.mxu0
        %v5609 = vpop.f32.mrf.mxu0
        %v5610 = vadd.f32 %v5449, %v5609
        %v5611 = vpop.f32.mrf.mxu0
        %5612 = vmatprep.mubr.bf16.mxu0 0
        %5613 = vmatmul.mubr.bf16.gmra.mxu0 %v5106
        %v5614 = vpop.f32.mrf.mxu0
        %v5615 = vadd.f32 %v5454, %v5614
        %v5616 = vpop.f32.mrf.mxu0
        %v5617 = vpop.f32.mrf.mxu0
        %v5618 = vadd.f32 %v5457, %v5617
        %v5619 = vpop.f32.mrf.mxu0
        %5620 = vdwg.mxu0
        %v5621 = vadd.f32 %v5027, %v5495
        %v5622 = vadd.f32 %v5028, %v5498
        %v5623 = vadd.f32 %v5029, %v5503
        %v5624 = vadd.f32 %v5030, %v5506
        %v5625 = vadd.f32 %v5031, %v5511
        %v5626 = vadd.f32 %v5032, %v5514
        %v5627 = vadd.f32 %v5033, %v5519
        %v5628 = vadd.f32 %v5034, %v5522
        %v5629 = vadd.f32 %v5035, %v5527
        %v5630 = vadd.f32 %v5036, %v5530
        %v5631 = vadd.f32 %v5037, %v5535
        %v5632 = vadd.f32 %v5038, %v5538
        %v5633 = vadd.f32 %v5039, %v5543
        %v5634 = vadd.f32 %v5040, %v5546
        %v5635 = vadd.f32 %v5041, %v5551
        %v5636 = vadd.f32 %v5042, %v5554
        %v5637 = vadd.f32 %v5043, %v5559
        %v5638 = vadd.f32 %v5044, %v5562
        %v5639 = vadd.f32 %v5045, %v5567
        %v5640 = vadd.f32 %v5046, %v5570
        %v5641 = vadd.f32 %v5047, %v5575
        %v5642 = vadd.f32 %v5048, %v5578
        %v5643 = vadd.f32 %v5049, %v5583
        %v5644 = vadd.f32 %v5050, %v5586
        %v5645 = vadd.f32 %v5051, %v5591
        %v5646 = vadd.f32 %v5052, %v5594
        %v5647 = vadd.f32 %v5053, %v5599
        %v5648 = vadd.f32 %v5054, %v5602
        %v5649 = vadd.f32 %v5055, %v5607
        %v5650 = vadd.f32 %v5056, %v5610
        %v5651 = vadd.f32 %v5057, %v5615
        %v5652 = vadd.f32 %v5058, %v5618
        %5653 = vst [vmem:[#allocation3] sm:$0xff] %v5621
        %5654 = vst [vmem:[#allocation3 + $0x8] sm:$0xff] %v5622
        %5655 = vst [vmem:[#allocation3 + $0x10] sm:$0xff] %v5623
        %5656 = vst [vmem:[#allocation3 + $0x18] sm:$0xff] %v5624
        %5657 = vst [vmem:[#allocation3 + $0x20] sm:$0xff] %v5625
        %5658 = vst [vmem:[#allocation3 + $0x28] sm:$0xff] %v5626
        %5659 = vst [vmem:[#allocation3 + $0x30] sm:$0xff] %v5627
        %5660 = vst [vmem:[#allocation3 + $0x38] sm:$0xff] %v5628
        %5661 = vst [vmem:[#allocation3 + $0x40] sm:$0xff] %v5629
        %5662 = vst [vmem:[#allocation3 + $0x48] sm:$0xff] %v5630
        %5663 = vst [vmem:[#allocation3 + $0x50] sm:$0xff] %v5631
        %5664 = vst [vmem:[#allocation3 + $0x58] sm:$0xff] %v5632
        %5665 = vst [vmem:[#allocation3 + $0x60] sm:$0xff] %v5633
        %5666 = vst [vmem:[#allocation3 + $0x68] sm:$0xff] %v5634
        %5667 = vst [vmem:[#allocation3 + $0x70] sm:$0xff] %v5635
        %5668 = vst [vmem:[#allocation3 + $0x78] sm:$0xff] %v5636
        %5669 = vst [vmem:[#allocation3 + $0x80] sm:$0xff] %v5637
        %5670 = vst [vmem:[#allocation3 + $0x88] sm:$0xff] %v5638
        %5671 = vst [vmem:[#allocation3 + $0x90] sm:$0xff] %v5639
        %5672 = vst [vmem:[#allocation3 + $0x98] sm:$0xff] %v5640
        %5673 = vst [vmem:[#allocation3 + $0xa0] sm:$0xff] %v5641
        %5674 = vst [vmem:[#allocation3 + $0xa8] sm:$0xff] %v5642
        %5675 = vst [vmem:[#allocation3 + $0xb0] sm:$0xff] %v5643
        %5676 = vst [vmem:[#allocation3 + $0xb8] sm:$0xff] %v5644
        %5677 = vst [vmem:[#allocation3 + $0xc0] sm:$0xff] %v5645
        %5678 = vst [vmem:[#allocation3 + $0xc8] sm:$0xff] %v5646
        %5679 = vst [vmem:[#allocation3 + $0xd0] sm:$0xff] %v5647
        %5680 = vst [vmem:[#allocation3 + $0xd8] sm:$0xff] %v5648
        %5681 = vst [vmem:[#allocation3 + $0xe0] sm:$0xff] %v5649
        %5682 = vst [vmem:[#allocation3 + $0xe8] sm:$0xff] %v5650
        %5683 = vst [vmem:[#allocation3 + $0xf0] sm:$0xff] %v5651
        %5684 = vst [vmem:[#allocation3 + $0xf8] sm:$0xff] %v5652
        %v5685 = vld [vmem:[%s2435] sm:$0xff]
        %v5686 = vld [vmem:[%s2435 + $0x8] sm:$0xff]
        %v5687 = vld [vmem:[%s2435 + $0x10] sm:$0xff]
        %v5688 = vld [vmem:[%s2435 + $0x18] sm:$0xff]
        %v5689 = vld [vmem:[%s2435 + $0x20] sm:$0xff]
        %v5690 = vld [vmem:[%s2435 + $0x28] sm:$0xff]
        %v5691 = vld [vmem:[%s2435 + $0x30] sm:$0xff]
        %v5692 = vld [vmem:[%s2435 + $0x38] sm:$0xff]
        %v5693 = vld [vmem:[%s2435 + $0x40] sm:$0xff]
        %v5694 = vld [vmem:[%s2435 + $0x48] sm:$0xff]
        %v5695 = vld [vmem:[%s2435 + $0x50] sm:$0xff]
        %v5696 = vld [vmem:[%s2435 + $0x58] sm:$0xff]
        %v5697 = vld [vmem:[%s2435 + $0x60] sm:$0xff]
        %v5698 = vld [vmem:[%s2435 + $0x68] sm:$0xff]
        %v5699 = vld [vmem:[%s2435 + $0x70] sm:$0xff]
        %v5700 = vld [vmem:[%s2435 + $0x78] sm:$0xff]
        %v5701 = vld [vmem:[%s2435 + $0x80] sm:$0xff]
        %v5702 = vld [vmem:[%s2435 + $0x88] sm:$0xff]
        %v5703 = vld [vmem:[%s2435 + $0x90] sm:$0xff]
        %v5704 = vld [vmem:[%s2435 + $0x98] sm:$0xff]
        %v5705 = vld [vmem:[%s2435 + $0xa0] sm:$0xff]
        %v5706 = vld [vmem:[%s2435 + $0xa8] sm:$0xff]
        %v5707 = vld [vmem:[%s2435 + $0xb0] sm:$0xff]
        %v5708 = vld [vmem:[%s2435 + $0xb8] sm:$0xff]
        %v5709 = vld [vmem:[%s2435 + $0xf0] sm:$0xff]
        %v5710 = vld [vmem:[%s2435 + $0xf8] sm:$0xff]
        %v5711 = vld [vmem:[%s2435 + $0x100] sm:$0xff]
        %v5712 = vld [vmem:[%s2435 + $0x108] sm:$0xff]
        %v5713 = vld [vmem:[%s2435 + $0x110] sm:$0xff]
        %v5714 = vld [vmem:[%s2435 + $0x118] sm:$0xff]
        %v5715 = vld [vmem:[%s2435 + $0x120] sm:$0xff]
        %v5716 = vld [vmem:[%s2435 + $0x128] sm:$0xff]
        %v5717 = vld [vmem:[%s2435 + $0x130] sm:$0xff]
        %v5718 = vld [vmem:[%s2435 + $0x138] sm:$0xff]
        %v5719 = vld [vmem:[%s2435 + $0x140] sm:$0xff]
        %v5720 = vld [vmem:[%s2435 + $0x148] sm:$0xff]
        %v5721 = vld [vmem:[%s2435 + $0x150] sm:$0xff]
        %v5722 = vld [vmem:[%s2435 + $0x158] sm:$0xff]
        %v5723 = vld [vmem:[%s2435 + $0x160] sm:$0xff]
        %v5724 = vld [vmem:[%s2435 + $0x168] sm:$0xff]
        %v5725 = vld [vmem:[%s2435 + $0x170] sm:$0xff]
        %v5726 = vld [vmem:[%s2435 + $0x178] sm:$0xff]
        %v5727 = vld [vmem:[%s2435 + $0x180] sm:$0xff]
        %v5728 = vld [vmem:[%s2435 + $0x188] sm:$0xff]
        %v5729 = vld [vmem:[%s2435 + $0x190] sm:$0xff]
        %v5730 = vld [vmem:[%s2435 + $0x198] sm:$0xff]
        %v5731 = vld [vmem:[%s2435 + $0x1a0] sm:$0xff]
        %v5732 = vld [vmem:[%s2435 + $0x1a8] sm:$0xff]
        %v5733 = vld [vmem:[%s2435 + $0x1e0] sm:$0xff]
        %v5734 = vld [vmem:[%s2435 + $0x1e8] sm:$0xff]
        %v5735 = vld [vmem:[%s2435 + $0x1f0] sm:$0xff]
        %v5736 = vld [vmem:[%s2435 + $0x1f8] sm:$0xff]
        %v5737 = vld [vmem:[%s2435 + $0x200] sm:$0xff]
        %v5738 = vld [vmem:[%s2435 + $0x208] sm:$0xff]
        %v5739 = vld [vmem:[%s2435 + $0x210] sm:$0xff]
        %v5740 = vld [vmem:[%s2435 + $0x218] sm:$0xff]
        %v5741 = vld [vmem:[%s2435 + $0x220] sm:$0xff]
        %v5742 = vld [vmem:[%s2435 + $0x228] sm:$0xff]
        %v5743 = vld [vmem:[%s2435 + $0x230] sm:$0xff]
        %v5744 = vld [vmem:[%s2435 + $0x238] sm:$0xff]
        %v5745 = vld [vmem:[%s2435 + $0x240] sm:$0xff]
        %v5746 = vld [vmem:[%s2435 + $0x248] sm:$0xff]
        %v5747 = vld [vmem:[%s2435 + $0x250] sm:$0xff]
        %v5748 = vld [vmem:[%s2435 + $0x258] sm:$0xff]
        %v5749 = vld [vmem:[%s2435 + $0x260] sm:$0xff]
        %v5750 = vld [vmem:[%s2435 + $0x268] sm:$0xff]
        %v5751 = vld [vmem:[%s2435 + $0x270] sm:$0xff]
        %v5752 = vld [vmem:[%s2435 + $0x278] sm:$0xff]
        %v5753 = vld [vmem:[%s2435 + $0x280] sm:$0xff]
        %v5754 = vld [vmem:[%s2435 + $0x288] sm:$0xff]
        %v5755 = vld [vmem:[%s2435 + $0x290] sm:$0xff]
        %v5756 = vld [vmem:[%s2435 + $0x298] sm:$0xff]
        %v5757 = vld [vmem:[%s2435 + $0x2d0] sm:$0xff]
        %v5758 = vld [vmem:[%s2435 + $0x2d8] sm:$0xff]
        %v5759 = vld [vmem:[%s2435 + $0x2e0] sm:$0xff]
        %v5760 = vld [vmem:[%s2435 + $0x2e8] sm:$0xff]
        %v5761 = vld [vmem:[%s2435 + $0x2f0] sm:$0xff]
        %v5762 = vld [vmem:[%s2435 + $0x2f8] sm:$0xff]
        %v5763 = vld [vmem:[%s2435 + $0x300] sm:$0xff]
        %v5764 = vld [vmem:[%s2435 + $0x308] sm:$0xff]
        %v5765 = vld [vmem:[%s2435 + $0x310] sm:$0xff]
        %v5766 = vld [vmem:[%s2435 + $0x318] sm:$0xff]
        %v5767 = vld [vmem:[%s2435 + $0x320] sm:$0xff]
        %v5768 = vld [vmem:[%s2435 + $0x328] sm:$0xff]
        %v5769 = vld [vmem:[%s2435 + $0x330] sm:$0xff]
        %v5770 = vld [vmem:[%s2435 + $0x338] sm:$0xff]
        %v5771 = vld [vmem:[%s2435 + $0x340] sm:$0xff]
        %v5772 = vld [vmem:[%s2435 + $0x348] sm:$0xff]
        %v5773 = vld [vmem:[%s2435 + $0x350] sm:$0xff]
        %v5774 = vld [vmem:[%s2435 + $0x358] sm:$0xff]
        %v5775 = vld [vmem:[%s2435 + $0x360] sm:$0xff]
        %v5776 = vld [vmem:[%s2435 + $0x368] sm:$0xff]
        %v5777 = vld [vmem:[%s2435 + $0x370] sm:$0xff]
        %v5778 = vld [vmem:[%s2435 + $0x378] sm:$0xff]
        %v5779 = vld [vmem:[%s2435 + $0x380] sm:$0xff]
        %v5780 = vld [vmem:[%s2435 + $0x388] sm:$0xff]
        %v5781 = vld [vmem:[#allocation3] sm:$0xff]
        %v5782 = vld [vmem:[#allocation3 + $0x8] sm:$0xff]
        %v5783 = vld [vmem:[#allocation3 + $0x10] sm:$0xff]
        %v5784 = vld [vmem:[#allocation3 + $0x18] sm:$0xff]
        %v5785 = vld [vmem:[#allocation3 + $0x20] sm:$0xff]
        %v5786 = vld [vmem:[#allocation3 + $0x28] sm:$0xff]
        %v5787 = vld [vmem:[#allocation3 + $0x30] sm:$0xff]
        %v5788 = vld [vmem:[#allocation3 + $0x38] sm:$0xff]
        %v5789 = vld [vmem:[#allocation3 + $0x40] sm:$0xff]
        %v5790 = vld [vmem:[#allocation3 + $0x48] sm:$0xff]
        %v5791 = vld [vmem:[#allocation3 + $0x50] sm:$0xff]
        %v5792 = vld [vmem:[#allocation3 + $0x58] sm:$0xff]
        %v5793 = vld [vmem:[#allocation3 + $0x60] sm:$0xff]
        %v5794 = vld [vmem:[#allocation3 + $0x68] sm:$0xff]
        %v5795 = vld [vmem:[#allocation3 + $0x70] sm:$0xff]
        %v5796 = vld [vmem:[#allocation3 + $0x78] sm:$0xff]
        %v5797 = vld [vmem:[#allocation3 + $0x80] sm:$0xff]
        %v5798 = vld [vmem:[#allocation3 + $0x88] sm:$0xff]
        %v5799 = vld [vmem:[#allocation3 + $0x90] sm:$0xff]
        %v5800 = vld [vmem:[#allocation3 + $0x98] sm:$0xff]
        %v5801 = vld [vmem:[#allocation3 + $0xa0] sm:$0xff]
        %v5802 = vld [vmem:[#allocation3 + $0xa8] sm:$0xff]
        %v5803 = vld [vmem:[#allocation3 + $0xb0] sm:$0xff]
        %v5804 = vld [vmem:[#allocation3 + $0xb8] sm:$0xff]
        %v5805 = vld [vmem:[#allocation3 + $0xc0] sm:$0xff]
        %v5806 = vld [vmem:[#allocation3 + $0xc8] sm:$0xff]
        %v5807 = vld [vmem:[#allocation3 + $0xd0] sm:$0xff]
        %v5808 = vld [vmem:[#allocation3 + $0xd8] sm:$0xff]
        %v5809 = vld [vmem:[#allocation3 + $0xe0] sm:$0xff]
        %v5810 = vld [vmem:[#allocation3 + $0xe8] sm:$0xff]
        %v5811 = vld [vmem:[#allocation3 + $0xf0] sm:$0xff]
        %v5812 = vld [vmem:[#allocation3 + $0xf8] sm:$0xff]
        %v5813 = vpack.c.bf16 %v5688, %v5685
        %v5814 = vpack.c.bf16 %v5689, %v5686
        %v5815 = vpack.c.bf16 %v5690, %v5687
        %v5816 = vpack.c.bf16 %v5694, %v5691
        %v5817 = vpack.c.bf16 %v5695, %v5692
        %v5818 = vpack.c.bf16 %v5696, %v5693
        %v5819 = vpack.c.bf16 %v5700, %v5697
        %v5820 = vpack.c.bf16 %v5701, %v5698
        %v5821 = vpack.c.bf16 %v5702, %v5699
        %v5822 = vpack.c.bf16 %v5706, %v5703
        %v5823 = vpack.c.bf16 %v5707, %v5704
        %v5824 = vpack.c.bf16 %v5708, %v5705
        %v5825 = vpack.c.bf16 %v5712, %v5709
        %v5826 = vpack.c.bf16 %v5713, %v5710
        %v5827 = vpack.c.bf16 %v5714, %v5711
        %v5828 = vpack.c.bf16 %v5718, %v5715
        %v5829 = vpack.c.bf16 %v5719, %v5716
        %v5830 = vpack.c.bf16 %v5720, %v5717
        %v5831 = vpack.c.bf16 %v5724, %v5721
        %v5832 = vpack.c.bf16 %v5725, %v5722
        %v5833 = vpack.c.bf16 %v5726, %v5723
        %v5834 = vpack.c.bf16 %v5730, %v5727
        %v5835 = vpack.c.bf16 %v5731, %v5728
        %v5836 = vpack.c.bf16 %v5732, %v5729
        %v5837 = vpack.c.bf16 %v5736, %v5733
        %v5838 = vpack.c.bf16 %v5737, %v5734
        %v5839 = vpack.c.bf16 %v5738, %v5735
        %v5840 = vpack.c.bf16 %v5742, %v5739
        %v5841 = vpack.c.bf16 %v5743, %v5740
        %v5842 = vpack.c.bf16 %v5744, %v5741
        %v5843 = vpack.c.bf16 %v5748, %v5745
        %v5844 = vpack.c.bf16 %v5749, %v5746
        %v5845 = vpack.c.bf16 %v5750, %v5747
        %v5846 = vpack.c.bf16 %v5754, %v5751
        %v5847 = vpack.c.bf16 %v5755, %v5752
        %v5848 = vpack.c.bf16 %v5756, %v5753
        %v5849 = vpack.c.bf16 %v5760, %v5757
        %v5850 = vpack.c.bf16 %v5761, %v5758
        %v5851 = vpack.c.bf16 %v5762, %v5759
        %v5852 = vpack.c.bf16 %v5766, %v5763
        %v5853 = vpack.c.bf16 %v5767, %v5764
        %v5854 = vpack.c.bf16 %v5768, %v5765
        %v5855 = vpack.c.bf16 %v5772, %v5769
        %v5856 = vpack.c.bf16 %v5773, %v5770
        %v5857 = vpack.c.bf16 %v5774, %v5771
        %v5858 = vpack.c.bf16 %v5778, %v5775
        %v5859 = vpack.c.bf16 %v5779, %v5776
        %v5860 = vpack.c.bf16 %v5780, %v5777
        %v5861 = vld [vmem:[%s2612] sm:$0xf]
        %v5862 = vld [vmem:[%s2612 + $0x4] sm:$0xf]
        %v5863 = vld [vmem:[%s2612 + $0x8] sm:$0xf]
        %v5864 = vld [vmem:[%s2612 + $0xc] sm:$0xf]
        %v5865 = vld [vmem:[%s2612 + $0x10] sm:$0xf]
        %v5866 = vld [vmem:[%s2612 + $0x14] sm:$0xf]
        %v5867 = vld [vmem:[%s2612 + $0x18] sm:$0xf]
        %v5868 = vld [vmem:[%s2612 + $0x1c] sm:$0xf]
        %v5869 = vld [vmem:[%s2612 + $0x20] sm:$0xf]
        %v5870 = vld [vmem:[%s2612 + $0x24] sm:$0xf]
        %v5871 = vld [vmem:[%s2612 + $0x28] sm:$0xf]
        %v5872 = vld [vmem:[%s2612 + $0x2c] sm:$0xf]
        %v5873 = vld [vmem:[%s2612 + $0x30] sm:$0xf]
        %v5874 = vld [vmem:[%s2612 + $0x34] sm:$0xf]
        %v5875 = vld [vmem:[%s2612 + $0x38] sm:$0xf]
        %v5876 = vld [vmem:[%s2612 + $0x3c] sm:$0xf]
        %v5877 = vld [vmem:[%s2612 + $0x40] sm:$0xf]
        %v5878 = vld [vmem:[%s2612 + $0x44] sm:$0xf]
        %v5879 = vld [vmem:[%s2612 + $0x48] sm:$0xf]
        %v5880 = vld [vmem:[%s2612 + $0x4c] sm:$0xf]
        %v5881 = vld [vmem:[%s2612 + $0x50] sm:$0xf]
        %v5882 = vld [vmem:[%s2612 + $0x54] sm:$0xf]
        %v5883 = vld [vmem:[%s2612 + $0x58] sm:$0xf]
        %v5884 = vld [vmem:[%s2612 + $0x5c] sm:$0xf]
        %v5885 = vld [vmem:[%s2612 + $0x60] sm:$0xf]
        %v5886 = vld [vmem:[%s2612 + $0x64] sm:$0xf]
        %v5887 = vld [vmem:[%s2612 + $0x68] sm:$0xf]
        %v5888 = vld [vmem:[%s2612 + $0x6c] sm:$0xf]
        %v5889 = vld [vmem:[%s2612 + $0x70] sm:$0xf]
        %v5890 = vld [vmem:[%s2612 + $0x74] sm:$0xf]
        %v5891 = vld [vmem:[%s2612 + $0x78] sm:$0xf]
        %v5892 = vld [vmem:[%s2612 + $0x7c] sm:$0xf]
        %v5893 = vld [vmem:[%s2612 + $0x80] sm:$0xf]
        %v5894 = vld [vmem:[%s2612 + $0x84] sm:$0xf]
        %v5895 = vld [vmem:[%s2612 + $0x88] sm:$0xf]
        %v5896 = vld [vmem:[%s2612 + $0x8c] sm:$0xf]
        %v5897 = vld [vmem:[%s2612 + $0x90] sm:$0xf]
        %v5898 = vld [vmem:[%s2612 + $0x94] sm:$0xf]
        %v5899 = vld [vmem:[%s2612 + $0x98] sm:$0xf]
        %v5900 = vld [vmem:[%s2612 + $0x9c] sm:$0xf]
        %v5901 = vld [vmem:[%s2612 + $0xa0] sm:$0xf]
        %v5902 = vld [vmem:[%s2612 + $0xa4] sm:$0xf]
        %v5903 = vld [vmem:[%s2612 + $0xa8] sm:$0xf]
        %v5904 = vld [vmem:[%s2612 + $0xac] sm:$0xf]
        %v5905 = vld [vmem:[%s2612 + $0xb0] sm:$0xf]
        %v5906 = vld [vmem:[%s2612 + $0xb4] sm:$0xf]
        %v5907 = vld [vmem:[%s2612 + $0xb8] sm:$0xf]
        %v5908 = vld [vmem:[%s2612 + $0xbc] sm:$0xf]
        %v5957 = vunpack.c.l.b16 %v5861
        %v5958 = vunpack.c.l.b16 %v5862
        %v5959 = vunpack.c.l.b16 %v5863
        %v5960 = vunpack.c.l.b16 %v5864
        %v5961 = vunpack.c.l.b16 %v5865
        %v5962 = vunpack.c.l.b16 %v5866
        %v5963 = vunpack.c.l.b16 %v5867
        %v5964 = vunpack.c.l.b16 %v5868
        %v5965 = vunpack.c.l.b16 %v5869
        %v5966 = vunpack.c.l.b16 %v5870
        %v5967 = vunpack.c.l.b16 %v5871
        %v5968 = vunpack.c.l.b16 %v5872
        %v5969 = vunpack.c.l.b16 %v5873
        %v5970 = vunpack.c.l.b16 %v5874
        %v5971 = vunpack.c.l.b16 %v5875
        %v5972 = vunpack.c.l.b16 %v5876
        %v5973 = vunpack.c.l.b16 %v5877
        %v5974 = vunpack.c.l.b16 %v5878
        %v5975 = vunpack.c.l.b16 %v5879
        %v5976 = vunpack.c.l.b16 %v5880
        %v5977 = vunpack.c.l.b16 %v5881
        %v5978 = vunpack.c.l.b16 %v5882
        %v5979 = vunpack.c.l.b16 %v5883
        %v5980 = vunpack.c.l.b16 %v5884
        %v5981 = vunpack.c.l.b16 %v5885
        %v5982 = vunpack.c.l.b16 %v5886
        %v5983 = vunpack.c.l.b16 %v5887
        %v5984 = vunpack.c.l.b16 %v5888
        %v5985 = vunpack.c.l.b16 %v5889
        %v5986 = vunpack.c.l.b16 %v5890
        %v5987 = vunpack.c.l.b16 %v5891
        %v5988 = vunpack.c.l.b16 %v5892
        %v5989 = vunpack.c.l.b16 %v5893
        %v5990 = vunpack.c.l.b16 %v5894
        %v5991 = vunpack.c.l.b16 %v5895
        %v5992 = vunpack.c.l.b16 %v5896
        %v5993 = vunpack.c.l.b16 %v5897
        %v5994 = vunpack.c.l.b16 %v5898
        %v5995 = vunpack.c.l.b16 %v5899
        %v5996 = vunpack.c.l.b16 %v5900
        %v5997 = vunpack.c.l.b16 %v5901
        %v5998 = vunpack.c.l.b16 %v5902
        %v5999 = vunpack.c.l.b16 %v5903
        %v6000 = vunpack.c.l.b16 %v5904
        %v6001 = vunpack.c.l.b16 %v5905
        %v6002 = vunpack.c.l.b16 %v5906
        %v6003 = vunpack.c.l.b16 %v5907
        %v6004 = vunpack.c.l.b16 %v5908
        %v6005 = vpack.c.b16 %v5958, %v5957
        %v6006 = vpack.c.b16 %v5960, %v5959
        %v6007 = vpack.c.b16 %v5962, %v5961
        %v6008 = vpack.c.b16 %v5964, %v5963
        %v6009 = vpack.c.b16 %v5966, %v5965
        %v6010 = vpack.c.b16 %v5968, %v5967
        %v6011 = vpack.c.b16 %v5970, %v5969
        %v6012 = vpack.c.b16 %v5972, %v5971
        %v6013 = vpack.c.b16 %v5974, %v5973
        %v6014 = vpack.c.b16 %v5976, %v5975
        %v6015 = vpack.c.b16 %v5978, %v5977
        %v6016 = vpack.c.b16 %v5980, %v5979
        %v6017 = vpack.c.b16 %v5982, %v5981
        %v6018 = vpack.c.b16 %v5984, %v5983
        %v6019 = vpack.c.b16 %v5986, %v5985
        %v6020 = vpack.c.b16 %v5988, %v5987
        %v6021 = vpack.c.b16 %v5990, %v5989
        %v6022 = vpack.c.b16 %v5992, %v5991
        %v6023 = vpack.c.b16 %v5994, %v5993
        %v6024 = vpack.c.b16 %v5996, %v5995
        %v6025 = vpack.c.b16 %v5998, %v5997
        %v6026 = vpack.c.b16 %v6000, %v5999
        %v6027 = vpack.c.b16 %v6002, %v6001
        %v6028 = vpack.c.b16 %v6004, %v6003
        %6053 = vmatprep.subr.bf16.mxu0 0
        %6054 = vmatpush1.bf16.msra.mxu0 %v6012
        %6055 = vmatprep.subr.bf16.mxu0 0
        %6056 = vmatpush1.bf16.msra.mxu0 %v6011
        %6057 = vmatprep.subr.bf16.mxu0 0
        %6058 = vmatpush1.bf16.msra.mxu0 %v6010
        %6059 = vmatprep.subr.bf16.mxu0 0
        %6060 = vmatpush1.bf16.msra.mxu0 %v6009
        %6061 = vmatprep.subr.bf16.mxu0 0
        %6062 = vmatpush1.bf16.msra.mxu0 %v6008
        %6063 = vmatprep.subr.bf16.mxu0 0
        %6064 = vmatpush1.bf16.msra.mxu0 %v6007
        %6065 = vmatprep.subr.bf16.mxu0 0
        %6066 = vmatpush1.bf16.msra.mxu0 %v6006
        %6067 = vmatprep.subr.bf16.mxu0 0
        %6068 = vmatpush1.bf16.msra.mxu0 %v6005
        %6069 = vmatprep.subr.bf16.mxu0 0
        %6070 = vmatpush2.bf16.msra.mxu0 %v6020
        %6071 = vmatprep.subr.bf16.mxu0 0
        %6072 = vmatpush2.bf16.msra.mxu0 %v6019
        %6073 = vmatprep.subr.bf16.mxu0 0
        %6074 = vmatpush2.bf16.msra.mxu0 %v6018
        %6075 = vmatprep.subr.bf16.mxu0 0
        %6076 = vmatpush2.bf16.msra.mxu0 %v6017
        %6077 = vmatprep.subr.bf16.mxu0 0
        %6078 = vmatpush2.bf16.msra.mxu0 %v6016
        %6079 = vmatprep.subr.bf16.mxu0 0
        %6080 = vmatpush2.bf16.msra.mxu0 %v6015
        %6081 = vmatprep.subr.bf16.mxu0 0
        %6082 = vmatpush2.bf16.msra.mxu0 %v6014
        %6083 = vmatprep.subr.bf16.mxu0 0
        %6084 = vmatpush2.bf16.msra.mxu0 %v6013
        %6085 = vmatprep.mubr.bf16.mxu0 %v5814
        %6086 = vmatmul.mubr.bf16.gmra.mxu0 %v5813
        %v6087 = vpop.f32.mrf.mxu0
        %v6088 = vadd.f32 0.0, %v6087
        %v6089 = vpop.f32.mrf.mxu0
        %v6090 = vpop.f32.mrf.mxu0
        %v6091 = vadd.f32 0.0, %v6090
        %v6092 = vpop.f32.mrf.mxu0
        %6093 = vmatprep.mubr.bf16.mxu0 %v5817
        %6094 = vmatmul.mubr.bf16.gmra.mxu0 %v5816
        %v6095 = vpop.f32.mrf.mxu0
        %v6096 = vadd.f32 0.0, %v6095
        %v6097 = vpop.f32.mrf.mxu0
        %v6098 = vpop.f32.mrf.mxu0
        %v6099 = vadd.f32 0.0, %v6098
        %v6100 = vpop.f32.mrf.mxu0
        %6101 = vmatprep.mubr.bf16.mxu0 %v5820
        %6102 = vmatmul.mubr.bf16.gmra.mxu0 %v5819
        %v6103 = vpop.f32.mrf.mxu0
        %v6104 = vadd.f32 0.0, %v6103
        %v6105 = vpop.f32.mrf.mxu0
        %v6106 = vpop.f32.mrf.mxu0
        %v6107 = vadd.f32 0.0, %v6106
        %v6108 = vpop.f32.mrf.mxu0
        %6109 = vmatprep.mubr.bf16.mxu0 %v5823
        %6110 = vmatmul.mubr.bf16.gmra.mxu0 %v5822
        %v6111 = vpop.f32.mrf.mxu0
        %v6112 = vadd.f32 0.0, %v6111
        %v6113 = vpop.f32.mrf.mxu0
        %v6114 = vpop.f32.mrf.mxu0
        %v6115 = vadd.f32 0.0, %v6114
        %v6116 = vpop.f32.mrf.mxu0
        %6117 = vmatprep.mubr.bf16.mxu0 %v5826
        %6118 = vmatmul.mubr.bf16.gmra.mxu0 %v5825
        %v6119 = vpop.f32.mrf.mxu0
        %v6120 = vadd.f32 0.0, %v6119
        %v6121 = vpop.f32.mrf.mxu0
        %v6122 = vpop.f32.mrf.mxu0
        %v6123 = vadd.f32 0.0, %v6122
        %v6124 = vpop.f32.mrf.mxu0
        %6125 = vmatprep.mubr.bf16.mxu0 %v5829
        %6126 = vmatmul.mubr.bf16.gmra.mxu0 %v5828
        %v6127 = vpop.f32.mrf.mxu0
        %v6128 = vadd.f32 0.0, %v6127
        %v6129 = vpop.f32.mrf.mxu0
        %v6130 = vpop.f32.mrf.mxu0
        %v6131 = vadd.f32 0.0, %v6130
        %v6132 = vpop.f32.mrf.mxu0
        %6133 = vmatprep.mubr.bf16.mxu0 %v5832
        %6134 = vmatmul.mubr.bf16.gmra.mxu0 %v5831
        %v6135 = vpop.f32.mrf.mxu0
        %v6136 = vadd.f32 0.0, %v6135
        %v6137 = vpop.f32.mrf.mxu0
        %v6138 = vpop.f32.mrf.mxu0
        %v6139 = vadd.f32 0.0, %v6138
        %v6140 = vpop.f32.mrf.mxu0
        %6141 = vmatprep.mubr.bf16.mxu0 %v5835
        %6142 = vmatmul.mubr.bf16.gmra.mxu0 %v5834
        %v6143 = vpop.f32.mrf.mxu0
        %v6144 = vadd.f32 0.0, %v6143
        %v6145 = vpop.f32.mrf.mxu0
        %v6146 = vpop.f32.mrf.mxu0
        %v6147 = vadd.f32 0.0, %v6146
        %v6148 = vpop.f32.mrf.mxu0
        %6149 = vmatprep.mubr.bf16.mxu0 %v5838
        %6150 = vmatmul.mubr.bf16.gmra.mxu0 %v5837
        %v6151 = vpop.f32.mrf.mxu0
        %v6152 = vadd.f32 0.0, %v6151
        %v6153 = vpop.f32.mrf.mxu0
        %v6154 = vpop.f32.mrf.mxu0
        %v6155 = vadd.f32 0.0, %v6154
        %v6156 = vpop.f32.mrf.mxu0
        %6157 = vmatprep.mubr.bf16.mxu0 %v5841
        %6158 = vmatmul.mubr.bf16.gmra.mxu0 %v5840
        %v6159 = vpop.f32.mrf.mxu0
        %v6160 = vadd.f32 0.0, %v6159
        %v6161 = vpop.f32.mrf.mxu0
        %v6162 = vpop.f32.mrf.mxu0
        %v6163 = vadd.f32 0.0, %v6162
        %v6164 = vpop.f32.mrf.mxu0
        %6165 = vmatprep.mubr.bf16.mxu0 %v5844
        %6166 = vmatmul.mubr.bf16.gmra.mxu0 %v5843
        %v6167 = vpop.f32.mrf.mxu0
        %v6168 = vadd.f32 0.0, %v6167
        %v6169 = vpop.f32.mrf.mxu0
        %v6170 = vpop.f32.mrf.mxu0
        %v6171 = vadd.f32 0.0, %v6170
        %v6172 = vpop.f32.mrf.mxu0
        %6173 = vmatprep.mubr.bf16.mxu0 %v5847
        %6174 = vmatmul.mubr.bf16.gmra.mxu0 %v5846
        %v6175 = vpop.f32.mrf.mxu0
        %v6176 = vadd.f32 0.0, %v6175
        %v6177 = vpop.f32.mrf.mxu0
        %v6178 = vpop.f32.mrf.mxu0
        %v6179 = vadd.f32 0.0, %v6178
        %v6180 = vpop.f32.mrf.mxu0
        %6181 = vmatprep.mubr.bf16.mxu0 %v5850
        %6182 = vmatmul.mubr.bf16.gmra.mxu0 %v5849
        %v6183 = vpop.f32.mrf.mxu0
        %v6184 = vadd.f32 0.0, %v6183
        %v6185 = vpop.f32.mrf.mxu0
        %v6186 = vpop.f32.mrf.mxu0
        %v6187 = vadd.f32 0.0, %v6186
        %v6188 = vpop.f32.mrf.mxu0
        %6189 = vmatprep.mubr.bf16.mxu0 %v5853
        %6190 = vmatmul.mubr.bf16.gmra.mxu0 %v5852
        %v6191 = vpop.f32.mrf.mxu0
        %v6192 = vadd.f32 0.0, %v6191
        %v6193 = vpop.f32.mrf.mxu0
        %v6194 = vpop.f32.mrf.mxu0
        %v6195 = vadd.f32 0.0, %v6194
        %v6196 = vpop.f32.mrf.mxu0
        %6197 = vmatprep.mubr.bf16.mxu0 %v5856
        %6198 = vmatmul.mubr.bf16.gmra.mxu0 %v5855
        %v6199 = vpop.f32.mrf.mxu0
        %v6200 = vadd.f32 0.0, %v6199
        %v6201 = vpop.f32.mrf.mxu0
        %v6202 = vpop.f32.mrf.mxu0
        %v6203 = vadd.f32 0.0, %v6202
        %v6204 = vpop.f32.mrf.mxu0
        %6205 = vmatprep.mubr.bf16.mxu0 %v5859
        %6206 = vmatmul.mubr.bf16.gmra.mxu0 %v5858
        %v6207 = vpop.f32.mrf.mxu0
        %v6208 = vadd.f32 0.0, %v6207
        %v6209 = vpop.f32.mrf.mxu0
        %v6210 = vpop.f32.mrf.mxu0
        %v6211 = vadd.f32 0.0, %v6210
        %v6212 = vpop.f32.mrf.mxu0
        %6213 = vdwg.mxu0
        %6214 = vmatprep.subr.bf16.mxu0 0
        %6215 = vmatpush1.bf16.msra.mxu0 %v6028
        %6216 = vmatprep.subr.bf16.mxu0 0
        %6217 = vmatpush1.bf16.msra.mxu0 %v6027
        %6218 = vmatprep.subr.bf16.mxu0 0
        %6219 = vmatpush1.bf16.msra.mxu0 %v6026
        %6220 = vmatprep.subr.bf16.mxu0 0
        %6221 = vmatpush1.bf16.msra.mxu0 %v6025
        %6222 = vmatprep.subr.bf16.mxu0 0
        %6223 = vmatpush1.bf16.msra.mxu0 %v6024
        %6224 = vmatprep.subr.bf16.mxu0 0
        %6225 = vmatpush1.bf16.msra.mxu0 %v6023
        %6226 = vmatprep.subr.bf16.mxu0 0
        %6227 = vmatpush1.bf16.msra.mxu0 %v6022
        %6228 = vmatprep.subr.bf16.mxu0 0
        %6229 = vmatpush1.bf16.msra.mxu0 %v6021
        %6230 = vmatprep.subr.bf16.mxu0 0
        %6231 = vmatpush2.bf16.msra.mxu0 0
        %6232 = vmatprep.subr.bf16.mxu0 0
        %6233 = vmatpush2.bf16.msra.mxu0 0
        %6234 = vmatprep.subr.bf16.mxu0 0
        %6235 = vmatpush2.bf16.msra.mxu0 0
        %6236 = vmatprep.subr.bf16.mxu0 0
        %6237 = vmatpush2.bf16.msra.mxu0 0
        %6238 = vmatprep.subr.bf16.mxu0 0
        %6239 = vmatpush2.bf16.msra.mxu0 0
        %6240 = vmatprep.subr.bf16.mxu0 0
        %6241 = vmatpush2.bf16.msra.mxu0 0
        %6242 = vmatprep.subr.bf16.mxu0 0
        %6243 = vmatpush2.bf16.msra.mxu0 0
        %6244 = vmatprep.subr.bf16.mxu0 0
        %6245 = vmatpush2.bf16.msra.mxu0 0
        %6246 = vmatprep.mubr.bf16.mxu0 0
        %6247 = vmatmul.mubr.bf16.gmra.mxu0 %v5815
        %v6248 = vpop.f32.mrf.mxu0
        %v6249 = vadd.f32 %v6088, %v6248
        %v6250 = vpop.f32.mrf.mxu0
        %v6251 = vpop.f32.mrf.mxu0
        %v6252 = vadd.f32 %v6091, %v6251
        %v6253 = vpop.f32.mrf.mxu0
        %6254 = vmatprep.mubr.bf16.mxu0 0
        %6255 = vmatmul.mubr.bf16.gmra.mxu0 %v5818
        %v6256 = vpop.f32.mrf.mxu0
        %v6257 = vadd.f32 %v6096, %v6256
        %v6258 = vpop.f32.mrf.mxu0
        %v6259 = vpop.f32.mrf.mxu0
        %v6260 = vadd.f32 %v6099, %v6259
        %v6261 = vpop.f32.mrf.mxu0
        %6262 = vmatprep.mubr.bf16.mxu0 0
        %6263 = vmatmul.mubr.bf16.gmra.mxu0 %v5821
        %v6264 = vpop.f32.mrf.mxu0
        %v6265 = vadd.f32 %v6104, %v6264
        %v6266 = vpop.f32.mrf.mxu0
        %v6267 = vpop.f32.mrf.mxu0
        %v6268 = vadd.f32 %v6107, %v6267
        %v6269 = vpop.f32.mrf.mxu0
        %6270 = vmatprep.mubr.bf16.mxu0 0
        %6271 = vmatmul.mubr.bf16.gmra.mxu0 %v5824
        %v6272 = vpop.f32.mrf.mxu0
        %v6273 = vadd.f32 %v6112, %v6272
        %v6274 = vpop.f32.mrf.mxu0
        %v6275 = vpop.f32.mrf.mxu0
        %v6276 = vadd.f32 %v6115, %v6275
        %v6277 = vpop.f32.mrf.mxu0
        %6278 = vmatprep.mubr.bf16.mxu0 0
        %6279 = vmatmul.mubr.bf16.gmra.mxu0 %v5827
        %v6280 = vpop.f32.mrf.mxu0
        %v6281 = vadd.f32 %v6120, %v6280
        %v6282 = vpop.f32.mrf.mxu0
        %v6283 = vpop.f32.mrf.mxu0
        %v6284 = vadd.f32 %v6123, %v6283
        %v6285 = vpop.f32.mrf.mxu0
        %6286 = vmatprep.mubr.bf16.mxu0 0
        %6287 = vmatmul.mubr.bf16.gmra.mxu0 %v5830
        %v6288 = vpop.f32.mrf.mxu0
        %v6289 = vadd.f32 %v6128, %v6288
        %v6290 = vpop.f32.mrf.mxu0
        %v6291 = vpop.f32.mrf.mxu0
        %v6292 = vadd.f32 %v6131, %v6291
        %v6293 = vpop.f32.mrf.mxu0
        %6294 = vmatprep.mubr.bf16.mxu0 0
        %6295 = vmatmul.mubr.bf16.gmra.mxu0 %v5833
        %v6296 = vpop.f32.mrf.mxu0
        %v6297 = vadd.f32 %v6136, %v6296
        %v6298 = vpop.f32.mrf.mxu0
        %v6299 = vpop.f32.mrf.mxu0
        %v6300 = vadd.f32 %v6139, %v6299
        %v6301 = vpop.f32.mrf.mxu0
        %6302 = vmatprep.mubr.bf16.mxu0 0
        %6303 = vmatmul.mubr.bf16.gmra.mxu0 %v5836
        %v6304 = vpop.f32.mrf.mxu0
        %v6305 = vadd.f32 %v6144, %v6304
        %v6306 = vpop.f32.mrf.mxu0
        %v6307 = vpop.f32.mrf.mxu0
        %v6308 = vadd.f32 %v6147, %v6307
        %v6309 = vpop.f32.mrf.mxu0
        %6310 = vmatprep.mubr.bf16.mxu0 0
        %6311 = vmatmul.mubr.bf16.gmra.mxu0 %v5839
        %v6312 = vpop.f32.mrf.mxu0
        %v6313 = vadd.f32 %v6152, %v6312
        %v6314 = vpop.f32.mrf.mxu0
        %v6315 = vpop.f32.mrf.mxu0
        %v6316 = vadd.f32 %v6155, %v6315
        %v6317 = vpop.f32.mrf.mxu0
        %6318 = vmatprep.mubr.bf16.mxu0 0
        %6319 = vmatmul.mubr.bf16.gmra.mxu0 %v5842
        %v6320 = vpop.f32.mrf.mxu0
        %v6321 = vadd.f32 %v6160, %v6320
        %v6322 = vpop.f32.mrf.mxu0
        %v6323 = vpop.f32.mrf.mxu0
        %v6324 = vadd.f32 %v6163, %v6323
        %v6325 = vpop.f32.mrf.mxu0
        %6326 = vmatprep.mubr.bf16.mxu0 0
        %6327 = vmatmul.mubr.bf16.gmra.mxu0 %v5845
        %v6328 = vpop.f32.mrf.mxu0
        %v6329 = vadd.f32 %v6168, %v6328
        %v6330 = vpop.f32.mrf.mxu0
        %v6331 = vpop.f32.mrf.mxu0
        %v6332 = vadd.f32 %v6171, %v6331
        %v6333 = vpop.f32.mrf.mxu0
        %6334 = vmatprep.mubr.bf16.mxu0 0
        %6335 = vmatmul.mubr.bf16.gmra.mxu0 %v5848
        %v6336 = vpop.f32.mrf.mxu0
        %v6337 = vadd.f32 %v6176, %v6336
        %v6338 = vpop.f32.mrf.mxu0
        %v6339 = vpop.f32.mrf.mxu0
        %v6340 = vadd.f32 %v6179, %v6339
        %v6341 = vpop.f32.mrf.mxu0
        %6342 = vmatprep.mubr.bf16.mxu0 0
        %6343 = vmatmul.mubr.bf16.gmra.mxu0 %v5851
        %v6344 = vpop.f32.mrf.mxu0
        %v6345 = vadd.f32 %v6184, %v6344
        %v6346 = vpop.f32.mrf.mxu0
        %v6347 = vpop.f32.mrf.mxu0
        %v6348 = vadd.f32 %v6187, %v6347
        %v6349 = vpop.f32.mrf.mxu0
        %6350 = vmatprep.mubr.bf16.mxu0 0
        %6351 = vmatmul.mubr.bf16.gmra.mxu0 %v5854
        %v6352 = vpop.f32.mrf.mxu0
        %v6353 = vadd.f32 %v6192, %v6352
        %v6354 = vpop.f32.mrf.mxu0
        %v6355 = vpop.f32.mrf.mxu0
        %v6356 = vadd.f32 %v6195, %v6355
        %v6357 = vpop.f32.mrf.mxu0
        %6358 = vmatprep.mubr.bf16.mxu0 0
        %6359 = vmatmul.mubr.bf16.gmra.mxu0 %v5857
        %v6360 = vpop.f32.mrf.mxu0
        %v6361 = vadd.f32 %v6200, %v6360
        %v6362 = vpop.f32.mrf.mxu0
        %v6363 = vpop.f32.mrf.mxu0
        %v6364 = vadd.f32 %v6203, %v6363
        %v6365 = vpop.f32.mrf.mxu0
        %6366 = vmatprep.mubr.bf16.mxu0 0
        %6367 = vmatmul.mubr.bf16.gmra.mxu0 %v5860
        %v6368 = vpop.f32.mrf.mxu0
        %v6369 = vadd.f32 %v6208, %v6368
        %v6370 = vpop.f32.mrf.mxu0
        %v6371 = vpop.f32.mrf.mxu0
        %v6372 = vadd.f32 %v6211, %v6371
        %v6373 = vpop.f32.mrf.mxu0
        %6374 = vdwg.mxu0
        %v6375 = vadd.f32 %v5781, %v6249
        %v6376 = vadd.f32 %v5782, %v6252
        %v6377 = vadd.f32 %v5783, %v6257
        %v6378 = vadd.f32 %v5784, %v6260
        %v6379 = vadd.f32 %v5785, %v6265
        %v6380 = vadd.f32 %v5786, %v6268
        %v6381 = vadd.f32 %v5787, %v6273
        %v6382 = vadd.f32 %v5788, %v6276
        %v6383 = vadd.f32 %v5789, %v6281
        %v6384 = vadd.f32 %v5790, %v6284
        %v6385 = vadd.f32 %v5791, %v6289
        %v6386 = vadd.f32 %v5792, %v6292
        %v6387 = vadd.f32 %v5793, %v6297
        %v6388 = vadd.f32 %v5794, %v6300
        %v6389 = vadd.f32 %v5795, %v6305
        %v6390 = vadd.f32 %v5796, %v6308
        %v6391 = vadd.f32 %v5797, %v6313
        %v6392 = vadd.f32 %v5798, %v6316
        %v6393 = vadd.f32 %v5799, %v6321
        %v6394 = vadd.f32 %v5800, %v6324
        %v6395 = vadd.f32 %v5801, %v6329
        %v6396 = vadd.f32 %v5802, %v6332
        %v6397 = vadd.f32 %v5803, %v6337
        %v6398 = vadd.f32 %v5804, %v6340
        %v6399 = vadd.f32 %v5805, %v6345
        %v6400 = vadd.f32 %v5806, %v6348
        %v6401 = vadd.f32 %v5807, %v6353
        %v6402 = vadd.f32 %v5808, %v6356
        %v6403 = vadd.f32 %v5809, %v6361
        %v6404 = vadd.f32 %v5810, %v6364
        %v6405 = vadd.f32 %v5811, %v6369
        %v6406 = vadd.f32 %v5812, %v6372
        %6407 = vst [vmem:[#allocation3] sm:$0xff] %v6375
        %6408 = vst [vmem:[#allocation3 + $0x8] sm:$0xff] %v6376
        %6409 = vst [vmem:[#allocation3 + $0x10] sm:$0xff] %v6377
        %6410 = vst [vmem:[#allocation3 + $0x18] sm:$0xff] %v6378
        %6411 = vst [vmem:[#allocation3 + $0x20] sm:$0xff] %v6379
        %6412 = vst [vmem:[#allocation3 + $0x28] sm:$0xff] %v6380
        %6413 = vst [vmem:[#allocation3 + $0x30] sm:$0xff] %v6381
        %6414 = vst [vmem:[#allocation3 + $0x38] sm:$0xff] %v6382
        %6415 = vst [vmem:[#allocation3 + $0x40] sm:$0xff] %v6383
        %6416 = vst [vmem:[#allocation3 + $0x48] sm:$0xff] %v6384
        %6417 = vst [vmem:[#allocation3 + $0x50] sm:$0xff] %v6385
        %6418 = vst [vmem:[#allocation3 + $0x58] sm:$0xff] %v6386
        %6419 = vst [vmem:[#allocation3 + $0x60] sm:$0xff] %v6387
        %6420 = vst [vmem:[#allocation3 + $0x68] sm:$0xff] %v6388
        %6421 = vst [vmem:[#allocation3 + $0x70] sm:$0xff] %v6389
        %6422 = vst [vmem:[#allocation3 + $0x78] sm:$0xff] %v6390
        %6423 = vst [vmem:[#allocation3 + $0x80] sm:$0xff] %v6391
        %6424 = vst [vmem:[#allocation3 + $0x88] sm:$0xff] %v6392
        %6425 = vst [vmem:[#allocation3 + $0x90] sm:$0xff] %v6393
        %6426 = vst [vmem:[#allocation3 + $0x98] sm:$0xff] %v6394
        %6427 = vst [vmem:[#allocation3 + $0xa0] sm:$0xff] %v6395
        %6428 = vst [vmem:[#allocation3 + $0xa8] sm:$0xff] %v6396
        %6429 = vst [vmem:[#allocation3 + $0xb0] sm:$0xff] %v6397
        %6430 = vst [vmem:[#allocation3 + $0xb8] sm:$0xff] %v6398
        %6431 = vst [vmem:[#allocation3 + $0xc0] sm:$0xff] %v6399
        %6432 = vst [vmem:[#allocation3 + $0xc8] sm:$0xff] %v6400
        %6433 = vst [vmem:[#allocation3 + $0xd0] sm:$0xff] %v6401
        %6434 = vst [vmem:[#allocation3 + $0xd8] sm:$0xff] %v6402
        %6435 = vst [vmem:[#allocation3 + $0xe0] sm:$0xff] %v6403
        %6436 = vst [vmem:[#allocation3 + $0xe8] sm:$0xff] %v6404
        %6437 = vst [vmem:[#allocation3 + $0xf0] sm:$0xff] %v6405
        %6438 = vst [vmem:[#allocation3 + $0xf8] sm:$0xff] %v6406
        %v6439 = vld [vmem:[#allocation3] sm:$0xff]
        %v6440 = vld [vmem:[#allocation3 + $0x8] sm:$0xff]
        %v6441 = vld [vmem:[#allocation3 + $0x10] sm:$0xff]
        %v6442 = vld [vmem:[#allocation3 + $0x18] sm:$0xff]
        %v6443 = vld [vmem:[#allocation3 + $0x20] sm:$0xff]
        %v6444 = vld [vmem:[#allocation3 + $0x28] sm:$0xff]
        %v6445 = vld [vmem:[#allocation3 + $0x30] sm:$0xff]
        %v6446 = vld [vmem:[#allocation3 + $0x38] sm:$0xff]
        %v6447 = vld [vmem:[#allocation3 + $0x40] sm:$0xff]
        %v6448 = vld [vmem:[#allocation3 + $0x48] sm:$0xff]
        %v6449 = vld [vmem:[#allocation3 + $0x50] sm:$0xff]
        %v6450 = vld [vmem:[#allocation3 + $0x58] sm:$0xff]
        %v6451 = vld [vmem:[#allocation3 + $0x60] sm:$0xff]
        %v6452 = vld [vmem:[#allocation3 + $0x68] sm:$0xff]
        %v6453 = vld [vmem:[#allocation3 + $0x70] sm:$0xff]
        %v6454 = vld [vmem:[#allocation3 + $0x78] sm:$0xff]
        %v6455 = vld [vmem:[#allocation3 + $0x80] sm:$0xff]
        %v6456 = vld [vmem:[#allocation3 + $0x88] sm:$0xff]
        %v6457 = vld [vmem:[#allocation3 + $0x90] sm:$0xff]
        %v6458 = vld [vmem:[#allocation3 + $0x98] sm:$0xff]
        %v6459 = vld [vmem:[#allocation3 + $0xa0] sm:$0xff]
        %v6460 = vld [vmem:[#allocation3 + $0xa8] sm:$0xff]
        %v6461 = vld [vmem:[#allocation3 + $0xb0] sm:$0xff]
        %v6462 = vld [vmem:[#allocation3 + $0xb8] sm:$0xff]
        %v6463 = vld [vmem:[#allocation3 + $0xc0] sm:$0xff]
        %v6464 = vld [vmem:[#allocation3 + $0xc8] sm:$0xff]
        %v6465 = vld [vmem:[#allocation3 + $0xd0] sm:$0xff]
        %v6466 = vld [vmem:[#allocation3 + $0xd8] sm:$0xff]
        %v6467 = vld [vmem:[#allocation3 + $0xe0] sm:$0xff]
        %v6468 = vld [vmem:[#allocation3 + $0xe8] sm:$0xff]
        %v6469 = vld [vmem:[#allocation3 + $0xf0] sm:$0xff]
        %v6470 = vld [vmem:[#allocation3 + $0xf8] sm:$0xff]
        %v6471 = vmax.f32 %v6439, 0.0
        %v6472 = vmax.f32 %v6440, 0.0
        %v6473 = vmax.f32 %v6441, 0.0
        %v6474 = vmax.f32 %v6442, 0.0
        %v6475 = vmax.f32 %v6443, 0.0
        %v6476 = vmax.f32 %v6444, 0.0
        %v6477 = vmax.f32 %v6445, 0.0
        %v6478 = vmax.f32 %v6446, 0.0
        %v6479 = vmax.f32 %v6447, 0.0
        %v6480 = vmax.f32 %v6448, 0.0
        %v6481 = vmax.f32 %v6449, 0.0
        %v6482 = vmax.f32 %v6450, 0.0
        %v6483 = vmax.f32 %v6451, 0.0
        %v6484 = vmax.f32 %v6452, 0.0
        %v6485 = vmax.f32 %v6453, 0.0
        %v6486 = vmax.f32 %v6454, 0.0
        %v6487 = vmax.f32 %v6455, 0.0
        %v6488 = vmax.f32 %v6456, 0.0
        %v6489 = vmax.f32 %v6457, 0.0
        %v6490 = vmax.f32 %v6458, 0.0
        %v6491 = vmax.f32 %v6459, 0.0
        %v6492 = vmax.f32 %v6460, 0.0
        %v6493 = vmax.f32 %v6461, 0.0
        %v6494 = vmax.f32 %v6462, 0.0
        %v6495 = vmax.f32 %v6463, 0.0
        %v6496 = vmax.f32 %v6464, 0.0
        %v6497 = vmax.f32 %v6465, 0.0
        %v6498 = vmax.f32 %v6466, 0.0
        %v6499 = vmax.f32 %v6467, 0.0
        %v6500 = vmax.f32 %v6468, 0.0
        %v6501 = vmax.f32 %v6469, 0.0
        %v6502 = vmax.f32 %v6470, 0.0
        %v6503 = vpack.c.bf16 %v6472, %v6471
        %v6504 = vpack.c.bf16 %v6474, %v6473
        %v6505 = vpack.c.bf16 %v6476, %v6475
        %v6506 = vpack.c.bf16 %v6478, %v6477
        %v6507 = vpack.c.bf16 %v6480, %v6479
        %v6508 = vpack.c.bf16 %v6482, %v6481
        %v6509 = vpack.c.bf16 %v6484, %v6483
        %v6510 = vpack.c.bf16 %v6486, %v6485
        %v6511 = vpack.c.bf16 %v6488, %v6487
        %v6512 = vpack.c.bf16 %v6490, %v6489
        %v6513 = vpack.c.bf16 %v6492, %v6491
        %v6514 = vpack.c.bf16 %v6494, %v6493
        %v6515 = vpack.c.bf16 %v6496, %v6495
        %v6516 = vpack.c.bf16 %v6498, %v6497
        %v6517 = vpack.c.bf16 %v6500, %v6499
        %v6518 = vpack.c.bf16 %v6502, %v6501
        %v6519 = vld [vmem:[#allocation10] sm:$0xf]
        %v6520 = vld [vmem:[#allocation10 + $0x4] sm:$0xf]
        %v6521 = vld [vmem:[#allocation10 + $0x8] sm:$0xf]
        %v6522 = vld [vmem:[#allocation10 + $0xc] sm:$0xf]
        %v6523 = vld [vmem:[#allocation10 + $0x10] sm:$0xf]
        %v6524 = vld [vmem:[#allocation10 + $0x14] sm:$0xf]
        %v6525 = vld [vmem:[#allocation10 + $0x18] sm:$0xf]
        %v6526 = vld [vmem:[#allocation10 + $0x1c] sm:$0xf]
        %v6527 = vld [vmem:[#allocation10 + $0x20] sm:$0xf]
        %v6528 = vld [vmem:[#allocation10 + $0x24] sm:$0xf]
        %v6529 = vld [vmem:[#allocation10 + $0x28] sm:$0xf]
        %v6530 = vld [vmem:[#allocation10 + $0x2c] sm:$0xf]
        %v6531 = vld [vmem:[#allocation10 + $0x30] sm:$0xf]
        %v6532 = vld [vmem:[#allocation10 + $0x34] sm:$0xf]
        %v6533 = vld [vmem:[#allocation10 + $0x38] sm:$0xf]
        %v6534 = vld [vmem:[#allocation10 + $0x3c] sm:$0xf]
        %v6535 = vld [vmem:[%s6] sm:$0x1]
        %v6537 = vlaneseq
        %v6538 = vshrl.u32 %v6537, 7
        %v6539 = vsub.s32 0, %v6538
        %v6540 = vrot.slane %v6535, %v6539
        %v6558 = vunpack.c.l.b16 %v6519
        %v6559 = vunpack.c.l.b16 %v6520
        %v6560 = vunpack.c.l.b16 %v6521
        %v6561 = vunpack.c.l.b16 %v6522
        %v6562 = vunpack.c.l.b16 %v6523
        %v6563 = vunpack.c.l.b16 %v6524
        %v6564 = vunpack.c.l.b16 %v6525
        %v6565 = vunpack.c.l.b16 %v6526
        %v6566 = vunpack.c.l.b16 %v6527
        %v6567 = vunpack.c.l.b16 %v6528
        %v6568 = vunpack.c.l.b16 %v6529
        %v6569 = vunpack.c.l.b16 %v6530
        %v6570 = vunpack.c.l.b16 %v6531
        %v6571 = vunpack.c.l.b16 %v6532
        %v6572 = vunpack.c.l.b16 %v6533
        %v6573 = vunpack.c.l.b16 %v6534
        %v6574 = vpack.c.b16 %v6559, %v6558
        %v6575 = vpack.c.b16 %v6561, %v6560
        %v6576 = vpack.c.b16 %v6563, %v6562
        %v6577 = vpack.c.b16 %v6565, %v6564
        %v6578 = vpack.c.b16 %v6567, %v6566
        %v6579 = vpack.c.b16 %v6569, %v6568
        %v6580 = vpack.c.b16 %v6571, %v6570
        %v6581 = vpack.c.b16 %v6573, %v6572
        %6590 = vmatprep.subr.bf16.mxu0 0
        %6591 = vmatpush1.bf16.msra.mxu0 %v6581
        %6592 = vmatprep.subr.bf16.mxu0 0
        %6593 = vmatpush1.bf16.msra.mxu0 %v6580
        %6594 = vmatprep.subr.bf16.mxu0 0
        %6595 = vmatpush1.bf16.msra.mxu0 %v6579
        %6596 = vmatprep.subr.bf16.mxu0 0
        %6597 = vmatpush1.bf16.msra.mxu0 %v6578
        %6598 = vmatprep.subr.bf16.mxu0 0
        %6599 = vmatpush1.bf16.msra.mxu0 %v6577
        %6600 = vmatprep.subr.bf16.mxu0 0
        %6601 = vmatpush1.bf16.msra.mxu0 %v6576
        %6602 = vmatprep.subr.bf16.mxu0 0
        %6603 = vmatpush1.bf16.msra.mxu0 %v6575
        %6604 = vmatprep.subr.bf16.mxu0 0
        %6605 = vmatpush1.bf16.msra.mxu0 %v6574
        %6606 = vmatprep.subr.bf16.mxu0 0
        %6607 = vmatpush2.bf16.msra.mxu0 0
        %6608 = vmatprep.subr.bf16.mxu0 0
        %6609 = vmatpush2.bf16.msra.mxu0 0
        %6610 = vmatprep.subr.bf16.mxu0 0
        %6611 = vmatpush2.bf16.msra.mxu0 0
        %6612 = vmatprep.subr.bf16.mxu0 0
        %6613 = vmatpush2.bf16.msra.mxu0 0
        %6614 = vmatprep.subr.bf16.mxu0 0
        %6615 = vmatpush2.bf16.msra.mxu0 0
        %6616 = vmatprep.subr.bf16.mxu0 0
        %6617 = vmatpush2.bf16.msra.mxu0 0
        %6618 = vmatprep.subr.bf16.mxu0 0
        %6619 = vmatpush2.bf16.msra.mxu0 0
        %6620 = vmatprep.subr.bf16.mxu0 0
        %6621 = vmatpush2.bf16.msra.mxu0 0
        %6622 = vmatprep.mubr.bf16.mxu0 0
        %6623 = vmatmul.mubr.bf16.gmra.mxu0 %v6503
        %v6624 = vpop.f32.mrf.mxu0
        %v6625 = vadd.f32 %v6540, %v6624
        %v6626 = vpop.f32.mrf.mxu0
        %v6627 = vpop.f32.mrf.mxu0
        %v6628 = vadd.f32 %v6540, %v6627
        %v6629 = vpop.f32.mrf.mxu0
        %6630 = vmatprep.mubr.bf16.mxu0 0
        %6631 = vmatmul.mubr.bf16.gmra.mxu0 %v6504
        %v6632 = vpop.f32.mrf.mxu0
        %v6633 = vadd.f32 %v6540, %v6632
        %v6634 = vpop.f32.mrf.mxu0
        %v6635 = vpop.f32.mrf.mxu0
        %v6636 = vadd.f32 %v6540, %v6635
        %v6637 = vpop.f32.mrf.mxu0
        %6638 = vmatprep.mubr.bf16.mxu0 0
        %6639 = vmatmul.mubr.bf16.gmra.mxu0 %v6505
        %v6640 = vpop.f32.mrf.mxu0
        %v6641 = vadd.f32 %v6540, %v6640
        %v6642 = vpop.f32.mrf.mxu0
        %v6643 = vpop.f32.mrf.mxu0
        %v6644 = vadd.f32 %v6540, %v6643
        %v6645 = vpop.f32.mrf.mxu0
        %6646 = vmatprep.mubr.bf16.mxu0 0
        %6647 = vmatmul.mubr.bf16.gmra.mxu0 %v6506
        %v6648 = vpop.f32.mrf.mxu0
        %v6649 = vadd.f32 %v6540, %v6648
        %v6650 = vpop.f32.mrf.mxu0
        %v6651 = vpop.f32.mrf.mxu0
        %v6652 = vadd.f32 %v6540, %v6651
        %v6653 = vpop.f32.mrf.mxu0
        %6654 = vmatprep.mubr.bf16.mxu0 0
        %6655 = vmatmul.mubr.bf16.gmra.mxu0 %v6507
        %v6656 = vpop.f32.mrf.mxu0
        %v6657 = vadd.f32 %v6540, %v6656
        %v6658 = vpop.f32.mrf.mxu0
        %v6659 = vpop.f32.mrf.mxu0
        %v6660 = vadd.f32 %v6540, %v6659
        %v6661 = vpop.f32.mrf.mxu0
        %6662 = vmatprep.mubr.bf16.mxu0 0
        %6663 = vmatmul.mubr.bf16.gmra.mxu0 %v6508
        %v6664 = vpop.f32.mrf.mxu0
        %v6665 = vadd.f32 %v6540, %v6664
        %v6666 = vpop.f32.mrf.mxu0
        %v6667 = vpop.f32.mrf.mxu0
        %v6668 = vadd.f32 %v6540, %v6667
        %v6669 = vpop.f32.mrf.mxu0
        %6670 = vmatprep.mubr.bf16.mxu0 0
        %6671 = vmatmul.mubr.bf16.gmra.mxu0 %v6509
        %v6672 = vpop.f32.mrf.mxu0
        %v6673 = vadd.f32 %v6540, %v6672
        %v6674 = vpop.f32.mrf.mxu0
        %v6675 = vpop.f32.mrf.mxu0
        %v6676 = vadd.f32 %v6540, %v6675
        %v6677 = vpop.f32.mrf.mxu0
        %6678 = vmatprep.mubr.bf16.mxu0 0
        %6679 = vmatmul.mubr.bf16.gmra.mxu0 %v6510
        %v6680 = vpop.f32.mrf.mxu0
        %v6681 = vadd.f32 %v6540, %v6680
        %v6682 = vpop.f32.mrf.mxu0
        %v6683 = vpop.f32.mrf.mxu0
        %v6684 = vadd.f32 %v6540, %v6683
        %v6685 = vpop.f32.mrf.mxu0
        %6686 = vmatprep.mubr.bf16.mxu0 0
        %6687 = vmatmul.mubr.bf16.gmra.mxu0 %v6511
        %v6688 = vpop.f32.mrf.mxu0
        %v6689 = vadd.f32 %v6540, %v6688
        %v6690 = vpop.f32.mrf.mxu0
        %v6691 = vpop.f32.mrf.mxu0
        %v6692 = vadd.f32 %v6540, %v6691
        %v6693 = vpop.f32.mrf.mxu0
        %6694 = vmatprep.mubr.bf16.mxu0 0
        %6695 = vmatmul.mubr.bf16.gmra.mxu0 %v6512
        %v6696 = vpop.f32.mrf.mxu0
        %v6697 = vadd.f32 %v6540, %v6696
        %v6698 = vpop.f32.mrf.mxu0
        %v6699 = vpop.f32.mrf.mxu0
        %v6700 = vadd.f32 %v6540, %v6699
        %v6701 = vpop.f32.mrf.mxu0
        %6702 = vmatprep.mubr.bf16.mxu0 0
        %6703 = vmatmul.mubr.bf16.gmra.mxu0 %v6513
        %v6704 = vpop.f32.mrf.mxu0
        %v6705 = vadd.f32 %v6540, %v6704
        %v6706 = vpop.f32.mrf.mxu0
        %v6707 = vpop.f32.mrf.mxu0
        %v6708 = vadd.f32 %v6540, %v6707
        %v6709 = vpop.f32.mrf.mxu0
        %6710 = vmatprep.mubr.bf16.mxu0 0
        %6711 = vmatmul.mubr.bf16.gmra.mxu0 %v6514
        %v6712 = vpop.f32.mrf.mxu0
        %v6713 = vadd.f32 %v6540, %v6712
        %v6714 = vpop.f32.mrf.mxu0
        %v6715 = vpop.f32.mrf.mxu0
        %v6716 = vadd.f32 %v6540, %v6715
        %v6717 = vpop.f32.mrf.mxu0
        %6718 = vmatprep.mubr.bf16.mxu0 0
        %6719 = vmatmul.mubr.bf16.gmra.mxu0 %v6515
        %v6720 = vpop.f32.mrf.mxu0
        %v6721 = vadd.f32 %v6540, %v6720
        %v6722 = vpop.f32.mrf.mxu0
        %v6723 = vpop.f32.mrf.mxu0
        %v6724 = vadd.f32 %v6540, %v6723
        %v6725 = vpop.f32.mrf.mxu0
        %6726 = vmatprep.mubr.bf16.mxu0 0
        %6727 = vmatmul.mubr.bf16.gmra.mxu0 %v6516
        %v6728 = vpop.f32.mrf.mxu0
        %v6729 = vadd.f32 %v6540, %v6728
        %v6730 = vpop.f32.mrf.mxu0
        %v6731 = vpop.f32.mrf.mxu0
        %v6732 = vadd.f32 %v6540, %v6731
        %v6733 = vpop.f32.mrf.mxu0
        %6734 = vmatprep.mubr.bf16.mxu0 0
        %6735 = vmatmul.mubr.bf16.gmra.mxu0 %v6517
        %v6736 = vpop.f32.mrf.mxu0
        %v6737 = vadd.f32 %v6540, %v6736
        %v6738 = vpop.f32.mrf.mxu0
        %v6739 = vpop.f32.mrf.mxu0
        %v6740 = vadd.f32 %v6540, %v6739
        %v6741 = vpop.f32.mrf.mxu0
        %6742 = vmatprep.mubr.bf16.mxu0 0
        %6743 = vmatmul.mubr.bf16.gmra.mxu0 %v6518
        %v6744 = vpop.f32.mrf.mxu0
        %v6745 = vadd.f32 %v6540, %v6744
        %v6746 = vpop.f32.mrf.mxu0
        %v6747 = vpop.f32.mrf.mxu0
        %v6748 = vadd.f32 %v6540, %v6747
        %v6749 = vpop.f32.mrf.mxu0
        %6750 = vdwg.mxu0
        %v6751 = vmax.f32 %v6625, 0.0
        %v6752 = vmax.f32 %v6628, 0.0
        %v6753 = vmax.f32 %v6633, 0.0
        %v6754 = vmax.f32 %v6636, 0.0
        %v6755 = vmax.f32 %v6641, 0.0
        %v6756 = vmax.f32 %v6644, 0.0
        %v6757 = vmax.f32 %v6649, 0.0
        %v6758 = vmax.f32 %v6652, 0.0
        %v6759 = vmax.f32 %v6657, 0.0
        %v6760 = vmax.f32 %v6660, 0.0
        %v6761 = vmax.f32 %v6665, 0.0
        %v6762 = vmax.f32 %v6668, 0.0
        %v6763 = vmax.f32 %v6673, 0.0
        %v6764 = vmax.f32 %v6676, 0.0
        %v6765 = vmax.f32 %v6681, 0.0
        %v6766 = vmax.f32 %v6684, 0.0
        %v6767 = vmax.f32 %v6689, 0.0
        %v6768 = vmax.f32 %v6692, 0.0
        %v6769 = vmax.f32 %v6697, 0.0
        %v6770 = vmax.f32 %v6700, 0.0
        %v6771 = vmax.f32 %v6705, 0.0
        %v6772 = vmax.f32 %v6708, 0.0
        %v6773 = vmax.f32 %v6713, 0.0
        %v6774 = vmax.f32 %v6716, 0.0
        %v6775 = vmax.f32 %v6721, 0.0
        %v6776 = vmax.f32 %v6724, 0.0
        %v6777 = vmax.f32 %v6729, 0.0
        %v6778 = vmax.f32 %v6732, 0.0
        %v6779 = vmax.f32 %v6737, 0.0
        %v6780 = vmax.f32 %v6740, 0.0
        %v6781 = vmax.f32 %v6745, 0.0
        %v6782 = vmax.f32 %v6748, 0.0
        %v6783 = vld [vmem:[%s3633] sm:$0xff]
        %v6784 = vld [vmem:[%s3633 + $0x8] sm:$0xff]
        %v6785 = vld [vmem:[%s3633 + $0x10] sm:$0xff]
        %v6786 = vld [vmem:[%s3633 + $0x18] sm:$0xff]
        %v6787 = vld [vmem:[%s3633 + $0x20] sm:$0xff]
        %v6788 = vld [vmem:[%s3633 + $0x28] sm:$0xff]
        %v6789 = vld [vmem:[%s3633 + $0x30] sm:$0xff]
        %v6790 = vld [vmem:[%s3633 + $0x38] sm:$0xff]
        %v6791 = vld [vmem:[%s3633 + $0x40] sm:$0xff]
        %v6792 = vld [vmem:[%s3633 + $0x48] sm:$0xff]
        %v6793 = vld [vmem:[%s3633 + $0x50] sm:$0xff]
        %v6794 = vld [vmem:[%s3633 + $0x58] sm:$0xff]
        %v6795 = vld [vmem:[%s3633 + $0x60] sm:$0xff]
        %v6796 = vld [vmem:[%s3633 + $0x68] sm:$0xff]
        %v6797 = vld [vmem:[%s3633 + $0x70] sm:$0xff]
        %v6798 = vld [vmem:[%s3633 + $0x78] sm:$0xff]
        %v6799 = vld [vmem:[%s3633 + $0x80] sm:$0xff]
        %v6800 = vld [vmem:[%s3633 + $0x88] sm:$0xff]
        %v6801 = vld [vmem:[%s3633 + $0x90] sm:$0xff]
        %v6802 = vld [vmem:[%s3633 + $0x98] sm:$0xff]
        %v6803 = vld [vmem:[%s3633 + $0xa0] sm:$0xff]
        %v6804 = vld [vmem:[%s3633 + $0xa8] sm:$0xff]
        %v6805 = vld [vmem:[%s3633 + $0xb0] sm:$0xff]
        %v6806 = vld [vmem:[%s3633 + $0xb8] sm:$0xff]
        %v6807 = vld [vmem:[%s3633 + $0xc0] sm:$0xff]
        %v6808 = vld [vmem:[%s3633 + $0xc8] sm:$0xff]
        %v6809 = vld [vmem:[%s3633 + $0xd0] sm:$0xff]
        %v6810 = vld [vmem:[%s3633 + $0xd8] sm:$0xff]
        %v6811 = vld [vmem:[%s3633 + $0xe0] sm:$0xff]
        %v6812 = vld [vmem:[%s3633 + $0xe8] sm:$0xff]
        %v6813 = vld [vmem:[%s3633 + $0xf0] sm:$0xff]
        %v6814 = vld [vmem:[%s3633 + $0xf8] sm:$0xff]
        %v6815 = vadd.f32 %v6783, %v6751
        %v6816 = vadd.f32 %v6784, %v6752
        %v6817 = vadd.f32 %v6785, %v6753
        %v6818 = vadd.f32 %v6786, %v6754
        %v6819 = vadd.f32 %v6787, %v6755
        %v6820 = vadd.f32 %v6788, %v6756
        %v6821 = vadd.f32 %v6789, %v6757
        %v6822 = vadd.f32 %v6790, %v6758
        %v6823 = vadd.f32 %v6791, %v6759
        %v6824 = vadd.f32 %v6792, %v6760
        %v6825 = vadd.f32 %v6793, %v6761
        %v6826 = vadd.f32 %v6794, %v6762
        %v6827 = vadd.f32 %v6795, %v6763
        %v6828 = vadd.f32 %v6796, %v6764
        %v6829 = vadd.f32 %v6797, %v6765
        %v6830 = vadd.f32 %v6798, %v6766
        %v6831 = vadd.f32 %v6799, %v6767
        %v6832 = vadd.f32 %v6800, %v6768
        %v6833 = vadd.f32 %v6801, %v6769
        %v6834 = vadd.f32 %v6802, %v6770
        %v6835 = vadd.f32 %v6803, %v6771
        %v6836 = vadd.f32 %v6804, %v6772
        %v6837 = vadd.f32 %v6805, %v6773
        %v6838 = vadd.f32 %v6806, %v6774
        %v6839 = vadd.f32 %v6807, %v6775
        %v6840 = vadd.f32 %v6808, %v6776
        %v6841 = vadd.f32 %v6809, %v6777
        %v6842 = vadd.f32 %v6810, %v6778
        %v6843 = vadd.f32 %v6811, %v6779
        %v6844 = vadd.f32 %v6812, %v6780
        %v6845 = vadd.f32 %v6813, %v6781
        %v6846 = vadd.f32 %v6814, %v6782
        %s6847 = scalar_lea.vmem %s341, %s3632 [#allocation12]
        %6848 = vst [vmem:[%s6847] sm:$0xff] %v6815
        %6849 = vst [vmem:[%s6847 + $0x8] sm:$0xff] %v6816
        %6850 = vst [vmem:[%s6847 + $0x10] sm:$0xff] %v6817
        %6851 = vst [vmem:[%s6847 + $0x18] sm:$0xff] %v6818
        %6852 = vst [vmem:[%s6847 + $0x20] sm:$0xff] %v6819
        %6853 = vst [vmem:[%s6847 + $0x28] sm:$0xff] %v6820
        %6854 = vst [vmem:[%s6847 + $0x30] sm:$0xff] %v6821
        %6855 = vst [vmem:[%s6847 + $0x38] sm:$0xff] %v6822
        %6856 = vst [vmem:[%s6847 + $0x40] sm:$0xff] %v6823
        %6857 = vst [vmem:[%s6847 + $0x48] sm:$0xff] %v6824
        %6858 = vst [vmem:[%s6847 + $0x50] sm:$0xff] %v6825
        %6859 = vst [vmem:[%s6847 + $0x58] sm:$0xff] %v6826
        %6860 = vst [vmem:[%s6847 + $0x60] sm:$0xff] %v6827
        %6861 = vst [vmem:[%s6847 + $0x68] sm:$0xff] %v6828
        %6862 = vst [vmem:[%s6847 + $0x70] sm:$0xff] %v6829
        %6863 = vst [vmem:[%s6847 + $0x78] sm:$0xff] %v6830
        %6864 = vst [vmem:[%s6847 + $0x80] sm:$0xff] %v6831
        %6865 = vst [vmem:[%s6847 + $0x88] sm:$0xff] %v6832
        %6866 = vst [vmem:[%s6847 + $0x90] sm:$0xff] %v6833
        %6867 = vst [vmem:[%s6847 + $0x98] sm:$0xff] %v6834
        %6868 = vst [vmem:[%s6847 + $0xa0] sm:$0xff] %v6835
        %6869 = vst [vmem:[%s6847 + $0xa8] sm:$0xff] %v6836
        %6870 = vst [vmem:[%s6847 + $0xb0] sm:$0xff] %v6837
        %6871 = vst [vmem:[%s6847 + $0xb8] sm:$0xff] %v6838
        %6872 = vst [vmem:[%s6847 + $0xc0] sm:$0xff] %v6839
        %6873 = vst [vmem:[%s6847 + $0xc8] sm:$0xff] %v6840
        %6874 = vst [vmem:[%s6847 + $0xd0] sm:$0xff] %v6841
        %6875 = vst [vmem:[%s6847 + $0xd8] sm:$0xff] %v6842
        %6876 = vst [vmem:[%s6847 + $0xe0] sm:$0xff] %v6843
        %6877 = vst [vmem:[%s6847 + $0xe8] sm:$0xff] %v6844
        %6878 = vst [vmem:[%s6847 + $0xf0] sm:$0xff] %v6845
        %6879 = vst [vmem:[%s6847 + $0xf8] sm:$0xff] %v6846
        %s6880 = sand.u32 %s186, 1
        %s6881 = scalar_lea.sflag [#allocation6], %s6880
        %s6882 = sand.u32 %s186, 1
        %s6883 = smul.addr %s6882, 512
        %s6884 = scalar_lea.vmem [#allocation12], %s6883
        // Predicated region
        $region65: #{tpu_custom_call.1} parent=47 // pred_check
          %p6885 = pneg %p196
        $region66: #{tpu_custom_call.1} parent=47 // pred_check_branch
          %6887 = sbr.rel (%p6885) target = $region68
        $region67: #{tpu_custom_call.1} parent=47 // pred_region
          %s6888 = smul.u32 8, %s26
          %s6890 = ssub.s32 8192, 8192
          %6891 = vsyncadd %s6881, %s6890
          %s6892 = smul.addr %s6888, 8
          %s6893 = smul.addr %s6892, 128
          %s6894 = scalar_lea.hbm %s7, %s6893
          %s6895 = sshll.u32 %s6884, 4
          %s6896 = int_to_ptr.vmem [resolvable:$true] %s6895
          %6901 = dma.vmem_to_hbm [thread:$0]  %s6896, 8192, %s6894, %s6881, 128, 128, 8
        $region68: #{tpu_custom_call.1} parent=47 // pred_fallthru
          _
      $region48: #{tpu_custom_call.1} parent=5 // pred_fallthru
        _
      %p6902 = scmp.le.s32.totalorder 2, %s21
      // Predicated region
      $region69: #{tpu_custom_call.1} parent=5 // pred_check
        %p6903 = pneg %p6902
      $region70: #{tpu_custom_call.1} parent=5 // pred_check_branch
        %6905 = sbr.rel (%p6903) target = $region72
      $region71: #{tpu_custom_call.1} parent=5 // pred_region
        %s6906 = ssub.s32 %s21, 2
        // Predicated region
        $region73: #{tpu_custom_call.1} parent=71 // pred_check
          %p6907 = pneg %p202
        $region74: #{tpu_custom_call.1} parent=71 // pred_check_branch
          %6909 = sbr.rel (%p6907) target = $region76
        $region75: #{tpu_custom_call.1} parent=71 // pred_region
          %s6910 = sand.u32 %s187, 1
          %s6911 = scalar_lea.sflag [#allocation6], %s6910
          %s6912 = sand.u32 %s187, 1
          %s6913 = smul.addr %s6912, 512
          %s6914 = scalar_lea.vmem [#allocation12], %s6913
          %6915 = dma.done %s6911, 8192
        $region76: #{tpu_custom_call.1} parent=71 // pred_fallthru
          _
      $region72: #{tpu_custom_call.1} parent=5 // pred_fallthru
        _
    $region6: #{tpu_custom_call.1} parent=1 // loop_footer
      %s25 = sadd.s32 1, %s21
    $region7: #{tpu_custom_call.1} parent=1 // loop_footer_branch
      %20 = sbr.rel target = $region3
    $region8: #{tpu_custom_call.1} parent=1 // loop_exit
      _
    %6916 = vsyncpa [#allocation5], 1
    %s6917 = scalar_lea.sflag [#allocation5], 1
    %6918 = vsyncpa %s6917, 1
    %6919 = vsyncpa [#allocation8], 1
    %6920 = vsyncpa [#allocation11], 1
    %6921 = vsyncpa [#allocation6], 1
    %s6922 = scalar_lea.sflag [#allocation6], 1
    %6923 = vsyncpa %s6922, 1

</llo_original>
